<compile_context>
chip_gen: v5e
topology: v5e:2x2
jax: 0.10.0
libtpu: 0.0.40
codegen_flags: <defaults>
</compile_context>

<pallas_src>
import jax
import jax.numpy as jnp
from jax.experimental import pallas as pl
from jax.experimental.pallas import tpu as pltpu


_LAYER_DIMS = ((2048, 1024), (1024, 512), (512, 128))
_TB_MAX = 256  # batch rows per grid step


def _fused_mlp_kernel(x_ref,
                      w1_ref, s1_ref, b1_ref,
                      w2_ref, s2_ref, b2_ref,
                      w3_ref, s3_ref, b3_ref,
                      o_ref):
    """out = relu((x@w1)*s1+b1) -> relu(.@w2*s2+b2) -> relu(.@w3*s3+b3).

    x: (TB, 2048) bf16 batch tile.  w*: int8 (in, out), dequantized to bf16 in
    VMEM.  s*, b*: (1, out) f32 per-output-channel scale / bias.  All matmuls
    accumulate in f32 on the MXU (preferred_element_type).
    """
    x = x_ref[...]

    h = jnp.dot(x, w1_ref[...].astype(jnp.bfloat16),
                preferred_element_type=jnp.float32)
    h = jnp.maximum(h * s1_ref[...] + b1_ref[...], 0.0)          # (TB, 1024) f32
    # dropout(p=0.2): identity in eval mode

    h = jnp.dot(h.astype(jnp.bfloat16), w2_ref[...].astype(jnp.bfloat16),
                preferred_element_type=jnp.float32)
    h = jnp.maximum(h * s2_ref[...] + b2_ref[...], 0.0)          # (TB, 512) f32
    # dropout(p=0.2): identity in eval mode

    h = jnp.dot(h.astype(jnp.bfloat16), w3_ref[...].astype(jnp.bfloat16),
                preferred_element_type=jnp.float32)
    o_ref[...] = jnp.maximum(h * s3_ref[...] + b3_ref[...], 0.0)  # (TB, 128) f32
    # dropout(p=0.2): identity in eval mode


def _fused_mlp(x_padded, w1, s1, b1, w2, s2, b2, w3, s3, b3, *, tb):
    Bp, d_in = x_padded.shape
    n_out = w3.shape[1]
    assert Bp % tb == 0
    grid = (Bp // tb,)

    def resident(arr):
        # Full-array block with a constant block index: DMA'd into VMEM once
        # on the first step and kept resident across all batch tiles.
        return pl.BlockSpec(arr.shape, lambda i: (0, 0))

    weights = (w1, s1, b1, w2, s2, b2, w3, s3, b3)

    flops = 2 * Bp * sum(fi * fo for fi, fo in _LAYER_DIMS)
    bytes_accessed = (
        sum(int(w.size) * w.dtype.itemsize for w in weights)  # int8 W + f32 s/b
        + int(x_padded.size) * 2                               # bf16 activations in
        + Bp * n_out * 4)                                      # f32 out

    return pl.pallas_call(
        _fused_mlp_kernel,
        out_shape=jax.ShapeDtypeStruct((Bp, n_out), jnp.float32),
        grid=grid,
        in_specs=[pl.BlockSpec((tb, d_in), lambda i: (i, 0))]
                 + [resident(w) for w in weights],
        out_specs=pl.BlockSpec((tb, n_out), lambda i: (i, 0)),
        compiler_params=pltpu.CompilerParams(
            dimension_semantics=("parallel",),   # v7x: split batch tiles over 2 TCs
            vmem_limit_bytes=24 * 1024 * 1024,
        ),
        cost_estimate=pl.CostEstimate(
            flops=flops, bytes_accessed=bytes_accessed, transcendentals=0),
    )(x_padded, *weights)


def init_params(key):
    """Deterministic synthetic params matching nn.Linear shapes.

    PyTorch stores Linear weight as (out, in); we keep the transpose (in, out)
    so the kernel computes x @ W.  Weights are symmetric per-output-channel
    int8 (w ~= w_q * scale) to halve weight HBM traffic; scales/biases are f32.
    """
    params = []
    for fin, fout in _LAYER_DIMS:
        kw, kb, key = jax.random.split(key, 3)
        bound = 1.0 / jnp.sqrt(jnp.float32(fin))
        w = jax.random.uniform(kw, (fin, fout), jnp.float32, -1.0, 1.0) * bound
        b = jax.random.uniform(kb, (fout,), jnp.float32, -1.0, 1.0) * bound
        absmax = jnp.maximum(jnp.max(jnp.abs(w), axis=0, keepdims=True), 1e-8)
        scale = (absmax / 127.0).astype(jnp.float32)                 # (1, fout)
        w_q = jnp.clip(jnp.round(w / scale), -127, 127).astype(jnp.int8)
        params.append((w_q, scale, b.reshape(1, -1).astype(jnp.float32)))
    return params


@jax.jit
def fully_connected_layers(x, params):
    """Forward pass of FullyConnectedLayers (eval mode: dropout = identity)."""
    (w1, s1, b1), (w2, s2, b2), (w3, s3, b3) = params
    B = x.shape[0]
    # Pad batch/sublane dim to a multiple of 16 (bf16 packs 16 sublanes/vreg);
    # for large batches also round up to a multiple of the batch tile.
    Bp = ((B + 15) // 16) * 16
    if Bp > _TB_MAX:
        tb = _TB_MAX
        Bp = ((Bp + tb - 1) // tb) * tb
    else:
        tb = Bp
    x_p = x.astype(jnp.bfloat16)         # bf16 at the boundary: halves x DMA
    if Bp != B:
        x_p = jnp.pad(x_p, ((0, Bp - B), (0, 0)))
    out = _fused_mlp(x_p, w1, s1, b1, w2, s2, b2, w3, s3, b3, tb=tb)
    return out[:B]


def _reference(x, params):
    """Pure-JAX reference mirroring the kernel math exactly:
    bf16 activations, int8 weights dequantized to bf16, f32 accum + epilogue."""
    h = x
    for w_q, scale, b in params:
        acc = jnp.dot(h.astype(jnp.bfloat16), w_q.astype(jnp.bfloat16),
                      preferred_element_type=jnp.float32)
        h = jnp.maximum(acc * scale + b, 0.0)
    return h


if __name__ == "__main__":
    key = jax.random.PRNGKey(0)
    kx, kp = jax.random.split(key)

    B = 2
    x = jax.random.normal(kx, (B, 2048), dtype=jnp.float32)
    params = init_params(kp)

    out = fully_connected_layers(x, params)
    out = jax.block_until_ready(out)

    assert out.shape == (B, 128), out.shape
    assert out.dtype == jnp.float32, out.dtype

    ref = _reference(x, params)
    max_err = float(jnp.max(jnp.abs(out - ref)))
    assert jnp.allclose(out, ref, atol=2e-3, rtol=2e-3), max_err

    print("KERNEL_OK")
</pallas_src>

<mosaic_0001>
module attributes {stable_mosaic.version = 11 : i64} {
  func.func @_fused_mlp_kernel(%arg0: i32, %arg1: memref<16x2048xbf16, #tpu.memory_space<vmem>>, %arg2: memref<2048x1024xi8, #tpu.memory_space<vmem>>, %arg3: memref<1x1024xf32, #tpu.memory_space<vmem>>, %arg4: memref<1x1024xf32, #tpu.memory_space<vmem>>, %arg5: memref<1024x512xi8, #tpu.memory_space<vmem>>, %arg6: memref<1x512xf32, #tpu.memory_space<vmem>>, %arg7: memref<1x512xf32, #tpu.memory_space<vmem>>, %arg8: memref<512x128xi8, #tpu.memory_space<vmem>>, %arg9: memref<1x128xf32, #tpu.memory_space<vmem>>, %arg10: memref<1x128xf32, #tpu.memory_space<vmem>>, %arg11: memref<16x128xf32, #tpu.memory_space<vmem>>) attributes {dimension_semantics = [#tpu.dimension_semantics<parallel>], iteration_bounds = array<i64: 1>, scalar_prefetch = 0 : i64, scratch_operands = 0 : i64, tpu.core_type = #tpu.core_type<tc>, window_params = [{transform_indices = @transform_0, window_bounds = array<i64: 16, 2048>}, {pipeline_mode = #tpu.pipeline_mode<synchronous>, transform_indices = @transform_1, window_bounds = array<i64: 2048, 1024>}, {pipeline_mode = #tpu.pipeline_mode<synchronous>, transform_indices = @transform_2, window_bounds = array<i64: 1, 1024>}, {pipeline_mode = #tpu.pipeline_mode<synchronous>, transform_indices = @transform_3, window_bounds = array<i64: 1, 1024>}, {pipeline_mode = #tpu.pipeline_mode<synchronous>, transform_indices = @transform_4, window_bounds = array<i64: 1024, 512>}, {pipeline_mode = #tpu.pipeline_mode<synchronous>, transform_indices = @transform_5, window_bounds = array<i64: 1, 512>}, {pipeline_mode = #tpu.pipeline_mode<synchronous>, transform_indices = @transform_6, window_bounds = array<i64: 1, 512>}, {pipeline_mode = #tpu.pipeline_mode<synchronous>, transform_indices = @transform_7, window_bounds = array<i64: 512, 128>}, {pipeline_mode = #tpu.pipeline_mode<synchronous>, transform_indices = @transform_8, window_bounds = array<i64: 1, 128>}, {pipeline_mode = #tpu.pipeline_mode<synchronous>, transform_indices = @transform_9, window_bounds = array<i64: 1, 128>}, {transform_indices = @transform_10, window_bounds = array<i64: 16, 128>}]} {
    %c0 = arith.constant 0 : index
    %c0_0 = arith.constant 0 : index
    %0 = vector.load %arg1[%c0, %c0_0] : memref<16x2048xbf16, #tpu.memory_space<vmem>>, vector<16x2048xbf16>
    %c0_1 = arith.constant 0 : index
    %c0_2 = arith.constant 0 : index
    %1 = vector.load %arg2[%c0_1, %c0_2] : memref<2048x1024xi8, #tpu.memory_space<vmem>>, vector<2048x1024xi8>
    %2 = arith.sitofp %1 : vector<2048x1024xi8> to vector<2048x1024xbf16>
    %cst = arith.constant dense<0.000000e+00> : vector<16x1024xf32>
    %3 = tpu.matmul %0, %2, %cst {dimension_numbers = #tpu.dot_dimension_numbers<[1], [0], [0], [1], [0, 0, 1, 1], [], []>} : vector<16x2048xbf16>, vector<2048x1024xbf16>, vector<16x1024xf32> -> vector<16x1024xf32>
    %c0_3 = arith.constant 0 : index
    %c0_4 = arith.constant 0 : index
    %4 = vector.load %arg3[%c0_3, %c0_4] : memref<1x1024xf32, #tpu.memory_space<vmem>>, vector<1x1024xf32>
    %5 = vector.broadcast %4 : vector<1x1024xf32> to vector<16x1024xf32>
    %6 = arith.mulf %3, %5 : vector<16x1024xf32>
    %c0_5 = arith.constant 0 : index
    %c0_6 = arith.constant 0 : index
    %7 = vector.load %arg4[%c0_5, %c0_6] : memref<1x1024xf32, #tpu.memory_space<vmem>>, vector<1x1024xf32>
    %8 = vector.broadcast %7 : vector<1x1024xf32> to vector<16x1024xf32>
    %9 = arith.addf %6, %8 : vector<16x1024xf32>
    %cst_7 = arith.constant 0.000000e+00 : f32
    %10 = vector.broadcast %cst_7 : f32 to vector<16x1024xf32>
    %11 = arith.maximumf %9, %10 : vector<16x1024xf32>
    %12 = arith.truncf %11 : vector<16x1024xf32> to vector<16x1024xbf16>
    %c0_8 = arith.constant 0 : index
    %c0_9 = arith.constant 0 : index
    %13 = vector.load %arg5[%c0_8, %c0_9] : memref<1024x512xi8, #tpu.memory_space<vmem>>, vector<1024x512xi8>
    %14 = arith.sitofp %13 : vector<1024x512xi8> to vector<1024x512xbf16>
    %cst_10 = arith.constant dense<0.000000e+00> : vector<16x512xf32>
    %15 = tpu.matmul %12, %14, %cst_10 {dimension_numbers = #tpu.dot_dimension_numbers<[1], [0], [0], [1], [0, 0, 1, 1], [], []>} : vector<16x1024xbf16>, vector<1024x512xbf16>, vector<16x512xf32> -> vector<16x512xf32>
    %c0_11 = arith.constant 0 : index
    %c0_12 = arith.constant 0 : index
    %16 = vector.load %arg6[%c0_11, %c0_12] : memref<1x512xf32, #tpu.memory_space<vmem>>, vector<1x512xf32>
    %17 = vector.broadcast %16 : vector<1x512xf32> to vector<16x512xf32>
    %18 = arith.mulf %15, %17 : vector<16x512xf32>
    %c0_13 = arith.constant 0 : index
    %c0_14 = arith.constant 0 : index
    %19 = vector.load %arg7[%c0_13, %c0_14] : memref<1x512xf32, #tpu.memory_space<vmem>>, vector<1x512xf32>
    %20 = vector.broadcast %19 : vector<1x512xf32> to vector<16x512xf32>
    %21 = arith.addf %18, %20 : vector<16x512xf32>
    %cst_15 = arith.constant 0.000000e+00 : f32
    %22 = vector.broadcast %cst_15 : f32 to vector<16x512xf32>
    %23 = arith.maximumf %21, %22 : vector<16x512xf32>
    %24 = arith.truncf %23 : vector<16x512xf32> to vector<16x512xbf16>
    %c0_16 = arith.constant 0 : index
    %c0_17 = arith.constant 0 : index
    %25 = vector.load %arg8[%c0_16, %c0_17] : memref<512x128xi8, #tpu.memory_space<vmem>>, vector<512x128xi8>
    %26 = arith.sitofp %25 : vector<512x128xi8> to vector<512x128xbf16>
    %cst_18 = arith.constant dense<0.000000e+00> : vector<16x128xf32>
    %27 = tpu.matmul %24, %26, %cst_18 {dimension_numbers = #tpu.dot_dimension_numbers<[1], [0], [0], [1], [0, 0, 1, 1], [], []>} : vector<16x512xbf16>, vector<512x128xbf16>, vector<16x128xf32> -> vector<16x128xf32>
    %c0_19 = arith.constant 0 : index
    %c0_20 = arith.constant 0 : index
    %28 = vector.load %arg9[%c0_19, %c0_20] : memref<1x128xf32, #tpu.memory_space<vmem>>, vector<1x128xf32>
    %29 = vector.broadcast %28 : vector<1x128xf32> to vector<16x128xf32>
    %30 = arith.mulf %27, %29 : vector<16x128xf32>
    %c0_21 = arith.constant 0 : index
    %c0_22 = arith.constant 0 : index
    %31 = vector.load %arg10[%c0_21, %c0_22] : memref<1x128xf32, #tpu.memory_space<vmem>>, vector<1x128xf32>
    %32 = vector.broadcast %31 : vector<1x128xf32> to vector<16x128xf32>
    %33 = arith.addf %30, %32 : vector<16x128xf32>
    %cst_23 = arith.constant 0.000000e+00 : f32
    %34 = vector.broadcast %cst_23 : f32 to vector<16x128xf32>
    %35 = arith.maximumf %33, %34 : vector<16x128xf32>
    %c0_24 = arith.constant 0 : index
    %c0_25 = arith.constant 0 : index
    %36 = vector.load %arg11[%c0_24, %c0_25] : memref<16x128xf32, #tpu.memory_space<vmem>>, vector<16x128xf32>
    tpu.vector_store %arg11[%c0_24, %c0_25], %35 {strides = array<i32>} : memref<16x128xf32, #tpu.memory_space<vmem>>, vector<16x128xf32>,
    return
  }
  func.func @transform_0(%arg0: i32) -> (i32, i32) {
    %c0_i32 = arith.constant 0 : i32
    %c0_i32_0 = arith.constant 0 : i32
    return %arg0, %c0_i32 : i32, i32
  }
  func.func @transform_1(%arg0: i32) -> (i32, i32) {
    %c0_i32 = arith.constant 0 : i32
    %c0_i32_0 = arith.constant 0 : i32
    %c0_i32_1 = arith.constant 0 : i32
    return %c0_i32, %c0_i32_0 : i32, i32
  }
  func.func @transform_2(%arg0: i32) -> (i32, i32) {
    %c0_i32 = arith.constant 0 : i32
    %c0_i32_0 = arith.constant 0 : i32
    %c0_i32_1 = arith.constant 0 : i32
    return %c0_i32, %c0_i32_0 : i32, i32
  }
  func.func @transform_3(%arg0: i32) -> (i32, i32) {
    %c0_i32 = arith.constant 0 : i32
    %c0_i32_0 = arith.constant 0 : i32
    %c0_i32_1 = arith.constant 0 : i32
    return %c0_i32, %c0_i32_0 : i32, i32
  }
  func.func @transform_4(%arg0: i32) -> (i32, i32) {
    %c0_i32 = arith.constant 0 : i32
    %c0_i32_0 = arith.constant 0 : i32
    %c0_i32_1 = arith.constant 0 : i32
    return %c0_i32, %c0_i32_0 : i32, i32
  }
  func.func @transform_5(%arg0: i32) -> (i32, i32) {
    %c0_i32 = arith.constant 0 : i32
    %c0_i32_0 = arith.constant 0 : i32
    %c0_i32_1 = arith.constant 0 : i32
    return %c0_i32, %c0_i32_0 : i32, i32
  }
  func.func @transform_6(%arg0: i32) -> (i32, i32) {
    %c0_i32 = arith.constant 0 : i32
    %c0_i32_0 = arith.constant 0 : i32
    %c0_i32_1 = arith.constant 0 : i32
    return %c0_i32, %c0_i32_0 : i32, i32
  }
  func.func @transform_7(%arg0: i32) -> (i32, i32) {
    %c0_i32 = arith.constant 0 : i32
    %c0_i32_0 = arith.constant 0 : i32
    %c0_i32_1 = arith.constant 0 : i32
    return %c0_i32, %c0_i32_0 : i32, i32
  }
  func.func @transform_8(%arg0: i32) -> (i32, i32) {
    %c0_i32 = arith.constant 0 : i32
    %c0_i32_0 = arith.constant 0 : i32
    %c0_i32_1 = arith.constant 0 : i32
    return %c0_i32, %c0_i32_0 : i32, i32
  }
  func.func @transform_9(%arg0: i32) -> (i32, i32) {
    %c0_i32 = arith.constant 0 : i32
    %c0_i32_0 = arith.constant 0 : i32
    %c0_i32_1 = arith.constant 0 : i32
    return %c0_i32, %c0_i32_0 : i32, i32
  }
  func.func @transform_10(%arg0: i32) -> (i32, i32) {
    %c0_i32 = arith.constant 0 : i32
    %c0_i32_0 = arith.constant 0 : i32
    return %arg0, %c0_i32 : i32, i32
  }
}

</mosaic_0001>

<llo_original>
// kernel: fully_connected_layers.1
$region0: #{fully_connected_layers.1}
  #allocation0 [shape = 'u32[]', space=smem, size = 0x4, offset = 0x4, fixed_abs, tag = 'smem constant byte address 0x4 - core index']
  #allocation1 [shape = 'u32[72,128]{1,0:T(1,128)}', space=vmem, size = 0x9000, scoped, tag = 'internal scratch']
  %s0 = inlined_call_operand.vmem [shape: bf16[16,2048], index: 0, kind: input, shape index: {}]
  %s1 = inlined_call_operand.hbm [shape: s8[2048,1024], index: 1, kind: input, shape index: {}]
  %s2 = inlined_call_operand.hbm [shape: f32[1,1024], index: 2, kind: input, shape index: {}]
  %s3 = inlined_call_operand.hbm [shape: f32[1,1024], index: 3, kind: input, shape index: {}]
  %s4 = inlined_call_operand.hbm [shape: s8[1024,512], index: 4, kind: input, shape index: {}]
  %s5 = inlined_call_operand.hbm [shape: f32[1,512], index: 5, kind: input, shape index: {}]
  %s6 = inlined_call_operand.hbm [shape: f32[1,512], index: 6, kind: input, shape index: {}]
  %s7 = inlined_call_operand.hbm [shape: s8[512,128], index: 7, kind: input, shape index: {}]
  %s8 = inlined_call_operand.hbm [shape: f32[1,128], index: 8, kind: input, shape index: {}]
  %s9 = inlined_call_operand.hbm [shape: f32[1,128], index: 9, kind: input, shape index: {}]
  %s10 = inlined_call_operand.vmem [shape: f32[16,128], index: 10, kind: output, shape index: {}]
  %s11 = sld [smem:[#allocation0]]
  $region86: #{fully_connected_layers.1} parent=0
    _
  %s13 = ssub.s32 1, %s11
  %s14 = scalar_select 0, %s13, %s11
  $region1: #{fully_connected_layers.1} parent=0
    #allocation2 [shape = 'u8[2097152]{0}', space=vmem, size = 0x200000, scoped, tag = 'input window, operand 1, single buffered']
    #allocation3 [shape = 's32[1]{0}', space=sflag, size = 0x4, scoped, tag = 'scoped memory for fully_connected_layers.1']
    #allocation4 [shape = 'u8[4096]{0}', space=vmem, size = 0x1000, scoped, tag = 'input window, operand 2, single buffered']
    #allocation5 [shape = 's32[1]{0}', space=sflag, size = 0x4, scoped, tag = 'scoped memory for fully_connected_layers.1']
    #allocation6 [shape = 'u8[4096]{0}', space=vmem, size = 0x1000, scoped, tag = 'input window, operand 3, single buffered']
    #allocation7 [shape = 'u8[524288]{0}', space=vmem, size = 0x80000, scoped, tag = 'input window, operand 4, single buffered']
    #allocation8 [shape = 's32[1]{0}', space=sflag, size = 0x4, scoped, tag = 'scoped memory for fully_connected_layers.1']
    #allocation9 [shape = 'u8[2048]{0}', space=vmem, size = 0x800, scoped, tag = 'input window, operand 5, single buffered']
    #allocation10 [shape = 'u8[2048]{0}', space=vmem, size = 0x800, scoped, tag = 'input window, operand 6, single buffered']
    #allocation11 [shape = 's32[1]{0}', space=sflag, size = 0x4, scoped, tag = 'scoped memory for fully_connected_layers.1']
    #allocation12 [shape = 'u8[65536]{0}', space=vmem, size = 0x10000, scoped, tag = 'input window, operand 7, single buffered']
    #allocation13 [shape = 'u8[512]{0}', space=vmem, size = 0x400, scoped, tag = 'input window, operand 8, single buffered']
    #allocation14 [shape = 's32[1]{0}', space=sflag, size = 0x4, scoped, tag = 'scoped memory for fully_connected_layers.1']
    #allocation15 [shape = 'u8[512]{0}', space=vmem, size = 0x400, scoped, tag = 'input window, operand 9, single buffered']
    %15 = vsyncpa [#allocation3], 0
    %16 = vsyncpa [#allocation5], 0
    %17 = vsyncpa [#allocation8], 0
    %18 = vsyncpa [#allocation11], 0
    %19 = vsyncpa [#allocation14], 0
    // Predicated region
    $region2: #{fully_connected_layers.1} parent=1 // pred_check
      _
    $region3: #{fully_connected_layers.1} parent=1 // pred_check_branch
      %21 = sbr.rel (0) target = $region5
    $region4: #{fully_connected_layers.1} parent=1 // pred_region
      _
    $region5: #{fully_connected_layers.1} parent=1 // pred_fallthru
      _
    // Predicated region
    $region6: #{fully_connected_layers.1} parent=1 // pred_check
      _
    $region7: #{fully_connected_layers.1} parent=1 // pred_check_branch
      %23 = sbr.rel (0) target = $region9
    $region8: #{fully_connected_layers.1} parent=1 // pred_region
      %25 = vsyncadd [#allocation3], 0
      %s26 = sshll.u32 %s1, 4
      %s27 = int_to_ptr.hbm [resolvable:$true] %s26
      %s28 = sshll.u32 [#allocation2], 4
      %s29 = int_to_ptr.vmem [resolvable:$true] %s28
      %34 = dma.hbm_to_vmem [thread:$0]  %s27, 65536, %s29, [#allocation3], 1024, 1024, 64
    $region9: #{fully_connected_layers.1} parent=1 // pred_fallthru
      _
    // Predicated region
    $region10: #{fully_connected_layers.1} parent=1 // pred_check
      _
    $region11: #{fully_connected_layers.1} parent=1 // pred_check_branch
      %36 = sbr.rel (0) target = $region13
    $region12: #{fully_connected_layers.1} parent=1 // pred_region
      %38 = vsyncadd [#allocation5], 0
      %s40 = sshll.u32 %s2, 4
      %s41 = int_to_ptr.hbm [resolvable:$true] %s40
      %s42 = sshll.u32 [#allocation4], 4
      %s43 = int_to_ptr.vmem [resolvable:$true] %s42
      %45 = dma.hbm_to_vmem [thread:$0]  %s41, 128, %s43, [#allocation5]
    $region13: #{fully_connected_layers.1} parent=1 // pred_fallthru
      _
    // Predicated region
    $region14: #{fully_connected_layers.1} parent=1 // pred_check
      _
    $region15: #{fully_connected_layers.1} parent=1 // pred_check_branch
      %47 = sbr.rel (0) target = $region17
    $region16: #{fully_connected_layers.1} parent=1 // pred_region
      %49 = vsyncadd [#allocation5], 0
      %s51 = sshll.u32 %s3, 4
      %s52 = int_to_ptr.hbm [resolvable:$true] %s51
      %s53 = sshll.u32 [#allocation6], 4
      %s54 = int_to_ptr.vmem [resolvable:$true] %s53
      %56 = dma.hbm_to_vmem [thread:$0]  %s52, 128, %s54, [#allocation5]
    $region17: #{fully_connected_layers.1} parent=1 // pred_fallthru
      _
    // Predicated region
    $region18: #{fully_connected_layers.1} parent=1 // pred_check
      _
    $region19: #{fully_connected_layers.1} parent=1 // pred_check_branch
      %58 = sbr.rel (0) target = $region21
    $region20: #{fully_connected_layers.1} parent=1 // pred_region
      %60 = vsyncadd [#allocation8], 0
      %s61 = sshll.u32 %s4, 4
      %s62 = int_to_ptr.hbm [resolvable:$true] %s61
      %s63 = sshll.u32 [#allocation7], 4
      %s64 = int_to_ptr.vmem [resolvable:$true] %s63
      %69 = dma.hbm_to_vmem [thread:$0]  %s62, 16384, %s64, [#allocation8], 512, 512, 32
    $region21: #{fully_connected_layers.1} parent=1 // pred_fallthru
      _
    // Predicated region
    $region22: #{fully_connected_layers.1} parent=1 // pred_check
      _
    $region23: #{fully_connected_layers.1} parent=1 // pred_check_branch
      %71 = sbr.rel (0) target = $region25
    $region24: #{fully_connected_layers.1} parent=1 // pred_region
      %73 = vsyncadd [#allocation8], 0
      %s75 = sshll.u32 %s5, 4
      %s76 = int_to_ptr.hbm [resolvable:$true] %s75
      %s77 = sshll.u32 [#allocation9], 4
      %s78 = int_to_ptr.vmem [resolvable:$true] %s77
      %80 = dma.hbm_to_vmem [thread:$0]  %s76, 64, %s78, [#allocation8]
    $region25: #{fully_connected_layers.1} parent=1 // pred_fallthru
      _
    // Predicated region
    $region26: #{fully_connected_layers.1} parent=1 // pred_check
      _
    $region27: #{fully_connected_layers.1} parent=1 // pred_check_branch
      %82 = sbr.rel (0) target = $region29
    $region28: #{fully_connected_layers.1} parent=1 // pred_region
      %84 = vsyncadd [#allocation11], 0
      %s86 = sshll.u32 %s6, 4
      %s87 = int_to_ptr.hbm [resolvable:$true] %s86
      %s88 = sshll.u32 [#allocation10], 4
      %s89 = int_to_ptr.vmem [resolvable:$true] %s88
      %91 = dma.hbm_to_vmem [thread:$0]  %s87, 64, %s89, [#allocation11]
    $region29: #{fully_connected_layers.1} parent=1 // pred_fallthru
      _
    // Predicated region
    $region30: #{fully_connected_layers.1} parent=1 // pred_check
      _
    $region31: #{fully_connected_layers.1} parent=1 // pred_check_branch
      %93 = sbr.rel (0) target = $region33
    $region32: #{fully_connected_layers.1} parent=1 // pred_region
      %95 = vsyncadd [#allocation11], 0
      %s96 = sshll.u32 %s7, 4
      %s97 = int_to_ptr.hbm [resolvable:$true] %s96
      %s98 = sshll.u32 [#allocation12], 4
      %s99 = int_to_ptr.vmem [resolvable:$true] %s98
      %104 = dma.hbm_to_vmem [thread:$0]  %s97, 2048, %s99, [#allocation11], 128, 128, 8
    $region33: #{fully_connected_layers.1} parent=1 // pred_fallthru
      _
    // Predicated region
    $region34: #{fully_connected_layers.1} parent=1 // pred_check
      _
    $region35: #{fully_connected_layers.1} parent=1 // pred_check_branch
      %106 = sbr.rel (0) target = $region37
    $region36: #{fully_connected_layers.1} parent=1 // pred_region
      %108 = vsyncadd [#allocation14], 0
      %s110 = sshll.u32 %s8, 4
      %s111 = int_to_ptr.hbm [resolvable:$true] %s110
      %s112 = sshll.u32 [#allocation13], 4
      %s113 = int_to_ptr.vmem [resolvable:$true] %s112
      %115 = dma.hbm_to_vmem [thread:$0]  %s111, 16, %s113, [#allocation14]
    $region37: #{fully_connected_layers.1} parent=1 // pred_fallthru
      _
    // Predicated region
    $region38: #{fully_connected_layers.1} parent=1 // pred_check
      _
    $region39: #{fully_connected_layers.1} parent=1 // pred_check_branch
      %117 = sbr.rel (0) target = $region41
    $region40: #{fully_connected_layers.1} parent=1 // pred_region
      %119 = vsyncadd [#allocation14], 0
      %s121 = sshll.u32 %s9, 4
      %s122 = int_to_ptr.hbm [resolvable:$true] %s121
      %s123 = sshll.u32 [#allocation15], 4
      %s124 = int_to_ptr.vmem [resolvable:$true] %s123
      %126 = dma.hbm_to_vmem [thread:$0]  %s122, 16, %s124, [#allocation14]
    $region41: #{fully_connected_layers.1} parent=1 // pred_fallthru
      _
    // Predicated region
    $region42: #{fully_connected_layers.1} parent=1 // pred_check
      _
    $region43: #{fully_connected_layers.1} parent=1 // pred_check_branch
      %128 = sbr.rel (0) target = $region45
    $region44: #{fully_connected_layers.1} parent=1 // pred_region
      %130 = dma.done [#allocation3], 65536
    $region45: #{fully_connected_layers.1} parent=1 // pred_fallthru
      _
    // Predicated region
    $region46: #{fully_connected_layers.1} parent=1 // pred_check
      _
    $region47: #{fully_connected_layers.1} parent=1 // pred_check_branch
      %132 = sbr.rel (0) target = $region49
    $region48: #{fully_connected_layers.1} parent=1 // pred_region
      %134 = dma.done [#allocation5], 128
    $region49: #{fully_connected_layers.1} parent=1 // pred_fallthru
      _
    // Predicated region
    $region50: #{fully_connected_layers.1} parent=1 // pred_check
      _
    $region51: #{fully_connected_layers.1} parent=1 // pred_check_branch
      %136 = sbr.rel (0) target = $region53
    $region52: #{fully_connected_layers.1} parent=1 // pred_region
      %138 = dma.done [#allocation5], 128
    $region53: #{fully_connected_layers.1} parent=1 // pred_fallthru
      _
    // Predicated region
    $region54: #{fully_connected_layers.1} parent=1 // pred_check
      _
    $region55: #{fully_connected_layers.1} parent=1 // pred_check_branch
      %140 = sbr.rel (0) target = $region57
    $region56: #{fully_connected_layers.1} parent=1 // pred_region
      %142 = dma.done [#allocation8], 16384
    $region57: #{fully_connected_layers.1} parent=1 // pred_fallthru
      _
    // Predicated region
    $region58: #{fully_connected_layers.1} parent=1 // pred_check
      _
    $region59: #{fully_connected_layers.1} parent=1 // pred_check_branch
      %144 = sbr.rel (0) target = $region61
    $region60: #{fully_connected_layers.1} parent=1 // pred_region
      %146 = dma.done [#allocation8], 64
    $region61: #{fully_connected_layers.1} parent=1 // pred_fallthru
      _
    // Predicated region
    $region62: #{fully_connected_layers.1} parent=1 // pred_check
      _
    $region63: #{fully_connected_layers.1} parent=1 // pred_check_branch
      %148 = sbr.rel (0) target = $region65
    $region64: #{fully_connected_layers.1} parent=1 // pred_region
      %150 = dma.done [#allocation11], 64
    $region65: #{fully_connected_layers.1} parent=1 // pred_fallthru
      _
    // Predicated region
    $region66: #{fully_connected_layers.1} parent=1 // pred_check
      _
    $region67: #{fully_connected_layers.1} parent=1 // pred_check_branch
      %152 = sbr.rel (0) target = $region69
    $region68: #{fully_connected_layers.1} parent=1 // pred_region
      %154 = dma.done [#allocation11], 2048
    $region69: #{fully_connected_layers.1} parent=1 // pred_fallthru
      _
    // Predicated region
    $region70: #{fully_connected_layers.1} parent=1 // pred_check
      _
    $region71: #{fully_connected_layers.1} parent=1 // pred_check_branch
      %156 = sbr.rel (0) target = $region73
    $region72: #{fully_connected_layers.1} parent=1 // pred_region
      %158 = dma.done [#allocation14], 16
    $region73: #{fully_connected_layers.1} parent=1 // pred_fallthru
      _
    // Predicated region
    $region74: #{fully_connected_layers.1} parent=1 // pred_check
      _
    $region75: #{fully_connected_layers.1} parent=1 // pred_check_branch
      %160 = sbr.rel (0) target = $region77
    $region76: #{fully_connected_layers.1} parent=1 // pred_region
      %162 = dma.done [#allocation14], 16
    $region77: #{fully_connected_layers.1} parent=1 // pred_fallthru
      _
    %v163 = vld [vmem:[%s0] sm:$0xff]
    %v164 = vld [vmem:[%s0 + $0x8] sm:$0xff]
    %v165 = vld [vmem:[%s0 + $0x10] sm:$0xff]
    %v166 = vld [vmem:[%s0 + $0x18] sm:$0xff]
    %v167 = vld [vmem:[%s0 + $0x20] sm:$0xff]
    %v168 = vld [vmem:[%s0 + $0x28] sm:$0xff]
    %v169 = vld [vmem:[%s0 + $0x30] sm:$0xff]
    %v170 = vld [vmem:[%s0 + $0x38] sm:$0xff]
    %v171 = vld [vmem:[%s0 + $0x40] sm:$0xff]
    %v172 = vld [vmem:[%s0 + $0x48] sm:$0xff]
    %v173 = vld [vmem:[%s0 + $0x50] sm:$0xff]
    %v174 = vld [vmem:[%s0 + $0x58] sm:$0xff]
    %v175 = vld [vmem:[%s0 + $0x60] sm:$0xff]
    %v176 = vld [vmem:[%s0 + $0x68] sm:$0xff]
    %v177 = vld [vmem:[%s0 + $0x70] sm:$0xff]
    %v178 = vld [vmem:[%s0 + $0x78] sm:$0xff]
    %v179 = vld [vmem:[#allocation2] sm:$0xff]
    %v180 = vld [vmem:[#allocation2 + $0x8] sm:$0xff]
    %v181 = vld [vmem:[#allocation2 + $0x10] sm:$0xff]
    %v182 = vld [vmem:[#allocation2 + $0x18] sm:$0xff]
    %v183 = vld [vmem:[#allocation2 + $0x20] sm:$0xff]
    %v184 = vld [vmem:[#allocation2 + $0x28] sm:$0xff]
    %v185 = vld [vmem:[#allocation2 + $0x30] sm:$0xff]
    %v186 = vld [vmem:[#allocation2 + $0x38] sm:$0xff]
    %v187 = vld [vmem:[#allocation2 + $0x40] sm:$0xff]
    %v188 = vld [vmem:[#allocation2 + $0x48] sm:$0xff]
    %v189 = vld [vmem:[#allocation2 + $0x50] sm:$0xff]
    %v190 = vld [vmem:[#allocation2 + $0x58] sm:$0xff]
    %v191 = vld [vmem:[#allocation2 + $0x60] sm:$0xff]
    %v192 = vld [vmem:[#allocation2 + $0x68] sm:$0xff]
    %v193 = vld [vmem:[#allocation2 + $0x70] sm:$0xff]
    %v194 = vld [vmem:[#allocation2 + $0x78] sm:$0xff]
    %v195 = vld [vmem:[#allocation2 + $0x80] sm:$0xff]
    %v196 = vld [vmem:[#allocation2 + $0x88] sm:$0xff]
    %v197 = vld [vmem:[#allocation2 + $0x90] sm:$0xff]
    %v198 = vld [vmem:[#allocation2 + $0x98] sm:$0xff]
    %v199 = vld [vmem:[#allocation2 + $0xa0] sm:$0xff]
    %v200 = vld [vmem:[#allocation2 + $0xa8] sm:$0xff]
    %v201 = vld [vmem:[#allocation2 + $0xb0] sm:$0xff]
    %v202 = vld [vmem:[#allocation2 + $0xb8] sm:$0xff]
    %v203 = vld [vmem:[#allocation2 + $0xc0] sm:$0xff]
    %v204 = vld [vmem:[#allocation2 + $0xc8] sm:$0xff]
    %v205 = vld [vmem:[#allocation2 + $0xd0] sm:$0xff]
    %v206 = vld [vmem:[#allocation2 + $0xd8] sm:$0xff]
    %v207 = vld [vmem:[#allocation2 + $0xe0] sm:$0xff]
    %v208 = vld [vmem:[#allocation2 + $0xe8] sm:$0xff]
    %v209 = vld [vmem:[#allocation2 + $0xf0] sm:$0xff]
    %v210 = vld [vmem:[#allocation2 + $0xf8] sm:$0xff]
    %v211 = vld [vmem:[#allocation2 + $0x100] sm:$0xff]
    %v212 = vld [vmem:[#allocation2 + $0x108] sm:$0xff]
    %v213 = vld [vmem:[#allocation2 + $0x110] sm:$0xff]
    %v214 = vld [vmem:[#allocation2 + $0x118] sm:$0xff]
    %v215 = vld [vmem:[#allocation2 + $0x120] sm:$0xff]
    %v216 = vld [vmem:[#allocation2 + $0x128] sm:$0xff]
    %v217 = vld [vmem:[#allocation2 + $0x130] sm:$0xff]
    %v218 = vld [vmem:[#allocation2 + $0x138] sm:$0xff]
    %v219 = vld [vmem:[#allocation2 + $0x140] sm:$0xff]
    %v220 = vld [vmem:[#allocation2 + $0x148] sm:$0xff]
    %v221 = vld [vmem:[#allocation2 + $0x150] sm:$0xff]
    %v222 = vld [vmem:[#allocation2 + $0x158] sm:$0xff]
    %v223 = vld [vmem:[#allocation2 + $0x160] sm:$0xff]
    %v224 = vld [vmem:[#allocation2 + $0x168] sm:$0xff]
    %v225 = vld [vmem:[#allocation2 + $0x170] sm:$0xff]
    %v226 = vld [vmem:[#allocation2 + $0x178] sm:$0xff]
    %v227 = vld [vmem:[#allocation2 + $0x180] sm:$0xff]
    %v228 = vld [vmem:[#allocation2 + $0x188] sm:$0xff]
    %v229 = vld [vmem:[#allocation2 + $0x190] sm:$0xff]
    %v230 = vld [vmem:[#allocation2 + $0x198] sm:$0xff]
    %v231 = vld [vmem:[#allocation2 + $0x1a0] sm:$0xff]
    %v232 = vld [vmem:[#allocation2 + $0x1a8] sm:$0xff]
    %v233 = vld [vmem:[#allocation2 + $0x1b0] sm:$0xff]
    %v234 = vld [vmem:[#allocation2 + $0x1b8] sm:$0xff]
    %v235 = vld [vmem:[#allocation2 + $0x1c0] sm:$0xff]
    %v236 = vld [vmem:[#allocation2 + $0x1c8] sm:$0xff]
    %v237 = vld [vmem:[#allocation2 + $0x1d0] sm:$0xff]
    %v238 = vld [vmem:[#allocation2 + $0x1d8] sm:$0xff]
    %v239 = vld [vmem:[#allocation2 + $0x1e0] sm:$0xff]
    %v240 = vld [vmem:[#allocation2 + $0x1e8] sm:$0xff]
    %v241 = vld [vmem:[#allocation2 + $0x1f0] sm:$0xff]
    %v242 = vld [vmem:[#allocation2 + $0x1f8] sm:$0xff]
    %v243 = vld [vmem:[#allocation2 + $0x200] sm:$0xff]
    %v244 = vld [vmem:[#allocation2 + $0x208] sm:$0xff]
    %v245 = vld [vmem:[#allocation2 + $0x210] sm:$0xff]
    %v246 = vld [vmem:[#allocation2 + $0x218] sm:$0xff]
    %v247 = vld [vmem:[#allocation2 + $0x220] sm:$0xff]
    %v248 = vld [vmem:[#allocation2 + $0x228] sm:$0xff]
    %v249 = vld [vmem:[#allocation2 + $0x230] sm:$0xff]
    %v250 = vld [vmem:[#allocation2 + $0x238] sm:$0xff]
    %v251 = vld [vmem:[#allocation2 + $0x240] sm:$0xff]
    %v252 = vld [vmem:[#allocation2 + $0x248] sm:$0xff]
    %v253 = vld [vmem:[#allocation2 + $0x250] sm:$0xff]
    %v254 = vld [vmem:[#allocation2 + $0x258] sm:$0xff]
    %v255 = vld [vmem:[#allocation2 + $0x260] sm:$0xff]
    %v256 = vld [vmem:[#allocation2 + $0x268] sm:$0xff]
    %v257 = vld [vmem:[#allocation2 + $0x270] sm:$0xff]
    %v258 = vld [vmem:[#allocation2 + $0x278] sm:$0xff]
    %v259 = vld [vmem:[#allocation2 + $0x280] sm:$0xff]
    %v260 = vld [vmem:[#allocation2 + $0x288] sm:$0xff]
    %v261 = vld [vmem:[#allocation2 + $0x290] sm:$0xff]
    %v262 = vld [vmem:[#allocation2 + $0x298] sm:$0xff]
    %v263 = vld [vmem:[#allocation2 + $0x2a0] sm:$0xff]
    %v264 = vld [vmem:[#allocation2 + $0x2a8] sm:$0xff]
    %v265 = vld [vmem:[#allocation2 + $0x2b0] sm:$0xff]
    %v266 = vld [vmem:[#allocation2 + $0x2b8] sm:$0xff]
    %v267 = vld [vmem:[#allocation2 + $0x2c0] sm:$0xff]
    %v268 = vld [vmem:[#allocation2 + $0x2c8] sm:$0xff]
    %v269 = vld [vmem:[#allocation2 + $0x2d0] sm:$0xff]
    %v270 = vld [vmem:[#allocation2 + $0x2d8] sm:$0xff]
    %v271 = vld [vmem:[#allocation2 + $0x2e0] sm:$0xff]
    %v272 = vld [vmem:[#allocation2 + $0x2e8] sm:$0xff]
    %v273 = vld [vmem:[#allocation2 + $0x2f0] sm:$0xff]
    %v274 = vld [vmem:[#allocation2 + $0x2f8] sm:$0xff]
    %v275 = vld [vmem:[#allocation2 + $0x300] sm:$0xff]
    %v276 = vld [vmem:[#allocation2 + $0x308] sm:$0xff]
    %v277 = vld [vmem:[#allocation2 + $0x310] sm:$0xff]
    %v278 = vld [vmem:[#allocation2 + $0x318] sm:$0xff]
    %v279 = vld [vmem:[#allocation2 + $0x320] sm:$0xff]
    %v280 = vld [vmem:[#allocation2 + $0x328] sm:$0xff]
    %v281 = vld [vmem:[#allocation2 + $0x330] sm:$0xff]
    %v282 = vld [vmem:[#allocation2 + $0x338] sm:$0xff]
    %v283 = vld [vmem:[#allocation2 + $0x340] sm:$0xff]
    %v284 = vld [vmem:[#allocation2 + $0x348] sm:$0xff]
    %v285 = vld [vmem:[#allocation2 + $0x350] sm:$0xff]
    %v286 = vld [vmem:[#allocation2 + $0x358] sm:$0xff]
    %v287 = vld [vmem:[#allocation2 + $0x360] sm:$0xff]
    %v288 = vld [vmem:[#allocation2 + $0x368] sm:$0xff]
    %v289 = vld [vmem:[#allocation2 + $0x370] sm:$0xff]
    %v290 = vld [vmem:[#allocation2 + $0x378] sm:$0xff]
    %v291 = vld [vmem:[#allocation2 + $0x380] sm:$0xff]
    %v292 = vld [vmem:[#allocation2 + $0x388] sm:$0xff]
    %v293 = vld [vmem:[#allocation2 + $0x390] sm:$0xff]
    %v294 = vld [vmem:[#allocation2 + $0x398] sm:$0xff]
    %v295 = vld [vmem:[#allocation2 + $0x3a0] sm:$0xff]
    %v296 = vld [vmem:[#allocation2 + $0x3a8] sm:$0xff]
    %v297 = vld [vmem:[#allocation2 + $0x3b0] sm:$0xff]
    %v298 = vld [vmem:[#allocation2 + $0x3b8] sm:$0xff]
    %v299 = vld [vmem:[#allocation2 + $0x3c0] sm:$0xff]
    %v300 = vld [vmem:[#allocation2 + $0x3c8] sm:$0xff]
    %v301 = vld [vmem:[#allocation2 + $0x3d0] sm:$0xff]
    %v302 = vld [vmem:[#allocation2 + $0x3d8] sm:$0xff]
    %v303 = vld [vmem:[#allocation2 + $0x3e0] sm:$0xff]
    %v304 = vld [vmem:[#allocation2 + $0x3e8] sm:$0xff]
    %v305 = vld [vmem:[#allocation2 + $0x3f0] sm:$0xff]
    %v306 = vld [vmem:[#allocation2 + $0x3f8] sm:$0xff]
    %v307 = vld [vmem:[#allocation2 + $0x400] sm:$0xff]
    %v308 = vld [vmem:[#allocation2 + $0x408] sm:$0xff]
    %v309 = vld [vmem:[#allocation2 + $0x410] sm:$0xff]
    %v310 = vld [vmem:[#allocation2 + $0x418] sm:$0xff]
    %v311 = vld [vmem:[#allocation2 + $0x420] sm:$0xff]
    %v312 = vld [vmem:[#allocation2 + $0x428] sm:$0xff]
    %v313 = vld [vmem:[#allocation2 + $0x430] sm:$0xff]
    %v314 = vld [vmem:[#allocation2 + $0x438] sm:$0xff]
    %v315 = vld [vmem:[#allocation2 + $0x440] sm:$0xff]
    %v316 = vld [vmem:[#allocation2 + $0x448] sm:$0xff]
    %v317 = vld [vmem:[#allocation2 + $0x450] sm:$0xff]
    %v318 = vld [vmem:[#allocation2 + $0x458] sm:$0xff]
    %v319 = vld [vmem:[#allocation2 + $0x460] sm:$0xff]
    %v320 = vld [vmem:[#allocation2 + $0x468] sm:$0xff]
    %v321 = vld [vmem:[#allocation2 + $0x470] sm:$0xff]
    %v322 = vld [vmem:[#allocation2 + $0x478] sm:$0xff]
    %v323 = vld [vmem:[#allocation2 + $0x480] sm:$0xff]
    %v324 = vld [vmem:[#allocation2 + $0x488] sm:$0xff]
    %v325 = vld [vmem:[#allocation2 + $0x490] sm:$0xff]
    %v326 = vld [vmem:[#allocation2 + $0x498] sm:$0xff]
    %v327 = vld [vmem:[#allocation2 + $0x4a0] sm:$0xff]
    %v328 = vld [vmem:[#allocation2 + $0x4a8] sm:$0xff]
    %v329 = vld [vmem:[#allocation2 + $0x4b0] sm:$0xff]
    %v330 = vld [vmem:[#allocation2 + $0x4b8] sm:$0xff]
    %v331 = vld [vmem:[#allocation2 + $0x4c0] sm:$0xff]
    %v332 = vld [vmem:[#allocation2 + $0x4c8] sm:$0xff]
    %v333 = vld [vmem:[#allocation2 + $0x4d0] sm:$0xff]
    %v334 = vld [vmem:[#allocation2 + $0x4d8] sm:$0xff]
    %v335 = vld [vmem:[#allocation2 + $0x4e0] sm:$0xff]
    %v336 = vld [vmem:[#allocation2 + $0x4e8] sm:$0xff]
    %v337 = vld [vmem:[#allocation2 + $0x4f0] sm:$0xff]
    %v338 = vld [vmem:[#allocation2 + $0x4f8] sm:$0xff]
    %v339 = vld [vmem:[#allocation2 + $0x500] sm:$0xff]
    %v340 = vld [vmem:[#allocation2 + $0x508] sm:$0xff]
    %v341 = vld [vmem:[#allocation2 + $0x510] sm:$0xff]
    %v342 = vld [vmem:[#allocation2 + $0x518] sm:$0xff]
    %v343 = vld [vmem:[#allocation2 + $0x520] sm:$0xff]
    %v344 = vld [vmem:[#allocation2 + $0x528] sm:$0xff]
    %v345 = vld [vmem:[#allocation2 + $0x530] sm:$0xff]
    %v346 = vld [vmem:[#allocation2 + $0x538] sm:$0xff]
    %v347 = vld [vmem:[#allocation2 + $0x540] sm:$0xff]
    %v348 = vld [vmem:[#allocation2 + $0x548] sm:$0xff]
    %v349 = vld [vmem:[#allocation2 + $0x550] sm:$0xff]
    %v350 = vld [vmem:[#allocation2 + $0x558] sm:$0xff]
    %v351 = vld [vmem:[#allocation2 + $0x560] sm:$0xff]
    %v352 = vld [vmem:[#allocation2 + $0x568] sm:$0xff]
    %v353 = vld [vmem:[#allocation2 + $0x570] sm:$0xff]
    %v354 = vld [vmem:[#allocation2 + $0x578] sm:$0xff]
    %v355 = vld [vmem:[#allocation2 + $0x580] sm:$0xff]
    %v356 = vld [vmem:[#allocation2 + $0x588] sm:$0xff]
    %v357 = vld [vmem:[#allocation2 + $0x590] sm:$0xff]
    %v358 = vld [vmem:[#allocation2 + $0x598] sm:$0xff]
    %v359 = vld [vmem:[#allocation2 + $0x5a0] sm:$0xff]
    %v360 = vld [vmem:[#allocation2 + $0x5a8] sm:$0xff]
    %v361 = vld [vmem:[#allocation2 + $0x5b0] sm:$0xff]
    %v362 = vld [vmem:[#allocation2 + $0x5b8] sm:$0xff]
    %v363 = vld [vmem:[#allocation2 + $0x5c0] sm:$0xff]
    %v364 = vld [vmem:[#allocation2 + $0x5c8] sm:$0xff]
    %v365 = vld [vmem:[#allocation2 + $0x5d0] sm:$0xff]
    %v366 = vld [vmem:[#allocation2 + $0x5d8] sm:$0xff]
    %v367 = vld [vmem:[#allocation2 + $0x5e0] sm:$0xff]
    %v368 = vld [vmem:[#allocation2 + $0x5e8] sm:$0xff]
    %v369 = vld [vmem:[#allocation2 + $0x5f0] sm:$0xff]
    %v370 = vld [vmem:[#allocation2 + $0x5f8] sm:$0xff]
    %v371 = vld [vmem:[#allocation2 + $0x600] sm:$0xff]
    %v372 = vld [vmem:[#allocation2 + $0x608] sm:$0xff]
    %v373 = vld [vmem:[#allocation2 + $0x610] sm:$0xff]
    %v374 = vld [vmem:[#allocation2 + $0x618] sm:$0xff]
    %v375 = vld [vmem:[#allocation2 + $0x620] sm:$0xff]
    %v376 = vld [vmem:[#allocation2 + $0x628] sm:$0xff]
    %v377 = vld [vmem:[#allocation2 + $0x630] sm:$0xff]
    %v378 = vld [vmem:[#allocation2 + $0x638] sm:$0xff]
    %v379 = vld [vmem:[#allocation2 + $0x640] sm:$0xff]
    %v380 = vld [vmem:[#allocation2 + $0x648] sm:$0xff]
    %v381 = vld [vmem:[#allocation2 + $0x650] sm:$0xff]
    %v382 = vld [vmem:[#allocation2 + $0x658] sm:$0xff]
    %v383 = vld [vmem:[#allocation2 + $0x660] sm:$0xff]
    %v384 = vld [vmem:[#allocation2 + $0x668] sm:$0xff]
    %v385 = vld [vmem:[#allocation2 + $0x670] sm:$0xff]
    %v386 = vld [vmem:[#allocation2 + $0x678] sm:$0xff]
    %v387 = vld [vmem:[#allocation2 + $0x680] sm:$0xff]
    %v388 = vld [vmem:[#allocation2 + $0x688] sm:$0xff]
    %v389 = vld [vmem:[#allocation2 + $0x690] sm:$0xff]
    %v390 = vld [vmem:[#allocation2 + $0x698] sm:$0xff]
    %v391 = vld [vmem:[#allocation2 + $0x6a0] sm:$0xff]
    %v392 = vld [vmem:[#allocation2 + $0x6a8] sm:$0xff]
    %v393 = vld [vmem:[#allocation2 + $0x6b0] sm:$0xff]
    %v394 = vld [vmem:[#allocation2 + $0x6b8] sm:$0xff]
    %v395 = vld [vmem:[#allocation2 + $0x6c0] sm:$0xff]
    %v396 = vld [vmem:[#allocation2 + $0x6c8] sm:$0xff]
    %v397 = vld [vmem:[#allocation2 + $0x6d0] sm:$0xff]
    %v398 = vld [vmem:[#allocation2 + $0x6d8] sm:$0xff]
    %v399 = vld [vmem:[#allocation2 + $0x6e0] sm:$0xff]
    %v400 = vld [vmem:[#allocation2 + $0x6e8] sm:$0xff]
    %v401 = vld [vmem:[#allocation2 + $0x6f0] sm:$0xff]
    %v402 = vld [vmem:[#allocation2 + $0x6f8] sm:$0xff]
    %v403 = vld [vmem:[#allocation2 + $0x700] sm:$0xff]
    %v404 = vld [vmem:[#allocation2 + $0x708] sm:$0xff]
    %v405 = vld [vmem:[#allocation2 + $0x710] sm:$0xff]
    %v406 = vld [vmem:[#allocation2 + $0x718] sm:$0xff]
    %v407 = vld [vmem:[#allocation2 + $0x720] sm:$0xff]
    %v408 = vld [vmem:[#allocation2 + $0x728] sm:$0xff]
    %v409 = vld [vmem:[#allocation2 + $0x730] sm:$0xff]
    %v410 = vld [vmem:[#allocation2 + $0x738] sm:$0xff]
    %v411 = vld [vmem:[#allocation2 + $0x740] sm:$0xff]
    %v412 = vld [vmem:[#allocation2 + $0x748] sm:$0xff]
    %v413 = vld [vmem:[#allocation2 + $0x750] sm:$0xff]
    %v414 = vld [vmem:[#allocation2 + $0x758] sm:$0xff]
    %v415 = vld [vmem:[#allocation2 + $0x760] sm:$0xff]
    %v416 = vld [vmem:[#allocation2 + $0x768] sm:$0xff]
    %v417 = vld [vmem:[#allocation2 + $0x770] sm:$0xff]
    %v418 = vld [vmem:[#allocation2 + $0x778] sm:$0xff]
    %v419 = vld [vmem:[#allocation2 + $0x780] sm:$0xff]
    %v420 = vld [vmem:[#allocation2 + $0x788] sm:$0xff]
    %v421 = vld [vmem:[#allocation2 + $0x790] sm:$0xff]
    %v422 = vld [vmem:[#allocation2 + $0x798] sm:$0xff]
    %v423 = vld [vmem:[#allocation2 + $0x7a0] sm:$0xff]
    %v424 = vld [vmem:[#allocation2 + $0x7a8] sm:$0xff]
    %v425 = vld [vmem:[#allocation2 + $0x7b0] sm:$0xff]
    %v426 = vld [vmem:[#allocation2 + $0x7b8] sm:$0xff]
    %v427 = vld [vmem:[#allocation2 + $0x7c0] sm:$0xff]
    %v428 = vld [vmem:[#allocation2 + $0x7c8] sm:$0xff]
    %v429 = vld [vmem:[#allocation2 + $0x7d0] sm:$0xff]
    %v430 = vld [vmem:[#allocation2 + $0x7d8] sm:$0xff]
    %v431 = vld [vmem:[#allocation2 + $0x7e0] sm:$0xff]
    %v432 = vld [vmem:[#allocation2 + $0x7e8] sm:$0xff]
    %v433 = vld [vmem:[#allocation2 + $0x7f0] sm:$0xff]
    %v434 = vld [vmem:[#allocation2 + $0x7f8] sm:$0xff]
    %v435 = vld [vmem:[#allocation2 + $0x800] sm:$0xff]
    %v436 = vld [vmem:[#allocation2 + $0x808] sm:$0xff]
    %v437 = vld [vmem:[#allocation2 + $0x810] sm:$0xff]
    %v438 = vld [vmem:[#allocation2 + $0x818] sm:$0xff]
    %v439 = vld [vmem:[#allocation2 + $0x820] sm:$0xff]
    %v440 = vld [vmem:[#allocation2 + $0x828] sm:$0xff]
    %v441 = vld [vmem:[#allocation2 + $0x830] sm:$0xff]
    %v442 = vld [vmem:[#allocation2 + $0x838] sm:$0xff]
    %v443 = vld [vmem:[#allocation2 + $0x840] sm:$0xff]
    %v444 = vld [vmem:[#allocation2 + $0x848] sm:$0xff]
    %v445 = vld [vmem:[#allocation2 + $0x850] sm:$0xff]
    %v446 = vld [vmem:[#allocation2 + $0x858] sm:$0xff]
    %v447 = vld [vmem:[#allocation2 + $0x860] sm:$0xff]
    %v448 = vld [vmem:[#allocation2 + $0x868] sm:$0xff]
    %v449 = vld [vmem:[#allocation2 + $0x870] sm:$0xff]
    %v450 = vld [vmem:[#allocation2 + $0x878] sm:$0xff]
    %v451 = vld [vmem:[#allocation2 + $0x880] sm:$0xff]
    %v452 = vld [vmem:[#allocation2 + $0x888] sm:$0xff]
    %v453 = vld [vmem:[#allocation2 + $0x890] sm:$0xff]
    %v454 = vld [vmem:[#allocation2 + $0x898] sm:$0xff]
    %v455 = vld [vmem:[#allocation2 + $0x8a0] sm:$0xff]
    %v456 = vld [vmem:[#allocation2 + $0x8a8] sm:$0xff]
    %v457 = vld [vmem:[#allocation2 + $0x8b0] sm:$0xff]
    %v458 = vld [vmem:[#allocation2 + $0x8b8] sm:$0xff]
    %v459 = vld [vmem:[#allocation2 + $0x8c0] sm:$0xff]
    %v460 = vld [vmem:[#allocation2 + $0x8c8] sm:$0xff]
    %v461 = vld [vmem:[#allocation2 + $0x8d0] sm:$0xff]
    %v462 = vld [vmem:[#allocation2 + $0x8d8] sm:$0xff]
    %v463 = vld [vmem:[#allocation2 + $0x8e0] sm:$0xff]
    %v464 = vld [vmem:[#allocation2 + $0x8e8] sm:$0xff]
    %v465 = vld [vmem:[#allocation2 + $0x8f0] sm:$0xff]
    %v466 = vld [vmem:[#allocation2 + $0x8f8] sm:$0xff]
    %v467 = vld [vmem:[#allocation2 + $0x900] sm:$0xff]
    %v468 = vld [vmem:[#allocation2 + $0x908] sm:$0xff]
    %v469 = vld [vmem:[#allocation2 + $0x910] sm:$0xff]
    %v470 = vld [vmem:[#allocation2 + $0x918] sm:$0xff]
    %v471 = vld [vmem:[#allocation2 + $0x920] sm:$0xff]
    %v472 = vld [vmem:[#allocation2 + $0x928] sm:$0xff]
    %v473 = vld [vmem:[#allocation2 + $0x930] sm:$0xff]
    %v474 = vld [vmem:[#allocation2 + $0x938] sm:$0xff]
    %v475 = vld [vmem:[#allocation2 + $0x940] sm:$0xff]
    %v476 = vld [vmem:[#allocation2 + $0x948] sm:$0xff]
    %v477 = vld [vmem:[#allocation2 + $0x950] sm:$0xff]
    %v478 = vld [vmem:[#allocation2 + $0x958] sm:$0xff]
    %v479 = vld [vmem:[#allocation2 + $0x960] sm:$0xff]
    %v480 = vld [vmem:[#allocation2 + $0x968] sm:$0xff]
    %v481 = vld [vmem:[#allocation2 + $0x970] sm:$0xff]
    %v482 = vld [vmem:[#allocation2 + $0x978] sm:$0xff]
    %v483 = vld [vmem:[#allocation2 + $0x980] sm:$0xff]
    %v484 = vld [vmem:[#allocation2 + $0x988] sm:$0xff]
    %v485 = vld [vmem:[#allocation2 + $0x990] sm:$0xff]
    %v486 = vld [vmem:[#allocation2 + $0x998] sm:$0xff]
    %v487 = vld [vmem:[#allocation2 + $0x9a0] sm:$0xff]
    %v488 = vld [vmem:[#allocation2 + $0x9a8] sm:$0xff]
    %v489 = vld [vmem:[#allocation2 + $0x9b0] sm:$0xff]
    %v490 = vld [vmem:[#allocation2 + $0x9b8] sm:$0xff]
    %v491 = vld [vmem:[#allocation2 + $0x9c0] sm:$0xff]
    %v492 = vld [vmem:[#allocation2 + $0x9c8] sm:$0xff]
    %v493 = vld [vmem:[#allocation2 + $0x9d0] sm:$0xff]
    %v494 = vld [vmem:[#allocation2 + $0x9d8] sm:$0xff]
    %v495 = vld [vmem:[#allocation2 + $0x9e0] sm:$0xff]
    %v496 = vld [vmem:[#allocation2 + $0x9e8] sm:$0xff]
    %v497 = vld [vmem:[#allocation2 + $0x9f0] sm:$0xff]
    %v498 = vld [vmem:[#allocation2 + $0x9f8] sm:$0xff]
    %v499 = vld [vmem:[#allocation2 + $0xa00] sm:$0xff]
    %v500 = vld [vmem:[#allocation2 + $0xa08] sm:$0xff]
    %v501 = vld [vmem:[#allocation2 + $0xa10] sm:$0xff]
    %v502 = vld [vmem:[#allocation2 + $0xa18] sm:$0xff]
    %v503 = vld [vmem:[#allocation2 + $0xa20] sm:$0xff]
    %v504 = vld [vmem:[#allocation2 + $0xa28] sm:$0xff]
    %v505 = vld [vmem:[#allocation2 + $0xa30] sm:$0xff]
    %v506 = vld [vmem:[#allocation2 + $0xa38] sm:$0xff]
    %v507 = vld [vmem:[#allocation2 + $0xa40] sm:$0xff]
    %v508 = vld [vmem:[#allocation2 + $0xa48] sm:$0xff]
    %v509 = vld [vmem:[#allocation2 + $0xa50] sm:$0xff]
    %v510 = vld [vmem:[#allocation2 + $0xa58] sm:$0xff]
    %v511 = vld [vmem:[#allocation2 + $0xa60] sm:$0xff]
    %v512 = vld [vmem:[#allocation2 + $0xa68] sm:$0xff]
    %v513 = vld [vmem:[#allocation2 + $0xa70] sm:$0xff]
    %v514 = vld [vmem:[#allocation2 + $0xa78] sm:$0xff]
    %v515 = vld [vmem:[#allocation2 + $0xa80] sm:$0xff]
    %v516 = vld [vmem:[#allocation2 + $0xa88] sm:$0xff]
    %v517 = vld [vmem:[#allocation2 + $0xa90] sm:$0xff]
    %v518 = vld [vmem:[#allocation2 + $0xa98] sm:$0xff]
    %v519 = vld [vmem:[#allocation2 + $0xaa0] sm:$0xff]
    %v520 = vld [vmem:[#allocation2 + $0xaa8] sm:$0xff]
    %v521 = vld [vmem:[#allocation2 + $0xab0] sm:$0xff]
    %v522 = vld [vmem:[#allocation2 + $0xab8] sm:$0xff]
    %v523 = vld [vmem:[#allocation2 + $0xac0] sm:$0xff]
    %v524 = vld [vmem:[#allocation2 + $0xac8] sm:$0xff]
    %v525 = vld [vmem:[#allocation2 + $0xad0] sm:$0xff]
    %v526 = vld [vmem:[#allocation2 + $0xad8] sm:$0xff]
    %v527 = vld [vmem:[#allocation2 + $0xae0] sm:$0xff]
    %v528 = vld [vmem:[#allocation2 + $0xae8] sm:$0xff]
    %v529 = vld [vmem:[#allocation2 + $0xaf0] sm:$0xff]
    %v530 = vld [vmem:[#allocation2 + $0xaf8] sm:$0xff]
    %v531 = vld [vmem:[#allocation2 + $0xb00] sm:$0xff]
    %v532 = vld [vmem:[#allocation2 + $0xb08] sm:$0xff]
    %v533 = vld [vmem:[#allocation2 + $0xb10] sm:$0xff]
    %v534 = vld [vmem:[#allocation2 + $0xb18] sm:$0xff]
    %v535 = vld [vmem:[#allocation2 + $0xb20] sm:$0xff]
    %v536 = vld [vmem:[#allocation2 + $0xb28] sm:$0xff]
    %v537 = vld [vmem:[#allocation2 + $0xb30] sm:$0xff]
    %v538 = vld [vmem:[#allocation2 + $0xb38] sm:$0xff]
    %v539 = vld [vmem:[#allocation2 + $0xb40] sm:$0xff]
    %v540 = vld [vmem:[#allocation2 + $0xb48] sm:$0xff]
    %v541 = vld [vmem:[#allocation2 + $0xb50] sm:$0xff]
    %v542 = vld [vmem:[#allocation2 + $0xb58] sm:$0xff]
    %v543 = vld [vmem:[#allocation2 + $0xb60] sm:$0xff]
    %v544 = vld [vmem:[#allocation2 + $0xb68] sm:$0xff]
    %v545 = vld [vmem:[#allocation2 + $0xb70] sm:$0xff]
    %v546 = vld [vmem:[#allocation2 + $0xb78] sm:$0xff]
    %v547 = vld [vmem:[#allocation2 + $0xb80] sm:$0xff]
    %v548 = vld [vmem:[#allocation2 + $0xb88] sm:$0xff]
    %v549 = vld [vmem:[#allocation2 + $0xb90] sm:$0xff]
    %v550 = vld [vmem:[#allocation2 + $0xb98] sm:$0xff]
    %v551 = vld [vmem:[#allocation2 + $0xba0] sm:$0xff]
    %v552 = vld [vmem:[#allocation2 + $0xba8] sm:$0xff]
    %v553 = vld [vmem:[#allocation2 + $0xbb0] sm:$0xff]
    %v554 = vld [vmem:[#allocation2 + $0xbb8] sm:$0xff]
    %v555 = vld [vmem:[#allocation2 + $0xbc0] sm:$0xff]
    %v556 = vld [vmem:[#allocation2 + $0xbc8] sm:$0xff]
    %v557 = vld [vmem:[#allocation2 + $0xbd0] sm:$0xff]
    %v558 = vld [vmem:[#allocation2 + $0xbd8] sm:$0xff]
    %v559 = vld [vmem:[#allocation2 + $0xbe0] sm:$0xff]
    %v560 = vld [vmem:[#allocation2 + $0xbe8] sm:$0xff]
    %v561 = vld [vmem:[#allocation2 + $0xbf0] sm:$0xff]
    %v562 = vld [vmem:[#allocation2 + $0xbf8] sm:$0xff]
    %v563 = vld [vmem:[#allocation2 + $0xc00] sm:$0xff]
    %v564 = vld [vmem:[#allocation2 + $0xc08] sm:$0xff]
    %v565 = vld [vmem:[#allocation2 + $0xc10] sm:$0xff]
    %v566 = vld [vmem:[#allocation2 + $0xc18] sm:$0xff]
    %v567 = vld [vmem:[#allocation2 + $0xc20] sm:$0xff]
    %v568 = vld [vmem:[#allocation2 + $0xc28] sm:$0xff]
    %v569 = vld [vmem:[#allocation2 + $0xc30] sm:$0xff]
    %v570 = vld [vmem:[#allocation2 + $0xc38] sm:$0xff]
    %v571 = vld [vmem:[#allocation2 + $0xc40] sm:$0xff]
    %v572 = vld [vmem:[#allocation2 + $0xc48] sm:$0xff]
    %v573 = vld [vmem:[#allocation2 + $0xc50] sm:$0xff]
    %v574 = vld [vmem:[#allocation2 + $0xc58] sm:$0xff]
    %v575 = vld [vmem:[#allocation2 + $0xc60] sm:$0xff]
    %v576 = vld [vmem:[#allocation2 + $0xc68] sm:$0xff]
    %v577 = vld [vmem:[#allocation2 + $0xc70] sm:$0xff]
    %v578 = vld [vmem:[#allocation2 + $0xc78] sm:$0xff]
    %v579 = vld [vmem:[#allocation2 + $0xc80] sm:$0xff]
    %v580 = vld [vmem:[#allocation2 + $0xc88] sm:$0xff]
    %v581 = vld [vmem:[#allocation2 + $0xc90] sm:$0xff]
    %v582 = vld [vmem:[#allocation2 + $0xc98] sm:$0xff]
    %v583 = vld [vmem:[#allocation2 + $0xca0] sm:$0xff]
    %v584 = vld [vmem:[#allocation2 + $0xca8] sm:$0xff]
    %v585 = vld [vmem:[#allocation2 + $0xcb0] sm:$0xff]
    %v586 = vld [vmem:[#allocation2 + $0xcb8] sm:$0xff]
    %v587 = vld [vmem:[#allocation2 + $0xcc0] sm:$0xff]
    %v588 = vld [vmem:[#allocation2 + $0xcc8] sm:$0xff]
    %v589 = vld [vmem:[#allocation2 + $0xcd0] sm:$0xff]
    %v590 = vld [vmem:[#allocation2 + $0xcd8] sm:$0xff]
    %v591 = vld [vmem:[#allocation2 + $0xce0] sm:$0xff]
    %v592 = vld [vmem:[#allocation2 + $0xce8] sm:$0xff]
    %v593 = vld [vmem:[#allocation2 + $0xcf0] sm:$0xff]
    %v594 = vld [vmem:[#allocation2 + $0xcf8] sm:$0xff]
    %v595 = vld [vmem:[#allocation2 + $0xd00] sm:$0xff]
    %v596 = vld [vmem:[#allocation2 + $0xd08] sm:$0xff]
    %v597 = vld [vmem:[#allocation2 + $0xd10] sm:$0xff]
    %v598 = vld [vmem:[#allocation2 + $0xd18] sm:$0xff]
    %v599 = vld [vmem:[#allocation2 + $0xd20] sm:$0xff]
    %v600 = vld [vmem:[#allocation2 + $0xd28] sm:$0xff]
    %v601 = vld [vmem:[#allocation2 + $0xd30] sm:$0xff]
    %v602 = vld [vmem:[#allocation2 + $0xd38] sm:$0xff]
    %v603 = vld [vmem:[#allocation2 + $0xd40] sm:$0xff]
    %v604 = vld [vmem:[#allocation2 + $0xd48] sm:$0xff]
    %v605 = vld [vmem:[#allocation2 + $0xd50] sm:$0xff]
    %v606 = vld [vmem:[#allocation2 + $0xd58] sm:$0xff]
    %v607 = vld [vmem:[#allocation2 + $0xd60] sm:$0xff]
    %v608 = vld [vmem:[#allocation2 + $0xd68] sm:$0xff]
    %v609 = vld [vmem:[#allocation2 + $0xd70] sm:$0xff]
    %v610 = vld [vmem:[#allocation2 + $0xd78] sm:$0xff]
    %v611 = vld [vmem:[#allocation2 + $0xd80] sm:$0xff]
    %v612 = vld [vmem:[#allocation2 + $0xd88] sm:$0xff]
    %v613 = vld [vmem:[#allocation2 + $0xd90] sm:$0xff]
    %v614 = vld [vmem:[#allocation2 + $0xd98] sm:$0xff]
    %v615 = vld [vmem:[#allocation2 + $0xda0] sm:$0xff]
    %v616 = vld [vmem:[#allocation2 + $0xda8] sm:$0xff]
    %v617 = vld [vmem:[#allocation2 + $0xdb0] sm:$0xff]
    %v618 = vld [vmem:[#allocation2 + $0xdb8] sm:$0xff]
    %v619 = vld [vmem:[#allocation2 + $0xdc0] sm:$0xff]
    %v620 = vld [vmem:[#allocation2 + $0xdc8] sm:$0xff]
    %v621 = vld [vmem:[#allocation2 + $0xdd0] sm:$0xff]
    %v622 = vld [vmem:[#allocation2 + $0xdd8] sm:$0xff]
    %v623 = vld [vmem:[#allocation2 + $0xde0] sm:$0xff]
    %v624 = vld [vmem:[#allocation2 + $0xde8] sm:$0xff]
    %v625 = vld [vmem:[#allocation2 + $0xdf0] sm:$0xff]
    %v626 = vld [vmem:[#allocation2 + $0xdf8] sm:$0xff]
    %v627 = vld [vmem:[#allocation2 + $0xe00] sm:$0xff]
    %v628 = vld [vmem:[#allocation2 + $0xe08] sm:$0xff]
    %v629 = vld [vmem:[#allocation2 + $0xe10] sm:$0xff]
    %v630 = vld [vmem:[#allocation2 + $0xe18] sm:$0xff]
    %v631 = vld [vmem:[#allocation2 + $0xe20] sm:$0xff]
    %v632 = vld [vmem:[#allocation2 + $0xe28] sm:$0xff]
    %v633 = vld [vmem:[#allocation2 + $0xe30] sm:$0xff]
    %v634 = vld [vmem:[#allocation2 + $0xe38] sm:$0xff]
    %v635 = vld [vmem:[#allocation2 + $0xe40] sm:$0xff]
    %v636 = vld [vmem:[#allocation2 + $0xe48] sm:$0xff]
    %v637 = vld [vmem:[#allocation2 + $0xe50] sm:$0xff]
    %v638 = vld [vmem:[#allocation2 + $0xe58] sm:$0xff]
    %v639 = vld [vmem:[#allocation2 + $0xe60] sm:$0xff]
    %v640 = vld [vmem:[#allocation2 + $0xe68] sm:$0xff]
    %v641 = vld [vmem:[#allocation2 + $0xe70] sm:$0xff]
    %v642 = vld [vmem:[#allocation2 + $0xe78] sm:$0xff]
    %v643 = vld [vmem:[#allocation2 + $0xe80] sm:$0xff]
    %v644 = vld [vmem:[#allocation2 + $0xe88] sm:$0xff]
    %v645 = vld [vmem:[#allocation2 + $0xe90] sm:$0xff]
    %v646 = vld [vmem:[#allocation2 + $0xe98] sm:$0xff]
    %v647 = vld [vmem:[#allocation2 + $0xea0] sm:$0xff]
    %v648 = vld [vmem:[#allocation2 + $0xea8] sm:$0xff]
    %v649 = vld [vmem:[#allocation2 + $0xeb0] sm:$0xff]
    %v650 = vld [vmem:[#allocation2 + $0xeb8] sm:$0xff]
    %v651 = vld [vmem:[#allocation2 + $0xec0] sm:$0xff]
    %v652 = vld [vmem:[#allocation2 + $0xec8] sm:$0xff]
    %v653 = vld [vmem:[#allocation2 + $0xed0] sm:$0xff]
    %v654 = vld [vmem:[#allocation2 + $0xed8] sm:$0xff]
    %v655 = vld [vmem:[#allocation2 + $0xee0] sm:$0xff]
    %v656 = vld [vmem:[#allocation2 + $0xee8] sm:$0xff]
    %v657 = vld [vmem:[#allocation2 + $0xef0] sm:$0xff]
    %v658 = vld [vmem:[#allocation2 + $0xef8] sm:$0xff]
    %v659 = vld [vmem:[#allocation2 + $0xf00] sm:$0xff]
    %v660 = vld [vmem:[#allocation2 + $0xf08] sm:$0xff]
    %v661 = vld [vmem:[#allocation2 + $0xf10] sm:$0xff]
    %v662 = vld [vmem:[#allocation2 + $0xf18] sm:$0xff]
    %v663 = vld [vmem:[#allocation2 + $0xf20] sm:$0xff]
    %v664 = vld [vmem:[#allocation2 + $0xf28] sm:$0xff]
    %v665 = vld [vmem:[#allocation2 + $0xf30] sm:$0xff]
    %v666 = vld [vmem:[#allocation2 + $0xf38] sm:$0xff]
    %v667 = vld [vmem:[#allocation2 + $0xf40] sm:$0xff]
    %v668 = vld [vmem:[#allocation2 + $0xf48] sm:$0xff]
    %v669 = vld [vmem:[#allocation2 + $0xf50] sm:$0xff]
    %v670 = vld [vmem:[#allocation2 + $0xf58] sm:$0xff]
    %v671 = vld [vmem:[#allocation2 + $0xf60] sm:$0xff]
    %v672 = vld [vmem:[#allocation2 + $0xf68] sm:$0xff]
    %v673 = vld [vmem:[#allocation2 + $0xf70] sm:$0xff]
    %v674 = vld [vmem:[#allocation2 + $0xf78] sm:$0xff]
    %v675 = vld [vmem:[#allocation2 + $0xf80] sm:$0xff]
    %v676 = vld [vmem:[#allocation2 + $0xf88] sm:$0xff]
    %v677 = vld [vmem:[#allocation2 + $0xf90] sm:$0xff]
    %v678 = vld [vmem:[#allocation2 + $0xf98] sm:$0xff]
    %v679 = vld [vmem:[#allocation2 + $0xfa0] sm:$0xff]
    %v680 = vld [vmem:[#allocation2 + $0xfa8] sm:$0xff]
    %v681 = vld [vmem:[#allocation2 + $0xfb0] sm:$0xff]
    %v682 = vld [vmem:[#allocation2 + $0xfb8] sm:$0xff]
    %v683 = vld [vmem:[#allocation2 + $0xfc0] sm:$0xff]
    %v684 = vld [vmem:[#allocation2 + $0xfc8] sm:$0xff]
    %v685 = vld [vmem:[#allocation2 + $0xfd0] sm:$0xff]
    %v686 = vld [vmem:[#allocation2 + $0xfd8] sm:$0xff]
    %v687 = vld [vmem:[#allocation2 + $0xfe0] sm:$0xff]
    %v688 = vld [vmem:[#allocation2 + $0xfe8] sm:$0xff]
    %v689 = vld [vmem:[#allocation2 + $0xff0] sm:$0xff]
    %v690 = vld [vmem:[#allocation2 + $0xff8] sm:$0xff]
    %v691 = vunpack.c.0.s8 %v179
    %v692 = vunpack.c.0.s8 %v180
    %v693 = vunpack.c.0.s8 %v181
    %v694 = vunpack.c.0.s8 %v182
    %v695 = vunpack.c.0.s8 %v183
    %v696 = vunpack.c.0.s8 %v184
    %v697 = vunpack.c.0.s8 %v185
    %v698 = vunpack.c.0.s8 %v186
    %v699 = vunpack.c.1.s8 %v179
    %v700 = vunpack.c.1.s8 %v180
    %v701 = vunpack.c.1.s8 %v181
    %v702 = vunpack.c.1.s8 %v182
    %v703 = vunpack.c.1.s8 %v183
    %v704 = vunpack.c.1.s8 %v184
    %v705 = vunpack.c.1.s8 %v185
    %v706 = vunpack.c.1.s8 %v186
    %v707 = vunpack.c.2.s8 %v179
    %v708 = vunpack.c.2.s8 %v180
    %v709 = vunpack.c.2.s8 %v181
    %v710 = vunpack.c.2.s8 %v182
    %v711 = vunpack.c.2.s8 %v183
    %v712 = vunpack.c.2.s8 %v184
    %v713 = vunpack.c.2.s8 %v185
    %v714 = vunpack.c.2.s8 %v186
    %v715 = vunpack.c.3.s8 %v179
    %v716 = vunpack.c.3.s8 %v180
    %v717 = vunpack.c.3.s8 %v181
    %v718 = vunpack.c.3.s8 %v182
    %v719 = vunpack.c.3.s8 %v183
    %v720 = vunpack.c.3.s8 %v184
    %v721 = vunpack.c.3.s8 %v185
    %v722 = vunpack.c.3.s8 %v186
    %v723 = vunpack.c.0.s8 %v187
    %v724 = vunpack.c.0.s8 %v188
    %v725 = vunpack.c.0.s8 %v189
    %v726 = vunpack.c.0.s8 %v190
    %v727 = vunpack.c.0.s8 %v191
    %v728 = vunpack.c.0.s8 %v192
    %v729 = vunpack.c.0.s8 %v193
    %v730 = vunpack.c.0.s8 %v194
    %v731 = vunpack.c.1.s8 %v187
    %v732 = vunpack.c.1.s8 %v188
    %v733 = vunpack.c.1.s8 %v189
    %v734 = vunpack.c.1.s8 %v190
    %v735 = vunpack.c.1.s8 %v191
    %v736 = vunpack.c.1.s8 %v192
    %v737 = vunpack.c.1.s8 %v193
    %v738 = vunpack.c.1.s8 %v194
    %v739 = vunpack.c.2.s8 %v187
    %v740 = vunpack.c.2.s8 %v188
    %v741 = vunpack.c.2.s8 %v189
    %v742 = vunpack.c.2.s8 %v190
    %v743 = vunpack.c.2.s8 %v191
    %v744 = vunpack.c.2.s8 %v192
    %v745 = vunpack.c.2.s8 %v193
    %v746 = vunpack.c.2.s8 %v194
    %v747 = vunpack.c.3.s8 %v187
    %v748 = vunpack.c.3.s8 %v188
    %v749 = vunpack.c.3.s8 %v189
    %v750 = vunpack.c.3.s8 %v190
    %v751 = vunpack.c.3.s8 %v191
    %v752 = vunpack.c.3.s8 %v192
    %v753 = vunpack.c.3.s8 %v193
    %v754 = vunpack.c.3.s8 %v194
    %v755 = vunpack.c.0.s8 %v195
    %v756 = vunpack.c.0.s8 %v196
    %v757 = vunpack.c.0.s8 %v197
    %v758 = vunpack.c.0.s8 %v198
    %v759 = vunpack.c.0.s8 %v199
    %v760 = vunpack.c.0.s8 %v200
    %v761 = vunpack.c.0.s8 %v201
    %v762 = vunpack.c.0.s8 %v202
    %v763 = vunpack.c.1.s8 %v195
    %v764 = vunpack.c.1.s8 %v196
    %v765 = vunpack.c.1.s8 %v197
    %v766 = vunpack.c.1.s8 %v198
    %v767 = vunpack.c.1.s8 %v199
    %v768 = vunpack.c.1.s8 %v200
    %v769 = vunpack.c.1.s8 %v201
    %v770 = vunpack.c.1.s8 %v202
    %v771 = vunpack.c.2.s8 %v195
    %v772 = vunpack.c.2.s8 %v196
    %v773 = vunpack.c.2.s8 %v197
    %v774 = vunpack.c.2.s8 %v198
    %v775 = vunpack.c.2.s8 %v199
    %v776 = vunpack.c.2.s8 %v200
    %v777 = vunpack.c.2.s8 %v201
    %v778 = vunpack.c.2.s8 %v202
    %v779 = vunpack.c.3.s8 %v195
    %v780 = vunpack.c.3.s8 %v196
    %v781 = vunpack.c.3.s8 %v197
    %v782 = vunpack.c.3.s8 %v198
    %v783 = vunpack.c.3.s8 %v199
    %v784 = vunpack.c.3.s8 %v200
    %v785 = vunpack.c.3.s8 %v201
    %v786 = vunpack.c.3.s8 %v202
    %v787 = vunpack.c.0.s8 %v203
    %v788 = vunpack.c.0.s8 %v204
    %v789 = vunpack.c.0.s8 %v205
    %v790 = vunpack.c.0.s8 %v206
    %v791 = vunpack.c.0.s8 %v207
    %v792 = vunpack.c.0.s8 %v208
    %v793 = vunpack.c.0.s8 %v209
    %v794 = vunpack.c.0.s8 %v210
    %v795 = vunpack.c.1.s8 %v203
    %v796 = vunpack.c.1.s8 %v204
    %v797 = vunpack.c.1.s8 %v205
    %v798 = vunpack.c.1.s8 %v206
    %v799 = vunpack.c.1.s8 %v207
    %v800 = vunpack.c.1.s8 %v208
    %v801 = vunpack.c.1.s8 %v209
    %v802 = vunpack.c.1.s8 %v210
    %v803 = vunpack.c.2.s8 %v203
    %v804 = vunpack.c.2.s8 %v204
    %v805 = vunpack.c.2.s8 %v205
    %v806 = vunpack.c.2.s8 %v206
    %v807 = vunpack.c.2.s8 %v207
    %v808 = vunpack.c.2.s8 %v208
    %v809 = vunpack.c.2.s8 %v209
    %v810 = vunpack.c.2.s8 %v210
    %v811 = vunpack.c.3.s8 %v203
    %v812 = vunpack.c.3.s8 %v204
    %v813 = vunpack.c.3.s8 %v205
    %v814 = vunpack.c.3.s8 %v206
    %v815 = vunpack.c.3.s8 %v207
    %v816 = vunpack.c.3.s8 %v208
    %v817 = vunpack.c.3.s8 %v209
    %v818 = vunpack.c.3.s8 %v210
    %v819 = vunpack.c.0.s8 %v211
    %v820 = vunpack.c.0.s8 %v212
    %v821 = vunpack.c.0.s8 %v213
    %v822 = vunpack.c.0.s8 %v214
    %v823 = vunpack.c.0.s8 %v215
    %v824 = vunpack.c.0.s8 %v216
    %v825 = vunpack.c.0.s8 %v217
    %v826 = vunpack.c.0.s8 %v218
    %v827 = vunpack.c.1.s8 %v211
    %v828 = vunpack.c.1.s8 %v212
    %v829 = vunpack.c.1.s8 %v213
    %v830 = vunpack.c.1.s8 %v214
    %v831 = vunpack.c.1.s8 %v215
    %v832 = vunpack.c.1.s8 %v216
    %v833 = vunpack.c.1.s8 %v217
    %v834 = vunpack.c.1.s8 %v218
    %v835 = vunpack.c.2.s8 %v211
    %v836 = vunpack.c.2.s8 %v212
    %v837 = vunpack.c.2.s8 %v213
    %v838 = vunpack.c.2.s8 %v214
    %v839 = vunpack.c.2.s8 %v215
    %v840 = vunpack.c.2.s8 %v216
    %v841 = vunpack.c.2.s8 %v217
    %v842 = vunpack.c.2.s8 %v218
    %v843 = vunpack.c.3.s8 %v211
    %v844 = vunpack.c.3.s8 %v212
    %v845 = vunpack.c.3.s8 %v213
    %v846 = vunpack.c.3.s8 %v214
    %v847 = vunpack.c.3.s8 %v215
    %v848 = vunpack.c.3.s8 %v216
    %v849 = vunpack.c.3.s8 %v217
    %v850 = vunpack.c.3.s8 %v218
    %v851 = vunpack.c.0.s8 %v219
    %v852 = vunpack.c.0.s8 %v220
    %v853 = vunpack.c.0.s8 %v221
    %v854 = vunpack.c.0.s8 %v222
    %v855 = vunpack.c.0.s8 %v223
    %v856 = vunpack.c.0.s8 %v224
    %v857 = vunpack.c.0.s8 %v225
    %v858 = vunpack.c.0.s8 %v226
    %v859 = vunpack.c.1.s8 %v219
    %v860 = vunpack.c.1.s8 %v220
    %v861 = vunpack.c.1.s8 %v221
    %v862 = vunpack.c.1.s8 %v222
    %v863 = vunpack.c.1.s8 %v223
    %v864 = vunpack.c.1.s8 %v224
    %v865 = vunpack.c.1.s8 %v225
    %v866 = vunpack.c.1.s8 %v226
    %v867 = vunpack.c.2.s8 %v219
    %v868 = vunpack.c.2.s8 %v220
    %v869 = vunpack.c.2.s8 %v221
    %v870 = vunpack.c.2.s8 %v222
    %v871 = vunpack.c.2.s8 %v223
    %v872 = vunpack.c.2.s8 %v224
    %v873 = vunpack.c.2.s8 %v225
    %v874 = vunpack.c.2.s8 %v226
    %v875 = vunpack.c.3.s8 %v219
    %v876 = vunpack.c.3.s8 %v220
    %v877 = vunpack.c.3.s8 %v221
    %v878 = vunpack.c.3.s8 %v222
    %v879 = vunpack.c.3.s8 %v223
    %v880 = vunpack.c.3.s8 %v224
    %v881 = vunpack.c.3.s8 %v225
    %v882 = vunpack.c.3.s8 %v226
    %v883 = vunpack.c.0.s8 %v227
    %v884 = vunpack.c.0.s8 %v228
    %v885 = vunpack.c.0.s8 %v229
    %v886 = vunpack.c.0.s8 %v230
    %v887 = vunpack.c.0.s8 %v231
    %v888 = vunpack.c.0.s8 %v232
    %v889 = vunpack.c.0.s8 %v233
    %v890 = vunpack.c.0.s8 %v234
    %v891 = vunpack.c.1.s8 %v227
    %v892 = vunpack.c.1.s8 %v228
    %v893 = vunpack.c.1.s8 %v229
    %v894 = vunpack.c.1.s8 %v230
    %v895 = vunpack.c.1.s8 %v231
    %v896 = vunpack.c.1.s8 %v232
    %v897 = vunpack.c.1.s8 %v233
    %v898 = vunpack.c.1.s8 %v234
    %v899 = vunpack.c.2.s8 %v227
    %v900 = vunpack.c.2.s8 %v228
    %v901 = vunpack.c.2.s8 %v229
    %v902 = vunpack.c.2.s8 %v230
    %v903 = vunpack.c.2.s8 %v231
    %v904 = vunpack.c.2.s8 %v232
    %v905 = vunpack.c.2.s8 %v233
    %v906 = vunpack.c.2.s8 %v234
    %v907 = vunpack.c.3.s8 %v227
    %v908 = vunpack.c.3.s8 %v228
    %v909 = vunpack.c.3.s8 %v229
    %v910 = vunpack.c.3.s8 %v230
    %v911 = vunpack.c.3.s8 %v231
    %v912 = vunpack.c.3.s8 %v232
    %v913 = vunpack.c.3.s8 %v233
    %v914 = vunpack.c.3.s8 %v234
    %v915 = vunpack.c.0.s8 %v235
    %v916 = vunpack.c.0.s8 %v236
    %v917 = vunpack.c.0.s8 %v237
    %v918 = vunpack.c.0.s8 %v238
    %v919 = vunpack.c.0.s8 %v239
    %v920 = vunpack.c.0.s8 %v240
    %v921 = vunpack.c.0.s8 %v241
    %v922 = vunpack.c.0.s8 %v242
    %v923 = vunpack.c.1.s8 %v235
    %v924 = vunpack.c.1.s8 %v236
    %v925 = vunpack.c.1.s8 %v237
    %v926 = vunpack.c.1.s8 %v238
    %v927 = vunpack.c.1.s8 %v239
    %v928 = vunpack.c.1.s8 %v240
    %v929 = vunpack.c.1.s8 %v241
    %v930 = vunpack.c.1.s8 %v242
    %v931 = vunpack.c.2.s8 %v235
    %v932 = vunpack.c.2.s8 %v236
    %v933 = vunpack.c.2.s8 %v237
    %v934 = vunpack.c.2.s8 %v238
    %v935 = vunpack.c.2.s8 %v239
    %v936 = vunpack.c.2.s8 %v240
    %v937 = vunpack.c.2.s8 %v241
    %v938 = vunpack.c.2.s8 %v242
    %v939 = vunpack.c.3.s8 %v235
    %v940 = vunpack.c.3.s8 %v236
    %v941 = vunpack.c.3.s8 %v237
    %v942 = vunpack.c.3.s8 %v238
    %v943 = vunpack.c.3.s8 %v239
    %v944 = vunpack.c.3.s8 %v240
    %v945 = vunpack.c.3.s8 %v241
    %v946 = vunpack.c.3.s8 %v242
    %v947 = vunpack.c.0.s8 %v243
    %v948 = vunpack.c.0.s8 %v244
    %v949 = vunpack.c.0.s8 %v245
    %v950 = vunpack.c.0.s8 %v246
    %v951 = vunpack.c.0.s8 %v247
    %v952 = vunpack.c.0.s8 %v248
    %v953 = vunpack.c.0.s8 %v249
    %v954 = vunpack.c.0.s8 %v250
    %v955 = vunpack.c.1.s8 %v243
    %v956 = vunpack.c.1.s8 %v244
    %v957 = vunpack.c.1.s8 %v245
    %v958 = vunpack.c.1.s8 %v246
    %v959 = vunpack.c.1.s8 %v247
    %v960 = vunpack.c.1.s8 %v248
    %v961 = vunpack.c.1.s8 %v249
    %v962 = vunpack.c.1.s8 %v250
    %v963 = vunpack.c.2.s8 %v243
    %v964 = vunpack.c.2.s8 %v244
    %v965 = vunpack.c.2.s8 %v245
    %v966 = vunpack.c.2.s8 %v246
    %v967 = vunpack.c.2.s8 %v247
    %v968 = vunpack.c.2.s8 %v248
    %v969 = vunpack.c.2.s8 %v249
    %v970 = vunpack.c.2.s8 %v250
    %v971 = vunpack.c.3.s8 %v243
    %v972 = vunpack.c.3.s8 %v244
    %v973 = vunpack.c.3.s8 %v245
    %v974 = vunpack.c.3.s8 %v246
    %v975 = vunpack.c.3.s8 %v247
    %v976 = vunpack.c.3.s8 %v248
    %v977 = vunpack.c.3.s8 %v249
    %v978 = vunpack.c.3.s8 %v250
    %v979 = vunpack.c.0.s8 %v251
    %v980 = vunpack.c.0.s8 %v252
    %v981 = vunpack.c.0.s8 %v253
    %v982 = vunpack.c.0.s8 %v254
    %v983 = vunpack.c.0.s8 %v255
    %v984 = vunpack.c.0.s8 %v256
    %v985 = vunpack.c.0.s8 %v257
    %v986 = vunpack.c.0.s8 %v258
    %v987 = vunpack.c.1.s8 %v251
    %v988 = vunpack.c.1.s8 %v252
    %v989 = vunpack.c.1.s8 %v253
    %v990 = vunpack.c.1.s8 %v254
    %v991 = vunpack.c.1.s8 %v255
    %v992 = vunpack.c.1.s8 %v256
    %v993 = vunpack.c.1.s8 %v257
    %v994 = vunpack.c.1.s8 %v258
    %v995 = vunpack.c.2.s8 %v251
    %v996 = vunpack.c.2.s8 %v252
    %v997 = vunpack.c.2.s8 %v253
    %v998 = vunpack.c.2.s8 %v254
    %v999 = vunpack.c.2.s8 %v255
    %v1000 = vunpack.c.2.s8 %v256
    %v1001 = vunpack.c.2.s8 %v257
    %v1002 = vunpack.c.2.s8 %v258
    %v1003 = vunpack.c.3.s8 %v251
    %v1004 = vunpack.c.3.s8 %v252
    %v1005 = vunpack.c.3.s8 %v253
    %v1006 = vunpack.c.3.s8 %v254
    %v1007 = vunpack.c.3.s8 %v255
    %v1008 = vunpack.c.3.s8 %v256
    %v1009 = vunpack.c.3.s8 %v257
    %v1010 = vunpack.c.3.s8 %v258
    %v1011 = vunpack.c.0.s8 %v259
    %v1012 = vunpack.c.0.s8 %v260
    %v1013 = vunpack.c.0.s8 %v261
    %v1014 = vunpack.c.0.s8 %v262
    %v1015 = vunpack.c.0.s8 %v263
    %v1016 = vunpack.c.0.s8 %v264
    %v1017 = vunpack.c.0.s8 %v265
    %v1018 = vunpack.c.0.s8 %v266
    %v1019 = vunpack.c.1.s8 %v259
    %v1020 = vunpack.c.1.s8 %v260
    %v1021 = vunpack.c.1.s8 %v261
    %v1022 = vunpack.c.1.s8 %v262
    %v1023 = vunpack.c.1.s8 %v263
    %v1024 = vunpack.c.1.s8 %v264
    %v1025 = vunpack.c.1.s8 %v265
    %v1026 = vunpack.c.1.s8 %v266
    %v1027 = vunpack.c.2.s8 %v259
    %v1028 = vunpack.c.2.s8 %v260
    %v1029 = vunpack.c.2.s8 %v261
    %v1030 = vunpack.c.2.s8 %v262
    %v1031 = vunpack.c.2.s8 %v263
    %v1032 = vunpack.c.2.s8 %v264
    %v1033 = vunpack.c.2.s8 %v265
    %v1034 = vunpack.c.2.s8 %v266
    %v1035 = vunpack.c.3.s8 %v259
    %v1036 = vunpack.c.3.s8 %v260
    %v1037 = vunpack.c.3.s8 %v261
    %v1038 = vunpack.c.3.s8 %v262
    %v1039 = vunpack.c.3.s8 %v263
    %v1040 = vunpack.c.3.s8 %v264
    %v1041 = vunpack.c.3.s8 %v265
    %v1042 = vunpack.c.3.s8 %v266
    %v1043 = vunpack.c.0.s8 %v267
    %v1044 = vunpack.c.0.s8 %v268
    %v1045 = vunpack.c.0.s8 %v269
    %v1046 = vunpack.c.0.s8 %v270
    %v1047 = vunpack.c.0.s8 %v271
    %v1048 = vunpack.c.0.s8 %v272
    %v1049 = vunpack.c.0.s8 %v273
    %v1050 = vunpack.c.0.s8 %v274
    %v1051 = vunpack.c.1.s8 %v267
    %v1052 = vunpack.c.1.s8 %v268
    %v1053 = vunpack.c.1.s8 %v269
    %v1054 = vunpack.c.1.s8 %v270
    %v1055 = vunpack.c.1.s8 %v271
    %v1056 = vunpack.c.1.s8 %v272
    %v1057 = vunpack.c.1.s8 %v273
    %v1058 = vunpack.c.1.s8 %v274
    %v1059 = vunpack.c.2.s8 %v267
    %v1060 = vunpack.c.2.s8 %v268
    %v1061 = vunpack.c.2.s8 %v269
    %v1062 = vunpack.c.2.s8 %v270
    %v1063 = vunpack.c.2.s8 %v271
    %v1064 = vunpack.c.2.s8 %v272
    %v1065 = vunpack.c.2.s8 %v273
    %v1066 = vunpack.c.2.s8 %v274
    %v1067 = vunpack.c.3.s8 %v267
    %v1068 = vunpack.c.3.s8 %v268
    %v1069 = vunpack.c.3.s8 %v269
    %v1070 = vunpack.c.3.s8 %v270
    %v1071 = vunpack.c.3.s8 %v271
    %v1072 = vunpack.c.3.s8 %v272
    %v1073 = vunpack.c.3.s8 %v273
    %v1074 = vunpack.c.3.s8 %v274
    %v1075 = vunpack.c.0.s8 %v275
    %v1076 = vunpack.c.0.s8 %v276
    %v1077 = vunpack.c.0.s8 %v277
    %v1078 = vunpack.c.0.s8 %v278
    %v1079 = vunpack.c.0.s8 %v279
    %v1080 = vunpack.c.0.s8 %v280
    %v1081 = vunpack.c.0.s8 %v281
    %v1082 = vunpack.c.0.s8 %v282
    %v1083 = vunpack.c.1.s8 %v275
    %v1084 = vunpack.c.1.s8 %v276
    %v1085 = vunpack.c.1.s8 %v277
    %v1086 = vunpack.c.1.s8 %v278
    %v1087 = vunpack.c.1.s8 %v279
    %v1088 = vunpack.c.1.s8 %v280
    %v1089 = vunpack.c.1.s8 %v281
    %v1090 = vunpack.c.1.s8 %v282
    %v1091 = vunpack.c.2.s8 %v275
    %v1092 = vunpack.c.2.s8 %v276
    %v1093 = vunpack.c.2.s8 %v277
    %v1094 = vunpack.c.2.s8 %v278
    %v1095 = vunpack.c.2.s8 %v279
    %v1096 = vunpack.c.2.s8 %v280
    %v1097 = vunpack.c.2.s8 %v281
    %v1098 = vunpack.c.2.s8 %v282
    %v1099 = vunpack.c.3.s8 %v275
    %v1100 = vunpack.c.3.s8 %v276
    %v1101 = vunpack.c.3.s8 %v277
    %v1102 = vunpack.c.3.s8 %v278
    %v1103 = vunpack.c.3.s8 %v279
    %v1104 = vunpack.c.3.s8 %v280
    %v1105 = vunpack.c.3.s8 %v281
    %v1106 = vunpack.c.3.s8 %v282
    %v1107 = vunpack.c.0.s8 %v283
    %v1108 = vunpack.c.0.s8 %v284
    %v1109 = vunpack.c.0.s8 %v285
    %v1110 = vunpack.c.0.s8 %v286
    %v1111 = vunpack.c.0.s8 %v287
    %v1112 = vunpack.c.0.s8 %v288
    %v1113 = vunpack.c.0.s8 %v289
    %v1114 = vunpack.c.0.s8 %v290
    %v1115 = vunpack.c.1.s8 %v283
    %v1116 = vunpack.c.1.s8 %v284
    %v1117 = vunpack.c.1.s8 %v285
    %v1118 = vunpack.c.1.s8 %v286
    %v1119 = vunpack.c.1.s8 %v287
    %v1120 = vunpack.c.1.s8 %v288
    %v1121 = vunpack.c.1.s8 %v289
    %v1122 = vunpack.c.1.s8 %v290
    %v1123 = vunpack.c.2.s8 %v283
    %v1124 = vunpack.c.2.s8 %v284
    %v1125 = vunpack.c.2.s8 %v285
    %v1126 = vunpack.c.2.s8 %v286
    %v1127 = vunpack.c.2.s8 %v287
    %v1128 = vunpack.c.2.s8 %v288
    %v1129 = vunpack.c.2.s8 %v289
    %v1130 = vunpack.c.2.s8 %v290
    %v1131 = vunpack.c.3.s8 %v283
    %v1132 = vunpack.c.3.s8 %v284
    %v1133 = vunpack.c.3.s8 %v285
    %v1134 = vunpack.c.3.s8 %v286
    %v1135 = vunpack.c.3.s8 %v287
    %v1136 = vunpack.c.3.s8 %v288
    %v1137 = vunpack.c.3.s8 %v289
    %v1138 = vunpack.c.3.s8 %v290
    %v1139 = vunpack.c.0.s8 %v291
    %v1140 = vunpack.c.0.s8 %v292
    %v1141 = vunpack.c.0.s8 %v293
    %v1142 = vunpack.c.0.s8 %v294
    %v1143 = vunpack.c.0.s8 %v295
    %v1144 = vunpack.c.0.s8 %v296
    %v1145 = vunpack.c.0.s8 %v297
    %v1146 = vunpack.c.0.s8 %v298
    %v1147 = vunpack.c.1.s8 %v291
    %v1148 = vunpack.c.1.s8 %v292
    %v1149 = vunpack.c.1.s8 %v293
    %v1150 = vunpack.c.1.s8 %v294
    %v1151 = vunpack.c.1.s8 %v295
    %v1152 = vunpack.c.1.s8 %v296
    %v1153 = vunpack.c.1.s8 %v297
    %v1154 = vunpack.c.1.s8 %v298
    %v1155 = vunpack.c.2.s8 %v291
    %v1156 = vunpack.c.2.s8 %v292
    %v1157 = vunpack.c.2.s8 %v293
    %v1158 = vunpack.c.2.s8 %v294
    %v1159 = vunpack.c.2.s8 %v295
    %v1160 = vunpack.c.2.s8 %v296
    %v1161 = vunpack.c.2.s8 %v297
    %v1162 = vunpack.c.2.s8 %v298
    %v1163 = vunpack.c.3.s8 %v291
    %v1164 = vunpack.c.3.s8 %v292
    %v1165 = vunpack.c.3.s8 %v293
    %v1166 = vunpack.c.3.s8 %v294
    %v1167 = vunpack.c.3.s8 %v295
    %v1168 = vunpack.c.3.s8 %v296
    %v1169 = vunpack.c.3.s8 %v297
    %v1170 = vunpack.c.3.s8 %v298
    %v1171 = vunpack.c.0.s8 %v299
    %v1172 = vunpack.c.0.s8 %v300
    %v1173 = vunpack.c.0.s8 %v301
    %v1174 = vunpack.c.0.s8 %v302
    %v1175 = vunpack.c.0.s8 %v303
    %v1176 = vunpack.c.0.s8 %v304
    %v1177 = vunpack.c.0.s8 %v305
    %v1178 = vunpack.c.0.s8 %v306
    %v1179 = vunpack.c.1.s8 %v299
    %v1180 = vunpack.c.1.s8 %v300
    %v1181 = vunpack.c.1.s8 %v301
    %v1182 = vunpack.c.1.s8 %v302
    %v1183 = vunpack.c.1.s8 %v303
    %v1184 = vunpack.c.1.s8 %v304
    %v1185 = vunpack.c.1.s8 %v305
    %v1186 = vunpack.c.1.s8 %v306
    %v1187 = vunpack.c.2.s8 %v299
    %v1188 = vunpack.c.2.s8 %v300
    %v1189 = vunpack.c.2.s8 %v301
    %v1190 = vunpack.c.2.s8 %v302
    %v1191 = vunpack.c.2.s8 %v303
    %v1192 = vunpack.c.2.s8 %v304
    %v1193 = vunpack.c.2.s8 %v305
    %v1194 = vunpack.c.2.s8 %v306
    %v1195 = vunpack.c.3.s8 %v299
    %v1196 = vunpack.c.3.s8 %v300
    %v1197 = vunpack.c.3.s8 %v301
    %v1198 = vunpack.c.3.s8 %v302
    %v1199 = vunpack.c.3.s8 %v303
    %v1200 = vunpack.c.3.s8 %v304
    %v1201 = vunpack.c.3.s8 %v305
    %v1202 = vunpack.c.3.s8 %v306
    %v1203 = vunpack.c.0.s8 %v307
    %v1204 = vunpack.c.0.s8 %v308
    %v1205 = vunpack.c.0.s8 %v309
    %v1206 = vunpack.c.0.s8 %v310
    %v1207 = vunpack.c.0.s8 %v311
    %v1208 = vunpack.c.0.s8 %v312
    %v1209 = vunpack.c.0.s8 %v313
    %v1210 = vunpack.c.0.s8 %v314
    %v1211 = vunpack.c.1.s8 %v307
    %v1212 = vunpack.c.1.s8 %v308
    %v1213 = vunpack.c.1.s8 %v309
    %v1214 = vunpack.c.1.s8 %v310
    %v1215 = vunpack.c.1.s8 %v311
    %v1216 = vunpack.c.1.s8 %v312
    %v1217 = vunpack.c.1.s8 %v313
    %v1218 = vunpack.c.1.s8 %v314
    %v1219 = vunpack.c.2.s8 %v307
    %v1220 = vunpack.c.2.s8 %v308
    %v1221 = vunpack.c.2.s8 %v309
    %v1222 = vunpack.c.2.s8 %v310
    %v1223 = vunpack.c.2.s8 %v311
    %v1224 = vunpack.c.2.s8 %v312
    %v1225 = vunpack.c.2.s8 %v313
    %v1226 = vunpack.c.2.s8 %v314
    %v1227 = vunpack.c.3.s8 %v307
    %v1228 = vunpack.c.3.s8 %v308
    %v1229 = vunpack.c.3.s8 %v309
    %v1230 = vunpack.c.3.s8 %v310
    %v1231 = vunpack.c.3.s8 %v311
    %v1232 = vunpack.c.3.s8 %v312
    %v1233 = vunpack.c.3.s8 %v313
    %v1234 = vunpack.c.3.s8 %v314
    %v1235 = vunpack.c.0.s8 %v315
    %v1236 = vunpack.c.0.s8 %v316
    %v1237 = vunpack.c.0.s8 %v317
    %v1238 = vunpack.c.0.s8 %v318
    %v1239 = vunpack.c.0.s8 %v319
    %v1240 = vunpack.c.0.s8 %v320
    %v1241 = vunpack.c.0.s8 %v321
    %v1242 = vunpack.c.0.s8 %v322
    %v1243 = vunpack.c.1.s8 %v315
    %v1244 = vunpack.c.1.s8 %v316
    %v1245 = vunpack.c.1.s8 %v317
    %v1246 = vunpack.c.1.s8 %v318
    %v1247 = vunpack.c.1.s8 %v319
    %v1248 = vunpack.c.1.s8 %v320
    %v1249 = vunpack.c.1.s8 %v321
    %v1250 = vunpack.c.1.s8 %v322
    %v1251 = vunpack.c.2.s8 %v315
    %v1252 = vunpack.c.2.s8 %v316
    %v1253 = vunpack.c.2.s8 %v317
    %v1254 = vunpack.c.2.s8 %v318
    %v1255 = vunpack.c.2.s8 %v319
    %v1256 = vunpack.c.2.s8 %v320
    %v1257 = vunpack.c.2.s8 %v321
    %v1258 = vunpack.c.2.s8 %v322
    %v1259 = vunpack.c.3.s8 %v315
    %v1260 = vunpack.c.3.s8 %v316
    %v1261 = vunpack.c.3.s8 %v317
    %v1262 = vunpack.c.3.s8 %v318
    %v1263 = vunpack.c.3.s8 %v319
    %v1264 = vunpack.c.3.s8 %v320
    %v1265 = vunpack.c.3.s8 %v321
    %v1266 = vunpack.c.3.s8 %v322
    %v1267 = vunpack.c.0.s8 %v323
    %v1268 = vunpack.c.0.s8 %v324
    %v1269 = vunpack.c.0.s8 %v325
    %v1270 = vunpack.c.0.s8 %v326
    %v1271 = vunpack.c.0.s8 %v327
    %v1272 = vunpack.c.0.s8 %v328
    %v1273 = vunpack.c.0.s8 %v329
    %v1274 = vunpack.c.0.s8 %v330
    %v1275 = vunpack.c.1.s8 %v323
    %v1276 = vunpack.c.1.s8 %v324
    %v1277 = vunpack.c.1.s8 %v325
    %v1278 = vunpack.c.1.s8 %v326
    %v1279 = vunpack.c.1.s8 %v327
    %v1280 = vunpack.c.1.s8 %v328
    %v1281 = vunpack.c.1.s8 %v329
    %v1282 = vunpack.c.1.s8 %v330
    %v1283 = vunpack.c.2.s8 %v323
    %v1284 = vunpack.c.2.s8 %v324
    %v1285 = vunpack.c.2.s8 %v325
    %v1286 = vunpack.c.2.s8 %v326
    %v1287 = vunpack.c.2.s8 %v327
    %v1288 = vunpack.c.2.s8 %v328
    %v1289 = vunpack.c.2.s8 %v329
    %v1290 = vunpack.c.2.s8 %v330
    %v1291 = vunpack.c.3.s8 %v323
    %v1292 = vunpack.c.3.s8 %v324
    %v1293 = vunpack.c.3.s8 %v325
    %v1294 = vunpack.c.3.s8 %v326
    %v1295 = vunpack.c.3.s8 %v327
    %v1296 = vunpack.c.3.s8 %v328
    %v1297 = vunpack.c.3.s8 %v329
    %v1298 = vunpack.c.3.s8 %v330
    %v1299 = vunpack.c.0.s8 %v331
    %v1300 = vunpack.c.0.s8 %v332
    %v1301 = vunpack.c.0.s8 %v333
    %v1302 = vunpack.c.0.s8 %v334
    %v1303 = vunpack.c.0.s8 %v335
    %v1304 = vunpack.c.0.s8 %v336
    %v1305 = vunpack.c.0.s8 %v337
    %v1306 = vunpack.c.0.s8 %v338
    %v1307 = vunpack.c.1.s8 %v331
    %v1308 = vunpack.c.1.s8 %v332
    %v1309 = vunpack.c.1.s8 %v333
    %v1310 = vunpack.c.1.s8 %v334
    %v1311 = vunpack.c.1.s8 %v335
    %v1312 = vunpack.c.1.s8 %v336
    %v1313 = vunpack.c.1.s8 %v337
    %v1314 = vunpack.c.1.s8 %v338
    %v1315 = vunpack.c.2.s8 %v331
    %v1316 = vunpack.c.2.s8 %v332
    %v1317 = vunpack.c.2.s8 %v333
    %v1318 = vunpack.c.2.s8 %v334
    %v1319 = vunpack.c.2.s8 %v335
    %v1320 = vunpack.c.2.s8 %v336
    %v1321 = vunpack.c.2.s8 %v337
    %v1322 = vunpack.c.2.s8 %v338
    %v1323 = vunpack.c.3.s8 %v331
    %v1324 = vunpack.c.3.s8 %v332
    %v1325 = vunpack.c.3.s8 %v333
    %v1326 = vunpack.c.3.s8 %v334
    %v1327 = vunpack.c.3.s8 %v335
    %v1328 = vunpack.c.3.s8 %v336
    %v1329 = vunpack.c.3.s8 %v337
    %v1330 = vunpack.c.3.s8 %v338
    %v1331 = vunpack.c.0.s8 %v339
    %v1332 = vunpack.c.0.s8 %v340
    %v1333 = vunpack.c.0.s8 %v341
    %v1334 = vunpack.c.0.s8 %v342
    %v1335 = vunpack.c.0.s8 %v343
    %v1336 = vunpack.c.0.s8 %v344
    %v1337 = vunpack.c.0.s8 %v345
    %v1338 = vunpack.c.0.s8 %v346
    %v1339 = vunpack.c.1.s8 %v339
    %v1340 = vunpack.c.1.s8 %v340
    %v1341 = vunpack.c.1.s8 %v341
    %v1342 = vunpack.c.1.s8 %v342
    %v1343 = vunpack.c.1.s8 %v343
    %v1344 = vunpack.c.1.s8 %v344
    %v1345 = vunpack.c.1.s8 %v345
    %v1346 = vunpack.c.1.s8 %v346
    %v1347 = vunpack.c.2.s8 %v339
    %v1348 = vunpack.c.2.s8 %v340
    %v1349 = vunpack.c.2.s8 %v341
    %v1350 = vunpack.c.2.s8 %v342
    %v1351 = vunpack.c.2.s8 %v343
    %v1352 = vunpack.c.2.s8 %v344
    %v1353 = vunpack.c.2.s8 %v345
    %v1354 = vunpack.c.2.s8 %v346
    %v1355 = vunpack.c.3.s8 %v339
    %v1356 = vunpack.c.3.s8 %v340
    %v1357 = vunpack.c.3.s8 %v341
    %v1358 = vunpack.c.3.s8 %v342
    %v1359 = vunpack.c.3.s8 %v343
    %v1360 = vunpack.c.3.s8 %v344
    %v1361 = vunpack.c.3.s8 %v345
    %v1362 = vunpack.c.3.s8 %v346
    %v1363 = vunpack.c.0.s8 %v347
    %v1364 = vunpack.c.0.s8 %v348
    %v1365 = vunpack.c.0.s8 %v349
    %v1366 = vunpack.c.0.s8 %v350
    %v1367 = vunpack.c.0.s8 %v351
    %v1368 = vunpack.c.0.s8 %v352
    %v1369 = vunpack.c.0.s8 %v353
    %v1370 = vunpack.c.0.s8 %v354
    %v1371 = vunpack.c.1.s8 %v347
    %v1372 = vunpack.c.1.s8 %v348
    %v1373 = vunpack.c.1.s8 %v349
    %v1374 = vunpack.c.1.s8 %v350
    %v1375 = vunpack.c.1.s8 %v351
    %v1376 = vunpack.c.1.s8 %v352
    %v1377 = vunpack.c.1.s8 %v353
    %v1378 = vunpack.c.1.s8 %v354
    %v1379 = vunpack.c.2.s8 %v347
    %v1380 = vunpack.c.2.s8 %v348
    %v1381 = vunpack.c.2.s8 %v349
    %v1382 = vunpack.c.2.s8 %v350
    %v1383 = vunpack.c.2.s8 %v351
    %v1384 = vunpack.c.2.s8 %v352
    %v1385 = vunpack.c.2.s8 %v353
    %v1386 = vunpack.c.2.s8 %v354
    %v1387 = vunpack.c.3.s8 %v347
    %v1388 = vunpack.c.3.s8 %v348
    %v1389 = vunpack.c.3.s8 %v349
    %v1390 = vunpack.c.3.s8 %v350
    %v1391 = vunpack.c.3.s8 %v351
    %v1392 = vunpack.c.3.s8 %v352
    %v1393 = vunpack.c.3.s8 %v353
    %v1394 = vunpack.c.3.s8 %v354
    %v1395 = vunpack.c.0.s8 %v355
    %v1396 = vunpack.c.0.s8 %v356
    %v1397 = vunpack.c.0.s8 %v357
    %v1398 = vunpack.c.0.s8 %v358
    %v1399 = vunpack.c.0.s8 %v359
    %v1400 = vunpack.c.0.s8 %v360
    %v1401 = vunpack.c.0.s8 %v361
    %v1402 = vunpack.c.0.s8 %v362
    %v1403 = vunpack.c.1.s8 %v355
    %v1404 = vunpack.c.1.s8 %v356
    %v1405 = vunpack.c.1.s8 %v357
    %v1406 = vunpack.c.1.s8 %v358
    %v1407 = vunpack.c.1.s8 %v359
    %v1408 = vunpack.c.1.s8 %v360
    %v1409 = vunpack.c.1.s8 %v361
    %v1410 = vunpack.c.1.s8 %v362
    %v1411 = vunpack.c.2.s8 %v355
    %v1412 = vunpack.c.2.s8 %v356
    %v1413 = vunpack.c.2.s8 %v357
    %v1414 = vunpack.c.2.s8 %v358
    %v1415 = vunpack.c.2.s8 %v359
    %v1416 = vunpack.c.2.s8 %v360
    %v1417 = vunpack.c.2.s8 %v361
    %v1418 = vunpack.c.2.s8 %v362
    %v1419 = vunpack.c.3.s8 %v355
    %v1420 = vunpack.c.3.s8 %v356
    %v1421 = vunpack.c.3.s8 %v357
    %v1422 = vunpack.c.3.s8 %v358
    %v1423 = vunpack.c.3.s8 %v359
    %v1424 = vunpack.c.3.s8 %v360
    %v1425 = vunpack.c.3.s8 %v361
    %v1426 = vunpack.c.3.s8 %v362
    %v1427 = vunpack.c.0.s8 %v363
    %v1428 = vunpack.c.0.s8 %v364
    %v1429 = vunpack.c.0.s8 %v365
    %v1430 = vunpack.c.0.s8 %v366
    %v1431 = vunpack.c.0.s8 %v367
    %v1432 = vunpack.c.0.s8 %v368
    %v1433 = vunpack.c.0.s8 %v369
    %v1434 = vunpack.c.0.s8 %v370
    %v1435 = vunpack.c.1.s8 %v363
    %v1436 = vunpack.c.1.s8 %v364
    %v1437 = vunpack.c.1.s8 %v365
    %v1438 = vunpack.c.1.s8 %v366
    %v1439 = vunpack.c.1.s8 %v367
    %v1440 = vunpack.c.1.s8 %v368
    %v1441 = vunpack.c.1.s8 %v369
    %v1442 = vunpack.c.1.s8 %v370
    %v1443 = vunpack.c.2.s8 %v363
    %v1444 = vunpack.c.2.s8 %v364
    %v1445 = vunpack.c.2.s8 %v365
    %v1446 = vunpack.c.2.s8 %v366
    %v1447 = vunpack.c.2.s8 %v367
    %v1448 = vunpack.c.2.s8 %v368
    %v1449 = vunpack.c.2.s8 %v369
    %v1450 = vunpack.c.2.s8 %v370
    %v1451 = vunpack.c.3.s8 %v363
    %v1452 = vunpack.c.3.s8 %v364
    %v1453 = vunpack.c.3.s8 %v365
    %v1454 = vunpack.c.3.s8 %v366
    %v1455 = vunpack.c.3.s8 %v367
    %v1456 = vunpack.c.3.s8 %v368
    %v1457 = vunpack.c.3.s8 %v369
    %v1458 = vunpack.c.3.s8 %v370
    %v1459 = vunpack.c.0.s8 %v371
    %v1460 = vunpack.c.0.s8 %v372
    %v1461 = vunpack.c.0.s8 %v373
    %v1462 = vunpack.c.0.s8 %v374
    %v1463 = vunpack.c.0.s8 %v375
    %v1464 = vunpack.c.0.s8 %v376
    %v1465 = vunpack.c.0.s8 %v377
    %v1466 = vunpack.c.0.s8 %v378
    %v1467 = vunpack.c.1.s8 %v371
    %v1468 = vunpack.c.1.s8 %v372
    %v1469 = vunpack.c.1.s8 %v373
    %v1470 = vunpack.c.1.s8 %v374
    %v1471 = vunpack.c.1.s8 %v375
    %v1472 = vunpack.c.1.s8 %v376
    %v1473 = vunpack.c.1.s8 %v377
    %v1474 = vunpack.c.1.s8 %v378
    %v1475 = vunpack.c.2.s8 %v371
    %v1476 = vunpack.c.2.s8 %v372
    %v1477 = vunpack.c.2.s8 %v373
    %v1478 = vunpack.c.2.s8 %v374
    %v1479 = vunpack.c.2.s8 %v375
    %v1480 = vunpack.c.2.s8 %v376
    %v1481 = vunpack.c.2.s8 %v377
    %v1482 = vunpack.c.2.s8 %v378
    %v1483 = vunpack.c.3.s8 %v371
    %v1484 = vunpack.c.3.s8 %v372
    %v1485 = vunpack.c.3.s8 %v373
    %v1486 = vunpack.c.3.s8 %v374
    %v1487 = vunpack.c.3.s8 %v375
    %v1488 = vunpack.c.3.s8 %v376
    %v1489 = vunpack.c.3.s8 %v377
    %v1490 = vunpack.c.3.s8 %v378
    %v1491 = vunpack.c.0.s8 %v379
    %v1492 = vunpack.c.0.s8 %v380
    %v1493 = vunpack.c.0.s8 %v381
    %v1494 = vunpack.c.0.s8 %v382
    %v1495 = vunpack.c.0.s8 %v383
    %v1496 = vunpack.c.0.s8 %v384
    %v1497 = vunpack.c.0.s8 %v385
    %v1498 = vunpack.c.0.s8 %v386
    %v1499 = vunpack.c.1.s8 %v379
    %v1500 = vunpack.c.1.s8 %v380
    %v1501 = vunpack.c.1.s8 %v381
    %v1502 = vunpack.c.1.s8 %v382
    %v1503 = vunpack.c.1.s8 %v383
    %v1504 = vunpack.c.1.s8 %v384
    %v1505 = vunpack.c.1.s8 %v385
    %v1506 = vunpack.c.1.s8 %v386
    %v1507 = vunpack.c.2.s8 %v379
    %v1508 = vunpack.c.2.s8 %v380
    %v1509 = vunpack.c.2.s8 %v381
    %v1510 = vunpack.c.2.s8 %v382
    %v1511 = vunpack.c.2.s8 %v383
    %v1512 = vunpack.c.2.s8 %v384
    %v1513 = vunpack.c.2.s8 %v385
    %v1514 = vunpack.c.2.s8 %v386
    %v1515 = vunpack.c.3.s8 %v379
    %v1516 = vunpack.c.3.s8 %v380
    %v1517 = vunpack.c.3.s8 %v381
    %v1518 = vunpack.c.3.s8 %v382
    %v1519 = vunpack.c.3.s8 %v383
    %v1520 = vunpack.c.3.s8 %v384
    %v1521 = vunpack.c.3.s8 %v385
    %v1522 = vunpack.c.3.s8 %v386
    %v1523 = vunpack.c.0.s8 %v387
    %v1524 = vunpack.c.0.s8 %v388
    %v1525 = vunpack.c.0.s8 %v389
    %v1526 = vunpack.c.0.s8 %v390
    %v1527 = vunpack.c.0.s8 %v391
    %v1528 = vunpack.c.0.s8 %v392
    %v1529 = vunpack.c.0.s8 %v393
    %v1530 = vunpack.c.0.s8 %v394
    %v1531 = vunpack.c.1.s8 %v387
    %v1532 = vunpack.c.1.s8 %v388
    %v1533 = vunpack.c.1.s8 %v389
    %v1534 = vunpack.c.1.s8 %v390
    %v1535 = vunpack.c.1.s8 %v391
    %v1536 = vunpack.c.1.s8 %v392
    %v1537 = vunpack.c.1.s8 %v393
    %v1538 = vunpack.c.1.s8 %v394
    %v1539 = vunpack.c.2.s8 %v387
    %v1540 = vunpack.c.2.s8 %v388
    %v1541 = vunpack.c.2.s8 %v389
    %v1542 = vunpack.c.2.s8 %v390
    %v1543 = vunpack.c.2.s8 %v391
    %v1544 = vunpack.c.2.s8 %v392
    %v1545 = vunpack.c.2.s8 %v393
    %v1546 = vunpack.c.2.s8 %v394
    %v1547 = vunpack.c.3.s8 %v387
    %v1548 = vunpack.c.3.s8 %v388
    %v1549 = vunpack.c.3.s8 %v389
    %v1550 = vunpack.c.3.s8 %v390
    %v1551 = vunpack.c.3.s8 %v391
    %v1552 = vunpack.c.3.s8 %v392
    %v1553 = vunpack.c.3.s8 %v393
    %v1554 = vunpack.c.3.s8 %v394
    %v1555 = vunpack.c.0.s8 %v395
    %v1556 = vunpack.c.0.s8 %v396
    %v1557 = vunpack.c.0.s8 %v397
    %v1558 = vunpack.c.0.s8 %v398
    %v1559 = vunpack.c.0.s8 %v399
    %v1560 = vunpack.c.0.s8 %v400
    %v1561 = vunpack.c.0.s8 %v401
    %v1562 = vunpack.c.0.s8 %v402
    %v1563 = vunpack.c.1.s8 %v395
    %v1564 = vunpack.c.1.s8 %v396
    %v1565 = vunpack.c.1.s8 %v397
    %v1566 = vunpack.c.1.s8 %v398
    %v1567 = vunpack.c.1.s8 %v399
    %v1568 = vunpack.c.1.s8 %v400
    %v1569 = vunpack.c.1.s8 %v401
    %v1570 = vunpack.c.1.s8 %v402
    %v1571 = vunpack.c.2.s8 %v395
    %v1572 = vunpack.c.2.s8 %v396
    %v1573 = vunpack.c.2.s8 %v397
    %v1574 = vunpack.c.2.s8 %v398
    %v1575 = vunpack.c.2.s8 %v399
    %v1576 = vunpack.c.2.s8 %v400
    %v1577 = vunpack.c.2.s8 %v401
    %v1578 = vunpack.c.2.s8 %v402
    %v1579 = vunpack.c.3.s8 %v395
    %v1580 = vunpack.c.3.s8 %v396
    %v1581 = vunpack.c.3.s8 %v397
    %v1582 = vunpack.c.3.s8 %v398
    %v1583 = vunpack.c.3.s8 %v399
    %v1584 = vunpack.c.3.s8 %v400
    %v1585 = vunpack.c.3.s8 %v401
    %v1586 = vunpack.c.3.s8 %v402
    %v1587 = vunpack.c.0.s8 %v403
    %v1588 = vunpack.c.0.s8 %v404
    %v1589 = vunpack.c.0.s8 %v405
    %v1590 = vunpack.c.0.s8 %v406
    %v1591 = vunpack.c.0.s8 %v407
    %v1592 = vunpack.c.0.s8 %v408
    %v1593 = vunpack.c.0.s8 %v409
    %v1594 = vunpack.c.0.s8 %v410
    %v1595 = vunpack.c.1.s8 %v403
    %v1596 = vunpack.c.1.s8 %v404
    %v1597 = vunpack.c.1.s8 %v405
    %v1598 = vunpack.c.1.s8 %v406
    %v1599 = vunpack.c.1.s8 %v407
    %v1600 = vunpack.c.1.s8 %v408
    %v1601 = vunpack.c.1.s8 %v409
    %v1602 = vunpack.c.1.s8 %v410
    %v1603 = vunpack.c.2.s8 %v403
    %v1604 = vunpack.c.2.s8 %v404
    %v1605 = vunpack.c.2.s8 %v405
    %v1606 = vunpack.c.2.s8 %v406
    %v1607 = vunpack.c.2.s8 %v407
    %v1608 = vunpack.c.2.s8 %v408
    %v1609 = vunpack.c.2.s8 %v409
    %v1610 = vunpack.c.2.s8 %v410
    %v1611 = vunpack.c.3.s8 %v403
    %v1612 = vunpack.c.3.s8 %v404
    %v1613 = vunpack.c.3.s8 %v405
    %v1614 = vunpack.c.3.s8 %v406
    %v1615 = vunpack.c.3.s8 %v407
    %v1616 = vunpack.c.3.s8 %v408
    %v1617 = vunpack.c.3.s8 %v409
    %v1618 = vunpack.c.3.s8 %v410
    %v1619 = vunpack.c.0.s8 %v411
    %v1620 = vunpack.c.0.s8 %v412
    %v1621 = vunpack.c.0.s8 %v413
    %v1622 = vunpack.c.0.s8 %v414
    %v1623 = vunpack.c.0.s8 %v415
    %v1624 = vunpack.c.0.s8 %v416
    %v1625 = vunpack.c.0.s8 %v417
    %v1626 = vunpack.c.0.s8 %v418
    %v1627 = vunpack.c.1.s8 %v411
    %v1628 = vunpack.c.1.s8 %v412
    %v1629 = vunpack.c.1.s8 %v413
    %v1630 = vunpack.c.1.s8 %v414
    %v1631 = vunpack.c.1.s8 %v415
    %v1632 = vunpack.c.1.s8 %v416
    %v1633 = vunpack.c.1.s8 %v417
    %v1634 = vunpack.c.1.s8 %v418
    %v1635 = vunpack.c.2.s8 %v411
    %v1636 = vunpack.c.2.s8 %v412
    %v1637 = vunpack.c.2.s8 %v413
    %v1638 = vunpack.c.2.s8 %v414
    %v1639 = vunpack.c.2.s8 %v415
    %v1640 = vunpack.c.2.s8 %v416
    %v1641 = vunpack.c.2.s8 %v417
    %v1642 = vunpack.c.2.s8 %v418
    %v1643 = vunpack.c.3.s8 %v411
    %v1644 = vunpack.c.3.s8 %v412
    %v1645 = vunpack.c.3.s8 %v413
    %v1646 = vunpack.c.3.s8 %v414
    %v1647 = vunpack.c.3.s8 %v415
    %v1648 = vunpack.c.3.s8 %v416
    %v1649 = vunpack.c.3.s8 %v417
    %v1650 = vunpack.c.3.s8 %v418
    %v1651 = vunpack.c.0.s8 %v419
    %v1652 = vunpack.c.0.s8 %v420
    %v1653 = vunpack.c.0.s8 %v421
    %v1654 = vunpack.c.0.s8 %v422
    %v1655 = vunpack.c.0.s8 %v423
    %v1656 = vunpack.c.0.s8 %v424
    %v1657 = vunpack.c.0.s8 %v425
    %v1658 = vunpack.c.0.s8 %v426
    %v1659 = vunpack.c.1.s8 %v419
    %v1660 = vunpack.c.1.s8 %v420
    %v1661 = vunpack.c.1.s8 %v421
    %v1662 = vunpack.c.1.s8 %v422
    %v1663 = vunpack.c.1.s8 %v423
    %v1664 = vunpack.c.1.s8 %v424
    %v1665 = vunpack.c.1.s8 %v425
    %v1666 = vunpack.c.1.s8 %v426
    %v1667 = vunpack.c.2.s8 %v419
    %v1668 = vunpack.c.2.s8 %v420
    %v1669 = vunpack.c.2.s8 %v421
    %v1670 = vunpack.c.2.s8 %v422
    %v1671 = vunpack.c.2.s8 %v423
    %v1672 = vunpack.c.2.s8 %v424
    %v1673 = vunpack.c.2.s8 %v425
    %v1674 = vunpack.c.2.s8 %v426
    %v1675 = vunpack.c.3.s8 %v419
    %v1676 = vunpack.c.3.s8 %v420
    %v1677 = vunpack.c.3.s8 %v421
    %v1678 = vunpack.c.3.s8 %v422
    %v1679 = vunpack.c.3.s8 %v423
    %v1680 = vunpack.c.3.s8 %v424
    %v1681 = vunpack.c.3.s8 %v425
    %v1682 = vunpack.c.3.s8 %v426
    %v1683 = vunpack.c.0.s8 %v427
    %v1684 = vunpack.c.0.s8 %v428
    %v1685 = vunpack.c.0.s8 %v429
    %v1686 = vunpack.c.0.s8 %v430
    %v1687 = vunpack.c.0.s8 %v431
    %v1688 = vunpack.c.0.s8 %v432
    %v1689 = vunpack.c.0.s8 %v433
    %v1690 = vunpack.c.0.s8 %v434
    %v1691 = vunpack.c.1.s8 %v427
    %v1692 = vunpack.c.1.s8 %v428
    %v1693 = vunpack.c.1.s8 %v429
    %v1694 = vunpack.c.1.s8 %v430
    %v1695 = vunpack.c.1.s8 %v431
    %v1696 = vunpack.c.1.s8 %v432
    %v1697 = vunpack.c.1.s8 %v433
    %v1698 = vunpack.c.1.s8 %v434
    %v1699 = vunpack.c.2.s8 %v427
    %v1700 = vunpack.c.2.s8 %v428
    %v1701 = vunpack.c.2.s8 %v429
    %v1702 = vunpack.c.2.s8 %v430
    %v1703 = vunpack.c.2.s8 %v431
    %v1704 = vunpack.c.2.s8 %v432
    %v1705 = vunpack.c.2.s8 %v433
    %v1706 = vunpack.c.2.s8 %v434
    %v1707 = vunpack.c.3.s8 %v427
    %v1708 = vunpack.c.3.s8 %v428
    %v1709 = vunpack.c.3.s8 %v429
    %v1710 = vunpack.c.3.s8 %v430
    %v1711 = vunpack.c.3.s8 %v431
    %v1712 = vunpack.c.3.s8 %v432
    %v1713 = vunpack.c.3.s8 %v433
    %v1714 = vunpack.c.3.s8 %v434
    %v1715 = vunpack.c.0.s8 %v435
    %v1716 = vunpack.c.0.s8 %v436
    %v1717 = vunpack.c.0.s8 %v437
    %v1718 = vunpack.c.0.s8 %v438
    %v1719 = vunpack.c.0.s8 %v439
    %v1720 = vunpack.c.0.s8 %v440
    %v1721 = vunpack.c.0.s8 %v441
    %v1722 = vunpack.c.0.s8 %v442
    %v1723 = vunpack.c.1.s8 %v435
    %v1724 = vunpack.c.1.s8 %v436
    %v1725 = vunpack.c.1.s8 %v437
    %v1726 = vunpack.c.1.s8 %v438
    %v1727 = vunpack.c.1.s8 %v439
    %v1728 = vunpack.c.1.s8 %v440
    %v1729 = vunpack.c.1.s8 %v441
    %v1730 = vunpack.c.1.s8 %v442
    %v1731 = vunpack.c.2.s8 %v435
    %v1732 = vunpack.c.2.s8 %v436
    %v1733 = vunpack.c.2.s8 %v437
    %v1734 = vunpack.c.2.s8 %v438
    %v1735 = vunpack.c.2.s8 %v439
    %v1736 = vunpack.c.2.s8 %v440
    %v1737 = vunpack.c.2.s8 %v441
    %v1738 = vunpack.c.2.s8 %v442
    %v1739 = vunpack.c.3.s8 %v435
    %v1740 = vunpack.c.3.s8 %v436
    %v1741 = vunpack.c.3.s8 %v437
    %v1742 = vunpack.c.3.s8 %v438
    %v1743 = vunpack.c.3.s8 %v439
    %v1744 = vunpack.c.3.s8 %v440
    %v1745 = vunpack.c.3.s8 %v441
    %v1746 = vunpack.c.3.s8 %v442
    %v1747 = vunpack.c.0.s8 %v443
    %v1748 = vunpack.c.0.s8 %v444
    %v1749 = vunpack.c.0.s8 %v445
    %v1750 = vunpack.c.0.s8 %v446
    %v1751 = vunpack.c.0.s8 %v447
    %v1752 = vunpack.c.0.s8 %v448
    %v1753 = vunpack.c.0.s8 %v449
    %v1754 = vunpack.c.0.s8 %v450
    %v1755 = vunpack.c.1.s8 %v443
    %v1756 = vunpack.c.1.s8 %v444
    %v1757 = vunpack.c.1.s8 %v445
    %v1758 = vunpack.c.1.s8 %v446
    %v1759 = vunpack.c.1.s8 %v447
    %v1760 = vunpack.c.1.s8 %v448
    %v1761 = vunpack.c.1.s8 %v449
    %v1762 = vunpack.c.1.s8 %v450
    %v1763 = vunpack.c.2.s8 %v443
    %v1764 = vunpack.c.2.s8 %v444
    %v1765 = vunpack.c.2.s8 %v445
    %v1766 = vunpack.c.2.s8 %v446
    %v1767 = vunpack.c.2.s8 %v447
    %v1768 = vunpack.c.2.s8 %v448
    %v1769 = vunpack.c.2.s8 %v449
    %v1770 = vunpack.c.2.s8 %v450
    %v1771 = vunpack.c.3.s8 %v443
    %v1772 = vunpack.c.3.s8 %v444
    %v1773 = vunpack.c.3.s8 %v445
    %v1774 = vunpack.c.3.s8 %v446
    %v1775 = vunpack.c.3.s8 %v447
    %v1776 = vunpack.c.3.s8 %v448
    %v1777 = vunpack.c.3.s8 %v449
    %v1778 = vunpack.c.3.s8 %v450
    %v1779 = vunpack.c.0.s8 %v451
    %v1780 = vunpack.c.0.s8 %v452
    %v1781 = vunpack.c.0.s8 %v453
    %v1782 = vunpack.c.0.s8 %v454
    %v1783 = vunpack.c.0.s8 %v455
    %v1784 = vunpack.c.0.s8 %v456
    %v1785 = vunpack.c.0.s8 %v457
    %v1786 = vunpack.c.0.s8 %v458
    %v1787 = vunpack.c.1.s8 %v451
    %v1788 = vunpack.c.1.s8 %v452
    %v1789 = vunpack.c.1.s8 %v453
    %v1790 = vunpack.c.1.s8 %v454
    %v1791 = vunpack.c.1.s8 %v455
    %v1792 = vunpack.c.1.s8 %v456
    %v1793 = vunpack.c.1.s8 %v457
    %v1794 = vunpack.c.1.s8 %v458
    %v1795 = vunpack.c.2.s8 %v451
    %v1796 = vunpack.c.2.s8 %v452
    %v1797 = vunpack.c.2.s8 %v453
    %v1798 = vunpack.c.2.s8 %v454
    %v1799 = vunpack.c.2.s8 %v455
    %v1800 = vunpack.c.2.s8 %v456
    %v1801 = vunpack.c.2.s8 %v457
    %v1802 = vunpack.c.2.s8 %v458
    %v1803 = vunpack.c.3.s8 %v451
    %v1804 = vunpack.c.3.s8 %v452
    %v1805 = vunpack.c.3.s8 %v453
    %v1806 = vunpack.c.3.s8 %v454
    %v1807 = vunpack.c.3.s8 %v455
    %v1808 = vunpack.c.3.s8 %v456
    %v1809 = vunpack.c.3.s8 %v457
    %v1810 = vunpack.c.3.s8 %v458
    %v1811 = vunpack.c.0.s8 %v459
    %v1812 = vunpack.c.0.s8 %v460
    %v1813 = vunpack.c.0.s8 %v461
    %v1814 = vunpack.c.0.s8 %v462
    %v1815 = vunpack.c.0.s8 %v463
    %v1816 = vunpack.c.0.s8 %v464
    %v1817 = vunpack.c.0.s8 %v465
    %v1818 = vunpack.c.0.s8 %v466
    %v1819 = vunpack.c.1.s8 %v459
    %v1820 = vunpack.c.1.s8 %v460
    %v1821 = vunpack.c.1.s8 %v461
    %v1822 = vunpack.c.1.s8 %v462
    %v1823 = vunpack.c.1.s8 %v463
    %v1824 = vunpack.c.1.s8 %v464
    %v1825 = vunpack.c.1.s8 %v465
    %v1826 = vunpack.c.1.s8 %v466
    %v1827 = vunpack.c.2.s8 %v459
    %v1828 = vunpack.c.2.s8 %v460
    %v1829 = vunpack.c.2.s8 %v461
    %v1830 = vunpack.c.2.s8 %v462
    %v1831 = vunpack.c.2.s8 %v463
    %v1832 = vunpack.c.2.s8 %v464
    %v1833 = vunpack.c.2.s8 %v465
    %v1834 = vunpack.c.2.s8 %v466
    %v1835 = vunpack.c.3.s8 %v459
    %v1836 = vunpack.c.3.s8 %v460
    %v1837 = vunpack.c.3.s8 %v461
    %v1838 = vunpack.c.3.s8 %v462
    %v1839 = vunpack.c.3.s8 %v463
    %v1840 = vunpack.c.3.s8 %v464
    %v1841 = vunpack.c.3.s8 %v465
    %v1842 = vunpack.c.3.s8 %v466
    %v1843 = vunpack.c.0.s8 %v467
    %v1844 = vunpack.c.0.s8 %v468
    %v1845 = vunpack.c.0.s8 %v469
    %v1846 = vunpack.c.0.s8 %v470
    %v1847 = vunpack.c.0.s8 %v471
    %v1848 = vunpack.c.0.s8 %v472
    %v1849 = vunpack.c.0.s8 %v473
    %v1850 = vunpack.c.0.s8 %v474
    %v1851 = vunpack.c.1.s8 %v467
    %v1852 = vunpack.c.1.s8 %v468
    %v1853 = vunpack.c.1.s8 %v469
    %v1854 = vunpack.c.1.s8 %v470
    %v1855 = vunpack.c.1.s8 %v471
    %v1856 = vunpack.c.1.s8 %v472
    %v1857 = vunpack.c.1.s8 %v473
    %v1858 = vunpack.c.1.s8 %v474
    %v1859 = vunpack.c.2.s8 %v467
    %v1860 = vunpack.c.2.s8 %v468
    %v1861 = vunpack.c.2.s8 %v469
    %v1862 = vunpack.c.2.s8 %v470
    %v1863 = vunpack.c.2.s8 %v471
    %v1864 = vunpack.c.2.s8 %v472
    %v1865 = vunpack.c.2.s8 %v473
    %v1866 = vunpack.c.2.s8 %v474
    %v1867 = vunpack.c.3.s8 %v467
    %v1868 = vunpack.c.3.s8 %v468
    %v1869 = vunpack.c.3.s8 %v469
    %v1870 = vunpack.c.3.s8 %v470
    %v1871 = vunpack.c.3.s8 %v471
    %v1872 = vunpack.c.3.s8 %v472
    %v1873 = vunpack.c.3.s8 %v473
    %v1874 = vunpack.c.3.s8 %v474
    %v1875 = vunpack.c.0.s8 %v475
    %v1876 = vunpack.c.0.s8 %v476
    %v1877 = vunpack.c.0.s8 %v477
    %v1878 = vunpack.c.0.s8 %v478
    %v1879 = vunpack.c.0.s8 %v479
    %v1880 = vunpack.c.0.s8 %v480
    %v1881 = vunpack.c.0.s8 %v481
    %v1882 = vunpack.c.0.s8 %v482
    %v1883 = vunpack.c.1.s8 %v475
    %v1884 = vunpack.c.1.s8 %v476
    %v1885 = vunpack.c.1.s8 %v477
    %v1886 = vunpack.c.1.s8 %v478
    %v1887 = vunpack.c.1.s8 %v479
    %v1888 = vunpack.c.1.s8 %v480
    %v1889 = vunpack.c.1.s8 %v481
    %v1890 = vunpack.c.1.s8 %v482
    %v1891 = vunpack.c.2.s8 %v475
    %v1892 = vunpack.c.2.s8 %v476
    %v1893 = vunpack.c.2.s8 %v477
    %v1894 = vunpack.c.2.s8 %v478
    %v1895 = vunpack.c.2.s8 %v479
    %v1896 = vunpack.c.2.s8 %v480
    %v1897 = vunpack.c.2.s8 %v481
    %v1898 = vunpack.c.2.s8 %v482
    %v1899 = vunpack.c.3.s8 %v475
    %v1900 = vunpack.c.3.s8 %v476
    %v1901 = vunpack.c.3.s8 %v477
    %v1902 = vunpack.c.3.s8 %v478
    %v1903 = vunpack.c.3.s8 %v479
    %v1904 = vunpack.c.3.s8 %v480
    %v1905 = vunpack.c.3.s8 %v481
    %v1906 = vunpack.c.3.s8 %v482
    %v1907 = vunpack.c.0.s8 %v483
    %v1908 = vunpack.c.0.s8 %v484
    %v1909 = vunpack.c.0.s8 %v485
    %v1910 = vunpack.c.0.s8 %v486
    %v1911 = vunpack.c.0.s8 %v487
    %v1912 = vunpack.c.0.s8 %v488
    %v1913 = vunpack.c.0.s8 %v489
    %v1914 = vunpack.c.0.s8 %v490
    %v1915 = vunpack.c.1.s8 %v483
    %v1916 = vunpack.c.1.s8 %v484
    %v1917 = vunpack.c.1.s8 %v485
    %v1918 = vunpack.c.1.s8 %v486
    %v1919 = vunpack.c.1.s8 %v487
    %v1920 = vunpack.c.1.s8 %v488
    %v1921 = vunpack.c.1.s8 %v489
    %v1922 = vunpack.c.1.s8 %v490
    %v1923 = vunpack.c.2.s8 %v483
    %v1924 = vunpack.c.2.s8 %v484
    %v1925 = vunpack.c.2.s8 %v485
    %v1926 = vunpack.c.2.s8 %v486
    %v1927 = vunpack.c.2.s8 %v487
    %v1928 = vunpack.c.2.s8 %v488
    %v1929 = vunpack.c.2.s8 %v489
    %v1930 = vunpack.c.2.s8 %v490
    %v1931 = vunpack.c.3.s8 %v483
    %v1932 = vunpack.c.3.s8 %v484
    %v1933 = vunpack.c.3.s8 %v485
    %v1934 = vunpack.c.3.s8 %v486
    %v1935 = vunpack.c.3.s8 %v487
    %v1936 = vunpack.c.3.s8 %v488
    %v1937 = vunpack.c.3.s8 %v489
    %v1938 = vunpack.c.3.s8 %v490
    %v1939 = vunpack.c.0.s8 %v491
    %v1940 = vunpack.c.0.s8 %v492
    %v1941 = vunpack.c.0.s8 %v493
    %v1942 = vunpack.c.0.s8 %v494
    %v1943 = vunpack.c.0.s8 %v495
    %v1944 = vunpack.c.0.s8 %v496
    %v1945 = vunpack.c.0.s8 %v497
    %v1946 = vunpack.c.0.s8 %v498
    %v1947 = vunpack.c.1.s8 %v491
    %v1948 = vunpack.c.1.s8 %v492
    %v1949 = vunpack.c.1.s8 %v493
    %v1950 = vunpack.c.1.s8 %v494
    %v1951 = vunpack.c.1.s8 %v495
    %v1952 = vunpack.c.1.s8 %v496
    %v1953 = vunpack.c.1.s8 %v497
    %v1954 = vunpack.c.1.s8 %v498
    %v1955 = vunpack.c.2.s8 %v491
    %v1956 = vunpack.c.2.s8 %v492
    %v1957 = vunpack.c.2.s8 %v493
    %v1958 = vunpack.c.2.s8 %v494
    %v1959 = vunpack.c.2.s8 %v495
    %v1960 = vunpack.c.2.s8 %v496
    %v1961 = vunpack.c.2.s8 %v497
    %v1962 = vunpack.c.2.s8 %v498
    %v1963 = vunpack.c.3.s8 %v491
    %v1964 = vunpack.c.3.s8 %v492
    %v1965 = vunpack.c.3.s8 %v493
    %v1966 = vunpack.c.3.s8 %v494
    %v1967 = vunpack.c.3.s8 %v495
    %v1968 = vunpack.c.3.s8 %v496
    %v1969 = vunpack.c.3.s8 %v497
    %v1970 = vunpack.c.3.s8 %v498
    %v1971 = vunpack.c.0.s8 %v499
    %v1972 = vunpack.c.0.s8 %v500
    %v1973 = vunpack.c.0.s8 %v501
    %v1974 = vunpack.c.0.s8 %v502
    %v1975 = vunpack.c.0.s8 %v503
    %v1976 = vunpack.c.0.s8 %v504
    %v1977 = vunpack.c.0.s8 %v505
    %v1978 = vunpack.c.0.s8 %v506
    %v1979 = vunpack.c.1.s8 %v499
    %v1980 = vunpack.c.1.s8 %v500
    %v1981 = vunpack.c.1.s8 %v501
    %v1982 = vunpack.c.1.s8 %v502
    %v1983 = vunpack.c.1.s8 %v503
    %v1984 = vunpack.c.1.s8 %v504
    %v1985 = vunpack.c.1.s8 %v505
    %v1986 = vunpack.c.1.s8 %v506
    %v1987 = vunpack.c.2.s8 %v499
    %v1988 = vunpack.c.2.s8 %v500
    %v1989 = vunpack.c.2.s8 %v501
    %v1990 = vunpack.c.2.s8 %v502
    %v1991 = vunpack.c.2.s8 %v503
    %v1992 = vunpack.c.2.s8 %v504
    %v1993 = vunpack.c.2.s8 %v505
    %v1994 = vunpack.c.2.s8 %v506
    %v1995 = vunpack.c.3.s8 %v499
    %v1996 = vunpack.c.3.s8 %v500
    %v1997 = vunpack.c.3.s8 %v501
    %v1998 = vunpack.c.3.s8 %v502
    %v1999 = vunpack.c.3.s8 %v503
    %v2000 = vunpack.c.3.s8 %v504
    %v2001 = vunpack.c.3.s8 %v505
    %v2002 = vunpack.c.3.s8 %v506
    %v2003 = vunpack.c.0.s8 %v507
    %v2004 = vunpack.c.0.s8 %v508
    %v2005 = vunpack.c.0.s8 %v509
    %v2006 = vunpack.c.0.s8 %v510
    %v2007 = vunpack.c.0.s8 %v511
    %v2008 = vunpack.c.0.s8 %v512
    %v2009 = vunpack.c.0.s8 %v513
    %v2010 = vunpack.c.0.s8 %v514
    %v2011 = vunpack.c.1.s8 %v507
    %v2012 = vunpack.c.1.s8 %v508
    %v2013 = vunpack.c.1.s8 %v509
    %v2014 = vunpack.c.1.s8 %v510
    %v2015 = vunpack.c.1.s8 %v511
    %v2016 = vunpack.c.1.s8 %v512
    %v2017 = vunpack.c.1.s8 %v513
    %v2018 = vunpack.c.1.s8 %v514
    %v2019 = vunpack.c.2.s8 %v507
    %v2020 = vunpack.c.2.s8 %v508
    %v2021 = vunpack.c.2.s8 %v509
    %v2022 = vunpack.c.2.s8 %v510
    %v2023 = vunpack.c.2.s8 %v511
    %v2024 = vunpack.c.2.s8 %v512
    %v2025 = vunpack.c.2.s8 %v513
    %v2026 = vunpack.c.2.s8 %v514
    %v2027 = vunpack.c.3.s8 %v507
    %v2028 = vunpack.c.3.s8 %v508
    %v2029 = vunpack.c.3.s8 %v509
    %v2030 = vunpack.c.3.s8 %v510
    %v2031 = vunpack.c.3.s8 %v511
    %v2032 = vunpack.c.3.s8 %v512
    %v2033 = vunpack.c.3.s8 %v513
    %v2034 = vunpack.c.3.s8 %v514
    %v2035 = vunpack.c.0.s8 %v515
    %v2036 = vunpack.c.0.s8 %v516
    %v2037 = vunpack.c.0.s8 %v517
    %v2038 = vunpack.c.0.s8 %v518
    %v2039 = vunpack.c.0.s8 %v519
    %v2040 = vunpack.c.0.s8 %v520
    %v2041 = vunpack.c.0.s8 %v521
    %v2042 = vunpack.c.0.s8 %v522
    %v2043 = vunpack.c.1.s8 %v515
    %v2044 = vunpack.c.1.s8 %v516
    %v2045 = vunpack.c.1.s8 %v517
    %v2046 = vunpack.c.1.s8 %v518
    %v2047 = vunpack.c.1.s8 %v519
    %v2048 = vunpack.c.1.s8 %v520
    %v2049 = vunpack.c.1.s8 %v521
    %v2050 = vunpack.c.1.s8 %v522
    %v2051 = vunpack.c.2.s8 %v515
    %v2052 = vunpack.c.2.s8 %v516
    %v2053 = vunpack.c.2.s8 %v517
    %v2054 = vunpack.c.2.s8 %v518
    %v2055 = vunpack.c.2.s8 %v519
    %v2056 = vunpack.c.2.s8 %v520
    %v2057 = vunpack.c.2.s8 %v521
    %v2058 = vunpack.c.2.s8 %v522
    %v2059 = vunpack.c.3.s8 %v515
    %v2060 = vunpack.c.3.s8 %v516
    %v2061 = vunpack.c.3.s8 %v517
    %v2062 = vunpack.c.3.s8 %v518
    %v2063 = vunpack.c.3.s8 %v519
    %v2064 = vunpack.c.3.s8 %v520
    %v2065 = vunpack.c.3.s8 %v521
    %v2066 = vunpack.c.3.s8 %v522
    %v2067 = vunpack.c.0.s8 %v523
    %v2068 = vunpack.c.0.s8 %v524
    %v2069 = vunpack.c.0.s8 %v525
    %v2070 = vunpack.c.0.s8 %v526
    %v2071 = vunpack.c.0.s8 %v527
    %v2072 = vunpack.c.0.s8 %v528
    %v2073 = vunpack.c.0.s8 %v529
    %v2074 = vunpack.c.0.s8 %v530
    %v2075 = vunpack.c.1.s8 %v523
    %v2076 = vunpack.c.1.s8 %v524
    %v2077 = vunpack.c.1.s8 %v525
    %v2078 = vunpack.c.1.s8 %v526
    %v2079 = vunpack.c.1.s8 %v527
    %v2080 = vunpack.c.1.s8 %v528
    %v2081 = vunpack.c.1.s8 %v529
    %v2082 = vunpack.c.1.s8 %v530
    %v2083 = vunpack.c.2.s8 %v523
    %v2084 = vunpack.c.2.s8 %v524
    %v2085 = vunpack.c.2.s8 %v525
    %v2086 = vunpack.c.2.s8 %v526
    %v2087 = vunpack.c.2.s8 %v527
    %v2088 = vunpack.c.2.s8 %v528
    %v2089 = vunpack.c.2.s8 %v529
    %v2090 = vunpack.c.2.s8 %v530
    %v2091 = vunpack.c.3.s8 %v523
    %v2092 = vunpack.c.3.s8 %v524
    %v2093 = vunpack.c.3.s8 %v525
    %v2094 = vunpack.c.3.s8 %v526
    %v2095 = vunpack.c.3.s8 %v527
    %v2096 = vunpack.c.3.s8 %v528
    %v2097 = vunpack.c.3.s8 %v529
    %v2098 = vunpack.c.3.s8 %v530
    %v2099 = vunpack.c.0.s8 %v531
    %v2100 = vunpack.c.0.s8 %v532
    %v2101 = vunpack.c.0.s8 %v533
    %v2102 = vunpack.c.0.s8 %v534
    %v2103 = vunpack.c.0.s8 %v535
    %v2104 = vunpack.c.0.s8 %v536
    %v2105 = vunpack.c.0.s8 %v537
    %v2106 = vunpack.c.0.s8 %v538
    %v2107 = vunpack.c.1.s8 %v531
    %v2108 = vunpack.c.1.s8 %v532
    %v2109 = vunpack.c.1.s8 %v533
    %v2110 = vunpack.c.1.s8 %v534
    %v2111 = vunpack.c.1.s8 %v535
    %v2112 = vunpack.c.1.s8 %v536
    %v2113 = vunpack.c.1.s8 %v537
    %v2114 = vunpack.c.1.s8 %v538
    %v2115 = vunpack.c.2.s8 %v531
    %v2116 = vunpack.c.2.s8 %v532
    %v2117 = vunpack.c.2.s8 %v533
    %v2118 = vunpack.c.2.s8 %v534
    %v2119 = vunpack.c.2.s8 %v535
    %v2120 = vunpack.c.2.s8 %v536
    %v2121 = vunpack.c.2.s8 %v537
    %v2122 = vunpack.c.2.s8 %v538
    %v2123 = vunpack.c.3.s8 %v531
    %v2124 = vunpack.c.3.s8 %v532
    %v2125 = vunpack.c.3.s8 %v533
    %v2126 = vunpack.c.3.s8 %v534
    %v2127 = vunpack.c.3.s8 %v535
    %v2128 = vunpack.c.3.s8 %v536
    %v2129 = vunpack.c.3.s8 %v537
    %v2130 = vunpack.c.3.s8 %v538
    %v2131 = vunpack.c.0.s8 %v539
    %v2132 = vunpack.c.0.s8 %v540
    %v2133 = vunpack.c.0.s8 %v541
    %v2134 = vunpack.c.0.s8 %v542
    %v2135 = vunpack.c.0.s8 %v543
    %v2136 = vunpack.c.0.s8 %v544
    %v2137 = vunpack.c.0.s8 %v545
    %v2138 = vunpack.c.0.s8 %v546
    %v2139 = vunpack.c.1.s8 %v539
    %v2140 = vunpack.c.1.s8 %v540
    %v2141 = vunpack.c.1.s8 %v541
    %v2142 = vunpack.c.1.s8 %v542
    %v2143 = vunpack.c.1.s8 %v543
    %v2144 = vunpack.c.1.s8 %v544
    %v2145 = vunpack.c.1.s8 %v545
    %v2146 = vunpack.c.1.s8 %v546
    %v2147 = vunpack.c.2.s8 %v539
    %v2148 = vunpack.c.2.s8 %v540
    %v2149 = vunpack.c.2.s8 %v541
    %v2150 = vunpack.c.2.s8 %v542
    %v2151 = vunpack.c.2.s8 %v543
    %v2152 = vunpack.c.2.s8 %v544
    %v2153 = vunpack.c.2.s8 %v545
    %v2154 = vunpack.c.2.s8 %v546
    %v2155 = vunpack.c.3.s8 %v539
    %v2156 = vunpack.c.3.s8 %v540
    %v2157 = vunpack.c.3.s8 %v541
    %v2158 = vunpack.c.3.s8 %v542
    %v2159 = vunpack.c.3.s8 %v543
    %v2160 = vunpack.c.3.s8 %v544
    %v2161 = vunpack.c.3.s8 %v545
    %v2162 = vunpack.c.3.s8 %v546
    %v2163 = vunpack.c.0.s8 %v547
    %v2164 = vunpack.c.0.s8 %v548
    %v2165 = vunpack.c.0.s8 %v549
    %v2166 = vunpack.c.0.s8 %v550
    %v2167 = vunpack.c.0.s8 %v551
    %v2168 = vunpack.c.0.s8 %v552
    %v2169 = vunpack.c.0.s8 %v553
    %v2170 = vunpack.c.0.s8 %v554
    %v2171 = vunpack.c.1.s8 %v547
    %v2172 = vunpack.c.1.s8 %v548
    %v2173 = vunpack.c.1.s8 %v549
    %v2174 = vunpack.c.1.s8 %v550
    %v2175 = vunpack.c.1.s8 %v551
    %v2176 = vunpack.c.1.s8 %v552
    %v2177 = vunpack.c.1.s8 %v553
    %v2178 = vunpack.c.1.s8 %v554
    %v2179 = vunpack.c.2.s8 %v547
    %v2180 = vunpack.c.2.s8 %v548
    %v2181 = vunpack.c.2.s8 %v549
    %v2182 = vunpack.c.2.s8 %v550
    %v2183 = vunpack.c.2.s8 %v551
    %v2184 = vunpack.c.2.s8 %v552
    %v2185 = vunpack.c.2.s8 %v553
    %v2186 = vunpack.c.2.s8 %v554
    %v2187 = vunpack.c.3.s8 %v547
    %v2188 = vunpack.c.3.s8 %v548
    %v2189 = vunpack.c.3.s8 %v549
    %v2190 = vunpack.c.3.s8 %v550
    %v2191 = vunpack.c.3.s8 %v551
    %v2192 = vunpack.c.3.s8 %v552
    %v2193 = vunpack.c.3.s8 %v553
    %v2194 = vunpack.c.3.s8 %v554
    %v2195 = vunpack.c.0.s8 %v555
    %v2196 = vunpack.c.0.s8 %v556
    %v2197 = vunpack.c.0.s8 %v557
    %v2198 = vunpack.c.0.s8 %v558
    %v2199 = vunpack.c.0.s8 %v559
    %v2200 = vunpack.c.0.s8 %v560
    %v2201 = vunpack.c.0.s8 %v561
    %v2202 = vunpack.c.0.s8 %v562
    %v2203 = vunpack.c.1.s8 %v555
    %v2204 = vunpack.c.1.s8 %v556
    %v2205 = vunpack.c.1.s8 %v557
    %v2206 = vunpack.c.1.s8 %v558
    %v2207 = vunpack.c.1.s8 %v559
    %v2208 = vunpack.c.1.s8 %v560
    %v2209 = vunpack.c.1.s8 %v561
    %v2210 = vunpack.c.1.s8 %v562
    %v2211 = vunpack.c.2.s8 %v555
    %v2212 = vunpack.c.2.s8 %v556
    %v2213 = vunpack.c.2.s8 %v557
    %v2214 = vunpack.c.2.s8 %v558
    %v2215 = vunpack.c.2.s8 %v559
    %v2216 = vunpack.c.2.s8 %v560
    %v2217 = vunpack.c.2.s8 %v561
    %v2218 = vunpack.c.2.s8 %v562
    %v2219 = vunpack.c.3.s8 %v555
    %v2220 = vunpack.c.3.s8 %v556
    %v2221 = vunpack.c.3.s8 %v557
    %v2222 = vunpack.c.3.s8 %v558
    %v2223 = vunpack.c.3.s8 %v559
    %v2224 = vunpack.c.3.s8 %v560
    %v2225 = vunpack.c.3.s8 %v561
    %v2226 = vunpack.c.3.s8 %v562
    %v2227 = vunpack.c.0.s8 %v563
    %v2228 = vunpack.c.0.s8 %v564
    %v2229 = vunpack.c.0.s8 %v565
    %v2230 = vunpack.c.0.s8 %v566
    %v2231 = vunpack.c.0.s8 %v567
    %v2232 = vunpack.c.0.s8 %v568
    %v2233 = vunpack.c.0.s8 %v569
    %v2234 = vunpack.c.0.s8 %v570
    %v2235 = vunpack.c.1.s8 %v563
    %v2236 = vunpack.c.1.s8 %v564
    %v2237 = vunpack.c.1.s8 %v565
    %v2238 = vunpack.c.1.s8 %v566
    %v2239 = vunpack.c.1.s8 %v567
    %v2240 = vunpack.c.1.s8 %v568
    %v2241 = vunpack.c.1.s8 %v569
    %v2242 = vunpack.c.1.s8 %v570
    %v2243 = vunpack.c.2.s8 %v563
    %v2244 = vunpack.c.2.s8 %v564
    %v2245 = vunpack.c.2.s8 %v565
    %v2246 = vunpack.c.2.s8 %v566
    %v2247 = vunpack.c.2.s8 %v567
    %v2248 = vunpack.c.2.s8 %v568
    %v2249 = vunpack.c.2.s8 %v569
    %v2250 = vunpack.c.2.s8 %v570
    %v2251 = vunpack.c.3.s8 %v563
    %v2252 = vunpack.c.3.s8 %v564
    %v2253 = vunpack.c.3.s8 %v565
    %v2254 = vunpack.c.3.s8 %v566
    %v2255 = vunpack.c.3.s8 %v567
    %v2256 = vunpack.c.3.s8 %v568
    %v2257 = vunpack.c.3.s8 %v569
    %v2258 = vunpack.c.3.s8 %v570
    %v2259 = vunpack.c.0.s8 %v571
    %v2260 = vunpack.c.0.s8 %v572
    %v2261 = vunpack.c.0.s8 %v573
    %v2262 = vunpack.c.0.s8 %v574
    %v2263 = vunpack.c.0.s8 %v575
    %v2264 = vunpack.c.0.s8 %v576
    %v2265 = vunpack.c.0.s8 %v577
    %v2266 = vunpack.c.0.s8 %v578
    %v2267 = vunpack.c.1.s8 %v571
    %v2268 = vunpack.c.1.s8 %v572
    %v2269 = vunpack.c.1.s8 %v573
    %v2270 = vunpack.c.1.s8 %v574
    %v2271 = vunpack.c.1.s8 %v575
    %v2272 = vunpack.c.1.s8 %v576
    %v2273 = vunpack.c.1.s8 %v577
    %v2274 = vunpack.c.1.s8 %v578
    %v2275 = vunpack.c.2.s8 %v571
    %v2276 = vunpack.c.2.s8 %v572
    %v2277 = vunpack.c.2.s8 %v573
    %v2278 = vunpack.c.2.s8 %v574
    %v2279 = vunpack.c.2.s8 %v575
    %v2280 = vunpack.c.2.s8 %v576
    %v2281 = vunpack.c.2.s8 %v577
    %v2282 = vunpack.c.2.s8 %v578
    %v2283 = vunpack.c.3.s8 %v571
    %v2284 = vunpack.c.3.s8 %v572
    %v2285 = vunpack.c.3.s8 %v573
    %v2286 = vunpack.c.3.s8 %v574
    %v2287 = vunpack.c.3.s8 %v575
    %v2288 = vunpack.c.3.s8 %v576
    %v2289 = vunpack.c.3.s8 %v577
    %v2290 = vunpack.c.3.s8 %v578
    %v2291 = vunpack.c.0.s8 %v579
    %v2292 = vunpack.c.0.s8 %v580
    %v2293 = vunpack.c.0.s8 %v581
    %v2294 = vunpack.c.0.s8 %v582
    %v2295 = vunpack.c.0.s8 %v583
    %v2296 = vunpack.c.0.s8 %v584
    %v2297 = vunpack.c.0.s8 %v585
    %v2298 = vunpack.c.0.s8 %v586
    %v2299 = vunpack.c.1.s8 %v579
    %v2300 = vunpack.c.1.s8 %v580
    %v2301 = vunpack.c.1.s8 %v581
    %v2302 = vunpack.c.1.s8 %v582
    %v2303 = vunpack.c.1.s8 %v583
    %v2304 = vunpack.c.1.s8 %v584
    %v2305 = vunpack.c.1.s8 %v585
    %v2306 = vunpack.c.1.s8 %v586
    %v2307 = vunpack.c.2.s8 %v579
    %v2308 = vunpack.c.2.s8 %v580
    %v2309 = vunpack.c.2.s8 %v581
    %v2310 = vunpack.c.2.s8 %v582
    %v2311 = vunpack.c.2.s8 %v583
    %v2312 = vunpack.c.2.s8 %v584
    %v2313 = vunpack.c.2.s8 %v585
    %v2314 = vunpack.c.2.s8 %v586
    %v2315 = vunpack.c.3.s8 %v579
    %v2316 = vunpack.c.3.s8 %v580
    %v2317 = vunpack.c.3.s8 %v581
    %v2318 = vunpack.c.3.s8 %v582
    %v2319 = vunpack.c.3.s8 %v583
    %v2320 = vunpack.c.3.s8 %v584
    %v2321 = vunpack.c.3.s8 %v585
    %v2322 = vunpack.c.3.s8 %v586
    %v2323 = vunpack.c.0.s8 %v587
    %v2324 = vunpack.c.0.s8 %v588
    %v2325 = vunpack.c.0.s8 %v589
    %v2326 = vunpack.c.0.s8 %v590
    %v2327 = vunpack.c.0.s8 %v591
    %v2328 = vunpack.c.0.s8 %v592
    %v2329 = vunpack.c.0.s8 %v593
    %v2330 = vunpack.c.0.s8 %v594
    %v2331 = vunpack.c.1.s8 %v587
    %v2332 = vunpack.c.1.s8 %v588
    %v2333 = vunpack.c.1.s8 %v589
    %v2334 = vunpack.c.1.s8 %v590
    %v2335 = vunpack.c.1.s8 %v591
    %v2336 = vunpack.c.1.s8 %v592
    %v2337 = vunpack.c.1.s8 %v593
    %v2338 = vunpack.c.1.s8 %v594
    %v2339 = vunpack.c.2.s8 %v587
    %v2340 = vunpack.c.2.s8 %v588
    %v2341 = vunpack.c.2.s8 %v589
    %v2342 = vunpack.c.2.s8 %v590
    %v2343 = vunpack.c.2.s8 %v591
    %v2344 = vunpack.c.2.s8 %v592
    %v2345 = vunpack.c.2.s8 %v593
    %v2346 = vunpack.c.2.s8 %v594
    %v2347 = vunpack.c.3.s8 %v587
    %v2348 = vunpack.c.3.s8 %v588
    %v2349 = vunpack.c.3.s8 %v589
    %v2350 = vunpack.c.3.s8 %v590
    %v2351 = vunpack.c.3.s8 %v591
    %v2352 = vunpack.c.3.s8 %v592
    %v2353 = vunpack.c.3.s8 %v593
    %v2354 = vunpack.c.3.s8 %v594
    %v2355 = vunpack.c.0.s8 %v595
    %v2356 = vunpack.c.0.s8 %v596
    %v2357 = vunpack.c.0.s8 %v597
    %v2358 = vunpack.c.0.s8 %v598
    %v2359 = vunpack.c.0.s8 %v599
    %v2360 = vunpack.c.0.s8 %v600
    %v2361 = vunpack.c.0.s8 %v601
    %v2362 = vunpack.c.0.s8 %v602
    %v2363 = vunpack.c.1.s8 %v595
    %v2364 = vunpack.c.1.s8 %v596
    %v2365 = vunpack.c.1.s8 %v597
    %v2366 = vunpack.c.1.s8 %v598
    %v2367 = vunpack.c.1.s8 %v599
    %v2368 = vunpack.c.1.s8 %v600
    %v2369 = vunpack.c.1.s8 %v601
    %v2370 = vunpack.c.1.s8 %v602
    %v2371 = vunpack.c.2.s8 %v595
    %v2372 = vunpack.c.2.s8 %v596
    %v2373 = vunpack.c.2.s8 %v597
    %v2374 = vunpack.c.2.s8 %v598
    %v2375 = vunpack.c.2.s8 %v599
    %v2376 = vunpack.c.2.s8 %v600
    %v2377 = vunpack.c.2.s8 %v601
    %v2378 = vunpack.c.2.s8 %v602
    %v2379 = vunpack.c.3.s8 %v595
    %v2380 = vunpack.c.3.s8 %v596
    %v2381 = vunpack.c.3.s8 %v597
    %v2382 = vunpack.c.3.s8 %v598
    %v2383 = vunpack.c.3.s8 %v599
    %v2384 = vunpack.c.3.s8 %v600
    %v2385 = vunpack.c.3.s8 %v601
    %v2386 = vunpack.c.3.s8 %v602
    %v2387 = vunpack.c.0.s8 %v603
    %v2388 = vunpack.c.0.s8 %v604
    %v2389 = vunpack.c.0.s8 %v605
    %v2390 = vunpack.c.0.s8 %v606
    %v2391 = vunpack.c.0.s8 %v607
    %v2392 = vunpack.c.0.s8 %v608
    %v2393 = vunpack.c.0.s8 %v609
    %v2394 = vunpack.c.0.s8 %v610
    %v2395 = vunpack.c.1.s8 %v603
    %v2396 = vunpack.c.1.s8 %v604
    %v2397 = vunpack.c.1.s8 %v605
    %v2398 = vunpack.c.1.s8 %v606
    %v2399 = vunpack.c.1.s8 %v607
    %v2400 = vunpack.c.1.s8 %v608
    %v2401 = vunpack.c.1.s8 %v609
    %v2402 = vunpack.c.1.s8 %v610
    %v2403 = vunpack.c.2.s8 %v603
    %v2404 = vunpack.c.2.s8 %v604
    %v2405 = vunpack.c.2.s8 %v605
    %v2406 = vunpack.c.2.s8 %v606
    %v2407 = vunpack.c.2.s8 %v607
    %v2408 = vunpack.c.2.s8 %v608
    %v2409 = vunpack.c.2.s8 %v609
    %v2410 = vunpack.c.2.s8 %v610
    %v2411 = vunpack.c.3.s8 %v603
    %v2412 = vunpack.c.3.s8 %v604
    %v2413 = vunpack.c.3.s8 %v605
    %v2414 = vunpack.c.3.s8 %v606
    %v2415 = vunpack.c.3.s8 %v607
    %v2416 = vunpack.c.3.s8 %v608
    %v2417 = vunpack.c.3.s8 %v609
    %v2418 = vunpack.c.3.s8 %v610
    %v2419 = vunpack.c.0.s8 %v611
    %v2420 = vunpack.c.0.s8 %v612
    %v2421 = vunpack.c.0.s8 %v613
    %v2422 = vunpack.c.0.s8 %v614
    %v2423 = vunpack.c.0.s8 %v615
    %v2424 = vunpack.c.0.s8 %v616
    %v2425 = vunpack.c.0.s8 %v617
    %v2426 = vunpack.c.0.s8 %v618
    %v2427 = vunpack.c.1.s8 %v611
    %v2428 = vunpack.c.1.s8 %v612
    %v2429 = vunpack.c.1.s8 %v613
    %v2430 = vunpack.c.1.s8 %v614
    %v2431 = vunpack.c.1.s8 %v615
    %v2432 = vunpack.c.1.s8 %v616
    %v2433 = vunpack.c.1.s8 %v617
    %v2434 = vunpack.c.1.s8 %v618
    %v2435 = vunpack.c.2.s8 %v611
    %v2436 = vunpack.c.2.s8 %v612
    %v2437 = vunpack.c.2.s8 %v613
    %v2438 = vunpack.c.2.s8 %v614
    %v2439 = vunpack.c.2.s8 %v615
    %v2440 = vunpack.c.2.s8 %v616
    %v2441 = vunpack.c.2.s8 %v617
    %v2442 = vunpack.c.2.s8 %v618
    %v2443 = vunpack.c.3.s8 %v611
    %v2444 = vunpack.c.3.s8 %v612
    %v2445 = vunpack.c.3.s8 %v613
    %v2446 = vunpack.c.3.s8 %v614
    %v2447 = vunpack.c.3.s8 %v615
    %v2448 = vunpack.c.3.s8 %v616
    %v2449 = vunpack.c.3.s8 %v617
    %v2450 = vunpack.c.3.s8 %v618
    %v2451 = vunpack.c.0.s8 %v619
    %v2452 = vunpack.c.0.s8 %v620
    %v2453 = vunpack.c.0.s8 %v621
    %v2454 = vunpack.c.0.s8 %v622
    %v2455 = vunpack.c.0.s8 %v623
    %v2456 = vunpack.c.0.s8 %v624
    %v2457 = vunpack.c.0.s8 %v625
    %v2458 = vunpack.c.0.s8 %v626
    %v2459 = vunpack.c.1.s8 %v619
    %v2460 = vunpack.c.1.s8 %v620
    %v2461 = vunpack.c.1.s8 %v621
    %v2462 = vunpack.c.1.s8 %v622
    %v2463 = vunpack.c.1.s8 %v623
    %v2464 = vunpack.c.1.s8 %v624
    %v2465 = vunpack.c.1.s8 %v625
    %v2466 = vunpack.c.1.s8 %v626
    %v2467 = vunpack.c.2.s8 %v619
    %v2468 = vunpack.c.2.s8 %v620
    %v2469 = vunpack.c.2.s8 %v621
    %v2470 = vunpack.c.2.s8 %v622
    %v2471 = vunpack.c.2.s8 %v623
    %v2472 = vunpack.c.2.s8 %v624
    %v2473 = vunpack.c.2.s8 %v625
    %v2474 = vunpack.c.2.s8 %v626
    %v2475 = vunpack.c.3.s8 %v619
    %v2476 = vunpack.c.3.s8 %v620
    %v2477 = vunpack.c.3.s8 %v621
    %v2478 = vunpack.c.3.s8 %v622
    %v2479 = vunpack.c.3.s8 %v623
    %v2480 = vunpack.c.3.s8 %v624
    %v2481 = vunpack.c.3.s8 %v625
    %v2482 = vunpack.c.3.s8 %v626
    %v2483 = vunpack.c.0.s8 %v627
    %v2484 = vunpack.c.0.s8 %v628
    %v2485 = vunpack.c.0.s8 %v629
    %v2486 = vunpack.c.0.s8 %v630
    %v2487 = vunpack.c.0.s8 %v631
    %v2488 = vunpack.c.0.s8 %v632
    %v2489 = vunpack.c.0.s8 %v633
    %v2490 = vunpack.c.0.s8 %v634
    %v2491 = vunpack.c.1.s8 %v627
    %v2492 = vunpack.c.1.s8 %v628
    %v2493 = vunpack.c.1.s8 %v629
    %v2494 = vunpack.c.1.s8 %v630
    %v2495 = vunpack.c.1.s8 %v631
    %v2496 = vunpack.c.1.s8 %v632
    %v2497 = vunpack.c.1.s8 %v633
    %v2498 = vunpack.c.1.s8 %v634
    %v2499 = vunpack.c.2.s8 %v627
    %v2500 = vunpack.c.2.s8 %v628
    %v2501 = vunpack.c.2.s8 %v629
    %v2502 = vunpack.c.2.s8 %v630
    %v2503 = vunpack.c.2.s8 %v631
    %v2504 = vunpack.c.2.s8 %v632
    %v2505 = vunpack.c.2.s8 %v633
    %v2506 = vunpack.c.2.s8 %v634
    %v2507 = vunpack.c.3.s8 %v627
    %v2508 = vunpack.c.3.s8 %v628
    %v2509 = vunpack.c.3.s8 %v629
    %v2510 = vunpack.c.3.s8 %v630
    %v2511 = vunpack.c.3.s8 %v631
    %v2512 = vunpack.c.3.s8 %v632
    %v2513 = vunpack.c.3.s8 %v633
    %v2514 = vunpack.c.3.s8 %v634
    %v2515 = vunpack.c.0.s8 %v635
    %v2516 = vunpack.c.0.s8 %v636
    %v2517 = vunpack.c.0.s8 %v637
    %v2518 = vunpack.c.0.s8 %v638
    %v2519 = vunpack.c.0.s8 %v639
    %v2520 = vunpack.c.0.s8 %v640
    %v2521 = vunpack.c.0.s8 %v641
    %v2522 = vunpack.c.0.s8 %v642
    %v2523 = vunpack.c.1.s8 %v635
    %v2524 = vunpack.c.1.s8 %v636
    %v2525 = vunpack.c.1.s8 %v637
    %v2526 = vunpack.c.1.s8 %v638
    %v2527 = vunpack.c.1.s8 %v639
    %v2528 = vunpack.c.1.s8 %v640
    %v2529 = vunpack.c.1.s8 %v641
    %v2530 = vunpack.c.1.s8 %v642
    %v2531 = vunpack.c.2.s8 %v635
    %v2532 = vunpack.c.2.s8 %v636
    %v2533 = vunpack.c.2.s8 %v637
    %v2534 = vunpack.c.2.s8 %v638
    %v2535 = vunpack.c.2.s8 %v639
    %v2536 = vunpack.c.2.s8 %v640
    %v2537 = vunpack.c.2.s8 %v641
    %v2538 = vunpack.c.2.s8 %v642
    %v2539 = vunpack.c.3.s8 %v635
    %v2540 = vunpack.c.3.s8 %v636
    %v2541 = vunpack.c.3.s8 %v637
    %v2542 = vunpack.c.3.s8 %v638
    %v2543 = vunpack.c.3.s8 %v639
    %v2544 = vunpack.c.3.s8 %v640
    %v2545 = vunpack.c.3.s8 %v641
    %v2546 = vunpack.c.3.s8 %v642
    %v2547 = vunpack.c.0.s8 %v643
    %v2548 = vunpack.c.0.s8 %v644
    %v2549 = vunpack.c.0.s8 %v645
    %v2550 = vunpack.c.0.s8 %v646
    %v2551 = vunpack.c.0.s8 %v647
    %v2552 = vunpack.c.0.s8 %v648
    %v2553 = vunpack.c.0.s8 %v649
    %v2554 = vunpack.c.0.s8 %v650
    %v2555 = vunpack.c.1.s8 %v643
    %v2556 = vunpack.c.1.s8 %v644
    %v2557 = vunpack.c.1.s8 %v645
    %v2558 = vunpack.c.1.s8 %v646
    %v2559 = vunpack.c.1.s8 %v647
    %v2560 = vunpack.c.1.s8 %v648
    %v2561 = vunpack.c.1.s8 %v649
    %v2562 = vunpack.c.1.s8 %v650
    %v2563 = vunpack.c.2.s8 %v643
    %v2564 = vunpack.c.2.s8 %v644
    %v2565 = vunpack.c.2.s8 %v645
    %v2566 = vunpack.c.2.s8 %v646
    %v2567 = vunpack.c.2.s8 %v647
    %v2568 = vunpack.c.2.s8 %v648
    %v2569 = vunpack.c.2.s8 %v649
    %v2570 = vunpack.c.2.s8 %v650
    %v2571 = vunpack.c.3.s8 %v643
    %v2572 = vunpack.c.3.s8 %v644
    %v2573 = vunpack.c.3.s8 %v645
    %v2574 = vunpack.c.3.s8 %v646
    %v2575 = vunpack.c.3.s8 %v647
    %v2576 = vunpack.c.3.s8 %v648
    %v2577 = vunpack.c.3.s8 %v649
    %v2578 = vunpack.c.3.s8 %v650
    %v2579 = vunpack.c.0.s8 %v651
    %v2580 = vunpack.c.0.s8 %v652
    %v2581 = vunpack.c.0.s8 %v653
    %v2582 = vunpack.c.0.s8 %v654
    %v2583 = vunpack.c.0.s8 %v655
    %v2584 = vunpack.c.0.s8 %v656
    %v2585 = vunpack.c.0.s8 %v657
    %v2586 = vunpack.c.0.s8 %v658
    %v2587 = vunpack.c.1.s8 %v651
    %v2588 = vunpack.c.1.s8 %v652
    %v2589 = vunpack.c.1.s8 %v653
    %v2590 = vunpack.c.1.s8 %v654
    %v2591 = vunpack.c.1.s8 %v655
    %v2592 = vunpack.c.1.s8 %v656
    %v2593 = vunpack.c.1.s8 %v657
    %v2594 = vunpack.c.1.s8 %v658
    %v2595 = vunpack.c.2.s8 %v651
    %v2596 = vunpack.c.2.s8 %v652
    %v2597 = vunpack.c.2.s8 %v653
    %v2598 = vunpack.c.2.s8 %v654
    %v2599 = vunpack.c.2.s8 %v655
    %v2600 = vunpack.c.2.s8 %v656
    %v2601 = vunpack.c.2.s8 %v657
    %v2602 = vunpack.c.2.s8 %v658
    %v2603 = vunpack.c.3.s8 %v651
    %v2604 = vunpack.c.3.s8 %v652
    %v2605 = vunpack.c.3.s8 %v653
    %v2606 = vunpack.c.3.s8 %v654
    %v2607 = vunpack.c.3.s8 %v655
    %v2608 = vunpack.c.3.s8 %v656
    %v2609 = vunpack.c.3.s8 %v657
    %v2610 = vunpack.c.3.s8 %v658
    %v2611 = vunpack.c.0.s8 %v659
    %v2612 = vunpack.c.0.s8 %v660
    %v2613 = vunpack.c.0.s8 %v661
    %v2614 = vunpack.c.0.s8 %v662
    %v2615 = vunpack.c.0.s8 %v663
    %v2616 = vunpack.c.0.s8 %v664
    %v2617 = vunpack.c.0.s8 %v665
    %v2618 = vunpack.c.0.s8 %v666
    %v2619 = vunpack.c.1.s8 %v659
    %v2620 = vunpack.c.1.s8 %v660
    %v2621 = vunpack.c.1.s8 %v661
    %v2622 = vunpack.c.1.s8 %v662
    %v2623 = vunpack.c.1.s8 %v663
    %v2624 = vunpack.c.1.s8 %v664
    %v2625 = vunpack.c.1.s8 %v665
    %v2626 = vunpack.c.1.s8 %v666
    %v2627 = vunpack.c.2.s8 %v659
    %v2628 = vunpack.c.2.s8 %v660
    %v2629 = vunpack.c.2.s8 %v661
    %v2630 = vunpack.c.2.s8 %v662
    %v2631 = vunpack.c.2.s8 %v663
    %v2632 = vunpack.c.2.s8 %v664
    %v2633 = vunpack.c.2.s8 %v665
    %v2634 = vunpack.c.2.s8 %v666
    %v2635 = vunpack.c.3.s8 %v659
    %v2636 = vunpack.c.3.s8 %v660
    %v2637 = vunpack.c.3.s8 %v661
    %v2638 = vunpack.c.3.s8 %v662
    %v2639 = vunpack.c.3.s8 %v663
    %v2640 = vunpack.c.3.s8 %v664
    %v2641 = vunpack.c.3.s8 %v665
    %v2642 = vunpack.c.3.s8 %v666
    %v2643 = vunpack.c.0.s8 %v667
    %v2644 = vunpack.c.0.s8 %v668
    %v2645 = vunpack.c.0.s8 %v669
    %v2646 = vunpack.c.0.s8 %v670
    %v2647 = vunpack.c.0.s8 %v671
    %v2648 = vunpack.c.0.s8 %v672
    %v2649 = vunpack.c.0.s8 %v673
    %v2650 = vunpack.c.0.s8 %v674
    %v2651 = vunpack.c.1.s8 %v667
    %v2652 = vunpack.c.1.s8 %v668
    %v2653 = vunpack.c.1.s8 %v669
    %v2654 = vunpack.c.1.s8 %v670
    %v2655 = vunpack.c.1.s8 %v671
    %v2656 = vunpack.c.1.s8 %v672
    %v2657 = vunpack.c.1.s8 %v673
    %v2658 = vunpack.c.1.s8 %v674
    %v2659 = vunpack.c.2.s8 %v667
    %v2660 = vunpack.c.2.s8 %v668
    %v2661 = vunpack.c.2.s8 %v669
    %v2662 = vunpack.c.2.s8 %v670
    %v2663 = vunpack.c.2.s8 %v671
    %v2664 = vunpack.c.2.s8 %v672
    %v2665 = vunpack.c.2.s8 %v673
    %v2666 = vunpack.c.2.s8 %v674
    %v2667 = vunpack.c.3.s8 %v667
    %v2668 = vunpack.c.3.s8 %v668
    %v2669 = vunpack.c.3.s8 %v669
    %v2670 = vunpack.c.3.s8 %v670
    %v2671 = vunpack.c.3.s8 %v671
    %v2672 = vunpack.c.3.s8 %v672
    %v2673 = vunpack.c.3.s8 %v673
    %v2674 = vunpack.c.3.s8 %v674
    %v2675 = vunpack.c.0.s8 %v675
    %v2676 = vunpack.c.0.s8 %v676
    %v2677 = vunpack.c.0.s8 %v677
    %v2678 = vunpack.c.0.s8 %v678
    %v2679 = vunpack.c.0.s8 %v679
    %v2680 = vunpack.c.0.s8 %v680
    %v2681 = vunpack.c.0.s8 %v681
    %v2682 = vunpack.c.0.s8 %v682
    %v2683 = vunpack.c.1.s8 %v675
    %v2684 = vunpack.c.1.s8 %v676
    %v2685 = vunpack.c.1.s8 %v677
    %v2686 = vunpack.c.1.s8 %v678
    %v2687 = vunpack.c.1.s8 %v679
    %v2688 = vunpack.c.1.s8 %v680
    %v2689 = vunpack.c.1.s8 %v681
    %v2690 = vunpack.c.1.s8 %v682
    %v2691 = vunpack.c.2.s8 %v675
    %v2692 = vunpack.c.2.s8 %v676
    %v2693 = vunpack.c.2.s8 %v677
    %v2694 = vunpack.c.2.s8 %v678
    %v2695 = vunpack.c.2.s8 %v679
    %v2696 = vunpack.c.2.s8 %v680
    %v2697 = vunpack.c.2.s8 %v681
    %v2698 = vunpack.c.2.s8 %v682
    %v2699 = vunpack.c.3.s8 %v675
    %v2700 = vunpack.c.3.s8 %v676
    %v2701 = vunpack.c.3.s8 %v677
    %v2702 = vunpack.c.3.s8 %v678
    %v2703 = vunpack.c.3.s8 %v679
    %v2704 = vunpack.c.3.s8 %v680
    %v2705 = vunpack.c.3.s8 %v681
    %v2706 = vunpack.c.3.s8 %v682
    %v2707 = vunpack.c.0.s8 %v683
    %v2708 = vunpack.c.0.s8 %v684
    %v2709 = vunpack.c.0.s8 %v685
    %v2710 = vunpack.c.0.s8 %v686
    %v2711 = vunpack.c.0.s8 %v687
    %v2712 = vunpack.c.0.s8 %v688
    %v2713 = vunpack.c.0.s8 %v689
    %v2714 = vunpack.c.0.s8 %v690
    %v2715 = vunpack.c.1.s8 %v683
    %v2716 = vunpack.c.1.s8 %v684
    %v2717 = vunpack.c.1.s8 %v685
    %v2718 = vunpack.c.1.s8 %v686
    %v2719 = vunpack.c.1.s8 %v687
    %v2720 = vunpack.c.1.s8 %v688
    %v2721 = vunpack.c.1.s8 %v689
    %v2722 = vunpack.c.1.s8 %v690
    %v2723 = vunpack.c.2.s8 %v683
    %v2724 = vunpack.c.2.s8 %v684
    %v2725 = vunpack.c.2.s8 %v685
    %v2726 = vunpack.c.2.s8 %v686
    %v2727 = vunpack.c.2.s8 %v687
    %v2728 = vunpack.c.2.s8 %v688
    %v2729 = vunpack.c.2.s8 %v689
    %v2730 = vunpack.c.2.s8 %v690
    %v2731 = vunpack.c.3.s8 %v683
    %v2732 = vunpack.c.3.s8 %v684
    %v2733 = vunpack.c.3.s8 %v685
    %v2734 = vunpack.c.3.s8 %v686
    %v2735 = vunpack.c.3.s8 %v687
    %v2736 = vunpack.c.3.s8 %v688
    %v2737 = vunpack.c.3.s8 %v689
    %v2738 = vunpack.c.3.s8 %v690
    %v2739 = vcvt.s32.f32 %v691
    %v2740 = vcvt.s32.f32 %v692
    %v2741 = vcvt.s32.f32 %v693
    %v2742 = vcvt.s32.f32 %v694
    %v2743 = vcvt.s32.f32 %v695
    %v2744 = vcvt.s32.f32 %v696
    %v2745 = vcvt.s32.f32 %v697
    %v2746 = vcvt.s32.f32 %v698
    %v2747 = vcvt.s32.f32 %v699
    %v2748 = vcvt.s32.f32 %v700
    %v2749 = vcvt.s32.f32 %v701
    %v2750 = vcvt.s32.f32 %v702
    %v2751 = vcvt.s32.f32 %v703
    %v2752 = vcvt.s32.f32 %v704
    %v2753 = vcvt.s32.f32 %v705
    %v2754 = vcvt.s32.f32 %v706
    %v2755 = vcvt.s32.f32 %v707
    %v2756 = vcvt.s32.f32 %v708
    %v2757 = vcvt.s32.f32 %v709
    %v2758 = vcvt.s32.f32 %v710
    %v2759 = vcvt.s32.f32 %v711
    %v2760 = vcvt.s32.f32 %v712
    %v2761 = vcvt.s32.f32 %v713
    %v2762 = vcvt.s32.f32 %v714
    %v2763 = vcvt.s32.f32 %v715
    %v2764 = vcvt.s32.f32 %v716
    %v2765 = vcvt.s32.f32 %v717
    %v2766 = vcvt.s32.f32 %v718
    %v2767 = vcvt.s32.f32 %v719
    %v2768 = vcvt.s32.f32 %v720
    %v2769 = vcvt.s32.f32 %v721
    %v2770 = vcvt.s32.f32 %v722
    %v2771 = vcvt.s32.f32 %v723
    %v2772 = vcvt.s32.f32 %v724
    %v2773 = vcvt.s32.f32 %v725
    %v2774 = vcvt.s32.f32 %v726
    %v2775 = vcvt.s32.f32 %v727
    %v2776 = vcvt.s32.f32 %v728
    %v2777 = vcvt.s32.f32 %v729
    %v2778 = vcvt.s32.f32 %v730
    %v2779 = vcvt.s32.f32 %v731
    %v2780 = vcvt.s32.f32 %v732
    %v2781 = vcvt.s32.f32 %v733
    %v2782 = vcvt.s32.f32 %v734
    %v2783 = vcvt.s32.f32 %v735
    %v2784 = vcvt.s32.f32 %v736
    %v2785 = vcvt.s32.f32 %v737
    %v2786 = vcvt.s32.f32 %v738
    %v2787 = vcvt.s32.f32 %v739
    %v2788 = vcvt.s32.f32 %v740
    %v2789 = vcvt.s32.f32 %v741
    %v2790 = vcvt.s32.f32 %v742
    %v2791 = vcvt.s32.f32 %v743
    %v2792 = vcvt.s32.f32 %v744
    %v2793 = vcvt.s32.f32 %v745
    %v2794 = vcvt.s32.f32 %v746
    %v2795 = vcvt.s32.f32 %v747
    %v2796 = vcvt.s32.f32 %v748
    %v2797 = vcvt.s32.f32 %v749
    %v2798 = vcvt.s32.f32 %v750
    %v2799 = vcvt.s32.f32 %v751
    %v2800 = vcvt.s32.f32 %v752
    %v2801 = vcvt.s32.f32 %v753
    %v2802 = vcvt.s32.f32 %v754
    %v2803 = vcvt.s32.f32 %v755
    %v2804 = vcvt.s32.f32 %v756
    %v2805 = vcvt.s32.f32 %v757
    %v2806 = vcvt.s32.f32 %v758
    %v2807 = vcvt.s32.f32 %v759
    %v2808 = vcvt.s32.f32 %v760
    %v2809 = vcvt.s32.f32 %v761
    %v2810 = vcvt.s32.f32 %v762
    %v2811 = vcvt.s32.f32 %v763
    %v2812 = vcvt.s32.f32 %v764
    %v2813 = vcvt.s32.f32 %v765
    %v2814 = vcvt.s32.f32 %v766
    %v2815 = vcvt.s32.f32 %v767
    %v2816 = vcvt.s32.f32 %v768
    %v2817 = vcvt.s32.f32 %v769
    %v2818 = vcvt.s32.f32 %v770
    %v2819 = vcvt.s32.f32 %v771
    %v2820 = vcvt.s32.f32 %v772
    %v2821 = vcvt.s32.f32 %v773
    %v2822 = vcvt.s32.f32 %v774
    %v2823 = vcvt.s32.f32 %v775
    %v2824 = vcvt.s32.f32 %v776
    %v2825 = vcvt.s32.f32 %v777
    %v2826 = vcvt.s32.f32 %v778
    %v2827 = vcvt.s32.f32 %v779
    %v2828 = vcvt.s32.f32 %v780
    %v2829 = vcvt.s32.f32 %v781
    %v2830 = vcvt.s32.f32 %v782
    %v2831 = vcvt.s32.f32 %v783
    %v2832 = vcvt.s32.f32 %v784
    %v2833 = vcvt.s32.f32 %v785
    %v2834 = vcvt.s32.f32 %v786
    %v2835 = vcvt.s32.f32 %v787
    %v2836 = vcvt.s32.f32 %v788
    %v2837 = vcvt.s32.f32 %v789
    %v2838 = vcvt.s32.f32 %v790
    %v2839 = vcvt.s32.f32 %v791
    %v2840 = vcvt.s32.f32 %v792
    %v2841 = vcvt.s32.f32 %v793
    %v2842 = vcvt.s32.f32 %v794
    %v2843 = vcvt.s32.f32 %v795
    %v2844 = vcvt.s32.f32 %v796
    %v2845 = vcvt.s32.f32 %v797
    %v2846 = vcvt.s32.f32 %v798
    %v2847 = vcvt.s32.f32 %v799
    %v2848 = vcvt.s32.f32 %v800
    %v2849 = vcvt.s32.f32 %v801
    %v2850 = vcvt.s32.f32 %v802
    %v2851 = vcvt.s32.f32 %v803
    %v2852 = vcvt.s32.f32 %v804
    %v2853 = vcvt.s32.f32 %v805
    %v2854 = vcvt.s32.f32 %v806
    %v2855 = vcvt.s32.f32 %v807
    %v2856 = vcvt.s32.f32 %v808
    %v2857 = vcvt.s32.f32 %v809
    %v2858 = vcvt.s32.f32 %v810
    %v2859 = vcvt.s32.f32 %v811
    %v2860 = vcvt.s32.f32 %v812
    %v2861 = vcvt.s32.f32 %v813
    %v2862 = vcvt.s32.f32 %v814
    %v2863 = vcvt.s32.f32 %v815
    %v2864 = vcvt.s32.f32 %v816
    %v2865 = vcvt.s32.f32 %v817
    %v2866 = vcvt.s32.f32 %v818
    %v2867 = vcvt.s32.f32 %v819
    %v2868 = vcvt.s32.f32 %v820
    %v2869 = vcvt.s32.f32 %v821
    %v2870 = vcvt.s32.f32 %v822
    %v2871 = vcvt.s32.f32 %v823
    %v2872 = vcvt.s32.f32 %v824
    %v2873 = vcvt.s32.f32 %v825
    %v2874 = vcvt.s32.f32 %v826
    %v2875 = vcvt.s32.f32 %v827
    %v2876 = vcvt.s32.f32 %v828
    %v2877 = vcvt.s32.f32 %v829
    %v2878 = vcvt.s32.f32 %v830
    %v2879 = vcvt.s32.f32 %v831
    %v2880 = vcvt.s32.f32 %v832
    %v2881 = vcvt.s32.f32 %v833
    %v2882 = vcvt.s32.f32 %v834
    %v2883 = vcvt.s32.f32 %v835
    %v2884 = vcvt.s32.f32 %v836
    %v2885 = vcvt.s32.f32 %v837
    %v2886 = vcvt.s32.f32 %v838
    %v2887 = vcvt.s32.f32 %v839
    %v2888 = vcvt.s32.f32 %v840
    %v2889 = vcvt.s32.f32 %v841
    %v2890 = vcvt.s32.f32 %v842
    %v2891 = vcvt.s32.f32 %v843
    %v2892 = vcvt.s32.f32 %v844
    %v2893 = vcvt.s32.f32 %v845
    %v2894 = vcvt.s32.f32 %v846
    %v2895 = vcvt.s32.f32 %v847
    %v2896 = vcvt.s32.f32 %v848
    %v2897 = vcvt.s32.f32 %v849
    %v2898 = vcvt.s32.f32 %v850
    %v2899 = vcvt.s32.f32 %v851
    %v2900 = vcvt.s32.f32 %v852
    %v2901 = vcvt.s32.f32 %v853
    %v2902 = vcvt.s32.f32 %v854
    %v2903 = vcvt.s32.f32 %v855
    %v2904 = vcvt.s32.f32 %v856
    %v2905 = vcvt.s32.f32 %v857
    %v2906 = vcvt.s32.f32 %v858
    %v2907 = vcvt.s32.f32 %v859
    %v2908 = vcvt.s32.f32 %v860
    %v2909 = vcvt.s32.f32 %v861
    %v2910 = vcvt.s32.f32 %v862
    %v2911 = vcvt.s32.f32 %v863
    %v2912 = vcvt.s32.f32 %v864
    %v2913 = vcvt.s32.f32 %v865
    %v2914 = vcvt.s32.f32 %v866
    %v2915 = vcvt.s32.f32 %v867
    %v2916 = vcvt.s32.f32 %v868
    %v2917 = vcvt.s32.f32 %v869
    %v2918 = vcvt.s32.f32 %v870
    %v2919 = vcvt.s32.f32 %v871
    %v2920 = vcvt.s32.f32 %v872
    %v2921 = vcvt.s32.f32 %v873
    %v2922 = vcvt.s32.f32 %v874
    %v2923 = vcvt.s32.f32 %v875
    %v2924 = vcvt.s32.f32 %v876
    %v2925 = vcvt.s32.f32 %v877
    %v2926 = vcvt.s32.f32 %v878
    %v2927 = vcvt.s32.f32 %v879
    %v2928 = vcvt.s32.f32 %v880
    %v2929 = vcvt.s32.f32 %v881
    %v2930 = vcvt.s32.f32 %v882
    %v2931 = vcvt.s32.f32 %v883
    %v2932 = vcvt.s32.f32 %v884
    %v2933 = vcvt.s32.f32 %v885
    %v2934 = vcvt.s32.f32 %v886
    %v2935 = vcvt.s32.f32 %v887
    %v2936 = vcvt.s32.f32 %v888
    %v2937 = vcvt.s32.f32 %v889
    %v2938 = vcvt.s32.f32 %v890
    %v2939 = vcvt.s32.f32 %v891
    %v2940 = vcvt.s32.f32 %v892
    %v2941 = vcvt.s32.f32 %v893
    %v2942 = vcvt.s32.f32 %v894
    %v2943 = vcvt.s32.f32 %v895
    %v2944 = vcvt.s32.f32 %v896
    %v2945 = vcvt.s32.f32 %v897
    %v2946 = vcvt.s32.f32 %v898
    %v2947 = vcvt.s32.f32 %v899
    %v2948 = vcvt.s32.f32 %v900
    %v2949 = vcvt.s32.f32 %v901
    %v2950 = vcvt.s32.f32 %v902
    %v2951 = vcvt.s32.f32 %v903
    %v2952 = vcvt.s32.f32 %v904
    %v2953 = vcvt.s32.f32 %v905
    %v2954 = vcvt.s32.f32 %v906
    %v2955 = vcvt.s32.f32 %v907
    %v2956 = vcvt.s32.f32 %v908
    %v2957 = vcvt.s32.f32 %v909
    %v2958 = vcvt.s32.f32 %v910
    %v2959 = vcvt.s32.f32 %v911
    %v2960 = vcvt.s32.f32 %v912
    %v2961 = vcvt.s32.f32 %v913
    %v2962 = vcvt.s32.f32 %v914
    %v2963 = vcvt.s32.f32 %v915
    %v2964 = vcvt.s32.f32 %v916
    %v2965 = vcvt.s32.f32 %v917
    %v2966 = vcvt.s32.f32 %v918
    %v2967 = vcvt.s32.f32 %v919
    %v2968 = vcvt.s32.f32 %v920
    %v2969 = vcvt.s32.f32 %v921
    %v2970 = vcvt.s32.f32 %v922
    %v2971 = vcvt.s32.f32 %v923
    %v2972 = vcvt.s32.f32 %v924
    %v2973 = vcvt.s32.f32 %v925
    %v2974 = vcvt.s32.f32 %v926
    %v2975 = vcvt.s32.f32 %v927
    %v2976 = vcvt.s32.f32 %v928
    %v2977 = vcvt.s32.f32 %v929
    %v2978 = vcvt.s32.f32 %v930
    %v2979 = vcvt.s32.f32 %v931
    %v2980 = vcvt.s32.f32 %v932
    %v2981 = vcvt.s32.f32 %v933
    %v2982 = vcvt.s32.f32 %v934
    %v2983 = vcvt.s32.f32 %v935
    %v2984 = vcvt.s32.f32 %v936
    %v2985 = vcvt.s32.f32 %v937
    %v2986 = vcvt.s32.f32 %v938
    %v2987 = vcvt.s32.f32 %v939
    %v2988 = vcvt.s32.f32 %v940
    %v2989 = vcvt.s32.f32 %v941
    %v2990 = vcvt.s32.f32 %v942
    %v2991 = vcvt.s32.f32 %v943
    %v2992 = vcvt.s32.f32 %v944
    %v2993 = vcvt.s32.f32 %v945
    %v2994 = vcvt.s32.f32 %v946
    %v2995 = vcvt.s32.f32 %v947
    %v2996 = vcvt.s32.f32 %v948
    %v2997 = vcvt.s32.f32 %v949
    %v2998 = vcvt.s32.f32 %v950
    %v2999 = vcvt.s32.f32 %v951
    %v3000 = vcvt.s32.f32 %v952
    %v3001 = vcvt.s32.f32 %v953
    %v3002 = vcvt.s32.f32 %v954
    %v3003 = vcvt.s32.f32 %v955
    %v3004 = vcvt.s32.f32 %v956
    %v3005 = vcvt.s32.f32 %v957
    %v3006 = vcvt.s32.f32 %v958
    %v3007 = vcvt.s32.f32 %v959
    %v3008 = vcvt.s32.f32 %v960
    %v3009 = vcvt.s32.f32 %v961
    %v3010 = vcvt.s32.f32 %v962
    %v3011 = vcvt.s32.f32 %v963
    %v3012 = vcvt.s32.f32 %v964
    %v3013 = vcvt.s32.f32 %v965
    %v3014 = vcvt.s32.f32 %v966
    %v3015 = vcvt.s32.f32 %v967
    %v3016 = vcvt.s32.f32 %v968
    %v3017 = vcvt.s32.f32 %v969
    %v3018 = vcvt.s32.f32 %v970
    %v3019 = vcvt.s32.f32 %v971
    %v3020 = vcvt.s32.f32 %v972
    %v3021 = vcvt.s32.f32 %v973
    %v3022 = vcvt.s32.f32 %v974
    %v3023 = vcvt.s32.f32 %v975
    %v3024 = vcvt.s32.f32 %v976
    %v3025 = vcvt.s32.f32 %v977
    %v3026 = vcvt.s32.f32 %v978
    %v3027 = vcvt.s32.f32 %v979
    %v3028 = vcvt.s32.f32 %v980
    %v3029 = vcvt.s32.f32 %v981
    %v3030 = vcvt.s32.f32 %v982
    %v3031 = vcvt.s32.f32 %v983
    %v3032 = vcvt.s32.f32 %v984
    %v3033 = vcvt.s32.f32 %v985
    %v3034 = vcvt.s32.f32 %v986
    %v3035 = vcvt.s32.f32 %v987
    %v3036 = vcvt.s32.f32 %v988
    %v3037 = vcvt.s32.f32 %v989
    %v3038 = vcvt.s32.f32 %v990
    %v3039 = vcvt.s32.f32 %v991
    %v3040 = vcvt.s32.f32 %v992
    %v3041 = vcvt.s32.f32 %v993
    %v3042 = vcvt.s32.f32 %v994
    %v3043 = vcvt.s32.f32 %v995
    %v3044 = vcvt.s32.f32 %v996
    %v3045 = vcvt.s32.f32 %v997
    %v3046 = vcvt.s32.f32 %v998
    %v3047 = vcvt.s32.f32 %v999
    %v3048 = vcvt.s32.f32 %v1000
    %v3049 = vcvt.s32.f32 %v1001
    %v3050 = vcvt.s32.f32 %v1002
    %v3051 = vcvt.s32.f32 %v1003
    %v3052 = vcvt.s32.f32 %v1004
    %v3053 = vcvt.s32.f32 %v1005
    %v3054 = vcvt.s32.f32 %v1006
    %v3055 = vcvt.s32.f32 %v1007
    %v3056 = vcvt.s32.f32 %v1008
    %v3057 = vcvt.s32.f32 %v1009
    %v3058 = vcvt.s32.f32 %v1010
    %v3059 = vcvt.s32.f32 %v1011
    %v3060 = vcvt.s32.f32 %v1012
    %v3061 = vcvt.s32.f32 %v1013
    %v3062 = vcvt.s32.f32 %v1014
    %v3063 = vcvt.s32.f32 %v1015
    %v3064 = vcvt.s32.f32 %v1016
    %v3065 = vcvt.s32.f32 %v1017
    %v3066 = vcvt.s32.f32 %v1018
    %v3067 = vcvt.s32.f32 %v1019
    %v3068 = vcvt.s32.f32 %v1020
    %v3069 = vcvt.s32.f32 %v1021
    %v3070 = vcvt.s32.f32 %v1022
    %v3071 = vcvt.s32.f32 %v1023
    %v3072 = vcvt.s32.f32 %v1024
    %v3073 = vcvt.s32.f32 %v1025
    %v3074 = vcvt.s32.f32 %v1026
    %v3075 = vcvt.s32.f32 %v1027
    %v3076 = vcvt.s32.f32 %v1028
    %v3077 = vcvt.s32.f32 %v1029
    %v3078 = vcvt.s32.f32 %v1030
    %v3079 = vcvt.s32.f32 %v1031
    %v3080 = vcvt.s32.f32 %v1032
    %v3081 = vcvt.s32.f32 %v1033
    %v3082 = vcvt.s32.f32 %v1034
    %v3083 = vcvt.s32.f32 %v1035
    %v3084 = vcvt.s32.f32 %v1036
    %v3085 = vcvt.s32.f32 %v1037
    %v3086 = vcvt.s32.f32 %v1038
    %v3087 = vcvt.s32.f32 %v1039
    %v3088 = vcvt.s32.f32 %v1040
    %v3089 = vcvt.s32.f32 %v1041
    %v3090 = vcvt.s32.f32 %v1042
    %v3091 = vcvt.s32.f32 %v1043
    %v3092 = vcvt.s32.f32 %v1044
    %v3093 = vcvt.s32.f32 %v1045
    %v3094 = vcvt.s32.f32 %v1046
    %v3095 = vcvt.s32.f32 %v1047
    %v3096 = vcvt.s32.f32 %v1048
    %v3097 = vcvt.s32.f32 %v1049
    %v3098 = vcvt.s32.f32 %v1050
    %v3099 = vcvt.s32.f32 %v1051
    %v3100 = vcvt.s32.f32 %v1052
    %v3101 = vcvt.s32.f32 %v1053
    %v3102 = vcvt.s32.f32 %v1054
    %v3103 = vcvt.s32.f32 %v1055
    %v3104 = vcvt.s32.f32 %v1056
    %v3105 = vcvt.s32.f32 %v1057
    %v3106 = vcvt.s32.f32 %v1058
    %v3107 = vcvt.s32.f32 %v1059
    %v3108 = vcvt.s32.f32 %v1060
    %v3109 = vcvt.s32.f32 %v1061
    %v3110 = vcvt.s32.f32 %v1062
    %v3111 = vcvt.s32.f32 %v1063
    %v3112 = vcvt.s32.f32 %v1064
    %v3113 = vcvt.s32.f32 %v1065
    %v3114 = vcvt.s32.f32 %v1066
    %v3115 = vcvt.s32.f32 %v1067
    %v3116 = vcvt.s32.f32 %v1068
    %v3117 = vcvt.s32.f32 %v1069
    %v3118 = vcvt.s32.f32 %v1070
    %v3119 = vcvt.s32.f32 %v1071
    %v3120 = vcvt.s32.f32 %v1072
    %v3121 = vcvt.s32.f32 %v1073
    %v3122 = vcvt.s32.f32 %v1074
    %v3123 = vcvt.s32.f32 %v1075
    %v3124 = vcvt.s32.f32 %v1076
    %v3125 = vcvt.s32.f32 %v1077
    %v3126 = vcvt.s32.f32 %v1078
    %v3127 = vcvt.s32.f32 %v1079
    %v3128 = vcvt.s32.f32 %v1080
    %v3129 = vcvt.s32.f32 %v1081
    %v3130 = vcvt.s32.f32 %v1082
    %v3131 = vcvt.s32.f32 %v1083
    %v3132 = vcvt.s32.f32 %v1084
    %v3133 = vcvt.s32.f32 %v1085
    %v3134 = vcvt.s32.f32 %v1086
    %v3135 = vcvt.s32.f32 %v1087
    %v3136 = vcvt.s32.f32 %v1088
    %v3137 = vcvt.s32.f32 %v1089
    %v3138 = vcvt.s32.f32 %v1090
    %v3139 = vcvt.s32.f32 %v1091
    %v3140 = vcvt.s32.f32 %v1092
    %v3141 = vcvt.s32.f32 %v1093
    %v3142 = vcvt.s32.f32 %v1094
    %v3143 = vcvt.s32.f32 %v1095
    %v3144 = vcvt.s32.f32 %v1096
    %v3145 = vcvt.s32.f32 %v1097
    %v3146 = vcvt.s32.f32 %v1098
    %v3147 = vcvt.s32.f32 %v1099
    %v3148 = vcvt.s32.f32 %v1100
    %v3149 = vcvt.s32.f32 %v1101
    %v3150 = vcvt.s32.f32 %v1102
    %v3151 = vcvt.s32.f32 %v1103
    %v3152 = vcvt.s32.f32 %v1104
    %v3153 = vcvt.s32.f32 %v1105
    %v3154 = vcvt.s32.f32 %v1106
    %v3155 = vcvt.s32.f32 %v1107
    %v3156 = vcvt.s32.f32 %v1108
    %v3157 = vcvt.s32.f32 %v1109
    %v3158 = vcvt.s32.f32 %v1110
    %v3159 = vcvt.s32.f32 %v1111
    %v3160 = vcvt.s32.f32 %v1112
    %v3161 = vcvt.s32.f32 %v1113
    %v3162 = vcvt.s32.f32 %v1114
    %v3163 = vcvt.s32.f32 %v1115
    %v3164 = vcvt.s32.f32 %v1116
    %v3165 = vcvt.s32.f32 %v1117
    %v3166 = vcvt.s32.f32 %v1118
    %v3167 = vcvt.s32.f32 %v1119
    %v3168 = vcvt.s32.f32 %v1120
    %v3169 = vcvt.s32.f32 %v1121
    %v3170 = vcvt.s32.f32 %v1122
    %v3171 = vcvt.s32.f32 %v1123
    %v3172 = vcvt.s32.f32 %v1124
    %v3173 = vcvt.s32.f32 %v1125
    %v3174 = vcvt.s32.f32 %v1126
    %v3175 = vcvt.s32.f32 %v1127
    %v3176 = vcvt.s32.f32 %v1128
    %v3177 = vcvt.s32.f32 %v1129
    %v3178 = vcvt.s32.f32 %v1130
    %v3179 = vcvt.s32.f32 %v1131
    %v3180 = vcvt.s32.f32 %v1132
    %v3181 = vcvt.s32.f32 %v1133
    %v3182 = vcvt.s32.f32 %v1134
    %v3183 = vcvt.s32.f32 %v1135
    %v3184 = vcvt.s32.f32 %v1136
    %v3185 = vcvt.s32.f32 %v1137
    %v3186 = vcvt.s32.f32 %v1138
    %v3187 = vcvt.s32.f32 %v1139
    %v3188 = vcvt.s32.f32 %v1140
    %v3189 = vcvt.s32.f32 %v1141
    %v3190 = vcvt.s32.f32 %v1142
    %v3191 = vcvt.s32.f32 %v1143
    %v3192 = vcvt.s32.f32 %v1144
    %v3193 = vcvt.s32.f32 %v1145
    %v3194 = vcvt.s32.f32 %v1146
    %v3195 = vcvt.s32.f32 %v1147
    %v3196 = vcvt.s32.f32 %v1148
    %v3197 = vcvt.s32.f32 %v1149
    %v3198 = vcvt.s32.f32 %v1150
    %v3199 = vcvt.s32.f32 %v1151
    %v3200 = vcvt.s32.f32 %v1152
    %v3201 = vcvt.s32.f32 %v1153
    %v3202 = vcvt.s32.f32 %v1154
    %v3203 = vcvt.s32.f32 %v1155
    %v3204 = vcvt.s32.f32 %v1156
    %v3205 = vcvt.s32.f32 %v1157
    %v3206 = vcvt.s32.f32 %v1158
    %v3207 = vcvt.s32.f32 %v1159
    %v3208 = vcvt.s32.f32 %v1160
    %v3209 = vcvt.s32.f32 %v1161
    %v3210 = vcvt.s32.f32 %v1162
    %v3211 = vcvt.s32.f32 %v1163
    %v3212 = vcvt.s32.f32 %v1164
    %v3213 = vcvt.s32.f32 %v1165
    %v3214 = vcvt.s32.f32 %v1166
    %v3215 = vcvt.s32.f32 %v1167
    %v3216 = vcvt.s32.f32 %v1168
    %v3217 = vcvt.s32.f32 %v1169
    %v3218 = vcvt.s32.f32 %v1170
    %v3219 = vcvt.s32.f32 %v1171
    %v3220 = vcvt.s32.f32 %v1172
    %v3221 = vcvt.s32.f32 %v1173
    %v3222 = vcvt.s32.f32 %v1174
    %v3223 = vcvt.s32.f32 %v1175
    %v3224 = vcvt.s32.f32 %v1176
    %v3225 = vcvt.s32.f32 %v1177
    %v3226 = vcvt.s32.f32 %v1178
    %v3227 = vcvt.s32.f32 %v1179
    %v3228 = vcvt.s32.f32 %v1180
    %v3229 = vcvt.s32.f32 %v1181
    %v3230 = vcvt.s32.f32 %v1182
    %v3231 = vcvt.s32.f32 %v1183
    %v3232 = vcvt.s32.f32 %v1184
    %v3233 = vcvt.s32.f32 %v1185
    %v3234 = vcvt.s32.f32 %v1186
    %v3235 = vcvt.s32.f32 %v1187
    %v3236 = vcvt.s32.f32 %v1188
    %v3237 = vcvt.s32.f32 %v1189
    %v3238 = vcvt.s32.f32 %v1190
    %v3239 = vcvt.s32.f32 %v1191
    %v3240 = vcvt.s32.f32 %v1192
    %v3241 = vcvt.s32.f32 %v1193
    %v3242 = vcvt.s32.f32 %v1194
    %v3243 = vcvt.s32.f32 %v1195
    %v3244 = vcvt.s32.f32 %v1196
    %v3245 = vcvt.s32.f32 %v1197
    %v3246 = vcvt.s32.f32 %v1198
    %v3247 = vcvt.s32.f32 %v1199
    %v3248 = vcvt.s32.f32 %v1200
    %v3249 = vcvt.s32.f32 %v1201
    %v3250 = vcvt.s32.f32 %v1202
    %v3251 = vcvt.s32.f32 %v1203
    %v3252 = vcvt.s32.f32 %v1204
    %v3253 = vcvt.s32.f32 %v1205
    %v3254 = vcvt.s32.f32 %v1206
    %v3255 = vcvt.s32.f32 %v1207
    %v3256 = vcvt.s32.f32 %v1208
    %v3257 = vcvt.s32.f32 %v1209
    %v3258 = vcvt.s32.f32 %v1210
    %v3259 = vcvt.s32.f32 %v1211
    %v3260 = vcvt.s32.f32 %v1212
    %v3261 = vcvt.s32.f32 %v1213
    %v3262 = vcvt.s32.f32 %v1214
    %v3263 = vcvt.s32.f32 %v1215
    %v3264 = vcvt.s32.f32 %v1216
    %v3265 = vcvt.s32.f32 %v1217
    %v3266 = vcvt.s32.f32 %v1218
    %v3267 = vcvt.s32.f32 %v1219
    %v3268 = vcvt.s32.f32 %v1220
    %v3269 = vcvt.s32.f32 %v1221
    %v3270 = vcvt.s32.f32 %v1222
    %v3271 = vcvt.s32.f32 %v1223
    %v3272 = vcvt.s32.f32 %v1224
    %v3273 = vcvt.s32.f32 %v1225
    %v3274 = vcvt.s32.f32 %v1226
    %v3275 = vcvt.s32.f32 %v1227
    %v3276 = vcvt.s32.f32 %v1228
    %v3277 = vcvt.s32.f32 %v1229
    %v3278 = vcvt.s32.f32 %v1230
    %v3279 = vcvt.s32.f32 %v1231
    %v3280 = vcvt.s32.f32 %v1232
    %v3281 = vcvt.s32.f32 %v1233
    %v3282 = vcvt.s32.f32 %v1234
    %v3283 = vcvt.s32.f32 %v1235
    %v3284 = vcvt.s32.f32 %v1236
    %v3285 = vcvt.s32.f32 %v1237
    %v3286 = vcvt.s32.f32 %v1238
    %v3287 = vcvt.s32.f32 %v1239
    %v3288 = vcvt.s32.f32 %v1240
    %v3289 = vcvt.s32.f32 %v1241
    %v3290 = vcvt.s32.f32 %v1242
    %v3291 = vcvt.s32.f32 %v1243
    %v3292 = vcvt.s32.f32 %v1244
    %v3293 = vcvt.s32.f32 %v1245
    %v3294 = vcvt.s32.f32 %v1246
    %v3295 = vcvt.s32.f32 %v1247
    %v3296 = vcvt.s32.f32 %v1248
    %v3297 = vcvt.s32.f32 %v1249
    %v3298 = vcvt.s32.f32 %v1250
    %v3299 = vcvt.s32.f32 %v1251
    %v3300 = vcvt.s32.f32 %v1252
    %v3301 = vcvt.s32.f32 %v1253
    %v3302 = vcvt.s32.f32 %v1254
    %v3303 = vcvt.s32.f32 %v1255
    %v3304 = vcvt.s32.f32 %v1256
    %v3305 = vcvt.s32.f32 %v1257
    %v3306 = vcvt.s32.f32 %v1258
    %v3307 = vcvt.s32.f32 %v1259
    %v3308 = vcvt.s32.f32 %v1260
    %v3309 = vcvt.s32.f32 %v1261
    %v3310 = vcvt.s32.f32 %v1262
    %v3311 = vcvt.s32.f32 %v1263
    %v3312 = vcvt.s32.f32 %v1264
    %v3313 = vcvt.s32.f32 %v1265
    %v3314 = vcvt.s32.f32 %v1266
    %v3315 = vcvt.s32.f32 %v1267
    %v3316 = vcvt.s32.f32 %v1268
    %v3317 = vcvt.s32.f32 %v1269
    %v3318 = vcvt.s32.f32 %v1270
    %v3319 = vcvt.s32.f32 %v1271
    %v3320 = vcvt.s32.f32 %v1272
    %v3321 = vcvt.s32.f32 %v1273
    %v3322 = vcvt.s32.f32 %v1274
    %v3323 = vcvt.s32.f32 %v1275
    %v3324 = vcvt.s32.f32 %v1276
    %v3325 = vcvt.s32.f32 %v1277
    %v3326 = vcvt.s32.f32 %v1278
    %v3327 = vcvt.s32.f32 %v1279
    %v3328 = vcvt.s32.f32 %v1280
    %v3329 = vcvt.s32.f32 %v1281
    %v3330 = vcvt.s32.f32 %v1282
    %v3331 = vcvt.s32.f32 %v1283
    %v3332 = vcvt.s32.f32 %v1284
    %v3333 = vcvt.s32.f32 %v1285
    %v3334 = vcvt.s32.f32 %v1286
    %v3335 = vcvt.s32.f32 %v1287
    %v3336 = vcvt.s32.f32 %v1288
    %v3337 = vcvt.s32.f32 %v1289
    %v3338 = vcvt.s32.f32 %v1290
    %v3339 = vcvt.s32.f32 %v1291
    %v3340 = vcvt.s32.f32 %v1292
    %v3341 = vcvt.s32.f32 %v1293
    %v3342 = vcvt.s32.f32 %v1294
    %v3343 = vcvt.s32.f32 %v1295
    %v3344 = vcvt.s32.f32 %v1296
    %v3345 = vcvt.s32.f32 %v1297
    %v3346 = vcvt.s32.f32 %v1298
    %v3347 = vcvt.s32.f32 %v1299
    %v3348 = vcvt.s32.f32 %v1300
    %v3349 = vcvt.s32.f32 %v1301
    %v3350 = vcvt.s32.f32 %v1302
    %v3351 = vcvt.s32.f32 %v1303
    %v3352 = vcvt.s32.f32 %v1304
    %v3353 = vcvt.s32.f32 %v1305
    %v3354 = vcvt.s32.f32 %v1306
    %v3355 = vcvt.s32.f32 %v1307
    %v3356 = vcvt.s32.f32 %v1308
    %v3357 = vcvt.s32.f32 %v1309
    %v3358 = vcvt.s32.f32 %v1310
    %v3359 = vcvt.s32.f32 %v1311
    %v3360 = vcvt.s32.f32 %v1312
    %v3361 = vcvt.s32.f32 %v1313
    %v3362 = vcvt.s32.f32 %v1314
    %v3363 = vcvt.s32.f32 %v1315
    %v3364 = vcvt.s32.f32 %v1316
    %v3365 = vcvt.s32.f32 %v1317
    %v3366 = vcvt.s32.f32 %v1318
    %v3367 = vcvt.s32.f32 %v1319
    %v3368 = vcvt.s32.f32 %v1320
    %v3369 = vcvt.s32.f32 %v1321
    %v3370 = vcvt.s32.f32 %v1322
    %v3371 = vcvt.s32.f32 %v1323
    %v3372 = vcvt.s32.f32 %v1324
    %v3373 = vcvt.s32.f32 %v1325
    %v3374 = vcvt.s32.f32 %v1326
    %v3375 = vcvt.s32.f32 %v1327
    %v3376 = vcvt.s32.f32 %v1328
    %v3377 = vcvt.s32.f32 %v1329
    %v3378 = vcvt.s32.f32 %v1330
    %v3379 = vcvt.s32.f32 %v1331
    %v3380 = vcvt.s32.f32 %v1332
    %v3381 = vcvt.s32.f32 %v1333
    %v3382 = vcvt.s32.f32 %v1334
    %v3383 = vcvt.s32.f32 %v1335
    %v3384 = vcvt.s32.f32 %v1336
    %v3385 = vcvt.s32.f32 %v1337
    %v3386 = vcvt.s32.f32 %v1338
    %v3387 = vcvt.s32.f32 %v1339
    %v3388 = vcvt.s32.f32 %v1340
    %v3389 = vcvt.s32.f32 %v1341
    %v3390 = vcvt.s32.f32 %v1342
    %v3391 = vcvt.s32.f32 %v1343
    %v3392 = vcvt.s32.f32 %v1344
    %v3393 = vcvt.s32.f32 %v1345
    %v3394 = vcvt.s32.f32 %v1346
    %v3395 = vcvt.s32.f32 %v1347
    %v3396 = vcvt.s32.f32 %v1348
    %v3397 = vcvt.s32.f32 %v1349
    %v3398 = vcvt.s32.f32 %v1350
    %v3399 = vcvt.s32.f32 %v1351
    %v3400 = vcvt.s32.f32 %v1352
    %v3401 = vcvt.s32.f32 %v1353
    %v3402 = vcvt.s32.f32 %v1354
    %v3403 = vcvt.s32.f32 %v1355
    %v3404 = vcvt.s32.f32 %v1356
    %v3405 = vcvt.s32.f32 %v1357
    %v3406 = vcvt.s32.f32 %v1358
    %v3407 = vcvt.s32.f32 %v1359
    %v3408 = vcvt.s32.f32 %v1360
    %v3409 = vcvt.s32.f32 %v1361
    %v3410 = vcvt.s32.f32 %v1362
    %v3411 = vcvt.s32.f32 %v1363
    %v3412 = vcvt.s32.f32 %v1364
    %v3413 = vcvt.s32.f32 %v1365
    %v3414 = vcvt.s32.f32 %v1366
    %v3415 = vcvt.s32.f32 %v1367
    %v3416 = vcvt.s32.f32 %v1368
    %v3417 = vcvt.s32.f32 %v1369
    %v3418 = vcvt.s32.f32 %v1370
    %v3419 = vcvt.s32.f32 %v1371
    %v3420 = vcvt.s32.f32 %v1372
    %v3421 = vcvt.s32.f32 %v1373
    %v3422 = vcvt.s32.f32 %v1374
    %v3423 = vcvt.s32.f32 %v1375
    %v3424 = vcvt.s32.f32 %v1376
    %v3425 = vcvt.s32.f32 %v1377
    %v3426 = vcvt.s32.f32 %v1378
    %v3427 = vcvt.s32.f32 %v1379
    %v3428 = vcvt.s32.f32 %v1380
    %v3429 = vcvt.s32.f32 %v1381
    %v3430 = vcvt.s32.f32 %v1382
    %v3431 = vcvt.s32.f32 %v1383
    %v3432 = vcvt.s32.f32 %v1384
    %v3433 = vcvt.s32.f32 %v1385
    %v3434 = vcvt.s32.f32 %v1386
    %v3435 = vcvt.s32.f32 %v1387
    %v3436 = vcvt.s32.f32 %v1388
    %v3437 = vcvt.s32.f32 %v1389
    %v3438 = vcvt.s32.f32 %v1390
    %v3439 = vcvt.s32.f32 %v1391
    %v3440 = vcvt.s32.f32 %v1392
    %v3441 = vcvt.s32.f32 %v1393
    %v3442 = vcvt.s32.f32 %v1394
    %v3443 = vcvt.s32.f32 %v1395
    %v3444 = vcvt.s32.f32 %v1396
    %v3445 = vcvt.s32.f32 %v1397
    %v3446 = vcvt.s32.f32 %v1398
    %v3447 = vcvt.s32.f32 %v1399
    %v3448 = vcvt.s32.f32 %v1400
    %v3449 = vcvt.s32.f32 %v1401
    %v3450 = vcvt.s32.f32 %v1402
    %v3451 = vcvt.s32.f32 %v1403
    %v3452 = vcvt.s32.f32 %v1404
    %v3453 = vcvt.s32.f32 %v1405
    %v3454 = vcvt.s32.f32 %v1406
    %v3455 = vcvt.s32.f32 %v1407
    %v3456 = vcvt.s32.f32 %v1408
    %v3457 = vcvt.s32.f32 %v1409
    %v3458 = vcvt.s32.f32 %v1410
    %v3459 = vcvt.s32.f32 %v1411
    %v3460 = vcvt.s32.f32 %v1412
    %v3461 = vcvt.s32.f32 %v1413
    %v3462 = vcvt.s32.f32 %v1414
    %v3463 = vcvt.s32.f32 %v1415
    %v3464 = vcvt.s32.f32 %v1416
    %v3465 = vcvt.s32.f32 %v1417
    %v3466 = vcvt.s32.f32 %v1418
    %v3467 = vcvt.s32.f32 %v1419
    %v3468 = vcvt.s32.f32 %v1420
    %v3469 = vcvt.s32.f32 %v1421
    %v3470 = vcvt.s32.f32 %v1422
    %v3471 = vcvt.s32.f32 %v1423
    %v3472 = vcvt.s32.f32 %v1424
    %v3473 = vcvt.s32.f32 %v1425
    %v3474 = vcvt.s32.f32 %v1426
    %v3475 = vcvt.s32.f32 %v1427
    %v3476 = vcvt.s32.f32 %v1428
    %v3477 = vcvt.s32.f32 %v1429
    %v3478 = vcvt.s32.f32 %v1430
    %v3479 = vcvt.s32.f32 %v1431
    %v3480 = vcvt.s32.f32 %v1432
    %v3481 = vcvt.s32.f32 %v1433
    %v3482 = vcvt.s32.f32 %v1434
    %v3483 = vcvt.s32.f32 %v1435
    %v3484 = vcvt.s32.f32 %v1436
    %v3485 = vcvt.s32.f32 %v1437
    %v3486 = vcvt.s32.f32 %v1438
    %v3487 = vcvt.s32.f32 %v1439
    %v3488 = vcvt.s32.f32 %v1440
    %v3489 = vcvt.s32.f32 %v1441
    %v3490 = vcvt.s32.f32 %v1442
    %v3491 = vcvt.s32.f32 %v1443
    %v3492 = vcvt.s32.f32 %v1444
    %v3493 = vcvt.s32.f32 %v1445
    %v3494 = vcvt.s32.f32 %v1446
    %v3495 = vcvt.s32.f32 %v1447
    %v3496 = vcvt.s32.f32 %v1448
    %v3497 = vcvt.s32.f32 %v1449
    %v3498 = vcvt.s32.f32 %v1450
    %v3499 = vcvt.s32.f32 %v1451
    %v3500 = vcvt.s32.f32 %v1452
    %v3501 = vcvt.s32.f32 %v1453
    %v3502 = vcvt.s32.f32 %v1454
    %v3503 = vcvt.s32.f32 %v1455
    %v3504 = vcvt.s32.f32 %v1456
    %v3505 = vcvt.s32.f32 %v1457
    %v3506 = vcvt.s32.f32 %v1458
    %v3507 = vcvt.s32.f32 %v1459
    %v3508 = vcvt.s32.f32 %v1460
    %v3509 = vcvt.s32.f32 %v1461
    %v3510 = vcvt.s32.f32 %v1462
    %v3511 = vcvt.s32.f32 %v1463
    %v3512 = vcvt.s32.f32 %v1464
    %v3513 = vcvt.s32.f32 %v1465
    %v3514 = vcvt.s32.f32 %v1466
    %v3515 = vcvt.s32.f32 %v1467
    %v3516 = vcvt.s32.f32 %v1468
    %v3517 = vcvt.s32.f32 %v1469
    %v3518 = vcvt.s32.f32 %v1470
    %v3519 = vcvt.s32.f32 %v1471
    %v3520 = vcvt.s32.f32 %v1472
    %v3521 = vcvt.s32.f32 %v1473
    %v3522 = vcvt.s32.f32 %v1474
    %v3523 = vcvt.s32.f32 %v1475
    %v3524 = vcvt.s32.f32 %v1476
    %v3525 = vcvt.s32.f32 %v1477
    %v3526 = vcvt.s32.f32 %v1478
    %v3527 = vcvt.s32.f32 %v1479
    %v3528 = vcvt.s32.f32 %v1480
    %v3529 = vcvt.s32.f32 %v1481
    %v3530 = vcvt.s32.f32 %v1482
    %v3531 = vcvt.s32.f32 %v1483
    %v3532 = vcvt.s32.f32 %v1484
    %v3533 = vcvt.s32.f32 %v1485
    %v3534 = vcvt.s32.f32 %v1486
    %v3535 = vcvt.s32.f32 %v1487
    %v3536 = vcvt.s32.f32 %v1488
    %v3537 = vcvt.s32.f32 %v1489
    %v3538 = vcvt.s32.f32 %v1490
    %v3539 = vcvt.s32.f32 %v1491
    %v3540 = vcvt.s32.f32 %v1492
    %v3541 = vcvt.s32.f32 %v1493
    %v3542 = vcvt.s32.f32 %v1494
    %v3543 = vcvt.s32.f32 %v1495
    %v3544 = vcvt.s32.f32 %v1496
    %v3545 = vcvt.s32.f32 %v1497
    %v3546 = vcvt.s32.f32 %v1498
    %v3547 = vcvt.s32.f32 %v1499
    %v3548 = vcvt.s32.f32 %v1500
    %v3549 = vcvt.s32.f32 %v1501
    %v3550 = vcvt.s32.f32 %v1502
    %v3551 = vcvt.s32.f32 %v1503
    %v3552 = vcvt.s32.f32 %v1504
    %v3553 = vcvt.s32.f32 %v1505
    %v3554 = vcvt.s32.f32 %v1506
    %v3555 = vcvt.s32.f32 %v1507
    %v3556 = vcvt.s32.f32 %v1508
    %v3557 = vcvt.s32.f32 %v1509
    %v3558 = vcvt.s32.f32 %v1510
    %v3559 = vcvt.s32.f32 %v1511
    %v3560 = vcvt.s32.f32 %v1512
    %v3561 = vcvt.s32.f32 %v1513
    %v3562 = vcvt.s32.f32 %v1514
    %v3563 = vcvt.s32.f32 %v1515
    %v3564 = vcvt.s32.f32 %v1516
    %v3565 = vcvt.s32.f32 %v1517
    %v3566 = vcvt.s32.f32 %v1518
    %v3567 = vcvt.s32.f32 %v1519
    %v3568 = vcvt.s32.f32 %v1520
    %v3569 = vcvt.s32.f32 %v1521
    %v3570 = vcvt.s32.f32 %v1522
    %v3571 = vcvt.s32.f32 %v1523
    %v3572 = vcvt.s32.f32 %v1524
    %v3573 = vcvt.s32.f32 %v1525
    %v3574 = vcvt.s32.f32 %v1526
    %v3575 = vcvt.s32.f32 %v1527
    %v3576 = vcvt.s32.f32 %v1528
    %v3577 = vcvt.s32.f32 %v1529
    %v3578 = vcvt.s32.f32 %v1530
    %v3579 = vcvt.s32.f32 %v1531
    %v3580 = vcvt.s32.f32 %v1532
    %v3581 = vcvt.s32.f32 %v1533
    %v3582 = vcvt.s32.f32 %v1534
    %v3583 = vcvt.s32.f32 %v1535
    %v3584 = vcvt.s32.f32 %v1536
    %v3585 = vcvt.s32.f32 %v1537
    %v3586 = vcvt.s32.f32 %v1538
    %v3587 = vcvt.s32.f32 %v1539
    %v3588 = vcvt.s32.f32 %v1540
    %v3589 = vcvt.s32.f32 %v1541
    %v3590 = vcvt.s32.f32 %v1542
    %v3591 = vcvt.s32.f32 %v1543
    %v3592 = vcvt.s32.f32 %v1544
    %v3593 = vcvt.s32.f32 %v1545
    %v3594 = vcvt.s32.f32 %v1546
    %v3595 = vcvt.s32.f32 %v1547
    %v3596 = vcvt.s32.f32 %v1548
    %v3597 = vcvt.s32.f32 %v1549
    %v3598 = vcvt.s32.f32 %v1550
    %v3599 = vcvt.s32.f32 %v1551
    %v3600 = vcvt.s32.f32 %v1552
    %v3601 = vcvt.s32.f32 %v1553
    %v3602 = vcvt.s32.f32 %v1554
    %v3603 = vcvt.s32.f32 %v1555
    %v3604 = vcvt.s32.f32 %v1556
    %v3605 = vcvt.s32.f32 %v1557
    %v3606 = vcvt.s32.f32 %v1558
    %v3607 = vcvt.s32.f32 %v1559
    %v3608 = vcvt.s32.f32 %v1560
    %v3609 = vcvt.s32.f32 %v1561
    %v3610 = vcvt.s32.f32 %v1562
    %v3611 = vcvt.s32.f32 %v1563
    %v3612 = vcvt.s32.f32 %v1564
    %v3613 = vcvt.s32.f32 %v1565
    %v3614 = vcvt.s32.f32 %v1566
    %v3615 = vcvt.s32.f32 %v1567
    %v3616 = vcvt.s32.f32 %v1568
    %v3617 = vcvt.s32.f32 %v1569
    %v3618 = vcvt.s32.f32 %v1570
    %v3619 = vcvt.s32.f32 %v1571
    %v3620 = vcvt.s32.f32 %v1572
    %v3621 = vcvt.s32.f32 %v1573
    %v3622 = vcvt.s32.f32 %v1574
    %v3623 = vcvt.s32.f32 %v1575
    %v3624 = vcvt.s32.f32 %v1576
    %v3625 = vcvt.s32.f32 %v1577
    %v3626 = vcvt.s32.f32 %v1578
    %v3627 = vcvt.s32.f32 %v1579
    %v3628 = vcvt.s32.f32 %v1580
    %v3629 = vcvt.s32.f32 %v1581
    %v3630 = vcvt.s32.f32 %v1582
    %v3631 = vcvt.s32.f32 %v1583
    %v3632 = vcvt.s32.f32 %v1584
    %v3633 = vcvt.s32.f32 %v1585
    %v3634 = vcvt.s32.f32 %v1586
    %v3635 = vcvt.s32.f32 %v1587
    %v3636 = vcvt.s32.f32 %v1588
    %v3637 = vcvt.s32.f32 %v1589
    %v3638 = vcvt.s32.f32 %v1590
    %v3639 = vcvt.s32.f32 %v1591
    %v3640 = vcvt.s32.f32 %v1592
    %v3641 = vcvt.s32.f32 %v1593
    %v3642 = vcvt.s32.f32 %v1594
    %v3643 = vcvt.s32.f32 %v1595
    %v3644 = vcvt.s32.f32 %v1596
    %v3645 = vcvt.s32.f32 %v1597
    %v3646 = vcvt.s32.f32 %v1598
    %v3647 = vcvt.s32.f32 %v1599
    %v3648 = vcvt.s32.f32 %v1600
    %v3649 = vcvt.s32.f32 %v1601
    %v3650 = vcvt.s32.f32 %v1602
    %v3651 = vcvt.s32.f32 %v1603
    %v3652 = vcvt.s32.f32 %v1604
    %v3653 = vcvt.s32.f32 %v1605
    %v3654 = vcvt.s32.f32 %v1606
    %v3655 = vcvt.s32.f32 %v1607
    %v3656 = vcvt.s32.f32 %v1608
    %v3657 = vcvt.s32.f32 %v1609
    %v3658 = vcvt.s32.f32 %v1610
    %v3659 = vcvt.s32.f32 %v1611
    %v3660 = vcvt.s32.f32 %v1612
    %v3661 = vcvt.s32.f32 %v1613
    %v3662 = vcvt.s32.f32 %v1614
    %v3663 = vcvt.s32.f32 %v1615
    %v3664 = vcvt.s32.f32 %v1616
    %v3665 = vcvt.s32.f32 %v1617
    %v3666 = vcvt.s32.f32 %v1618
    %v3667 = vcvt.s32.f32 %v1619
    %v3668 = vcvt.s32.f32 %v1620
    %v3669 = vcvt.s32.f32 %v1621
    %v3670 = vcvt.s32.f32 %v1622
    %v3671 = vcvt.s32.f32 %v1623
    %v3672 = vcvt.s32.f32 %v1624
    %v3673 = vcvt.s32.f32 %v1625
    %v3674 = vcvt.s32.f32 %v1626
    %v3675 = vcvt.s32.f32 %v1627
    %v3676 = vcvt.s32.f32 %v1628
    %v3677 = vcvt.s32.f32 %v1629
    %v3678 = vcvt.s32.f32 %v1630
    %v3679 = vcvt.s32.f32 %v1631
    %v3680 = vcvt.s32.f32 %v1632
    %v3681 = vcvt.s32.f32 %v1633
    %v3682 = vcvt.s32.f32 %v1634
    %v3683 = vcvt.s32.f32 %v1635
    %v3684 = vcvt.s32.f32 %v1636
    %v3685 = vcvt.s32.f32 %v1637
    %v3686 = vcvt.s32.f32 %v1638
    %v3687 = vcvt.s32.f32 %v1639
    %v3688 = vcvt.s32.f32 %v1640
    %v3689 = vcvt.s32.f32 %v1641
    %v3690 = vcvt.s32.f32 %v1642
    %v3691 = vcvt.s32.f32 %v1643
    %v3692 = vcvt.s32.f32 %v1644
    %v3693 = vcvt.s32.f32 %v1645
    %v3694 = vcvt.s32.f32 %v1646
    %v3695 = vcvt.s32.f32 %v1647
    %v3696 = vcvt.s32.f32 %v1648
    %v3697 = vcvt.s32.f32 %v1649
    %v3698 = vcvt.s32.f32 %v1650
    %v3699 = vcvt.s32.f32 %v1651
    %v3700 = vcvt.s32.f32 %v1652
    %v3701 = vcvt.s32.f32 %v1653
    %v3702 = vcvt.s32.f32 %v1654
    %v3703 = vcvt.s32.f32 %v1655
    %v3704 = vcvt.s32.f32 %v1656
    %v3705 = vcvt.s32.f32 %v1657
    %v3706 = vcvt.s32.f32 %v1658
    %v3707 = vcvt.s32.f32 %v1659
    %v3708 = vcvt.s32.f32 %v1660
    %v3709 = vcvt.s32.f32 %v1661
    %v3710 = vcvt.s32.f32 %v1662
    %v3711 = vcvt.s32.f32 %v1663
    %v3712 = vcvt.s32.f32 %v1664
    %v3713 = vcvt.s32.f32 %v1665
    %v3714 = vcvt.s32.f32 %v1666
    %v3715 = vcvt.s32.f32 %v1667
    %v3716 = vcvt.s32.f32 %v1668
    %v3717 = vcvt.s32.f32 %v1669
    %v3718 = vcvt.s32.f32 %v1670
    %v3719 = vcvt.s32.f32 %v1671
    %v3720 = vcvt.s32.f32 %v1672
    %v3721 = vcvt.s32.f32 %v1673
    %v3722 = vcvt.s32.f32 %v1674
    %v3723 = vcvt.s32.f32 %v1675
    %v3724 = vcvt.s32.f32 %v1676
    %v3725 = vcvt.s32.f32 %v1677
    %v3726 = vcvt.s32.f32 %v1678
    %v3727 = vcvt.s32.f32 %v1679
    %v3728 = vcvt.s32.f32 %v1680
    %v3729 = vcvt.s32.f32 %v1681
    %v3730 = vcvt.s32.f32 %v1682
    %v3731 = vcvt.s32.f32 %v1683
    %v3732 = vcvt.s32.f32 %v1684
    %v3733 = vcvt.s32.f32 %v1685
    %v3734 = vcvt.s32.f32 %v1686
    %v3735 = vcvt.s32.f32 %v1687
    %v3736 = vcvt.s32.f32 %v1688
    %v3737 = vcvt.s32.f32 %v1689
    %v3738 = vcvt.s32.f32 %v1690
    %v3739 = vcvt.s32.f32 %v1691
    %v3740 = vcvt.s32.f32 %v1692
    %v3741 = vcvt.s32.f32 %v1693
    %v3742 = vcvt.s32.f32 %v1694
    %v3743 = vcvt.s32.f32 %v1695
    %v3744 = vcvt.s32.f32 %v1696
    %v3745 = vcvt.s32.f32 %v1697
    %v3746 = vcvt.s32.f32 %v1698
    %v3747 = vcvt.s32.f32 %v1699
    %v3748 = vcvt.s32.f32 %v1700
    %v3749 = vcvt.s32.f32 %v1701
    %v3750 = vcvt.s32.f32 %v1702
    %v3751 = vcvt.s32.f32 %v1703
    %v3752 = vcvt.s32.f32 %v1704
    %v3753 = vcvt.s32.f32 %v1705
    %v3754 = vcvt.s32.f32 %v1706
    %v3755 = vcvt.s32.f32 %v1707
    %v3756 = vcvt.s32.f32 %v1708
    %v3757 = vcvt.s32.f32 %v1709
    %v3758 = vcvt.s32.f32 %v1710
    %v3759 = vcvt.s32.f32 %v1711
    %v3760 = vcvt.s32.f32 %v1712
    %v3761 = vcvt.s32.f32 %v1713
    %v3762 = vcvt.s32.f32 %v1714
    %v3763 = vcvt.s32.f32 %v1715
    %v3764 = vcvt.s32.f32 %v1716
    %v3765 = vcvt.s32.f32 %v1717
    %v3766 = vcvt.s32.f32 %v1718
    %v3767 = vcvt.s32.f32 %v1719
    %v3768 = vcvt.s32.f32 %v1720
    %v3769 = vcvt.s32.f32 %v1721
    %v3770 = vcvt.s32.f32 %v1722
    %v3771 = vcvt.s32.f32 %v1723
    %v3772 = vcvt.s32.f32 %v1724
    %v3773 = vcvt.s32.f32 %v1725
    %v3774 = vcvt.s32.f32 %v1726
    %v3775 = vcvt.s32.f32 %v1727
    %v3776 = vcvt.s32.f32 %v1728
    %v3777 = vcvt.s32.f32 %v1729
    %v3778 = vcvt.s32.f32 %v1730
    %v3779 = vcvt.s32.f32 %v1731
    %v3780 = vcvt.s32.f32 %v1732
    %v3781 = vcvt.s32.f32 %v1733
    %v3782 = vcvt.s32.f32 %v1734
    %v3783 = vcvt.s32.f32 %v1735
    %v3784 = vcvt.s32.f32 %v1736
    %v3785 = vcvt.s32.f32 %v1737
    %v3786 = vcvt.s32.f32 %v1738
    %v3787 = vcvt.s32.f32 %v1739
    %v3788 = vcvt.s32.f32 %v1740
    %v3789 = vcvt.s32.f32 %v1741
    %v3790 = vcvt.s32.f32 %v1742
    %v3791 = vcvt.s32.f32 %v1743
    %v3792 = vcvt.s32.f32 %v1744
    %v3793 = vcvt.s32.f32 %v1745
    %v3794 = vcvt.s32.f32 %v1746
    %v3795 = vcvt.s32.f32 %v1747
    %v3796 = vcvt.s32.f32 %v1748
    %v3797 = vcvt.s32.f32 %v1749
    %v3798 = vcvt.s32.f32 %v1750
    %v3799 = vcvt.s32.f32 %v1751
    %v3800 = vcvt.s32.f32 %v1752
    %v3801 = vcvt.s32.f32 %v1753
    %v3802 = vcvt.s32.f32 %v1754
    %v3803 = vcvt.s32.f32 %v1755
    %v3804 = vcvt.s32.f32 %v1756
    %v3805 = vcvt.s32.f32 %v1757
    %v3806 = vcvt.s32.f32 %v1758
    %v3807 = vcvt.s32.f32 %v1759
    %v3808 = vcvt.s32.f32 %v1760
    %v3809 = vcvt.s32.f32 %v1761
    %v3810 = vcvt.s32.f32 %v1762
    %v3811 = vcvt.s32.f32 %v1763
    %v3812 = vcvt.s32.f32 %v1764
    %v3813 = vcvt.s32.f32 %v1765
    %v3814 = vcvt.s32.f32 %v1766
    %v3815 = vcvt.s32.f32 %v1767
    %v3816 = vcvt.s32.f32 %v1768
    %v3817 = vcvt.s32.f32 %v1769
    %v3818 = vcvt.s32.f32 %v1770
    %v3819 = vcvt.s32.f32 %v1771
    %v3820 = vcvt.s32.f32 %v1772
    %v3821 = vcvt.s32.f32 %v1773
    %v3822 = vcvt.s32.f32 %v1774
    %v3823 = vcvt.s32.f32 %v1775
    %v3824 = vcvt.s32.f32 %v1776
    %v3825 = vcvt.s32.f32 %v1777
    %v3826 = vcvt.s32.f32 %v1778
    %v3827 = vcvt.s32.f32 %v1779
    %v3828 = vcvt.s32.f32 %v1780
    %v3829 = vcvt.s32.f32 %v1781
    %v3830 = vcvt.s32.f32 %v1782
    %v3831 = vcvt.s32.f32 %v1783
    %v3832 = vcvt.s32.f32 %v1784
    %v3833 = vcvt.s32.f32 %v1785
    %v3834 = vcvt.s32.f32 %v1786
    %v3835 = vcvt.s32.f32 %v1787
    %v3836 = vcvt.s32.f32 %v1788
    %v3837 = vcvt.s32.f32 %v1789
    %v3838 = vcvt.s32.f32 %v1790
    %v3839 = vcvt.s32.f32 %v1791
    %v3840 = vcvt.s32.f32 %v1792
    %v3841 = vcvt.s32.f32 %v1793
    %v3842 = vcvt.s32.f32 %v1794
    %v3843 = vcvt.s32.f32 %v1795
    %v3844 = vcvt.s32.f32 %v1796
    %v3845 = vcvt.s32.f32 %v1797
    %v3846 = vcvt.s32.f32 %v1798
    %v3847 = vcvt.s32.f32 %v1799
    %v3848 = vcvt.s32.f32 %v1800
    %v3849 = vcvt.s32.f32 %v1801
    %v3850 = vcvt.s32.f32 %v1802
    %v3851 = vcvt.s32.f32 %v1803
    %v3852 = vcvt.s32.f32 %v1804
    %v3853 = vcvt.s32.f32 %v1805
    %v3854 = vcvt.s32.f32 %v1806
    %v3855 = vcvt.s32.f32 %v1807
    %v3856 = vcvt.s32.f32 %v1808
    %v3857 = vcvt.s32.f32 %v1809
    %v3858 = vcvt.s32.f32 %v1810
    %v3859 = vcvt.s32.f32 %v1811
    %v3860 = vcvt.s32.f32 %v1812
    %v3861 = vcvt.s32.f32 %v1813
    %v3862 = vcvt.s32.f32 %v1814
    %v3863 = vcvt.s32.f32 %v1815
    %v3864 = vcvt.s32.f32 %v1816
    %v3865 = vcvt.s32.f32 %v1817
    %v3866 = vcvt.s32.f32 %v1818
    %v3867 = vcvt.s32.f32 %v1819
    %v3868 = vcvt.s32.f32 %v1820
    %v3869 = vcvt.s32.f32 %v1821
    %v3870 = vcvt.s32.f32 %v1822
    %v3871 = vcvt.s32.f32 %v1823
    %v3872 = vcvt.s32.f32 %v1824
    %v3873 = vcvt.s32.f32 %v1825
    %v3874 = vcvt.s32.f32 %v1826
    %v3875 = vcvt.s32.f32 %v1827
    %v3876 = vcvt.s32.f32 %v1828
    %v3877 = vcvt.s32.f32 %v1829
    %v3878 = vcvt.s32.f32 %v1830
    %v3879 = vcvt.s32.f32 %v1831
    %v3880 = vcvt.s32.f32 %v1832
    %v3881 = vcvt.s32.f32 %v1833
    %v3882 = vcvt.s32.f32 %v1834
    %v3883 = vcvt.s32.f32 %v1835
    %v3884 = vcvt.s32.f32 %v1836
    %v3885 = vcvt.s32.f32 %v1837
    %v3886 = vcvt.s32.f32 %v1838
    %v3887 = vcvt.s32.f32 %v1839
    %v3888 = vcvt.s32.f32 %v1840
    %v3889 = vcvt.s32.f32 %v1841
    %v3890 = vcvt.s32.f32 %v1842
    %v3891 = vcvt.s32.f32 %v1843
    %v3892 = vcvt.s32.f32 %v1844
    %v3893 = vcvt.s32.f32 %v1845
    %v3894 = vcvt.s32.f32 %v1846
    %v3895 = vcvt.s32.f32 %v1847
    %v3896 = vcvt.s32.f32 %v1848
    %v3897 = vcvt.s32.f32 %v1849
    %v3898 = vcvt.s32.f32 %v1850
    %v3899 = vcvt.s32.f32 %v1851
    %v3900 = vcvt.s32.f32 %v1852
    %v3901 = vcvt.s32.f32 %v1853
    %v3902 = vcvt.s32.f32 %v1854
    %v3903 = vcvt.s32.f32 %v1855
    %v3904 = vcvt.s32.f32 %v1856
    %v3905 = vcvt.s32.f32 %v1857
    %v3906 = vcvt.s32.f32 %v1858
    %v3907 = vcvt.s32.f32 %v1859
    %v3908 = vcvt.s32.f32 %v1860
    %v3909 = vcvt.s32.f32 %v1861
    %v3910 = vcvt.s32.f32 %v1862
    %v3911 = vcvt.s32.f32 %v1863
    %v3912 = vcvt.s32.f32 %v1864
    %v3913 = vcvt.s32.f32 %v1865
    %v3914 = vcvt.s32.f32 %v1866
    %v3915 = vcvt.s32.f32 %v1867
    %v3916 = vcvt.s32.f32 %v1868
    %v3917 = vcvt.s32.f32 %v1869
    %v3918 = vcvt.s32.f32 %v1870
    %v3919 = vcvt.s32.f32 %v1871
    %v3920 = vcvt.s32.f32 %v1872
    %v3921 = vcvt.s32.f32 %v1873
    %v3922 = vcvt.s32.f32 %v1874
    %v3923 = vcvt.s32.f32 %v1875
    %v3924 = vcvt.s32.f32 %v1876
    %v3925 = vcvt.s32.f32 %v1877
    %v3926 = vcvt.s32.f32 %v1878
    %v3927 = vcvt.s32.f32 %v1879
    %v3928 = vcvt.s32.f32 %v1880
    %v3929 = vcvt.s32.f32 %v1881
    %v3930 = vcvt.s32.f32 %v1882
    %v3931 = vcvt.s32.f32 %v1883
    %v3932 = vcvt.s32.f32 %v1884
    %v3933 = vcvt.s32.f32 %v1885
    %v3934 = vcvt.s32.f32 %v1886
    %v3935 = vcvt.s32.f32 %v1887
    %v3936 = vcvt.s32.f32 %v1888
    %v3937 = vcvt.s32.f32 %v1889
    %v3938 = vcvt.s32.f32 %v1890
    %v3939 = vcvt.s32.f32 %v1891
    %v3940 = vcvt.s32.f32 %v1892
    %v3941 = vcvt.s32.f32 %v1893
    %v3942 = vcvt.s32.f32 %v1894
    %v3943 = vcvt.s32.f32 %v1895
    %v3944 = vcvt.s32.f32 %v1896
    %v3945 = vcvt.s32.f32 %v1897
    %v3946 = vcvt.s32.f32 %v1898
    %v3947 = vcvt.s32.f32 %v1899
    %v3948 = vcvt.s32.f32 %v1900
    %v3949 = vcvt.s32.f32 %v1901
    %v3950 = vcvt.s32.f32 %v1902
    %v3951 = vcvt.s32.f32 %v1903
    %v3952 = vcvt.s32.f32 %v1904
    %v3953 = vcvt.s32.f32 %v1905
    %v3954 = vcvt.s32.f32 %v1906
    %v3955 = vcvt.s32.f32 %v1907
    %v3956 = vcvt.s32.f32 %v1908
    %v3957 = vcvt.s32.f32 %v1909
    %v3958 = vcvt.s32.f32 %v1910
    %v3959 = vcvt.s32.f32 %v1911
    %v3960 = vcvt.s32.f32 %v1912
    %v3961 = vcvt.s32.f32 %v1913
    %v3962 = vcvt.s32.f32 %v1914
    %v3963 = vcvt.s32.f32 %v1915
    %v3964 = vcvt.s32.f32 %v1916
    %v3965 = vcvt.s32.f32 %v1917
    %v3966 = vcvt.s32.f32 %v1918
    %v3967 = vcvt.s32.f32 %v1919
    %v3968 = vcvt.s32.f32 %v1920
    %v3969 = vcvt.s32.f32 %v1921
    %v3970 = vcvt.s32.f32 %v1922
    %v3971 = vcvt.s32.f32 %v1923
    %v3972 = vcvt.s32.f32 %v1924
    %v3973 = vcvt.s32.f32 %v1925
    %v3974 = vcvt.s32.f32 %v1926
    %v3975 = vcvt.s32.f32 %v1927
    %v3976 = vcvt.s32.f32 %v1928
    %v3977 = vcvt.s32.f32 %v1929
    %v3978 = vcvt.s32.f32 %v1930
    %v3979 = vcvt.s32.f32 %v1931
    %v3980 = vcvt.s32.f32 %v1932
    %v3981 = vcvt.s32.f32 %v1933
    %v3982 = vcvt.s32.f32 %v1934
    %v3983 = vcvt.s32.f32 %v1935
    %v3984 = vcvt.s32.f32 %v1936
    %v3985 = vcvt.s32.f32 %v1937
    %v3986 = vcvt.s32.f32 %v1938
    %v3987 = vcvt.s32.f32 %v1939
    %v3988 = vcvt.s32.f32 %v1940
    %v3989 = vcvt.s32.f32 %v1941
    %v3990 = vcvt.s32.f32 %v1942
    %v3991 = vcvt.s32.f32 %v1943
    %v3992 = vcvt.s32.f32 %v1944
    %v3993 = vcvt.s32.f32 %v1945
    %v3994 = vcvt.s32.f32 %v1946
    %v3995 = vcvt.s32.f32 %v1947
    %v3996 = vcvt.s32.f32 %v1948
    %v3997 = vcvt.s32.f32 %v1949
    %v3998 = vcvt.s32.f32 %v1950
    %v3999 = vcvt.s32.f32 %v1951
    %v4000 = vcvt.s32.f32 %v1952
    %v4001 = vcvt.s32.f32 %v1953
    %v4002 = vcvt.s32.f32 %v1954
    %v4003 = vcvt.s32.f32 %v1955
    %v4004 = vcvt.s32.f32 %v1956
    %v4005 = vcvt.s32.f32 %v1957
    %v4006 = vcvt.s32.f32 %v1958
    %v4007 = vcvt.s32.f32 %v1959
    %v4008 = vcvt.s32.f32 %v1960
    %v4009 = vcvt.s32.f32 %v1961
    %v4010 = vcvt.s32.f32 %v1962
    %v4011 = vcvt.s32.f32 %v1963
    %v4012 = vcvt.s32.f32 %v1964
    %v4013 = vcvt.s32.f32 %v1965
    %v4014 = vcvt.s32.f32 %v1966
    %v4015 = vcvt.s32.f32 %v1967
    %v4016 = vcvt.s32.f32 %v1968
    %v4017 = vcvt.s32.f32 %v1969
    %v4018 = vcvt.s32.f32 %v1970
    %v4019 = vcvt.s32.f32 %v1971
    %v4020 = vcvt.s32.f32 %v1972
    %v4021 = vcvt.s32.f32 %v1973
    %v4022 = vcvt.s32.f32 %v1974
    %v4023 = vcvt.s32.f32 %v1975
    %v4024 = vcvt.s32.f32 %v1976
    %v4025 = vcvt.s32.f32 %v1977
    %v4026 = vcvt.s32.f32 %v1978
    %v4027 = vcvt.s32.f32 %v1979
    %v4028 = vcvt.s32.f32 %v1980
    %v4029 = vcvt.s32.f32 %v1981
    %v4030 = vcvt.s32.f32 %v1982
    %v4031 = vcvt.s32.f32 %v1983
    %v4032 = vcvt.s32.f32 %v1984
    %v4033 = vcvt.s32.f32 %v1985
    %v4034 = vcvt.s32.f32 %v1986
    %v4035 = vcvt.s32.f32 %v1987
    %v4036 = vcvt.s32.f32 %v1988
    %v4037 = vcvt.s32.f32 %v1989
    %v4038 = vcvt.s32.f32 %v1990
    %v4039 = vcvt.s32.f32 %v1991
    %v4040 = vcvt.s32.f32 %v1992
    %v4041 = vcvt.s32.f32 %v1993
    %v4042 = vcvt.s32.f32 %v1994
    %v4043 = vcvt.s32.f32 %v1995
    %v4044 = vcvt.s32.f32 %v1996
    %v4045 = vcvt.s32.f32 %v1997
    %v4046 = vcvt.s32.f32 %v1998
    %v4047 = vcvt.s32.f32 %v1999
    %v4048 = vcvt.s32.f32 %v2000
    %v4049 = vcvt.s32.f32 %v2001
    %v4050 = vcvt.s32.f32 %v2002
    %v4051 = vcvt.s32.f32 %v2003
    %v4052 = vcvt.s32.f32 %v2004
    %v4053 = vcvt.s32.f32 %v2005
    %v4054 = vcvt.s32.f32 %v2006
    %v4055 = vcvt.s32.f32 %v2007
    %v4056 = vcvt.s32.f32 %v2008
    %v4057 = vcvt.s32.f32 %v2009
    %v4058 = vcvt.s32.f32 %v2010
    %v4059 = vcvt.s32.f32 %v2011
    %v4060 = vcvt.s32.f32 %v2012
    %v4061 = vcvt.s32.f32 %v2013
    %v4062 = vcvt.s32.f32 %v2014
    %v4063 = vcvt.s32.f32 %v2015
    %v4064 = vcvt.s32.f32 %v2016
    %v4065 = vcvt.s32.f32 %v2017
    %v4066 = vcvt.s32.f32 %v2018
    %v4067 = vcvt.s32.f32 %v2019
    %v4068 = vcvt.s32.f32 %v2020
    %v4069 = vcvt.s32.f32 %v2021
    %v4070 = vcvt.s32.f32 %v2022
    %v4071 = vcvt.s32.f32 %v2023
    %v4072 = vcvt.s32.f32 %v2024
    %v4073 = vcvt.s32.f32 %v2025
    %v4074 = vcvt.s32.f32 %v2026
    %v4075 = vcvt.s32.f32 %v2027
    %v4076 = vcvt.s32.f32 %v2028
    %v4077 = vcvt.s32.f32 %v2029
    %v4078 = vcvt.s32.f32 %v2030
    %v4079 = vcvt.s32.f32 %v2031
    %v4080 = vcvt.s32.f32 %v2032
    %v4081 = vcvt.s32.f32 %v2033
    %v4082 = vcvt.s32.f32 %v2034
    %v4083 = vcvt.s32.f32 %v2035
    %v4084 = vcvt.s32.f32 %v2036
    %v4085 = vcvt.s32.f32 %v2037
    %v4086 = vcvt.s32.f32 %v2038
    %v4087 = vcvt.s32.f32 %v2039
    %v4088 = vcvt.s32.f32 %v2040
    %v4089 = vcvt.s32.f32 %v2041
    %v4090 = vcvt.s32.f32 %v2042
    %v4091 = vcvt.s32.f32 %v2043
    %v4092 = vcvt.s32.f32 %v2044
    %v4093 = vcvt.s32.f32 %v2045
    %v4094 = vcvt.s32.f32 %v2046
    %v4095 = vcvt.s32.f32 %v2047
    %v4096 = vcvt.s32.f32 %v2048
    %v4097 = vcvt.s32.f32 %v2049
    %v4098 = vcvt.s32.f32 %v2050
    %v4099 = vcvt.s32.f32 %v2051
    %v4100 = vcvt.s32.f32 %v2052
    %v4101 = vcvt.s32.f32 %v2053
    %v4102 = vcvt.s32.f32 %v2054
    %v4103 = vcvt.s32.f32 %v2055
    %v4104 = vcvt.s32.f32 %v2056
    %v4105 = vcvt.s32.f32 %v2057
    %v4106 = vcvt.s32.f32 %v2058
    %v4107 = vcvt.s32.f32 %v2059
    %v4108 = vcvt.s32.f32 %v2060
    %v4109 = vcvt.s32.f32 %v2061
    %v4110 = vcvt.s32.f32 %v2062
    %v4111 = vcvt.s32.f32 %v2063
    %v4112 = vcvt.s32.f32 %v2064
    %v4113 = vcvt.s32.f32 %v2065
    %v4114 = vcvt.s32.f32 %v2066
    %v4115 = vcvt.s32.f32 %v2067
    %v4116 = vcvt.s32.f32 %v2068
    %v4117 = vcvt.s32.f32 %v2069
    %v4118 = vcvt.s32.f32 %v2070
    %v4119 = vcvt.s32.f32 %v2071
    %v4120 = vcvt.s32.f32 %v2072
    %v4121 = vcvt.s32.f32 %v2073
    %v4122 = vcvt.s32.f32 %v2074
    %v4123 = vcvt.s32.f32 %v2075
    %v4124 = vcvt.s32.f32 %v2076
    %v4125 = vcvt.s32.f32 %v2077
    %v4126 = vcvt.s32.f32 %v2078
    %v4127 = vcvt.s32.f32 %v2079
    %v4128 = vcvt.s32.f32 %v2080
    %v4129 = vcvt.s32.f32 %v2081
    %v4130 = vcvt.s32.f32 %v2082
    %v4131 = vcvt.s32.f32 %v2083
    %v4132 = vcvt.s32.f32 %v2084
    %v4133 = vcvt.s32.f32 %v2085
    %v4134 = vcvt.s32.f32 %v2086
    %v4135 = vcvt.s32.f32 %v2087
    %v4136 = vcvt.s32.f32 %v2088
    %v4137 = vcvt.s32.f32 %v2089
    %v4138 = vcvt.s32.f32 %v2090
    %v4139 = vcvt.s32.f32 %v2091
    %v4140 = vcvt.s32.f32 %v2092
    %v4141 = vcvt.s32.f32 %v2093
    %v4142 = vcvt.s32.f32 %v2094
    %v4143 = vcvt.s32.f32 %v2095
    %v4144 = vcvt.s32.f32 %v2096
    %v4145 = vcvt.s32.f32 %v2097
    %v4146 = vcvt.s32.f32 %v2098
    %v4147 = vcvt.s32.f32 %v2099
    %v4148 = vcvt.s32.f32 %v2100
    %v4149 = vcvt.s32.f32 %v2101
    %v4150 = vcvt.s32.f32 %v2102
    %v4151 = vcvt.s32.f32 %v2103
    %v4152 = vcvt.s32.f32 %v2104
    %v4153 = vcvt.s32.f32 %v2105
    %v4154 = vcvt.s32.f32 %v2106
    %v4155 = vcvt.s32.f32 %v2107
    %v4156 = vcvt.s32.f32 %v2108
    %v4157 = vcvt.s32.f32 %v2109
    %v4158 = vcvt.s32.f32 %v2110
    %v4159 = vcvt.s32.f32 %v2111
    %v4160 = vcvt.s32.f32 %v2112
    %v4161 = vcvt.s32.f32 %v2113
    %v4162 = vcvt.s32.f32 %v2114
    %v4163 = vcvt.s32.f32 %v2115
    %v4164 = vcvt.s32.f32 %v2116
    %v4165 = vcvt.s32.f32 %v2117
    %v4166 = vcvt.s32.f32 %v2118
    %v4167 = vcvt.s32.f32 %v2119
    %v4168 = vcvt.s32.f32 %v2120
    %v4169 = vcvt.s32.f32 %v2121
    %v4170 = vcvt.s32.f32 %v2122
    %v4171 = vcvt.s32.f32 %v2123
    %v4172 = vcvt.s32.f32 %v2124
    %v4173 = vcvt.s32.f32 %v2125
    %v4174 = vcvt.s32.f32 %v2126
    %v4175 = vcvt.s32.f32 %v2127
    %v4176 = vcvt.s32.f32 %v2128
    %v4177 = vcvt.s32.f32 %v2129
    %v4178 = vcvt.s32.f32 %v2130
    %v4179 = vcvt.s32.f32 %v2131
    %v4180 = vcvt.s32.f32 %v2132
    %v4181 = vcvt.s32.f32 %v2133
    %v4182 = vcvt.s32.f32 %v2134
    %v4183 = vcvt.s32.f32 %v2135
    %v4184 = vcvt.s32.f32 %v2136
    %v4185 = vcvt.s32.f32 %v2137
    %v4186 = vcvt.s32.f32 %v2138
    %v4187 = vcvt.s32.f32 %v2139
    %v4188 = vcvt.s32.f32 %v2140
    %v4189 = vcvt.s32.f32 %v2141
    %v4190 = vcvt.s32.f32 %v2142
    %v4191 = vcvt.s32.f32 %v2143
    %v4192 = vcvt.s32.f32 %v2144
    %v4193 = vcvt.s32.f32 %v2145
    %v4194 = vcvt.s32.f32 %v2146
    %v4195 = vcvt.s32.f32 %v2147
    %v4196 = vcvt.s32.f32 %v2148
    %v4197 = vcvt.s32.f32 %v2149
    %v4198 = vcvt.s32.f32 %v2150
    %v4199 = vcvt.s32.f32 %v2151
    %v4200 = vcvt.s32.f32 %v2152
    %v4201 = vcvt.s32.f32 %v2153
    %v4202 = vcvt.s32.f32 %v2154
    %v4203 = vcvt.s32.f32 %v2155
    %v4204 = vcvt.s32.f32 %v2156
    %v4205 = vcvt.s32.f32 %v2157
    %v4206 = vcvt.s32.f32 %v2158
    %v4207 = vcvt.s32.f32 %v2159
    %v4208 = vcvt.s32.f32 %v2160
    %v4209 = vcvt.s32.f32 %v2161
    %v4210 = vcvt.s32.f32 %v2162
    %v4211 = vcvt.s32.f32 %v2163
    %v4212 = vcvt.s32.f32 %v2164
    %v4213 = vcvt.s32.f32 %v2165
    %v4214 = vcvt.s32.f32 %v2166
    %v4215 = vcvt.s32.f32 %v2167
    %v4216 = vcvt.s32.f32 %v2168
    %v4217 = vcvt.s32.f32 %v2169
    %v4218 = vcvt.s32.f32 %v2170
    %v4219 = vcvt.s32.f32 %v2171
    %v4220 = vcvt.s32.f32 %v2172
    %v4221 = vcvt.s32.f32 %v2173
    %v4222 = vcvt.s32.f32 %v2174
    %v4223 = vcvt.s32.f32 %v2175
    %v4224 = vcvt.s32.f32 %v2176
    %v4225 = vcvt.s32.f32 %v2177
    %v4226 = vcvt.s32.f32 %v2178
    %v4227 = vcvt.s32.f32 %v2179
    %v4228 = vcvt.s32.f32 %v2180
    %v4229 = vcvt.s32.f32 %v2181
    %v4230 = vcvt.s32.f32 %v2182
    %v4231 = vcvt.s32.f32 %v2183
    %v4232 = vcvt.s32.f32 %v2184
    %v4233 = vcvt.s32.f32 %v2185
    %v4234 = vcvt.s32.f32 %v2186
    %v4235 = vcvt.s32.f32 %v2187
    %v4236 = vcvt.s32.f32 %v2188
    %v4237 = vcvt.s32.f32 %v2189
    %v4238 = vcvt.s32.f32 %v2190
    %v4239 = vcvt.s32.f32 %v2191
    %v4240 = vcvt.s32.f32 %v2192
    %v4241 = vcvt.s32.f32 %v2193
    %v4242 = vcvt.s32.f32 %v2194
    %v4243 = vcvt.s32.f32 %v2195
    %v4244 = vcvt.s32.f32 %v2196
    %v4245 = vcvt.s32.f32 %v2197
    %v4246 = vcvt.s32.f32 %v2198
    %v4247 = vcvt.s32.f32 %v2199
    %v4248 = vcvt.s32.f32 %v2200
    %v4249 = vcvt.s32.f32 %v2201
    %v4250 = vcvt.s32.f32 %v2202
    %v4251 = vcvt.s32.f32 %v2203
    %v4252 = vcvt.s32.f32 %v2204
    %v4253 = vcvt.s32.f32 %v2205
    %v4254 = vcvt.s32.f32 %v2206
    %v4255 = vcvt.s32.f32 %v2207
    %v4256 = vcvt.s32.f32 %v2208
    %v4257 = vcvt.s32.f32 %v2209
    %v4258 = vcvt.s32.f32 %v2210
    %v4259 = vcvt.s32.f32 %v2211
    %v4260 = vcvt.s32.f32 %v2212
    %v4261 = vcvt.s32.f32 %v2213
    %v4262 = vcvt.s32.f32 %v2214
    %v4263 = vcvt.s32.f32 %v2215
    %v4264 = vcvt.s32.f32 %v2216
    %v4265 = vcvt.s32.f32 %v2217
    %v4266 = vcvt.s32.f32 %v2218
    %v4267 = vcvt.s32.f32 %v2219
    %v4268 = vcvt.s32.f32 %v2220
    %v4269 = vcvt.s32.f32 %v2221
    %v4270 = vcvt.s32.f32 %v2222
    %v4271 = vcvt.s32.f32 %v2223
    %v4272 = vcvt.s32.f32 %v2224
    %v4273 = vcvt.s32.f32 %v2225
    %v4274 = vcvt.s32.f32 %v2226
    %v4275 = vcvt.s32.f32 %v2227
    %v4276 = vcvt.s32.f32 %v2228
    %v4277 = vcvt.s32.f32 %v2229
    %v4278 = vcvt.s32.f32 %v2230
    %v4279 = vcvt.s32.f32 %v2231
    %v4280 = vcvt.s32.f32 %v2232
    %v4281 = vcvt.s32.f32 %v2233
    %v4282 = vcvt.s32.f32 %v2234
    %v4283 = vcvt.s32.f32 %v2235
    %v4284 = vcvt.s32.f32 %v2236
    %v4285 = vcvt.s32.f32 %v2237
    %v4286 = vcvt.s32.f32 %v2238
    %v4287 = vcvt.s32.f32 %v2239
    %v4288 = vcvt.s32.f32 %v2240
    %v4289 = vcvt.s32.f32 %v2241
    %v4290 = vcvt.s32.f32 %v2242
    %v4291 = vcvt.s32.f32 %v2243
    %v4292 = vcvt.s32.f32 %v2244
    %v4293 = vcvt.s32.f32 %v2245
    %v4294 = vcvt.s32.f32 %v2246
    %v4295 = vcvt.s32.f32 %v2247
    %v4296 = vcvt.s32.f32 %v2248
    %v4297 = vcvt.s32.f32 %v2249
    %v4298 = vcvt.s32.f32 %v2250
    %v4299 = vcvt.s32.f32 %v2251
    %v4300 = vcvt.s32.f32 %v2252
    %v4301 = vcvt.s32.f32 %v2253
    %v4302 = vcvt.s32.f32 %v2254
    %v4303 = vcvt.s32.f32 %v2255
    %v4304 = vcvt.s32.f32 %v2256
    %v4305 = vcvt.s32.f32 %v2257
    %v4306 = vcvt.s32.f32 %v2258
    %v4307 = vcvt.s32.f32 %v2259
    %v4308 = vcvt.s32.f32 %v2260
    %v4309 = vcvt.s32.f32 %v2261
    %v4310 = vcvt.s32.f32 %v2262
    %v4311 = vcvt.s32.f32 %v2263
    %v4312 = vcvt.s32.f32 %v2264
    %v4313 = vcvt.s32.f32 %v2265
    %v4314 = vcvt.s32.f32 %v2266
    %v4315 = vcvt.s32.f32 %v2267
    %v4316 = vcvt.s32.f32 %v2268
    %v4317 = vcvt.s32.f32 %v2269
    %v4318 = vcvt.s32.f32 %v2270
    %v4319 = vcvt.s32.f32 %v2271
    %v4320 = vcvt.s32.f32 %v2272
    %v4321 = vcvt.s32.f32 %v2273
    %v4322 = vcvt.s32.f32 %v2274
    %v4323 = vcvt.s32.f32 %v2275
    %v4324 = vcvt.s32.f32 %v2276
    %v4325 = vcvt.s32.f32 %v2277
    %v4326 = vcvt.s32.f32 %v2278
    %v4327 = vcvt.s32.f32 %v2279
    %v4328 = vcvt.s32.f32 %v2280
    %v4329 = vcvt.s32.f32 %v2281
    %v4330 = vcvt.s32.f32 %v2282
    %v4331 = vcvt.s32.f32 %v2283
    %v4332 = vcvt.s32.f32 %v2284
    %v4333 = vcvt.s32.f32 %v2285
    %v4334 = vcvt.s32.f32 %v2286
    %v4335 = vcvt.s32.f32 %v2287
    %v4336 = vcvt.s32.f32 %v2288
    %v4337 = vcvt.s32.f32 %v2289
    %v4338 = vcvt.s32.f32 %v2290
    %v4339 = vcvt.s32.f32 %v2291
    %v4340 = vcvt.s32.f32 %v2292
    %v4341 = vcvt.s32.f32 %v2293
    %v4342 = vcvt.s32.f32 %v2294
    %v4343 = vcvt.s32.f32 %v2295
    %v4344 = vcvt.s32.f32 %v2296
    %v4345 = vcvt.s32.f32 %v2297
    %v4346 = vcvt.s32.f32 %v2298
    %v4347 = vcvt.s32.f32 %v2299
    %v4348 = vcvt.s32.f32 %v2300
    %v4349 = vcvt.s32.f32 %v2301
    %v4350 = vcvt.s32.f32 %v2302
    %v4351 = vcvt.s32.f32 %v2303
    %v4352 = vcvt.s32.f32 %v2304
    %v4353 = vcvt.s32.f32 %v2305
    %v4354 = vcvt.s32.f32 %v2306
    %v4355 = vcvt.s32.f32 %v2307
    %v4356 = vcvt.s32.f32 %v2308
    %v4357 = vcvt.s32.f32 %v2309
    %v4358 = vcvt.s32.f32 %v2310
    %v4359 = vcvt.s32.f32 %v2311
    %v4360 = vcvt.s32.f32 %v2312
    %v4361 = vcvt.s32.f32 %v2313
    %v4362 = vcvt.s32.f32 %v2314
    %v4363 = vcvt.s32.f32 %v2315
    %v4364 = vcvt.s32.f32 %v2316
    %v4365 = vcvt.s32.f32 %v2317
    %v4366 = vcvt.s32.f32 %v2318
    %v4367 = vcvt.s32.f32 %v2319
    %v4368 = vcvt.s32.f32 %v2320
    %v4369 = vcvt.s32.f32 %v2321
    %v4370 = vcvt.s32.f32 %v2322
    %v4371 = vcvt.s32.f32 %v2323
    %v4372 = vcvt.s32.f32 %v2324
    %v4373 = vcvt.s32.f32 %v2325
    %v4374 = vcvt.s32.f32 %v2326
    %v4375 = vcvt.s32.f32 %v2327
    %v4376 = vcvt.s32.f32 %v2328
    %v4377 = vcvt.s32.f32 %v2329
    %v4378 = vcvt.s32.f32 %v2330
    %v4379 = vcvt.s32.f32 %v2331
    %v4380 = vcvt.s32.f32 %v2332
    %v4381 = vcvt.s32.f32 %v2333
    %v4382 = vcvt.s32.f32 %v2334
    %v4383 = vcvt.s32.f32 %v2335
    %v4384 = vcvt.s32.f32 %v2336
    %v4385 = vcvt.s32.f32 %v2337
    %v4386 = vcvt.s32.f32 %v2338
    %v4387 = vcvt.s32.f32 %v2339
    %v4388 = vcvt.s32.f32 %v2340
    %v4389 = vcvt.s32.f32 %v2341
    %v4390 = vcvt.s32.f32 %v2342
    %v4391 = vcvt.s32.f32 %v2343
    %v4392 = vcvt.s32.f32 %v2344
    %v4393 = vcvt.s32.f32 %v2345
    %v4394 = vcvt.s32.f32 %v2346
    %v4395 = vcvt.s32.f32 %v2347
    %v4396 = vcvt.s32.f32 %v2348
    %v4397 = vcvt.s32.f32 %v2349
    %v4398 = vcvt.s32.f32 %v2350
    %v4399 = vcvt.s32.f32 %v2351
    %v4400 = vcvt.s32.f32 %v2352
    %v4401 = vcvt.s32.f32 %v2353
    %v4402 = vcvt.s32.f32 %v2354
    %v4403 = vcvt.s32.f32 %v2355
    %v4404 = vcvt.s32.f32 %v2356
    %v4405 = vcvt.s32.f32 %v2357
    %v4406 = vcvt.s32.f32 %v2358
    %v4407 = vcvt.s32.f32 %v2359
    %v4408 = vcvt.s32.f32 %v2360
    %v4409 = vcvt.s32.f32 %v2361
    %v4410 = vcvt.s32.f32 %v2362
    %v4411 = vcvt.s32.f32 %v2363
    %v4412 = vcvt.s32.f32 %v2364
    %v4413 = vcvt.s32.f32 %v2365
    %v4414 = vcvt.s32.f32 %v2366
    %v4415 = vcvt.s32.f32 %v2367
    %v4416 = vcvt.s32.f32 %v2368
    %v4417 = vcvt.s32.f32 %v2369
    %v4418 = vcvt.s32.f32 %v2370
    %v4419 = vcvt.s32.f32 %v2371
    %v4420 = vcvt.s32.f32 %v2372
    %v4421 = vcvt.s32.f32 %v2373
    %v4422 = vcvt.s32.f32 %v2374
    %v4423 = vcvt.s32.f32 %v2375
    %v4424 = vcvt.s32.f32 %v2376
    %v4425 = vcvt.s32.f32 %v2377
    %v4426 = vcvt.s32.f32 %v2378
    %v4427 = vcvt.s32.f32 %v2379
    %v4428 = vcvt.s32.f32 %v2380
    %v4429 = vcvt.s32.f32 %v2381
    %v4430 = vcvt.s32.f32 %v2382
    %v4431 = vcvt.s32.f32 %v2383
    %v4432 = vcvt.s32.f32 %v2384
    %v4433 = vcvt.s32.f32 %v2385
    %v4434 = vcvt.s32.f32 %v2386
    %v4435 = vcvt.s32.f32 %v2387
    %v4436 = vcvt.s32.f32 %v2388
    %v4437 = vcvt.s32.f32 %v2389
    %v4438 = vcvt.s32.f32 %v2390
    %v4439 = vcvt.s32.f32 %v2391
    %v4440 = vcvt.s32.f32 %v2392
    %v4441 = vcvt.s32.f32 %v2393
    %v4442 = vcvt.s32.f32 %v2394
    %v4443 = vcvt.s32.f32 %v2395
    %v4444 = vcvt.s32.f32 %v2396
    %v4445 = vcvt.s32.f32 %v2397
    %v4446 = vcvt.s32.f32 %v2398
    %v4447 = vcvt.s32.f32 %v2399
    %v4448 = vcvt.s32.f32 %v2400
    %v4449 = vcvt.s32.f32 %v2401
    %v4450 = vcvt.s32.f32 %v2402
    %v4451 = vcvt.s32.f32 %v2403
    %v4452 = vcvt.s32.f32 %v2404
    %v4453 = vcvt.s32.f32 %v2405
    %v4454 = vcvt.s32.f32 %v2406
    %v4455 = vcvt.s32.f32 %v2407
    %v4456 = vcvt.s32.f32 %v2408
    %v4457 = vcvt.s32.f32 %v2409
    %v4458 = vcvt.s32.f32 %v2410
    %v4459 = vcvt.s32.f32 %v2411
    %v4460 = vcvt.s32.f32 %v2412
    %v4461 = vcvt.s32.f32 %v2413
    %v4462 = vcvt.s32.f32 %v2414
    %v4463 = vcvt.s32.f32 %v2415
    %v4464 = vcvt.s32.f32 %v2416
    %v4465 = vcvt.s32.f32 %v2417
    %v4466 = vcvt.s32.f32 %v2418
    %v4467 = vcvt.s32.f32 %v2419
    %v4468 = vcvt.s32.f32 %v2420
    %v4469 = vcvt.s32.f32 %v2421
    %v4470 = vcvt.s32.f32 %v2422
    %v4471 = vcvt.s32.f32 %v2423
    %v4472 = vcvt.s32.f32 %v2424
    %v4473 = vcvt.s32.f32 %v2425
    %v4474 = vcvt.s32.f32 %v2426
    %v4475 = vcvt.s32.f32 %v2427
    %v4476 = vcvt.s32.f32 %v2428
    %v4477 = vcvt.s32.f32 %v2429
    %v4478 = vcvt.s32.f32 %v2430
    %v4479 = vcvt.s32.f32 %v2431
    %v4480 = vcvt.s32.f32 %v2432
    %v4481 = vcvt.s32.f32 %v2433
    %v4482 = vcvt.s32.f32 %v2434
    %v4483 = vcvt.s32.f32 %v2435
    %v4484 = vcvt.s32.f32 %v2436
    %v4485 = vcvt.s32.f32 %v2437
    %v4486 = vcvt.s32.f32 %v2438
    %v4487 = vcvt.s32.f32 %v2439
    %v4488 = vcvt.s32.f32 %v2440
    %v4489 = vcvt.s32.f32 %v2441
    %v4490 = vcvt.s32.f32 %v2442
    %v4491 = vcvt.s32.f32 %v2443
    %v4492 = vcvt.s32.f32 %v2444
    %v4493 = vcvt.s32.f32 %v2445
    %v4494 = vcvt.s32.f32 %v2446
    %v4495 = vcvt.s32.f32 %v2447
    %v4496 = vcvt.s32.f32 %v2448
    %v4497 = vcvt.s32.f32 %v2449
    %v4498 = vcvt.s32.f32 %v2450
    %v4499 = vcvt.s32.f32 %v2451
    %v4500 = vcvt.s32.f32 %v2452
    %v4501 = vcvt.s32.f32 %v2453
    %v4502 = vcvt.s32.f32 %v2454
    %v4503 = vcvt.s32.f32 %v2455
    %v4504 = vcvt.s32.f32 %v2456
    %v4505 = vcvt.s32.f32 %v2457
    %v4506 = vcvt.s32.f32 %v2458
    %v4507 = vcvt.s32.f32 %v2459
    %v4508 = vcvt.s32.f32 %v2460
    %v4509 = vcvt.s32.f32 %v2461
    %v4510 = vcvt.s32.f32 %v2462
    %v4511 = vcvt.s32.f32 %v2463
    %v4512 = vcvt.s32.f32 %v2464
    %v4513 = vcvt.s32.f32 %v2465
    %v4514 = vcvt.s32.f32 %v2466
    %v4515 = vcvt.s32.f32 %v2467
    %v4516 = vcvt.s32.f32 %v2468
    %v4517 = vcvt.s32.f32 %v2469
    %v4518 = vcvt.s32.f32 %v2470
    %v4519 = vcvt.s32.f32 %v2471
    %v4520 = vcvt.s32.f32 %v2472
    %v4521 = vcvt.s32.f32 %v2473
    %v4522 = vcvt.s32.f32 %v2474
    %v4523 = vcvt.s32.f32 %v2475
    %v4524 = vcvt.s32.f32 %v2476
    %v4525 = vcvt.s32.f32 %v2477
    %v4526 = vcvt.s32.f32 %v2478
    %v4527 = vcvt.s32.f32 %v2479
    %v4528 = vcvt.s32.f32 %v2480
    %v4529 = vcvt.s32.f32 %v2481
    %v4530 = vcvt.s32.f32 %v2482
    %v4531 = vcvt.s32.f32 %v2483
    %v4532 = vcvt.s32.f32 %v2484
    %v4533 = vcvt.s32.f32 %v2485
    %v4534 = vcvt.s32.f32 %v2486
    %v4535 = vcvt.s32.f32 %v2487
    %v4536 = vcvt.s32.f32 %v2488
    %v4537 = vcvt.s32.f32 %v2489
    %v4538 = vcvt.s32.f32 %v2490
    %v4539 = vcvt.s32.f32 %v2491
    %v4540 = vcvt.s32.f32 %v2492
    %v4541 = vcvt.s32.f32 %v2493
    %v4542 = vcvt.s32.f32 %v2494
    %v4543 = vcvt.s32.f32 %v2495
    %v4544 = vcvt.s32.f32 %v2496
    %v4545 = vcvt.s32.f32 %v2497
    %v4546 = vcvt.s32.f32 %v2498
    %v4547 = vcvt.s32.f32 %v2499
    %v4548 = vcvt.s32.f32 %v2500
    %v4549 = vcvt.s32.f32 %v2501
    %v4550 = vcvt.s32.f32 %v2502
    %v4551 = vcvt.s32.f32 %v2503
    %v4552 = vcvt.s32.f32 %v2504
    %v4553 = vcvt.s32.f32 %v2505
    %v4554 = vcvt.s32.f32 %v2506
    %v4555 = vcvt.s32.f32 %v2507
    %v4556 = vcvt.s32.f32 %v2508
    %v4557 = vcvt.s32.f32 %v2509
    %v4558 = vcvt.s32.f32 %v2510
    %v4559 = vcvt.s32.f32 %v2511
    %v4560 = vcvt.s32.f32 %v2512
    %v4561 = vcvt.s32.f32 %v2513
    %v4562 = vcvt.s32.f32 %v2514
    %v4563 = vcvt.s32.f32 %v2515
    %v4564 = vcvt.s32.f32 %v2516
    %v4565 = vcvt.s32.f32 %v2517
    %v4566 = vcvt.s32.f32 %v2518
    %v4567 = vcvt.s32.f32 %v2519
    %v4568 = vcvt.s32.f32 %v2520
    %v4569 = vcvt.s32.f32 %v2521
    %v4570 = vcvt.s32.f32 %v2522
    %v4571 = vcvt.s32.f32 %v2523
    %v4572 = vcvt.s32.f32 %v2524
    %v4573 = vcvt.s32.f32 %v2525
    %v4574 = vcvt.s32.f32 %v2526
    %v4575 = vcvt.s32.f32 %v2527
    %v4576 = vcvt.s32.f32 %v2528
    %v4577 = vcvt.s32.f32 %v2529
    %v4578 = vcvt.s32.f32 %v2530
    %v4579 = vcvt.s32.f32 %v2531
    %v4580 = vcvt.s32.f32 %v2532
    %v4581 = vcvt.s32.f32 %v2533
    %v4582 = vcvt.s32.f32 %v2534
    %v4583 = vcvt.s32.f32 %v2535
    %v4584 = vcvt.s32.f32 %v2536
    %v4585 = vcvt.s32.f32 %v2537
    %v4586 = vcvt.s32.f32 %v2538
    %v4587 = vcvt.s32.f32 %v2539
    %v4588 = vcvt.s32.f32 %v2540
    %v4589 = vcvt.s32.f32 %v2541
    %v4590 = vcvt.s32.f32 %v2542
    %v4591 = vcvt.s32.f32 %v2543
    %v4592 = vcvt.s32.f32 %v2544
    %v4593 = vcvt.s32.f32 %v2545
    %v4594 = vcvt.s32.f32 %v2546
    %v4595 = vcvt.s32.f32 %v2547
    %v4596 = vcvt.s32.f32 %v2548
    %v4597 = vcvt.s32.f32 %v2549
    %v4598 = vcvt.s32.f32 %v2550
    %v4599 = vcvt.s32.f32 %v2551
    %v4600 = vcvt.s32.f32 %v2552
    %v4601 = vcvt.s32.f32 %v2553
    %v4602 = vcvt.s32.f32 %v2554
    %v4603 = vcvt.s32.f32 %v2555
    %v4604 = vcvt.s32.f32 %v2556
    %v4605 = vcvt.s32.f32 %v2557
    %v4606 = vcvt.s32.f32 %v2558
    %v4607 = vcvt.s32.f32 %v2559
    %v4608 = vcvt.s32.f32 %v2560
    %v4609 = vcvt.s32.f32 %v2561
    %v4610 = vcvt.s32.f32 %v2562
    %v4611 = vcvt.s32.f32 %v2563
    %v4612 = vcvt.s32.f32 %v2564
    %v4613 = vcvt.s32.f32 %v2565
    %v4614 = vcvt.s32.f32 %v2566
    %v4615 = vcvt.s32.f32 %v2567
    %v4616 = vcvt.s32.f32 %v2568
    %v4617 = vcvt.s32.f32 %v2569
    %v4618 = vcvt.s32.f32 %v2570
    %v4619 = vcvt.s32.f32 %v2571
    %v4620 = vcvt.s32.f32 %v2572
    %v4621 = vcvt.s32.f32 %v2573
    %v4622 = vcvt.s32.f32 %v2574
    %v4623 = vcvt.s32.f32 %v2575
    %v4624 = vcvt.s32.f32 %v2576
    %v4625 = vcvt.s32.f32 %v2577
    %v4626 = vcvt.s32.f32 %v2578
    %v4627 = vcvt.s32.f32 %v2579
    %v4628 = vcvt.s32.f32 %v2580
    %v4629 = vcvt.s32.f32 %v2581
    %v4630 = vcvt.s32.f32 %v2582
    %v4631 = vcvt.s32.f32 %v2583
    %v4632 = vcvt.s32.f32 %v2584
    %v4633 = vcvt.s32.f32 %v2585
    %v4634 = vcvt.s32.f32 %v2586
    %v4635 = vcvt.s32.f32 %v2587
    %v4636 = vcvt.s32.f32 %v2588
    %v4637 = vcvt.s32.f32 %v2589
    %v4638 = vcvt.s32.f32 %v2590
    %v4639 = vcvt.s32.f32 %v2591
    %v4640 = vcvt.s32.f32 %v2592
    %v4641 = vcvt.s32.f32 %v2593
    %v4642 = vcvt.s32.f32 %v2594
    %v4643 = vcvt.s32.f32 %v2595
    %v4644 = vcvt.s32.f32 %v2596
    %v4645 = vcvt.s32.f32 %v2597
    %v4646 = vcvt.s32.f32 %v2598
    %v4647 = vcvt.s32.f32 %v2599
    %v4648 = vcvt.s32.f32 %v2600
    %v4649 = vcvt.s32.f32 %v2601
    %v4650 = vcvt.s32.f32 %v2602
    %v4651 = vcvt.s32.f32 %v2603
    %v4652 = vcvt.s32.f32 %v2604
    %v4653 = vcvt.s32.f32 %v2605
    %v4654 = vcvt.s32.f32 %v2606
    %v4655 = vcvt.s32.f32 %v2607
    %v4656 = vcvt.s32.f32 %v2608
    %v4657 = vcvt.s32.f32 %v2609
    %v4658 = vcvt.s32.f32 %v2610
    %v4659 = vcvt.s32.f32 %v2611
    %v4660 = vcvt.s32.f32 %v2612
    %v4661 = vcvt.s32.f32 %v2613
    %v4662 = vcvt.s32.f32 %v2614
    %v4663 = vcvt.s32.f32 %v2615
    %v4664 = vcvt.s32.f32 %v2616
    %v4665 = vcvt.s32.f32 %v2617
    %v4666 = vcvt.s32.f32 %v2618
    %v4667 = vcvt.s32.f32 %v2619
    %v4668 = vcvt.s32.f32 %v2620
    %v4669 = vcvt.s32.f32 %v2621
    %v4670 = vcvt.s32.f32 %v2622
    %v4671 = vcvt.s32.f32 %v2623
    %v4672 = vcvt.s32.f32 %v2624
    %v4673 = vcvt.s32.f32 %v2625
    %v4674 = vcvt.s32.f32 %v2626
    %v4675 = vcvt.s32.f32 %v2627
    %v4676 = vcvt.s32.f32 %v2628
    %v4677 = vcvt.s32.f32 %v2629
    %v4678 = vcvt.s32.f32 %v2630
    %v4679 = vcvt.s32.f32 %v2631
    %v4680 = vcvt.s32.f32 %v2632
    %v4681 = vcvt.s32.f32 %v2633
    %v4682 = vcvt.s32.f32 %v2634
    %v4683 = vcvt.s32.f32 %v2635
    %v4684 = vcvt.s32.f32 %v2636
    %v4685 = vcvt.s32.f32 %v2637
    %v4686 = vcvt.s32.f32 %v2638
    %v4687 = vcvt.s32.f32 %v2639
    %v4688 = vcvt.s32.f32 %v2640
    %v4689 = vcvt.s32.f32 %v2641
    %v4690 = vcvt.s32.f32 %v2642
    %v4691 = vcvt.s32.f32 %v2643
    %v4692 = vcvt.s32.f32 %v2644
    %v4693 = vcvt.s32.f32 %v2645
    %v4694 = vcvt.s32.f32 %v2646
    %v4695 = vcvt.s32.f32 %v2647
    %v4696 = vcvt.s32.f32 %v2648
    %v4697 = vcvt.s32.f32 %v2649
    %v4698 = vcvt.s32.f32 %v2650
    %v4699 = vcvt.s32.f32 %v2651
    %v4700 = vcvt.s32.f32 %v2652
    %v4701 = vcvt.s32.f32 %v2653
    %v4702 = vcvt.s32.f32 %v2654
    %v4703 = vcvt.s32.f32 %v2655
    %v4704 = vcvt.s32.f32 %v2656
    %v4705 = vcvt.s32.f32 %v2657
    %v4706 = vcvt.s32.f32 %v2658
    %v4707 = vcvt.s32.f32 %v2659
    %v4708 = vcvt.s32.f32 %v2660
    %v4709 = vcvt.s32.f32 %v2661
    %v4710 = vcvt.s32.f32 %v2662
    %v4711 = vcvt.s32.f32 %v2663
    %v4712 = vcvt.s32.f32 %v2664
    %v4713 = vcvt.s32.f32 %v2665
    %v4714 = vcvt.s32.f32 %v2666
    %v4715 = vcvt.s32.f32 %v2667
    %v4716 = vcvt.s32.f32 %v2668
    %v4717 = vcvt.s32.f32 %v2669
    %v4718 = vcvt.s32.f32 %v2670
    %v4719 = vcvt.s32.f32 %v2671
    %v4720 = vcvt.s32.f32 %v2672
    %v4721 = vcvt.s32.f32 %v2673
    %v4722 = vcvt.s32.f32 %v2674
    %v4723 = vcvt.s32.f32 %v2675
    %v4724 = vcvt.s32.f32 %v2676
    %v4725 = vcvt.s32.f32 %v2677
    %v4726 = vcvt.s32.f32 %v2678
    %v4727 = vcvt.s32.f32 %v2679
    %v4728 = vcvt.s32.f32 %v2680
    %v4729 = vcvt.s32.f32 %v2681
    %v4730 = vcvt.s32.f32 %v2682
    %v4731 = vcvt.s32.f32 %v2683
    %v4732 = vcvt.s32.f32 %v2684
    %v4733 = vcvt.s32.f32 %v2685
    %v4734 = vcvt.s32.f32 %v2686
    %v4735 = vcvt.s32.f32 %v2687
    %v4736 = vcvt.s32.f32 %v2688
    %v4737 = vcvt.s32.f32 %v2689
    %v4738 = vcvt.s32.f32 %v2690
    %v4739 = vcvt.s32.f32 %v2691
    %v4740 = vcvt.s32.f32 %v2692
    %v4741 = vcvt.s32.f32 %v2693
    %v4742 = vcvt.s32.f32 %v2694
    %v4743 = vcvt.s32.f32 %v2695
    %v4744 = vcvt.s32.f32 %v2696
    %v4745 = vcvt.s32.f32 %v2697
    %v4746 = vcvt.s32.f32 %v2698
    %v4747 = vcvt.s32.f32 %v2699
    %v4748 = vcvt.s32.f32 %v2700
    %v4749 = vcvt.s32.f32 %v2701
    %v4750 = vcvt.s32.f32 %v2702
    %v4751 = vcvt.s32.f32 %v2703
    %v4752 = vcvt.s32.f32 %v2704
    %v4753 = vcvt.s32.f32 %v2705
    %v4754 = vcvt.s32.f32 %v2706
    %v4755 = vcvt.s32.f32 %v2707
    %v4756 = vcvt.s32.f32 %v2708
    %v4757 = vcvt.s32.f32 %v2709
    %v4758 = vcvt.s32.f32 %v2710
    %v4759 = vcvt.s32.f32 %v2711
    %v4760 = vcvt.s32.f32 %v2712
    %v4761 = vcvt.s32.f32 %v2713
    %v4762 = vcvt.s32.f32 %v2714
    %v4763 = vcvt.s32.f32 %v2715
    %v4764 = vcvt.s32.f32 %v2716
    %v4765 = vcvt.s32.f32 %v2717
    %v4766 = vcvt.s32.f32 %v2718
    %v4767 = vcvt.s32.f32 %v2719
    %v4768 = vcvt.s32.f32 %v2720
    %v4769 = vcvt.s32.f32 %v2721
    %v4770 = vcvt.s32.f32 %v2722
    %v4771 = vcvt.s32.f32 %v2723
    %v4772 = vcvt.s32.f32 %v2724
    %v4773 = vcvt.s32.f32 %v2725
    %v4774 = vcvt.s32.f32 %v2726
    %v4775 = vcvt.s32.f32 %v2727
    %v4776 = vcvt.s32.f32 %v2728
    %v4777 = vcvt.s32.f32 %v2729
    %v4778 = vcvt.s32.f32 %v2730
    %v4779 = vcvt.s32.f32 %v2731
    %v4780 = vcvt.s32.f32 %v2732
    %v4781 = vcvt.s32.f32 %v2733
    %v4782 = vcvt.s32.f32 %v2734
    %v4783 = vcvt.s32.f32 %v2735
    %v4784 = vcvt.s32.f32 %v2736
    %v4785 = vcvt.s32.f32 %v2737
    %v4786 = vcvt.s32.f32 %v2738
    %v4787 = vpack.c.bf16 %v2747, %v2739
    %v4788 = vpack.c.bf16 %v2748, %v2740
    %v4789 = vpack.c.bf16 %v2749, %v2741
    %v4790 = vpack.c.bf16 %v2750, %v2742
    %v4791 = vpack.c.bf16 %v2751, %v2743
    %v4792 = vpack.c.bf16 %v2752, %v2744
    %v4793 = vpack.c.bf16 %v2753, %v2745
    %v4794 = vpack.c.bf16 %v2754, %v2746
    %v4795 = vpack.c.bf16 %v2763, %v2755
    %v4796 = vpack.c.bf16 %v2764, %v2756
    %v4797 = vpack.c.bf16 %v2765, %v2757
    %v4798 = vpack.c.bf16 %v2766, %v2758
    %v4799 = vpack.c.bf16 %v2767, %v2759
    %v4800 = vpack.c.bf16 %v2768, %v2760
    %v4801 = vpack.c.bf16 %v2769, %v2761
    %v4802 = vpack.c.bf16 %v2770, %v2762
    %v4803 = vpack.c.bf16 %v2779, %v2771
    %v4804 = vpack.c.bf16 %v2780, %v2772
    %v4805 = vpack.c.bf16 %v2781, %v2773
    %v4806 = vpack.c.bf16 %v2782, %v2774
    %v4807 = vpack.c.bf16 %v2783, %v2775
    %v4808 = vpack.c.bf16 %v2784, %v2776
    %v4809 = vpack.c.bf16 %v2785, %v2777
    %v4810 = vpack.c.bf16 %v2786, %v2778
    %v4811 = vpack.c.bf16 %v2795, %v2787
    %v4812 = vpack.c.bf16 %v2796, %v2788
    %v4813 = vpack.c.bf16 %v2797, %v2789
    %v4814 = vpack.c.bf16 %v2798, %v2790
    %v4815 = vpack.c.bf16 %v2799, %v2791
    %v4816 = vpack.c.bf16 %v2800, %v2792
    %v4817 = vpack.c.bf16 %v2801, %v2793
    %v4818 = vpack.c.bf16 %v2802, %v2794
    %v4819 = vpack.c.bf16 %v2811, %v2803
    %v4820 = vpack.c.bf16 %v2812, %v2804
    %v4821 = vpack.c.bf16 %v2813, %v2805
    %v4822 = vpack.c.bf16 %v2814, %v2806
    %v4823 = vpack.c.bf16 %v2815, %v2807
    %v4824 = vpack.c.bf16 %v2816, %v2808
    %v4825 = vpack.c.bf16 %v2817, %v2809
    %v4826 = vpack.c.bf16 %v2818, %v2810
    %v4827 = vpack.c.bf16 %v2827, %v2819
    %v4828 = vpack.c.bf16 %v2828, %v2820
    %v4829 = vpack.c.bf16 %v2829, %v2821
    %v4830 = vpack.c.bf16 %v2830, %v2822
    %v4831 = vpack.c.bf16 %v2831, %v2823
    %v4832 = vpack.c.bf16 %v2832, %v2824
    %v4833 = vpack.c.bf16 %v2833, %v2825
    %v4834 = vpack.c.bf16 %v2834, %v2826
    %v4835 = vpack.c.bf16 %v2843, %v2835
    %v4836 = vpack.c.bf16 %v2844, %v2836
    %v4837 = vpack.c.bf16 %v2845, %v2837
    %v4838 = vpack.c.bf16 %v2846, %v2838
    %v4839 = vpack.c.bf16 %v2847, %v2839
    %v4840 = vpack.c.bf16 %v2848, %v2840
    %v4841 = vpack.c.bf16 %v2849, %v2841
    %v4842 = vpack.c.bf16 %v2850, %v2842
    %v4843 = vpack.c.bf16 %v2859, %v2851
    %v4844 = vpack.c.bf16 %v2860, %v2852
    %v4845 = vpack.c.bf16 %v2861, %v2853
    %v4846 = vpack.c.bf16 %v2862, %v2854
    %v4847 = vpack.c.bf16 %v2863, %v2855
    %v4848 = vpack.c.bf16 %v2864, %v2856
    %v4849 = vpack.c.bf16 %v2865, %v2857
    %v4850 = vpack.c.bf16 %v2866, %v2858
    %v4851 = vpack.c.bf16 %v2875, %v2867
    %v4852 = vpack.c.bf16 %v2876, %v2868
    %v4853 = vpack.c.bf16 %v2877, %v2869
    %v4854 = vpack.c.bf16 %v2878, %v2870
    %v4855 = vpack.c.bf16 %v2879, %v2871
    %v4856 = vpack.c.bf16 %v2880, %v2872
    %v4857 = vpack.c.bf16 %v2881, %v2873
    %v4858 = vpack.c.bf16 %v2882, %v2874
    %v4859 = vpack.c.bf16 %v2891, %v2883
    %v4860 = vpack.c.bf16 %v2892, %v2884
    %v4861 = vpack.c.bf16 %v2893, %v2885
    %v4862 = vpack.c.bf16 %v2894, %v2886
    %v4863 = vpack.c.bf16 %v2895, %v2887
    %v4864 = vpack.c.bf16 %v2896, %v2888
    %v4865 = vpack.c.bf16 %v2897, %v2889
    %v4866 = vpack.c.bf16 %v2898, %v2890
    %v4867 = vpack.c.bf16 %v2907, %v2899
    %v4868 = vpack.c.bf16 %v2908, %v2900
    %v4869 = vpack.c.bf16 %v2909, %v2901
    %v4870 = vpack.c.bf16 %v2910, %v2902
    %v4871 = vpack.c.bf16 %v2911, %v2903
    %v4872 = vpack.c.bf16 %v2912, %v2904
    %v4873 = vpack.c.bf16 %v2913, %v2905
    %v4874 = vpack.c.bf16 %v2914, %v2906
    %v4875 = vpack.c.bf16 %v2923, %v2915
    %v4876 = vpack.c.bf16 %v2924, %v2916
    %v4877 = vpack.c.bf16 %v2925, %v2917
    %v4878 = vpack.c.bf16 %v2926, %v2918
    %v4879 = vpack.c.bf16 %v2927, %v2919
    %v4880 = vpack.c.bf16 %v2928, %v2920
    %v4881 = vpack.c.bf16 %v2929, %v2921
    %v4882 = vpack.c.bf16 %v2930, %v2922
    %v4883 = vpack.c.bf16 %v2939, %v2931
    %v4884 = vpack.c.bf16 %v2940, %v2932
    %v4885 = vpack.c.bf16 %v2941, %v2933
    %v4886 = vpack.c.bf16 %v2942, %v2934
    %v4887 = vpack.c.bf16 %v2943, %v2935
    %v4888 = vpack.c.bf16 %v2944, %v2936
    %v4889 = vpack.c.bf16 %v2945, %v2937
    %v4890 = vpack.c.bf16 %v2946, %v2938
    %v4891 = vpack.c.bf16 %v2955, %v2947
    %v4892 = vpack.c.bf16 %v2956, %v2948
    %v4893 = vpack.c.bf16 %v2957, %v2949
    %v4894 = vpack.c.bf16 %v2958, %v2950
    %v4895 = vpack.c.bf16 %v2959, %v2951
    %v4896 = vpack.c.bf16 %v2960, %v2952
    %v4897 = vpack.c.bf16 %v2961, %v2953
    %v4898 = vpack.c.bf16 %v2962, %v2954
    %v4899 = vpack.c.bf16 %v2971, %v2963
    %v4900 = vpack.c.bf16 %v2972, %v2964
    %v4901 = vpack.c.bf16 %v2973, %v2965
    %v4902 = vpack.c.bf16 %v2974, %v2966
    %v4903 = vpack.c.bf16 %v2975, %v2967
    %v4904 = vpack.c.bf16 %v2976, %v2968
    %v4905 = vpack.c.bf16 %v2977, %v2969
    %v4906 = vpack.c.bf16 %v2978, %v2970
    %v4907 = vpack.c.bf16 %v2987, %v2979
    %v4908 = vpack.c.bf16 %v2988, %v2980
    %v4909 = vpack.c.bf16 %v2989, %v2981
    %v4910 = vpack.c.bf16 %v2990, %v2982
    %v4911 = vpack.c.bf16 %v2991, %v2983
    %v4912 = vpack.c.bf16 %v2992, %v2984
    %v4913 = vpack.c.bf16 %v2993, %v2985
    %v4914 = vpack.c.bf16 %v2994, %v2986
    %v4915 = vpack.c.bf16 %v3003, %v2995
    %v4916 = vpack.c.bf16 %v3004, %v2996
    %v4917 = vpack.c.bf16 %v3005, %v2997
    %v4918 = vpack.c.bf16 %v3006, %v2998
    %v4919 = vpack.c.bf16 %v3007, %v2999
    %v4920 = vpack.c.bf16 %v3008, %v3000
    %v4921 = vpack.c.bf16 %v3009, %v3001
    %v4922 = vpack.c.bf16 %v3010, %v3002
    %v4923 = vpack.c.bf16 %v3019, %v3011
    %v4924 = vpack.c.bf16 %v3020, %v3012
    %v4925 = vpack.c.bf16 %v3021, %v3013
    %v4926 = vpack.c.bf16 %v3022, %v3014
    %v4927 = vpack.c.bf16 %v3023, %v3015
    %v4928 = vpack.c.bf16 %v3024, %v3016
    %v4929 = vpack.c.bf16 %v3025, %v3017
    %v4930 = vpack.c.bf16 %v3026, %v3018
    %v4931 = vpack.c.bf16 %v3035, %v3027
    %v4932 = vpack.c.bf16 %v3036, %v3028
    %v4933 = vpack.c.bf16 %v3037, %v3029
    %v4934 = vpack.c.bf16 %v3038, %v3030
    %v4935 = vpack.c.bf16 %v3039, %v3031
    %v4936 = vpack.c.bf16 %v3040, %v3032
    %v4937 = vpack.c.bf16 %v3041, %v3033
    %v4938 = vpack.c.bf16 %v3042, %v3034
    %v4939 = vpack.c.bf16 %v3051, %v3043
    %v4940 = vpack.c.bf16 %v3052, %v3044
    %v4941 = vpack.c.bf16 %v3053, %v3045
    %v4942 = vpack.c.bf16 %v3054, %v3046
    %v4943 = vpack.c.bf16 %v3055, %v3047
    %v4944 = vpack.c.bf16 %v3056, %v3048
    %v4945 = vpack.c.bf16 %v3057, %v3049
    %v4946 = vpack.c.bf16 %v3058, %v3050
    %v4947 = vpack.c.bf16 %v3067, %v3059
    %v4948 = vpack.c.bf16 %v3068, %v3060
    %v4949 = vpack.c.bf16 %v3069, %v3061
    %v4950 = vpack.c.bf16 %v3070, %v3062
    %v4951 = vpack.c.bf16 %v3071, %v3063
    %v4952 = vpack.c.bf16 %v3072, %v3064
    %v4953 = vpack.c.bf16 %v3073, %v3065
    %v4954 = vpack.c.bf16 %v3074, %v3066
    %v4955 = vpack.c.bf16 %v3083, %v3075
    %v4956 = vpack.c.bf16 %v3084, %v3076
    %v4957 = vpack.c.bf16 %v3085, %v3077
    %v4958 = vpack.c.bf16 %v3086, %v3078
    %v4959 = vpack.c.bf16 %v3087, %v3079
    %v4960 = vpack.c.bf16 %v3088, %v3080
    %v4961 = vpack.c.bf16 %v3089, %v3081
    %v4962 = vpack.c.bf16 %v3090, %v3082
    %v4963 = vpack.c.bf16 %v3099, %v3091
    %v4964 = vpack.c.bf16 %v3100, %v3092
    %v4965 = vpack.c.bf16 %v3101, %v3093
    %v4966 = vpack.c.bf16 %v3102, %v3094
    %v4967 = vpack.c.bf16 %v3103, %v3095
    %v4968 = vpack.c.bf16 %v3104, %v3096
    %v4969 = vpack.c.bf16 %v3105, %v3097
    %v4970 = vpack.c.bf16 %v3106, %v3098
    %v4971 = vpack.c.bf16 %v3115, %v3107
    %v4972 = vpack.c.bf16 %v3116, %v3108
    %v4973 = vpack.c.bf16 %v3117, %v3109
    %v4974 = vpack.c.bf16 %v3118, %v3110
    %v4975 = vpack.c.bf16 %v3119, %v3111
    %v4976 = vpack.c.bf16 %v3120, %v3112
    %v4977 = vpack.c.bf16 %v3121, %v3113
    %v4978 = vpack.c.bf16 %v3122, %v3114
    %v4979 = vpack.c.bf16 %v3131, %v3123
    %v4980 = vpack.c.bf16 %v3132, %v3124
    %v4981 = vpack.c.bf16 %v3133, %v3125
    %v4982 = vpack.c.bf16 %v3134, %v3126
    %v4983 = vpack.c.bf16 %v3135, %v3127
    %v4984 = vpack.c.bf16 %v3136, %v3128
    %v4985 = vpack.c.bf16 %v3137, %v3129
    %v4986 = vpack.c.bf16 %v3138, %v3130
    %v4987 = vpack.c.bf16 %v3147, %v3139
    %v4988 = vpack.c.bf16 %v3148, %v3140
    %v4989 = vpack.c.bf16 %v3149, %v3141
    %v4990 = vpack.c.bf16 %v3150, %v3142
    %v4991 = vpack.c.bf16 %v3151, %v3143
    %v4992 = vpack.c.bf16 %v3152, %v3144
    %v4993 = vpack.c.bf16 %v3153, %v3145
    %v4994 = vpack.c.bf16 %v3154, %v3146
    %v4995 = vpack.c.bf16 %v3163, %v3155
    %v4996 = vpack.c.bf16 %v3164, %v3156
    %v4997 = vpack.c.bf16 %v3165, %v3157
    %v4998 = vpack.c.bf16 %v3166, %v3158
    %v4999 = vpack.c.bf16 %v3167, %v3159
    %v5000 = vpack.c.bf16 %v3168, %v3160
    %v5001 = vpack.c.bf16 %v3169, %v3161
    %v5002 = vpack.c.bf16 %v3170, %v3162
    %v5003 = vpack.c.bf16 %v3179, %v3171
    %v5004 = vpack.c.bf16 %v3180, %v3172
    %v5005 = vpack.c.bf16 %v3181, %v3173
    %v5006 = vpack.c.bf16 %v3182, %v3174
    %v5007 = vpack.c.bf16 %v3183, %v3175
    %v5008 = vpack.c.bf16 %v3184, %v3176
    %v5009 = vpack.c.bf16 %v3185, %v3177
    %v5010 = vpack.c.bf16 %v3186, %v3178
    %v5011 = vpack.c.bf16 %v3195, %v3187
    %v5012 = vpack.c.bf16 %v3196, %v3188
    %v5013 = vpack.c.bf16 %v3197, %v3189
    %v5014 = vpack.c.bf16 %v3198, %v3190
    %v5015 = vpack.c.bf16 %v3199, %v3191
    %v5016 = vpack.c.bf16 %v3200, %v3192
    %v5017 = vpack.c.bf16 %v3201, %v3193
    %v5018 = vpack.c.bf16 %v3202, %v3194
    %v5019 = vpack.c.bf16 %v3211, %v3203
    %v5020 = vpack.c.bf16 %v3212, %v3204
    %v5021 = vpack.c.bf16 %v3213, %v3205
    %v5022 = vpack.c.bf16 %v3214, %v3206
    %v5023 = vpack.c.bf16 %v3215, %v3207
    %v5024 = vpack.c.bf16 %v3216, %v3208
    %v5025 = vpack.c.bf16 %v3217, %v3209
    %v5026 = vpack.c.bf16 %v3218, %v3210
    %v5027 = vpack.c.bf16 %v3227, %v3219
    %v5028 = vpack.c.bf16 %v3228, %v3220
    %v5029 = vpack.c.bf16 %v3229, %v3221
    %v5030 = vpack.c.bf16 %v3230, %v3222
    %v5031 = vpack.c.bf16 %v3231, %v3223
    %v5032 = vpack.c.bf16 %v3232, %v3224
    %v5033 = vpack.c.bf16 %v3233, %v3225
    %v5034 = vpack.c.bf16 %v3234, %v3226
    %v5035 = vpack.c.bf16 %v3243, %v3235
    %v5036 = vpack.c.bf16 %v3244, %v3236
    %v5037 = vpack.c.bf16 %v3245, %v3237
    %v5038 = vpack.c.bf16 %v3246, %v3238
    %v5039 = vpack.c.bf16 %v3247, %v3239
    %v5040 = vpack.c.bf16 %v3248, %v3240
    %v5041 = vpack.c.bf16 %v3249, %v3241
    %v5042 = vpack.c.bf16 %v3250, %v3242
    %v5043 = vpack.c.bf16 %v3259, %v3251
    %v5044 = vpack.c.bf16 %v3260, %v3252
    %v5045 = vpack.c.bf16 %v3261, %v3253
    %v5046 = vpack.c.bf16 %v3262, %v3254
    %v5047 = vpack.c.bf16 %v3263, %v3255
    %v5048 = vpack.c.bf16 %v3264, %v3256
    %v5049 = vpack.c.bf16 %v3265, %v3257
    %v5050 = vpack.c.bf16 %v3266, %v3258
    %v5051 = vpack.c.bf16 %v3275, %v3267
    %v5052 = vpack.c.bf16 %v3276, %v3268
    %v5053 = vpack.c.bf16 %v3277, %v3269
    %v5054 = vpack.c.bf16 %v3278, %v3270
    %v5055 = vpack.c.bf16 %v3279, %v3271
    %v5056 = vpack.c.bf16 %v3280, %v3272
    %v5057 = vpack.c.bf16 %v3281, %v3273
    %v5058 = vpack.c.bf16 %v3282, %v3274
    %v5059 = vpack.c.bf16 %v3291, %v3283
    %v5060 = vpack.c.bf16 %v3292, %v3284
    %v5061 = vpack.c.bf16 %v3293, %v3285
    %v5062 = vpack.c.bf16 %v3294, %v3286
    %v5063 = vpack.c.bf16 %v3295, %v3287
    %v5064 = vpack.c.bf16 %v3296, %v3288
    %v5065 = vpack.c.bf16 %v3297, %v3289
    %v5066 = vpack.c.bf16 %v3298, %v3290
    %v5067 = vpack.c.bf16 %v3307, %v3299
    %v5068 = vpack.c.bf16 %v3308, %v3300
    %v5069 = vpack.c.bf16 %v3309, %v3301
    %v5070 = vpack.c.bf16 %v3310, %v3302
    %v5071 = vpack.c.bf16 %v3311, %v3303
    %v5072 = vpack.c.bf16 %v3312, %v3304
    %v5073 = vpack.c.bf16 %v3313, %v3305
    %v5074 = vpack.c.bf16 %v3314, %v3306
    %v5075 = vpack.c.bf16 %v3323, %v3315
    %v5076 = vpack.c.bf16 %v3324, %v3316
    %v5077 = vpack.c.bf16 %v3325, %v3317
    %v5078 = vpack.c.bf16 %v3326, %v3318
    %v5079 = vpack.c.bf16 %v3327, %v3319
    %v5080 = vpack.c.bf16 %v3328, %v3320
    %v5081 = vpack.c.bf16 %v3329, %v3321
    %v5082 = vpack.c.bf16 %v3330, %v3322
    %v5083 = vpack.c.bf16 %v3339, %v3331
    %v5084 = vpack.c.bf16 %v3340, %v3332
    %v5085 = vpack.c.bf16 %v3341, %v3333
    %v5086 = vpack.c.bf16 %v3342, %v3334
    %v5087 = vpack.c.bf16 %v3343, %v3335
    %v5088 = vpack.c.bf16 %v3344, %v3336
    %v5089 = vpack.c.bf16 %v3345, %v3337
    %v5090 = vpack.c.bf16 %v3346, %v3338
    %v5091 = vpack.c.bf16 %v3355, %v3347
    %v5092 = vpack.c.bf16 %v3356, %v3348
    %v5093 = vpack.c.bf16 %v3357, %v3349
    %v5094 = vpack.c.bf16 %v3358, %v3350
    %v5095 = vpack.c.bf16 %v3359, %v3351
    %v5096 = vpack.c.bf16 %v3360, %v3352
    %v5097 = vpack.c.bf16 %v3361, %v3353
    %v5098 = vpack.c.bf16 %v3362, %v3354
    %v5099 = vpack.c.bf16 %v3371, %v3363
    %v5100 = vpack.c.bf16 %v3372, %v3364
    %v5101 = vpack.c.bf16 %v3373, %v3365
    %v5102 = vpack.c.bf16 %v3374, %v3366
    %v5103 = vpack.c.bf16 %v3375, %v3367
    %v5104 = vpack.c.bf16 %v3376, %v3368
    %v5105 = vpack.c.bf16 %v3377, %v3369
    %v5106 = vpack.c.bf16 %v3378, %v3370
    %v5107 = vpack.c.bf16 %v3387, %v3379
    %v5108 = vpack.c.bf16 %v3388, %v3380
    %v5109 = vpack.c.bf16 %v3389, %v3381
    %v5110 = vpack.c.bf16 %v3390, %v3382
    %v5111 = vpack.c.bf16 %v3391, %v3383
    %v5112 = vpack.c.bf16 %v3392, %v3384
    %v5113 = vpack.c.bf16 %v3393, %v3385
    %v5114 = vpack.c.bf16 %v3394, %v3386
    %v5115 = vpack.c.bf16 %v3403, %v3395
    %v5116 = vpack.c.bf16 %v3404, %v3396
    %v5117 = vpack.c.bf16 %v3405, %v3397
    %v5118 = vpack.c.bf16 %v3406, %v3398
    %v5119 = vpack.c.bf16 %v3407, %v3399
    %v5120 = vpack.c.bf16 %v3408, %v3400
    %v5121 = vpack.c.bf16 %v3409, %v3401
    %v5122 = vpack.c.bf16 %v3410, %v3402
    %v5123 = vpack.c.bf16 %v3419, %v3411
    %v5124 = vpack.c.bf16 %v3420, %v3412
    %v5125 = vpack.c.bf16 %v3421, %v3413
    %v5126 = vpack.c.bf16 %v3422, %v3414
    %v5127 = vpack.c.bf16 %v3423, %v3415
    %v5128 = vpack.c.bf16 %v3424, %v3416
    %v5129 = vpack.c.bf16 %v3425, %v3417
    %v5130 = vpack.c.bf16 %v3426, %v3418
    %v5131 = vpack.c.bf16 %v3435, %v3427
    %v5132 = vpack.c.bf16 %v3436, %v3428
    %v5133 = vpack.c.bf16 %v3437, %v3429
    %v5134 = vpack.c.bf16 %v3438, %v3430
    %v5135 = vpack.c.bf16 %v3439, %v3431
    %v5136 = vpack.c.bf16 %v3440, %v3432
    %v5137 = vpack.c.bf16 %v3441, %v3433
    %v5138 = vpack.c.bf16 %v3442, %v3434
    %v5139 = vpack.c.bf16 %v3451, %v3443
    %v5140 = vpack.c.bf16 %v3452, %v3444
    %v5141 = vpack.c.bf16 %v3453, %v3445
    %v5142 = vpack.c.bf16 %v3454, %v3446
    %v5143 = vpack.c.bf16 %v3455, %v3447
    %v5144 = vpack.c.bf16 %v3456, %v3448
    %v5145 = vpack.c.bf16 %v3457, %v3449
    %v5146 = vpack.c.bf16 %v3458, %v3450
    %v5147 = vpack.c.bf16 %v3467, %v3459
    %v5148 = vpack.c.bf16 %v3468, %v3460
    %v5149 = vpack.c.bf16 %v3469, %v3461
    %v5150 = vpack.c.bf16 %v3470, %v3462
    %v5151 = vpack.c.bf16 %v3471, %v3463
    %v5152 = vpack.c.bf16 %v3472, %v3464
    %v5153 = vpack.c.bf16 %v3473, %v3465
    %v5154 = vpack.c.bf16 %v3474, %v3466
    %v5155 = vpack.c.bf16 %v3483, %v3475
    %v5156 = vpack.c.bf16 %v3484, %v3476
    %v5157 = vpack.c.bf16 %v3485, %v3477
    %v5158 = vpack.c.bf16 %v3486, %v3478
    %v5159 = vpack.c.bf16 %v3487, %v3479
    %v5160 = vpack.c.bf16 %v3488, %v3480
    %v5161 = vpack.c.bf16 %v3489, %v3481
    %v5162 = vpack.c.bf16 %v3490, %v3482
    %v5163 = vpack.c.bf16 %v3499, %v3491
    %v5164 = vpack.c.bf16 %v3500, %v3492
    %v5165 = vpack.c.bf16 %v3501, %v3493
    %v5166 = vpack.c.bf16 %v3502, %v3494
    %v5167 = vpack.c.bf16 %v3503, %v3495
    %v5168 = vpack.c.bf16 %v3504, %v3496
    %v5169 = vpack.c.bf16 %v3505, %v3497
    %v5170 = vpack.c.bf16 %v3506, %v3498
    %v5171 = vpack.c.bf16 %v3515, %v3507
    %v5172 = vpack.c.bf16 %v3516, %v3508
    %v5173 = vpack.c.bf16 %v3517, %v3509
    %v5174 = vpack.c.bf16 %v3518, %v3510
    %v5175 = vpack.c.bf16 %v3519, %v3511
    %v5176 = vpack.c.bf16 %v3520, %v3512
    %v5177 = vpack.c.bf16 %v3521, %v3513
    %v5178 = vpack.c.bf16 %v3522, %v3514
    %v5179 = vpack.c.bf16 %v3531, %v3523
    %v5180 = vpack.c.bf16 %v3532, %v3524
    %v5181 = vpack.c.bf16 %v3533, %v3525
    %v5182 = vpack.c.bf16 %v3534, %v3526
    %v5183 = vpack.c.bf16 %v3535, %v3527
    %v5184 = vpack.c.bf16 %v3536, %v3528
    %v5185 = vpack.c.bf16 %v3537, %v3529
    %v5186 = vpack.c.bf16 %v3538, %v3530
    %v5187 = vpack.c.bf16 %v3547, %v3539
    %v5188 = vpack.c.bf16 %v3548, %v3540
    %v5189 = vpack.c.bf16 %v3549, %v3541
    %v5190 = vpack.c.bf16 %v3550, %v3542
    %v5191 = vpack.c.bf16 %v3551, %v3543
    %v5192 = vpack.c.bf16 %v3552, %v3544
    %v5193 = vpack.c.bf16 %v3553, %v3545
    %v5194 = vpack.c.bf16 %v3554, %v3546
    %v5195 = vpack.c.bf16 %v3563, %v3555
    %v5196 = vpack.c.bf16 %v3564, %v3556
    %v5197 = vpack.c.bf16 %v3565, %v3557
    %v5198 = vpack.c.bf16 %v3566, %v3558
    %v5199 = vpack.c.bf16 %v3567, %v3559
    %v5200 = vpack.c.bf16 %v3568, %v3560
    %v5201 = vpack.c.bf16 %v3569, %v3561
    %v5202 = vpack.c.bf16 %v3570, %v3562
    %v5203 = vpack.c.bf16 %v3579, %v3571
    %v5204 = vpack.c.bf16 %v3580, %v3572
    %v5205 = vpack.c.bf16 %v3581, %v3573
    %v5206 = vpack.c.bf16 %v3582, %v3574
    %v5207 = vpack.c.bf16 %v3583, %v3575
    %v5208 = vpack.c.bf16 %v3584, %v3576
    %v5209 = vpack.c.bf16 %v3585, %v3577
    %v5210 = vpack.c.bf16 %v3586, %v3578
    %v5211 = vpack.c.bf16 %v3595, %v3587
    %v5212 = vpack.c.bf16 %v3596, %v3588
    %v5213 = vpack.c.bf16 %v3597, %v3589
    %v5214 = vpack.c.bf16 %v3598, %v3590
    %v5215 = vpack.c.bf16 %v3599, %v3591
    %v5216 = vpack.c.bf16 %v3600, %v3592
    %v5217 = vpack.c.bf16 %v3601, %v3593
    %v5218 = vpack.c.bf16 %v3602, %v3594
    %v5219 = vpack.c.bf16 %v3611, %v3603
    %v5220 = vpack.c.bf16 %v3612, %v3604
    %v5221 = vpack.c.bf16 %v3613, %v3605
    %v5222 = vpack.c.bf16 %v3614, %v3606
    %v5223 = vpack.c.bf16 %v3615, %v3607
    %v5224 = vpack.c.bf16 %v3616, %v3608
    %v5225 = vpack.c.bf16 %v3617, %v3609
    %v5226 = vpack.c.bf16 %v3618, %v3610
    %v5227 = vpack.c.bf16 %v3627, %v3619
    %v5228 = vpack.c.bf16 %v3628, %v3620
    %v5229 = vpack.c.bf16 %v3629, %v3621
    %v5230 = vpack.c.bf16 %v3630, %v3622
    %v5231 = vpack.c.bf16 %v3631, %v3623
    %v5232 = vpack.c.bf16 %v3632, %v3624
    %v5233 = vpack.c.bf16 %v3633, %v3625
    %v5234 = vpack.c.bf16 %v3634, %v3626
    %v5235 = vpack.c.bf16 %v3643, %v3635
    %v5236 = vpack.c.bf16 %v3644, %v3636
    %v5237 = vpack.c.bf16 %v3645, %v3637
    %v5238 = vpack.c.bf16 %v3646, %v3638
    %v5239 = vpack.c.bf16 %v3647, %v3639
    %v5240 = vpack.c.bf16 %v3648, %v3640
    %v5241 = vpack.c.bf16 %v3649, %v3641
    %v5242 = vpack.c.bf16 %v3650, %v3642
    %v5243 = vpack.c.bf16 %v3659, %v3651
    %v5244 = vpack.c.bf16 %v3660, %v3652
    %v5245 = vpack.c.bf16 %v3661, %v3653
    %v5246 = vpack.c.bf16 %v3662, %v3654
    %v5247 = vpack.c.bf16 %v3663, %v3655
    %v5248 = vpack.c.bf16 %v3664, %v3656
    %v5249 = vpack.c.bf16 %v3665, %v3657
    %v5250 = vpack.c.bf16 %v3666, %v3658
    %v5251 = vpack.c.bf16 %v3675, %v3667
    %v5252 = vpack.c.bf16 %v3676, %v3668
    %v5253 = vpack.c.bf16 %v3677, %v3669
    %v5254 = vpack.c.bf16 %v3678, %v3670
    %v5255 = vpack.c.bf16 %v3679, %v3671
    %v5256 = vpack.c.bf16 %v3680, %v3672
    %v5257 = vpack.c.bf16 %v3681, %v3673
    %v5258 = vpack.c.bf16 %v3682, %v3674
    %v5259 = vpack.c.bf16 %v3691, %v3683
    %v5260 = vpack.c.bf16 %v3692, %v3684
    %v5261 = vpack.c.bf16 %v3693, %v3685
    %v5262 = vpack.c.bf16 %v3694, %v3686
    %v5263 = vpack.c.bf16 %v3695, %v3687
    %v5264 = vpack.c.bf16 %v3696, %v3688
    %v5265 = vpack.c.bf16 %v3697, %v3689
    %v5266 = vpack.c.bf16 %v3698, %v3690
    %v5267 = vpack.c.bf16 %v3707, %v3699
    %v5268 = vpack.c.bf16 %v3708, %v3700
    %v5269 = vpack.c.bf16 %v3709, %v3701
    %v5270 = vpack.c.bf16 %v3710, %v3702
    %v5271 = vpack.c.bf16 %v3711, %v3703
    %v5272 = vpack.c.bf16 %v3712, %v3704
    %v5273 = vpack.c.bf16 %v3713, %v3705
    %v5274 = vpack.c.bf16 %v3714, %v3706
    %v5275 = vpack.c.bf16 %v3723, %v3715
    %v5276 = vpack.c.bf16 %v3724, %v3716
    %v5277 = vpack.c.bf16 %v3725, %v3717
    %v5278 = vpack.c.bf16 %v3726, %v3718
    %v5279 = vpack.c.bf16 %v3727, %v3719
    %v5280 = vpack.c.bf16 %v3728, %v3720
    %v5281 = vpack.c.bf16 %v3729, %v3721
    %v5282 = vpack.c.bf16 %v3730, %v3722
    %v5283 = vpack.c.bf16 %v3739, %v3731
    %v5284 = vpack.c.bf16 %v3740, %v3732
    %v5285 = vpack.c.bf16 %v3741, %v3733
    %v5286 = vpack.c.bf16 %v3742, %v3734
    %v5287 = vpack.c.bf16 %v3743, %v3735
    %v5288 = vpack.c.bf16 %v3744, %v3736
    %v5289 = vpack.c.bf16 %v3745, %v3737
    %v5290 = vpack.c.bf16 %v3746, %v3738
    %v5291 = vpack.c.bf16 %v3755, %v3747
    %v5292 = vpack.c.bf16 %v3756, %v3748
    %v5293 = vpack.c.bf16 %v3757, %v3749
    %v5294 = vpack.c.bf16 %v3758, %v3750
    %v5295 = vpack.c.bf16 %v3759, %v3751
    %v5296 = vpack.c.bf16 %v3760, %v3752
    %v5297 = vpack.c.bf16 %v3761, %v3753
    %v5298 = vpack.c.bf16 %v3762, %v3754
    %v5299 = vpack.c.bf16 %v3771, %v3763
    %v5300 = vpack.c.bf16 %v3772, %v3764
    %v5301 = vpack.c.bf16 %v3773, %v3765
    %v5302 = vpack.c.bf16 %v3774, %v3766
    %v5303 = vpack.c.bf16 %v3775, %v3767
    %v5304 = vpack.c.bf16 %v3776, %v3768
    %v5305 = vpack.c.bf16 %v3777, %v3769
    %v5306 = vpack.c.bf16 %v3778, %v3770
    %v5307 = vpack.c.bf16 %v3787, %v3779
    %v5308 = vpack.c.bf16 %v3788, %v3780
    %v5309 = vpack.c.bf16 %v3789, %v3781
    %v5310 = vpack.c.bf16 %v3790, %v3782
    %v5311 = vpack.c.bf16 %v3791, %v3783
    %v5312 = vpack.c.bf16 %v3792, %v3784
    %v5313 = vpack.c.bf16 %v3793, %v3785
    %v5314 = vpack.c.bf16 %v3794, %v3786
    %v5315 = vpack.c.bf16 %v3803, %v3795
    %v5316 = vpack.c.bf16 %v3804, %v3796
    %v5317 = vpack.c.bf16 %v3805, %v3797
    %v5318 = vpack.c.bf16 %v3806, %v3798
    %v5319 = vpack.c.bf16 %v3807, %v3799
    %v5320 = vpack.c.bf16 %v3808, %v3800
    %v5321 = vpack.c.bf16 %v3809, %v3801
    %v5322 = vpack.c.bf16 %v3810, %v3802
    %v5323 = vpack.c.bf16 %v3819, %v3811
    %v5324 = vpack.c.bf16 %v3820, %v3812
    %v5325 = vpack.c.bf16 %v3821, %v3813
    %v5326 = vpack.c.bf16 %v3822, %v3814
    %v5327 = vpack.c.bf16 %v3823, %v3815
    %v5328 = vpack.c.bf16 %v3824, %v3816
    %v5329 = vpack.c.bf16 %v3825, %v3817
    %v5330 = vpack.c.bf16 %v3826, %v3818
    %v5331 = vpack.c.bf16 %v3835, %v3827
    %v5332 = vpack.c.bf16 %v3836, %v3828
    %v5333 = vpack.c.bf16 %v3837, %v3829
    %v5334 = vpack.c.bf16 %v3838, %v3830
    %v5335 = vpack.c.bf16 %v3839, %v3831
    %v5336 = vpack.c.bf16 %v3840, %v3832
    %v5337 = vpack.c.bf16 %v3841, %v3833
    %v5338 = vpack.c.bf16 %v3842, %v3834
    %v5339 = vpack.c.bf16 %v3851, %v3843
    %v5340 = vpack.c.bf16 %v3852, %v3844
    %v5341 = vpack.c.bf16 %v3853, %v3845
    %v5342 = vpack.c.bf16 %v3854, %v3846
    %v5343 = vpack.c.bf16 %v3855, %v3847
    %v5344 = vpack.c.bf16 %v3856, %v3848
    %v5345 = vpack.c.bf16 %v3857, %v3849
    %v5346 = vpack.c.bf16 %v3858, %v3850
    %v5347 = vpack.c.bf16 %v3867, %v3859
    %v5348 = vpack.c.bf16 %v3868, %v3860
    %v5349 = vpack.c.bf16 %v3869, %v3861
    %v5350 = vpack.c.bf16 %v3870, %v3862
    %v5351 = vpack.c.bf16 %v3871, %v3863
    %v5352 = vpack.c.bf16 %v3872, %v3864
    %v5353 = vpack.c.bf16 %v3873, %v3865
    %v5354 = vpack.c.bf16 %v3874, %v3866
    %v5355 = vpack.c.bf16 %v3883, %v3875
    %v5356 = vpack.c.bf16 %v3884, %v3876
    %v5357 = vpack.c.bf16 %v3885, %v3877
    %v5358 = vpack.c.bf16 %v3886, %v3878
    %v5359 = vpack.c.bf16 %v3887, %v3879
    %v5360 = vpack.c.bf16 %v3888, %v3880
    %v5361 = vpack.c.bf16 %v3889, %v3881
    %v5362 = vpack.c.bf16 %v3890, %v3882
    %v5363 = vpack.c.bf16 %v3899, %v3891
    %v5364 = vpack.c.bf16 %v3900, %v3892
    %v5365 = vpack.c.bf16 %v3901, %v3893
    %v5366 = vpack.c.bf16 %v3902, %v3894
    %v5367 = vpack.c.bf16 %v3903, %v3895
    %v5368 = vpack.c.bf16 %v3904, %v3896
    %v5369 = vpack.c.bf16 %v3905, %v3897
    %v5370 = vpack.c.bf16 %v3906, %v3898
    %v5371 = vpack.c.bf16 %v3915, %v3907
    %v5372 = vpack.c.bf16 %v3916, %v3908
    %v5373 = vpack.c.bf16 %v3917, %v3909
    %v5374 = vpack.c.bf16 %v3918, %v3910
    %v5375 = vpack.c.bf16 %v3919, %v3911
    %v5376 = vpack.c.bf16 %v3920, %v3912
    %v5377 = vpack.c.bf16 %v3921, %v3913
    %v5378 = vpack.c.bf16 %v3922, %v3914
    %v5379 = vpack.c.bf16 %v3931, %v3923
    %v5380 = vpack.c.bf16 %v3932, %v3924
    %v5381 = vpack.c.bf16 %v3933, %v3925
    %v5382 = vpack.c.bf16 %v3934, %v3926
    %v5383 = vpack.c.bf16 %v3935, %v3927
    %v5384 = vpack.c.bf16 %v3936, %v3928
    %v5385 = vpack.c.bf16 %v3937, %v3929
    %v5386 = vpack.c.bf16 %v3938, %v3930
    %v5387 = vpack.c.bf16 %v3947, %v3939
    %v5388 = vpack.c.bf16 %v3948, %v3940
    %v5389 = vpack.c.bf16 %v3949, %v3941
    %v5390 = vpack.c.bf16 %v3950, %v3942
    %v5391 = vpack.c.bf16 %v3951, %v3943
    %v5392 = vpack.c.bf16 %v3952, %v3944
    %v5393 = vpack.c.bf16 %v3953, %v3945
    %v5394 = vpack.c.bf16 %v3954, %v3946
    %v5395 = vpack.c.bf16 %v3963, %v3955
    %v5396 = vpack.c.bf16 %v3964, %v3956
    %v5397 = vpack.c.bf16 %v3965, %v3957
    %v5398 = vpack.c.bf16 %v3966, %v3958
    %v5399 = vpack.c.bf16 %v3967, %v3959
    %v5400 = vpack.c.bf16 %v3968, %v3960
    %v5401 = vpack.c.bf16 %v3969, %v3961
    %v5402 = vpack.c.bf16 %v3970, %v3962
    %v5403 = vpack.c.bf16 %v3979, %v3971
    %v5404 = vpack.c.bf16 %v3980, %v3972
    %v5405 = vpack.c.bf16 %v3981, %v3973
    %v5406 = vpack.c.bf16 %v3982, %v3974
    %v5407 = vpack.c.bf16 %v3983, %v3975
    %v5408 = vpack.c.bf16 %v3984, %v3976
    %v5409 = vpack.c.bf16 %v3985, %v3977
    %v5410 = vpack.c.bf16 %v3986, %v3978
    %v5411 = vpack.c.bf16 %v3995, %v3987
    %v5412 = vpack.c.bf16 %v3996, %v3988
    %v5413 = vpack.c.bf16 %v3997, %v3989
    %v5414 = vpack.c.bf16 %v3998, %v3990
    %v5415 = vpack.c.bf16 %v3999, %v3991
    %v5416 = vpack.c.bf16 %v4000, %v3992
    %v5417 = vpack.c.bf16 %v4001, %v3993
    %v5418 = vpack.c.bf16 %v4002, %v3994
    %v5419 = vpack.c.bf16 %v4011, %v4003
    %v5420 = vpack.c.bf16 %v4012, %v4004
    %v5421 = vpack.c.bf16 %v4013, %v4005
    %v5422 = vpack.c.bf16 %v4014, %v4006
    %v5423 = vpack.c.bf16 %v4015, %v4007
    %v5424 = vpack.c.bf16 %v4016, %v4008
    %v5425 = vpack.c.bf16 %v4017, %v4009
    %v5426 = vpack.c.bf16 %v4018, %v4010
    %v5427 = vpack.c.bf16 %v4027, %v4019
    %v5428 = vpack.c.bf16 %v4028, %v4020
    %v5429 = vpack.c.bf16 %v4029, %v4021
    %v5430 = vpack.c.bf16 %v4030, %v4022
    %v5431 = vpack.c.bf16 %v4031, %v4023
    %v5432 = vpack.c.bf16 %v4032, %v4024
    %v5433 = vpack.c.bf16 %v4033, %v4025
    %v5434 = vpack.c.bf16 %v4034, %v4026
    %v5435 = vpack.c.bf16 %v4043, %v4035
    %v5436 = vpack.c.bf16 %v4044, %v4036
    %v5437 = vpack.c.bf16 %v4045, %v4037
    %v5438 = vpack.c.bf16 %v4046, %v4038
    %v5439 = vpack.c.bf16 %v4047, %v4039
    %v5440 = vpack.c.bf16 %v4048, %v4040
    %v5441 = vpack.c.bf16 %v4049, %v4041
    %v5442 = vpack.c.bf16 %v4050, %v4042
    %v5443 = vpack.c.bf16 %v4059, %v4051
    %v5444 = vpack.c.bf16 %v4060, %v4052
    %v5445 = vpack.c.bf16 %v4061, %v4053
    %v5446 = vpack.c.bf16 %v4062, %v4054
    %v5447 = vpack.c.bf16 %v4063, %v4055
    %v5448 = vpack.c.bf16 %v4064, %v4056
    %v5449 = vpack.c.bf16 %v4065, %v4057
    %v5450 = vpack.c.bf16 %v4066, %v4058
    %v5451 = vpack.c.bf16 %v4075, %v4067
    %v5452 = vpack.c.bf16 %v4076, %v4068
    %v5453 = vpack.c.bf16 %v4077, %v4069
    %v5454 = vpack.c.bf16 %v4078, %v4070
    %v5455 = vpack.c.bf16 %v4079, %v4071
    %v5456 = vpack.c.bf16 %v4080, %v4072
    %v5457 = vpack.c.bf16 %v4081, %v4073
    %v5458 = vpack.c.bf16 %v4082, %v4074
    %v5459 = vpack.c.bf16 %v4091, %v4083
    %v5460 = vpack.c.bf16 %v4092, %v4084
    %v5461 = vpack.c.bf16 %v4093, %v4085
    %v5462 = vpack.c.bf16 %v4094, %v4086
    %v5463 = vpack.c.bf16 %v4095, %v4087
    %v5464 = vpack.c.bf16 %v4096, %v4088
    %v5465 = vpack.c.bf16 %v4097, %v4089
    %v5466 = vpack.c.bf16 %v4098, %v4090
    %v5467 = vpack.c.bf16 %v4107, %v4099
    %v5468 = vpack.c.bf16 %v4108, %v4100
    %v5469 = vpack.c.bf16 %v4109, %v4101
    %v5470 = vpack.c.bf16 %v4110, %v4102
    %v5471 = vpack.c.bf16 %v4111, %v4103
    %v5472 = vpack.c.bf16 %v4112, %v4104
    %v5473 = vpack.c.bf16 %v4113, %v4105
    %v5474 = vpack.c.bf16 %v4114, %v4106
    %v5475 = vpack.c.bf16 %v4123, %v4115
    %v5476 = vpack.c.bf16 %v4124, %v4116
    %v5477 = vpack.c.bf16 %v4125, %v4117
    %v5478 = vpack.c.bf16 %v4126, %v4118
    %v5479 = vpack.c.bf16 %v4127, %v4119
    %v5480 = vpack.c.bf16 %v4128, %v4120
    %v5481 = vpack.c.bf16 %v4129, %v4121
    %v5482 = vpack.c.bf16 %v4130, %v4122
    %v5483 = vpack.c.bf16 %v4139, %v4131
    %v5484 = vpack.c.bf16 %v4140, %v4132
    %v5485 = vpack.c.bf16 %v4141, %v4133
    %v5486 = vpack.c.bf16 %v4142, %v4134
    %v5487 = vpack.c.bf16 %v4143, %v4135
    %v5488 = vpack.c.bf16 %v4144, %v4136
    %v5489 = vpack.c.bf16 %v4145, %v4137
    %v5490 = vpack.c.bf16 %v4146, %v4138
    %v5491 = vpack.c.bf16 %v4155, %v4147
    %v5492 = vpack.c.bf16 %v4156, %v4148
    %v5493 = vpack.c.bf16 %v4157, %v4149
    %v5494 = vpack.c.bf16 %v4158, %v4150
    %v5495 = vpack.c.bf16 %v4159, %v4151
    %v5496 = vpack.c.bf16 %v4160, %v4152
    %v5497 = vpack.c.bf16 %v4161, %v4153
    %v5498 = vpack.c.bf16 %v4162, %v4154
    %v5499 = vpack.c.bf16 %v4171, %v4163
    %v5500 = vpack.c.bf16 %v4172, %v4164
    %v5501 = vpack.c.bf16 %v4173, %v4165
    %v5502 = vpack.c.bf16 %v4174, %v4166
    %v5503 = vpack.c.bf16 %v4175, %v4167
    %v5504 = vpack.c.bf16 %v4176, %v4168
    %v5505 = vpack.c.bf16 %v4177, %v4169
    %v5506 = vpack.c.bf16 %v4178, %v4170
    %v5507 = vpack.c.bf16 %v4187, %v4179
    %v5508 = vpack.c.bf16 %v4188, %v4180
    %v5509 = vpack.c.bf16 %v4189, %v4181
    %v5510 = vpack.c.bf16 %v4190, %v4182
    %v5511 = vpack.c.bf16 %v4191, %v4183
    %v5512 = vpack.c.bf16 %v4192, %v4184
    %v5513 = vpack.c.bf16 %v4193, %v4185
    %v5514 = vpack.c.bf16 %v4194, %v4186
    %v5515 = vpack.c.bf16 %v4203, %v4195
    %v5516 = vpack.c.bf16 %v4204, %v4196
    %v5517 = vpack.c.bf16 %v4205, %v4197
    %v5518 = vpack.c.bf16 %v4206, %v4198
    %v5519 = vpack.c.bf16 %v4207, %v4199
    %v5520 = vpack.c.bf16 %v4208, %v4200
    %v5521 = vpack.c.bf16 %v4209, %v4201
    %v5522 = vpack.c.bf16 %v4210, %v4202
    %v5523 = vpack.c.bf16 %v4219, %v4211
    %v5524 = vpack.c.bf16 %v4220, %v4212
    %v5525 = vpack.c.bf16 %v4221, %v4213
    %v5526 = vpack.c.bf16 %v4222, %v4214
    %v5527 = vpack.c.bf16 %v4223, %v4215
    %v5528 = vpack.c.bf16 %v4224, %v4216
    %v5529 = vpack.c.bf16 %v4225, %v4217
    %v5530 = vpack.c.bf16 %v4226, %v4218
    %v5531 = vpack.c.bf16 %v4235, %v4227
    %v5532 = vpack.c.bf16 %v4236, %v4228
    %v5533 = vpack.c.bf16 %v4237, %v4229
    %v5534 = vpack.c.bf16 %v4238, %v4230
    %v5535 = vpack.c.bf16 %v4239, %v4231
    %v5536 = vpack.c.bf16 %v4240, %v4232
    %v5537 = vpack.c.bf16 %v4241, %v4233
    %v5538 = vpack.c.bf16 %v4242, %v4234
    %v5539 = vpack.c.bf16 %v4251, %v4243
    %v5540 = vpack.c.bf16 %v4252, %v4244
    %v5541 = vpack.c.bf16 %v4253, %v4245
    %v5542 = vpack.c.bf16 %v4254, %v4246
    %v5543 = vpack.c.bf16 %v4255, %v4247
    %v5544 = vpack.c.bf16 %v4256, %v4248
    %v5545 = vpack.c.bf16 %v4257, %v4249
    %v5546 = vpack.c.bf16 %v4258, %v4250
    %v5547 = vpack.c.bf16 %v4267, %v4259
    %v5548 = vpack.c.bf16 %v4268, %v4260
    %v5549 = vpack.c.bf16 %v4269, %v4261
    %v5550 = vpack.c.bf16 %v4270, %v4262
    %v5551 = vpack.c.bf16 %v4271, %v4263
    %v5552 = vpack.c.bf16 %v4272, %v4264
    %v5553 = vpack.c.bf16 %v4273, %v4265
    %v5554 = vpack.c.bf16 %v4274, %v4266
    %v5555 = vpack.c.bf16 %v4283, %v4275
    %v5556 = vpack.c.bf16 %v4284, %v4276
    %v5557 = vpack.c.bf16 %v4285, %v4277
    %v5558 = vpack.c.bf16 %v4286, %v4278
    %v5559 = vpack.c.bf16 %v4287, %v4279
    %v5560 = vpack.c.bf16 %v4288, %v4280
    %v5561 = vpack.c.bf16 %v4289, %v4281
    %v5562 = vpack.c.bf16 %v4290, %v4282
    %v5563 = vpack.c.bf16 %v4299, %v4291
    %v5564 = vpack.c.bf16 %v4300, %v4292
    %v5565 = vpack.c.bf16 %v4301, %v4293
    %v5566 = vpack.c.bf16 %v4302, %v4294
    %v5567 = vpack.c.bf16 %v4303, %v4295
    %v5568 = vpack.c.bf16 %v4304, %v4296
    %v5569 = vpack.c.bf16 %v4305, %v4297
    %v5570 = vpack.c.bf16 %v4306, %v4298
    %v5571 = vpack.c.bf16 %v4315, %v4307
    %v5572 = vpack.c.bf16 %v4316, %v4308
    %v5573 = vpack.c.bf16 %v4317, %v4309
    %v5574 = vpack.c.bf16 %v4318, %v4310
    %v5575 = vpack.c.bf16 %v4319, %v4311
    %v5576 = vpack.c.bf16 %v4320, %v4312
    %v5577 = vpack.c.bf16 %v4321, %v4313
    %v5578 = vpack.c.bf16 %v4322, %v4314
    %v5579 = vpack.c.bf16 %v4331, %v4323
    %v5580 = vpack.c.bf16 %v4332, %v4324
    %v5581 = vpack.c.bf16 %v4333, %v4325
    %v5582 = vpack.c.bf16 %v4334, %v4326
    %v5583 = vpack.c.bf16 %v4335, %v4327
    %v5584 = vpack.c.bf16 %v4336, %v4328
    %v5585 = vpack.c.bf16 %v4337, %v4329
    %v5586 = vpack.c.bf16 %v4338, %v4330
    %v5587 = vpack.c.bf16 %v4347, %v4339
    %v5588 = vpack.c.bf16 %v4348, %v4340
    %v5589 = vpack.c.bf16 %v4349, %v4341
    %v5590 = vpack.c.bf16 %v4350, %v4342
    %v5591 = vpack.c.bf16 %v4351, %v4343
    %v5592 = vpack.c.bf16 %v4352, %v4344
    %v5593 = vpack.c.bf16 %v4353, %v4345
    %v5594 = vpack.c.bf16 %v4354, %v4346
    %v5595 = vpack.c.bf16 %v4363, %v4355
    %v5596 = vpack.c.bf16 %v4364, %v4356
    %v5597 = vpack.c.bf16 %v4365, %v4357
    %v5598 = vpack.c.bf16 %v4366, %v4358
    %v5599 = vpack.c.bf16 %v4367, %v4359
    %v5600 = vpack.c.bf16 %v4368, %v4360
    %v5601 = vpack.c.bf16 %v4369, %v4361
    %v5602 = vpack.c.bf16 %v4370, %v4362
    %v5603 = vpack.c.bf16 %v4379, %v4371
    %v5604 = vpack.c.bf16 %v4380, %v4372
    %v5605 = vpack.c.bf16 %v4381, %v4373
    %v5606 = vpack.c.bf16 %v4382, %v4374
    %v5607 = vpack.c.bf16 %v4383, %v4375
    %v5608 = vpack.c.bf16 %v4384, %v4376
    %v5609 = vpack.c.bf16 %v4385, %v4377
    %v5610 = vpack.c.bf16 %v4386, %v4378
    %v5611 = vpack.c.bf16 %v4395, %v4387
    %v5612 = vpack.c.bf16 %v4396, %v4388
    %v5613 = vpack.c.bf16 %v4397, %v4389
    %v5614 = vpack.c.bf16 %v4398, %v4390
    %v5615 = vpack.c.bf16 %v4399, %v4391
    %v5616 = vpack.c.bf16 %v4400, %v4392
    %v5617 = vpack.c.bf16 %v4401, %v4393
    %v5618 = vpack.c.bf16 %v4402, %v4394
    %v5619 = vpack.c.bf16 %v4411, %v4403
    %v5620 = vpack.c.bf16 %v4412, %v4404
    %v5621 = vpack.c.bf16 %v4413, %v4405
    %v5622 = vpack.c.bf16 %v4414, %v4406
    %v5623 = vpack.c.bf16 %v4415, %v4407
    %v5624 = vpack.c.bf16 %v4416, %v4408
    %v5625 = vpack.c.bf16 %v4417, %v4409
    %v5626 = vpack.c.bf16 %v4418, %v4410
    %v5627 = vpack.c.bf16 %v4427, %v4419
    %v5628 = vpack.c.bf16 %v4428, %v4420
    %v5629 = vpack.c.bf16 %v4429, %v4421
    %v5630 = vpack.c.bf16 %v4430, %v4422
    %v5631 = vpack.c.bf16 %v4431, %v4423
    %v5632 = vpack.c.bf16 %v4432, %v4424
    %v5633 = vpack.c.bf16 %v4433, %v4425
    %v5634 = vpack.c.bf16 %v4434, %v4426
    %v5635 = vpack.c.bf16 %v4443, %v4435
    %v5636 = vpack.c.bf16 %v4444, %v4436
    %v5637 = vpack.c.bf16 %v4445, %v4437
    %v5638 = vpack.c.bf16 %v4446, %v4438
    %v5639 = vpack.c.bf16 %v4447, %v4439
    %v5640 = vpack.c.bf16 %v4448, %v4440
    %v5641 = vpack.c.bf16 %v4449, %v4441
    %v5642 = vpack.c.bf16 %v4450, %v4442
    %v5643 = vpack.c.bf16 %v4459, %v4451
    %v5644 = vpack.c.bf16 %v4460, %v4452
    %v5645 = vpack.c.bf16 %v4461, %v4453
    %v5646 = vpack.c.bf16 %v4462, %v4454
    %v5647 = vpack.c.bf16 %v4463, %v4455
    %v5648 = vpack.c.bf16 %v4464, %v4456
    %v5649 = vpack.c.bf16 %v4465, %v4457
    %v5650 = vpack.c.bf16 %v4466, %v4458
    %v5651 = vpack.c.bf16 %v4475, %v4467
    %v5652 = vpack.c.bf16 %v4476, %v4468
    %v5653 = vpack.c.bf16 %v4477, %v4469
    %v5654 = vpack.c.bf16 %v4478, %v4470
    %v5655 = vpack.c.bf16 %v4479, %v4471
    %v5656 = vpack.c.bf16 %v4480, %v4472
    %v5657 = vpack.c.bf16 %v4481, %v4473
    %v5658 = vpack.c.bf16 %v4482, %v4474
    %v5659 = vpack.c.bf16 %v4491, %v4483
    %v5660 = vpack.c.bf16 %v4492, %v4484
    %v5661 = vpack.c.bf16 %v4493, %v4485
    %v5662 = vpack.c.bf16 %v4494, %v4486
    %v5663 = vpack.c.bf16 %v4495, %v4487
    %v5664 = vpack.c.bf16 %v4496, %v4488
    %v5665 = vpack.c.bf16 %v4497, %v4489
    %v5666 = vpack.c.bf16 %v4498, %v4490
    %v5667 = vpack.c.bf16 %v4507, %v4499
    %v5668 = vpack.c.bf16 %v4508, %v4500
    %v5669 = vpack.c.bf16 %v4509, %v4501
    %v5670 = vpack.c.bf16 %v4510, %v4502
    %v5671 = vpack.c.bf16 %v4511, %v4503
    %v5672 = vpack.c.bf16 %v4512, %v4504
    %v5673 = vpack.c.bf16 %v4513, %v4505
    %v5674 = vpack.c.bf16 %v4514, %v4506
    %v5675 = vpack.c.bf16 %v4523, %v4515
    %v5676 = vpack.c.bf16 %v4524, %v4516
    %v5677 = vpack.c.bf16 %v4525, %v4517
    %v5678 = vpack.c.bf16 %v4526, %v4518
    %v5679 = vpack.c.bf16 %v4527, %v4519
    %v5680 = vpack.c.bf16 %v4528, %v4520
    %v5681 = vpack.c.bf16 %v4529, %v4521
    %v5682 = vpack.c.bf16 %v4530, %v4522
    %v5683 = vpack.c.bf16 %v4539, %v4531
    %v5684 = vpack.c.bf16 %v4540, %v4532
    %v5685 = vpack.c.bf16 %v4541, %v4533
    %v5686 = vpack.c.bf16 %v4542, %v4534
    %v5687 = vpack.c.bf16 %v4543, %v4535
    %v5688 = vpack.c.bf16 %v4544, %v4536
    %v5689 = vpack.c.bf16 %v4545, %v4537
    %v5690 = vpack.c.bf16 %v4546, %v4538
    %v5691 = vpack.c.bf16 %v4555, %v4547
    %v5692 = vpack.c.bf16 %v4556, %v4548
    %v5693 = vpack.c.bf16 %v4557, %v4549
    %v5694 = vpack.c.bf16 %v4558, %v4550
    %v5695 = vpack.c.bf16 %v4559, %v4551
    %v5696 = vpack.c.bf16 %v4560, %v4552
    %v5697 = vpack.c.bf16 %v4561, %v4553
    %v5698 = vpack.c.bf16 %v4562, %v4554
    %v5699 = vpack.c.bf16 %v4571, %v4563
    %v5700 = vpack.c.bf16 %v4572, %v4564
    %v5701 = vpack.c.bf16 %v4573, %v4565
    %v5702 = vpack.c.bf16 %v4574, %v4566
    %v5703 = vpack.c.bf16 %v4575, %v4567
    %v5704 = vpack.c.bf16 %v4576, %v4568
    %v5705 = vpack.c.bf16 %v4577, %v4569
    %v5706 = vpack.c.bf16 %v4578, %v4570
    %v5707 = vpack.c.bf16 %v4587, %v4579
    %v5708 = vpack.c.bf16 %v4588, %v4580
    %v5709 = vpack.c.bf16 %v4589, %v4581
    %v5710 = vpack.c.bf16 %v4590, %v4582
    %v5711 = vpack.c.bf16 %v4591, %v4583
    %v5712 = vpack.c.bf16 %v4592, %v4584
    %v5713 = vpack.c.bf16 %v4593, %v4585
    %v5714 = vpack.c.bf16 %v4594, %v4586
    %v5715 = vpack.c.bf16 %v4603, %v4595
    %v5716 = vpack.c.bf16 %v4604, %v4596
    %v5717 = vpack.c.bf16 %v4605, %v4597
    %v5718 = vpack.c.bf16 %v4606, %v4598
    %v5719 = vpack.c.bf16 %v4607, %v4599
    %v5720 = vpack.c.bf16 %v4608, %v4600
    %v5721 = vpack.c.bf16 %v4609, %v4601
    %v5722 = vpack.c.bf16 %v4610, %v4602
    %v5723 = vpack.c.bf16 %v4619, %v4611
    %v5724 = vpack.c.bf16 %v4620, %v4612
    %v5725 = vpack.c.bf16 %v4621, %v4613
    %v5726 = vpack.c.bf16 %v4622, %v4614
    %v5727 = vpack.c.bf16 %v4623, %v4615
    %v5728 = vpack.c.bf16 %v4624, %v4616
    %v5729 = vpack.c.bf16 %v4625, %v4617
    %v5730 = vpack.c.bf16 %v4626, %v4618
    %v5731 = vpack.c.bf16 %v4635, %v4627
    %v5732 = vpack.c.bf16 %v4636, %v4628
    %v5733 = vpack.c.bf16 %v4637, %v4629
    %v5734 = vpack.c.bf16 %v4638, %v4630
    %v5735 = vpack.c.bf16 %v4639, %v4631
    %v5736 = vpack.c.bf16 %v4640, %v4632
    %v5737 = vpack.c.bf16 %v4641, %v4633
    %v5738 = vpack.c.bf16 %v4642, %v4634
    %v5739 = vpack.c.bf16 %v4651, %v4643
    %v5740 = vpack.c.bf16 %v4652, %v4644
    %v5741 = vpack.c.bf16 %v4653, %v4645
    %v5742 = vpack.c.bf16 %v4654, %v4646
    %v5743 = vpack.c.bf16 %v4655, %v4647
    %v5744 = vpack.c.bf16 %v4656, %v4648
    %v5745 = vpack.c.bf16 %v4657, %v4649
    %v5746 = vpack.c.bf16 %v4658, %v4650
    %v5747 = vpack.c.bf16 %v4667, %v4659
    %v5748 = vpack.c.bf16 %v4668, %v4660
    %v5749 = vpack.c.bf16 %v4669, %v4661
    %v5750 = vpack.c.bf16 %v4670, %v4662
    %v5751 = vpack.c.bf16 %v4671, %v4663
    %v5752 = vpack.c.bf16 %v4672, %v4664
    %v5753 = vpack.c.bf16 %v4673, %v4665
    %v5754 = vpack.c.bf16 %v4674, %v4666
    %v5755 = vpack.c.bf16 %v4683, %v4675
    %v5756 = vpack.c.bf16 %v4684, %v4676
    %v5757 = vpack.c.bf16 %v4685, %v4677
    %v5758 = vpack.c.bf16 %v4686, %v4678
    %v5759 = vpack.c.bf16 %v4687, %v4679
    %v5760 = vpack.c.bf16 %v4688, %v4680
    %v5761 = vpack.c.bf16 %v4689, %v4681
    %v5762 = vpack.c.bf16 %v4690, %v4682
    %v5763 = vpack.c.bf16 %v4699, %v4691
    %v5764 = vpack.c.bf16 %v4700, %v4692
    %v5765 = vpack.c.bf16 %v4701, %v4693
    %v5766 = vpack.c.bf16 %v4702, %v4694
    %v5767 = vpack.c.bf16 %v4703, %v4695
    %v5768 = vpack.c.bf16 %v4704, %v4696
    %v5769 = vpack.c.bf16 %v4705, %v4697
    %v5770 = vpack.c.bf16 %v4706, %v4698
    %v5771 = vpack.c.bf16 %v4715, %v4707
    %v5772 = vpack.c.bf16 %v4716, %v4708
    %v5773 = vpack.c.bf16 %v4717, %v4709
    %v5774 = vpack.c.bf16 %v4718, %v4710
    %v5775 = vpack.c.bf16 %v4719, %v4711
    %v5776 = vpack.c.bf16 %v4720, %v4712
    %v5777 = vpack.c.bf16 %v4721, %v4713
    %v5778 = vpack.c.bf16 %v4722, %v4714
    %v5779 = vpack.c.bf16 %v4731, %v4723
    %v5780 = vpack.c.bf16 %v4732, %v4724
    %v5781 = vpack.c.bf16 %v4733, %v4725
    %v5782 = vpack.c.bf16 %v4734, %v4726
    %v5783 = vpack.c.bf16 %v4735, %v4727
    %v5784 = vpack.c.bf16 %v4736, %v4728
    %v5785 = vpack.c.bf16 %v4737, %v4729
    %v5786 = vpack.c.bf16 %v4738, %v4730
    %v5787 = vpack.c.bf16 %v4747, %v4739
    %v5788 = vpack.c.bf16 %v4748, %v4740
    %v5789 = vpack.c.bf16 %v4749, %v4741
    %v5790 = vpack.c.bf16 %v4750, %v4742
    %v5791 = vpack.c.bf16 %v4751, %v4743
    %v5792 = vpack.c.bf16 %v4752, %v4744
    %v5793 = vpack.c.bf16 %v4753, %v4745
    %v5794 = vpack.c.bf16 %v4754, %v4746
    %v5795 = vpack.c.bf16 %v4763, %v4755
    %v5796 = vpack.c.bf16 %v4764, %v4756
    %v5797 = vpack.c.bf16 %v4765, %v4757
    %v5798 = vpack.c.bf16 %v4766, %v4758
    %v5799 = vpack.c.bf16 %v4767, %v4759
    %v5800 = vpack.c.bf16 %v4768, %v4760
    %v5801 = vpack.c.bf16 %v4769, %v4761
    %v5802 = vpack.c.bf16 %v4770, %v4762
    %v5803 = vpack.c.bf16 %v4779, %v4771
    %v5804 = vpack.c.bf16 %v4780, %v4772
    %v5805 = vpack.c.bf16 %v4781, %v4773
    %v5806 = vpack.c.bf16 %v4782, %v4774
    %v5807 = vpack.c.bf16 %v4783, %v4775
    %v5808 = vpack.c.bf16 %v4784, %v4776
    %v5809 = vpack.c.bf16 %v4785, %v4777
    %v5810 = vpack.c.bf16 %v4786, %v4778
    %v5827 = vunpack.c.l.b16 %v163
    %v5828 = vunpack.c.h.b16 %v163
    %v5829 = vunpack.c.l.b16 %v164
    %v5830 = vunpack.c.h.b16 %v164
    %v5831 = vunpack.c.l.b16 %v165
    %v5832 = vunpack.c.h.b16 %v165
    %v5833 = vunpack.c.l.b16 %v166
    %v5834 = vunpack.c.h.b16 %v166
    %v5835 = vunpack.c.l.b16 %v167
    %v5836 = vunpack.c.h.b16 %v167
    %v5837 = vunpack.c.l.b16 %v168
    %v5838 = vunpack.c.h.b16 %v168
    %v5839 = vunpack.c.l.b16 %v169
    %v5840 = vunpack.c.h.b16 %v169
    %v5841 = vunpack.c.l.b16 %v170
    %v5842 = vunpack.c.h.b16 %v170
    %v5843 = vunpack.c.l.b16 %v171
    %v5844 = vunpack.c.h.b16 %v171
    %v5845 = vunpack.c.l.b16 %v172
    %v5846 = vunpack.c.h.b16 %v172
    %v5847 = vunpack.c.l.b16 %v173
    %v5848 = vunpack.c.h.b16 %v173
    %v5849 = vunpack.c.l.b16 %v174
    %v5850 = vunpack.c.h.b16 %v174
    %v5851 = vunpack.c.l.b16 %v175
    %v5852 = vunpack.c.h.b16 %v175
    %v5853 = vunpack.c.l.b16 %v176
    %v5854 = vunpack.c.h.b16 %v176
    %v5855 = vunpack.c.l.b16 %v177
    %v5856 = vunpack.c.h.b16 %v177
    %v5857 = vunpack.c.l.b16 %v178
    %v5858 = vunpack.c.h.b16 %v178
    %v5859 = vpack.c.b16 %v5843, %v5827
    %v5860 = vpack.c.b16 %v5844, %v5828
    %v5861 = vpack.c.b16 %v5845, %v5829
    %v5862 = vpack.c.b16 %v5846, %v5830
    %v5863 = vpack.c.b16 %v5847, %v5831
    %v5864 = vpack.c.b16 %v5848, %v5832
    %v5865 = vpack.c.b16 %v5849, %v5833
    %v5866 = vpack.c.b16 %v5850, %v5834
    %v5867 = vpack.c.b16 %v5851, %v5835
    %v5868 = vpack.c.b16 %v5852, %v5836
    %v5869 = vpack.c.b16 %v5853, %v5837
    %v5870 = vpack.c.b16 %v5854, %v5838
    %v5871 = vpack.c.b16 %v5855, %v5839
    %v5872 = vpack.c.b16 %v5856, %v5840
    %v5873 = vpack.c.b16 %v5857, %v5841
    %v5874 = vpack.c.b16 %v5858, %v5842
    %5891 = vmatpush.bf16.msra.mxu0 %v4843
    %5892 = vmatpush.bf16.msra.mxu0 %v4835
    %5893 = vmatpush.bf16.msra.mxu0 %v4827
    %5894 = vmatpush.bf16.msra.mxu0 %v4819
    %5895 = vmatpush.bf16.msra.mxu0 %v4811
    %5896 = vmatpush.bf16.msra.mxu0 %v4803
    %5897 = vmatpush.bf16.msra.mxu0 %v4795
    %5898 = vmatpush.bf16.msra.mxu0 %v4787
    %5899 = vmatmul.bf16.gmra.mxu0 %v5859
    %v5900 = vpop.f32.mrf.mxu0
    %v5901 = vadd.f32 0.0, %v5900
    %v5902 = vpop.f32.mrf.mxu0
    %v5903 = vadd.f32 0.0, %v5902
    %5904 = vdwg.mxu0
    %5905 = vmatpush.bf16.msra.mxu0 %v4907
    %5906 = vmatpush.bf16.msra.mxu0 %v4899
    %5907 = vmatpush.bf16.msra.mxu0 %v4891
    %5908 = vmatpush.bf16.msra.mxu0 %v4883
    %5909 = vmatpush.bf16.msra.mxu0 %v4875
    %5910 = vmatpush.bf16.msra.mxu0 %v4867
    %5911 = vmatpush.bf16.msra.mxu0 %v4859
    %5912 = vmatpush.bf16.msra.mxu0 %v4851
    %5913 = vmatmul.bf16.gmra.mxu0 %v5860
    %v5914 = vpop.f32.mrf.mxu0
    %v5915 = vadd.f32 %v5901, %v5914
    %v5916 = vpop.f32.mrf.mxu0
    %v5917 = vadd.f32 %v5903, %v5916
    %5918 = vdwg.mxu0
    %5919 = vmatpush.bf16.msra.mxu0 %v4971
    %5920 = vmatpush.bf16.msra.mxu0 %v4963
    %5921 = vmatpush.bf16.msra.mxu0 %v4955
    %5922 = vmatpush.bf16.msra.mxu0 %v4947
    %5923 = vmatpush.bf16.msra.mxu0 %v4939
    %5924 = vmatpush.bf16.msra.mxu0 %v4931
    %5925 = vmatpush.bf16.msra.mxu0 %v4923
    %5926 = vmatpush.bf16.msra.mxu0 %v4915
    %5927 = vmatmul.bf16.gmra.mxu0 %v5861
    %v5928 = vpop.f32.mrf.mxu0
    %v5929 = vadd.f32 %v5915, %v5928
    %v5930 = vpop.f32.mrf.mxu0
    %v5931 = vadd.f32 %v5917, %v5930
    %5932 = vdwg.mxu0
    %5933 = vmatpush.bf16.msra.mxu0 %v5035
    %5934 = vmatpush.bf16.msra.mxu0 %v5027
    %5935 = vmatpush.bf16.msra.mxu0 %v5019
    %5936 = vmatpush.bf16.msra.mxu0 %v5011
    %5937 = vmatpush.bf16.msra.mxu0 %v5003
    %5938 = vmatpush.bf16.msra.mxu0 %v4995
    %5939 = vmatpush.bf16.msra.mxu0 %v4987
    %5940 = vmatpush.bf16.msra.mxu0 %v4979
    %5941 = vmatmul.bf16.gmra.mxu0 %v5862
    %v5942 = vpop.f32.mrf.mxu0
    %v5943 = vadd.f32 %v5929, %v5942
    %v5944 = vpop.f32.mrf.mxu0
    %v5945 = vadd.f32 %v5931, %v5944
    %5946 = vdwg.mxu0
    %5947 = vmatpush.bf16.msra.mxu0 %v5099
    %5948 = vmatpush.bf16.msra.mxu0 %v5091
    %5949 = vmatpush.bf16.msra.mxu0 %v5083
    %5950 = vmatpush.bf16.msra.mxu0 %v5075
    %5951 = vmatpush.bf16.msra.mxu0 %v5067
    %5952 = vmatpush.bf16.msra.mxu0 %v5059
    %5953 = vmatpush.bf16.msra.mxu0 %v5051
    %5954 = vmatpush.bf16.msra.mxu0 %v5043
    %5955 = vmatmul.bf16.gmra.mxu0 %v5863
    %v5956 = vpop.f32.mrf.mxu0
    %v5957 = vadd.f32 %v5943, %v5956
    %v5958 = vpop.f32.mrf.mxu0
    %v5959 = vadd.f32 %v5945, %v5958
    %5960 = vdwg.mxu0
    %5961 = vmatpush.bf16.msra.mxu0 %v5163
    %5962 = vmatpush.bf16.msra.mxu0 %v5155
    %5963 = vmatpush.bf16.msra.mxu0 %v5147
    %5964 = vmatpush.bf16.msra.mxu0 %v5139
    %5965 = vmatpush.bf16.msra.mxu0 %v5131
    %5966 = vmatpush.bf16.msra.mxu0 %v5123
    %5967 = vmatpush.bf16.msra.mxu0 %v5115
    %5968 = vmatpush.bf16.msra.mxu0 %v5107
    %5969 = vmatmul.bf16.gmra.mxu0 %v5864
    %v5970 = vpop.f32.mrf.mxu0
    %v5971 = vadd.f32 %v5957, %v5970
    %v5972 = vpop.f32.mrf.mxu0
    %v5973 = vadd.f32 %v5959, %v5972
    %5974 = vdwg.mxu0
    %5975 = vmatpush.bf16.msra.mxu0 %v5227
    %5976 = vmatpush.bf16.msra.mxu0 %v5219
    %5977 = vmatpush.bf16.msra.mxu0 %v5211
    %5978 = vmatpush.bf16.msra.mxu0 %v5203
    %5979 = vmatpush.bf16.msra.mxu0 %v5195
    %5980 = vmatpush.bf16.msra.mxu0 %v5187
    %5981 = vmatpush.bf16.msra.mxu0 %v5179
    %5982 = vmatpush.bf16.msra.mxu0 %v5171
    %5983 = vmatmul.bf16.gmra.mxu0 %v5865
    %v5984 = vpop.f32.mrf.mxu0
    %v5985 = vadd.f32 %v5971, %v5984
    %v5986 = vpop.f32.mrf.mxu0
    %v5987 = vadd.f32 %v5973, %v5986
    %5988 = vdwg.mxu0
    %5989 = vmatpush.bf16.msra.mxu0 %v5291
    %5990 = vmatpush.bf16.msra.mxu0 %v5283
    %5991 = vmatpush.bf16.msra.mxu0 %v5275
    %5992 = vmatpush.bf16.msra.mxu0 %v5267
    %5993 = vmatpush.bf16.msra.mxu0 %v5259
    %5994 = vmatpush.bf16.msra.mxu0 %v5251
    %5995 = vmatpush.bf16.msra.mxu0 %v5243
    %5996 = vmatpush.bf16.msra.mxu0 %v5235
    %5997 = vmatmul.bf16.gmra.mxu0 %v5866
    %v5998 = vpop.f32.mrf.mxu0
    %v5999 = vadd.f32 %v5985, %v5998
    %v6000 = vpop.f32.mrf.mxu0
    %v6001 = vadd.f32 %v5987, %v6000
    %6002 = vdwg.mxu0
    %6003 = vmatpush.bf16.msra.mxu0 %v5355
    %6004 = vmatpush.bf16.msra.mxu0 %v5347
    %6005 = vmatpush.bf16.msra.mxu0 %v5339
    %6006 = vmatpush.bf16.msra.mxu0 %v5331
    %6007 = vmatpush.bf16.msra.mxu0 %v5323
    %6008 = vmatpush.bf16.msra.mxu0 %v5315
    %6009 = vmatpush.bf16.msra.mxu0 %v5307
    %6010 = vmatpush.bf16.msra.mxu0 %v5299
    %6011 = vmatmul.bf16.gmra.mxu0 %v5867
    %v6012 = vpop.f32.mrf.mxu0
    %v6013 = vadd.f32 %v5999, %v6012
    %v6014 = vpop.f32.mrf.mxu0
    %v6015 = vadd.f32 %v6001, %v6014
    %6016 = vdwg.mxu0
    %6017 = vmatpush.bf16.msra.mxu0 %v5419
    %6018 = vmatpush.bf16.msra.mxu0 %v5411
    %6019 = vmatpush.bf16.msra.mxu0 %v5403
    %6020 = vmatpush.bf16.msra.mxu0 %v5395
    %6021 = vmatpush.bf16.msra.mxu0 %v5387
    %6022 = vmatpush.bf16.msra.mxu0 %v5379
    %6023 = vmatpush.bf16.msra.mxu0 %v5371
    %6024 = vmatpush.bf16.msra.mxu0 %v5363
    %6025 = vmatmul.bf16.gmra.mxu0 %v5868
    %v6026 = vpop.f32.mrf.mxu0
    %v6027 = vadd.f32 %v6013, %v6026
    %v6028 = vpop.f32.mrf.mxu0
    %v6029 = vadd.f32 %v6015, %v6028
    %6030 = vdwg.mxu0
    %6031 = vmatpush.bf16.msra.mxu0 %v5483
    %6032 = vmatpush.bf16.msra.mxu0 %v5475
    %6033 = vmatpush.bf16.msra.mxu0 %v5467
    %6034 = vmatpush.bf16.msra.mxu0 %v5459
    %6035 = vmatpush.bf16.msra.mxu0 %v5451
    %6036 = vmatpush.bf16.msra.mxu0 %v5443
    %6037 = vmatpush.bf16.msra.mxu0 %v5435
    %6038 = vmatpush.bf16.msra.mxu0 %v5427
    %6039 = vmatmul.bf16.gmra.mxu0 %v5869
    %v6040 = vpop.f32.mrf.mxu0
    %v6041 = vadd.f32 %v6027, %v6040
    %v6042 = vpop.f32.mrf.mxu0
    %v6043 = vadd.f32 %v6029, %v6042
    %6044 = vdwg.mxu0
    %6045 = vmatpush.bf16.msra.mxu0 %v5547
    %6046 = vmatpush.bf16.msra.mxu0 %v5539
    %6047 = vmatpush.bf16.msra.mxu0 %v5531
    %6048 = vmatpush.bf16.msra.mxu0 %v5523
    %6049 = vmatpush.bf16.msra.mxu0 %v5515
    %6050 = vmatpush.bf16.msra.mxu0 %v5507
    %6051 = vmatpush.bf16.msra.mxu0 %v5499
    %6052 = vmatpush.bf16.msra.mxu0 %v5491
    %6053 = vmatmul.bf16.gmra.mxu0 %v5870
    %v6054 = vpop.f32.mrf.mxu0
    %v6055 = vadd.f32 %v6041, %v6054
    %v6056 = vpop.f32.mrf.mxu0
    %v6057 = vadd.f32 %v6043, %v6056
    %6058 = vdwg.mxu0
    %6059 = vmatpush.bf16.msra.mxu0 %v5611
    %6060 = vmatpush.bf16.msra.mxu0 %v5603
    %6061 = vmatpush.bf16.msra.mxu0 %v5595
    %6062 = vmatpush.bf16.msra.mxu0 %v5587
    %6063 = vmatpush.bf16.msra.mxu0 %v5579
    %6064 = vmatpush.bf16.msra.mxu0 %v5571
    %6065 = vmatpush.bf16.msra.mxu0 %v5563
    %6066 = vmatpush.bf16.msra.mxu0 %v5555
    %6067 = vmatmul.bf16.gmra.mxu0 %v5871
    %v6068 = vpop.f32.mrf.mxu0
    %v6069 = vadd.f32 %v6055, %v6068
    %v6070 = vpop.f32.mrf.mxu0
    %v6071 = vadd.f32 %v6057, %v6070
    %6072 = vdwg.mxu0
    %6073 = vmatpush.bf16.msra.mxu0 %v5675
    %6074 = vmatpush.bf16.msra.mxu0 %v5667
    %6075 = vmatpush.bf16.msra.mxu0 %v5659
    %6076 = vmatpush.bf16.msra.mxu0 %v5651
    %6077 = vmatpush.bf16.msra.mxu0 %v5643
    %6078 = vmatpush.bf16.msra.mxu0 %v5635
    %6079 = vmatpush.bf16.msra.mxu0 %v5627
    %6080 = vmatpush.bf16.msra.mxu0 %v5619
    %6081 = vmatmul.bf16.gmra.mxu0 %v5872
    %v6082 = vpop.f32.mrf.mxu0
    %v6083 = vadd.f32 %v6069, %v6082
    %v6084 = vpop.f32.mrf.mxu0
    %v6085 = vadd.f32 %v6071, %v6084
    %6086 = vdwg.mxu0
    %6087 = vmatpush.bf16.msra.mxu0 %v5739
    %6088 = vmatpush.bf16.msra.mxu0 %v5731
    %6089 = vmatpush.bf16.msra.mxu0 %v5723
    %6090 = vmatpush.bf16.msra.mxu0 %v5715
    %6091 = vmatpush.bf16.msra.mxu0 %v5707
    %6092 = vmatpush.bf16.msra.mxu0 %v5699
    %6093 = vmatpush.bf16.msra.mxu0 %v5691
    %6094 = vmatpush.bf16.msra.mxu0 %v5683
    %6095 = vmatmul.bf16.gmra.mxu0 %v5873
    %v6096 = vpop.f32.mrf.mxu0
    %v6097 = vadd.f32 %v6083, %v6096
    %v6098 = vpop.f32.mrf.mxu0
    %v6099 = vadd.f32 %v6085, %v6098
    %6100 = vdwg.mxu0
    %6101 = vmatpush.bf16.msra.mxu0 %v5803
    %6102 = vmatpush.bf16.msra.mxu0 %v5795
    %6103 = vmatpush.bf16.msra.mxu0 %v5787
    %6104 = vmatpush.bf16.msra.mxu0 %v5779
    %6105 = vmatpush.bf16.msra.mxu0 %v5771
    %6106 = vmatpush.bf16.msra.mxu0 %v5763
    %6107 = vmatpush.bf16.msra.mxu0 %v5755
    %6108 = vmatpush.bf16.msra.mxu0 %v5747
    %6109 = vmatmul.bf16.gmra.mxu0 %v5874
    %v6110 = vpop.f32.mrf.mxu0
    %v6111 = vadd.f32 %v6097, %v6110
    %v6112 = vpop.f32.mrf.mxu0
    %v6113 = vadd.f32 %v6099, %v6112
    %6114 = vdwg.mxu0
    %6115 = vmatpush.bf16.msra.mxu0 %v4844
    %6116 = vmatpush.bf16.msra.mxu0 %v4836
    %6117 = vmatpush.bf16.msra.mxu0 %v4828
    %6118 = vmatpush.bf16.msra.mxu0 %v4820
    %6119 = vmatpush.bf16.msra.mxu0 %v4812
    %6120 = vmatpush.bf16.msra.mxu0 %v4804
    %6121 = vmatpush.bf16.msra.mxu0 %v4796
    %6122 = vmatpush.bf16.msra.mxu0 %v4788
    %6123 = vmatmul.bf16.gmra.mxu0 %v5859
    %v6124 = vpop.f32.mrf.mxu0
    %v6125 = vadd.f32 0.0, %v6124
    %v6126 = vpop.f32.mrf.mxu0
    %v6127 = vadd.f32 0.0, %v6126
    %6128 = vdwg.mxu0
    %6129 = vmatpush.bf16.msra.mxu0 %v4908
    %6130 = vmatpush.bf16.msra.mxu0 %v4900
    %6131 = vmatpush.bf16.msra.mxu0 %v4892
    %6132 = vmatpush.bf16.msra.mxu0 %v4884
    %6133 = vmatpush.bf16.msra.mxu0 %v4876
    %6134 = vmatpush.bf16.msra.mxu0 %v4868
    %6135 = vmatpush.bf16.msra.mxu0 %v4860
    %6136 = vmatpush.bf16.msra.mxu0 %v4852
    %6137 = vmatmul.bf16.gmra.mxu0 %v5860
    %v6138 = vpop.f32.mrf.mxu0
    %v6139 = vadd.f32 %v6125, %v6138
    %v6140 = vpop.f32.mrf.mxu0
    %v6141 = vadd.f32 %v6127, %v6140
    %6142 = vdwg.mxu0
    %6143 = vmatpush.bf16.msra.mxu0 %v4972
    %6144 = vmatpush.bf16.msra.mxu0 %v4964
    %6145 = vmatpush.bf16.msra.mxu0 %v4956
    %6146 = vmatpush.bf16.msra.mxu0 %v4948
    %6147 = vmatpush.bf16.msra.mxu0 %v4940
    %6148 = vmatpush.bf16.msra.mxu0 %v4932
    %6149 = vmatpush.bf16.msra.mxu0 %v4924
    %6150 = vmatpush.bf16.msra.mxu0 %v4916
    %6151 = vmatmul.bf16.gmra.mxu0 %v5861
    %v6152 = vpop.f32.mrf.mxu0
    %v6153 = vadd.f32 %v6139, %v6152
    %v6154 = vpop.f32.mrf.mxu0
    %v6155 = vadd.f32 %v6141, %v6154
    %6156 = vdwg.mxu0
    %6157 = vmatpush.bf16.msra.mxu0 %v5036
    %6158 = vmatpush.bf16.msra.mxu0 %v5028
    %6159 = vmatpush.bf16.msra.mxu0 %v5020
    %6160 = vmatpush.bf16.msra.mxu0 %v5012
    %6161 = vmatpush.bf16.msra.mxu0 %v5004
    %6162 = vmatpush.bf16.msra.mxu0 %v4996
    %6163 = vmatpush.bf16.msra.mxu0 %v4988
    %6164 = vmatpush.bf16.msra.mxu0 %v4980
    %6165 = vmatmul.bf16.gmra.mxu0 %v5862
    %v6166 = vpop.f32.mrf.mxu0
    %v6167 = vadd.f32 %v6153, %v6166
    %v6168 = vpop.f32.mrf.mxu0
    %v6169 = vadd.f32 %v6155, %v6168
    %6170 = vdwg.mxu0
    %6171 = vmatpush.bf16.msra.mxu0 %v5100
    %6172 = vmatpush.bf16.msra.mxu0 %v5092
    %6173 = vmatpush.bf16.msra.mxu0 %v5084
    %6174 = vmatpush.bf16.msra.mxu0 %v5076
    %6175 = vmatpush.bf16.msra.mxu0 %v5068
    %6176 = vmatpush.bf16.msra.mxu0 %v5060
    %6177 = vmatpush.bf16.msra.mxu0 %v5052
    %6178 = vmatpush.bf16.msra.mxu0 %v5044
    %6179 = vmatmul.bf16.gmra.mxu0 %v5863
    %v6180 = vpop.f32.mrf.mxu0
    %v6181 = vadd.f32 %v6167, %v6180
    %v6182 = vpop.f32.mrf.mxu0
    %v6183 = vadd.f32 %v6169, %v6182
    %6184 = vdwg.mxu0
    %6185 = vmatpush.bf16.msra.mxu0 %v5164
    %6186 = vmatpush.bf16.msra.mxu0 %v5156
    %6187 = vmatpush.bf16.msra.mxu0 %v5148
    %6188 = vmatpush.bf16.msra.mxu0 %v5140
    %6189 = vmatpush.bf16.msra.mxu0 %v5132
    %6190 = vmatpush.bf16.msra.mxu0 %v5124
    %6191 = vmatpush.bf16.msra.mxu0 %v5116
    %6192 = vmatpush.bf16.msra.mxu0 %v5108
    %6193 = vmatmul.bf16.gmra.mxu0 %v5864
    %v6194 = vpop.f32.mrf.mxu0
    %v6195 = vadd.f32 %v6181, %v6194
    %v6196 = vpop.f32.mrf.mxu0
    %v6197 = vadd.f32 %v6183, %v6196
    %6198 = vdwg.mxu0
    %6199 = vmatpush.bf16.msra.mxu0 %v5228
    %6200 = vmatpush.bf16.msra.mxu0 %v5220
    %6201 = vmatpush.bf16.msra.mxu0 %v5212
    %6202 = vmatpush.bf16.msra.mxu0 %v5204
    %6203 = vmatpush.bf16.msra.mxu0 %v5196
    %6204 = vmatpush.bf16.msra.mxu0 %v5188
    %6205 = vmatpush.bf16.msra.mxu0 %v5180
    %6206 = vmatpush.bf16.msra.mxu0 %v5172
    %6207 = vmatmul.bf16.gmra.mxu0 %v5865
    %v6208 = vpop.f32.mrf.mxu0
    %v6209 = vadd.f32 %v6195, %v6208
    %v6210 = vpop.f32.mrf.mxu0
    %v6211 = vadd.f32 %v6197, %v6210
    %6212 = vdwg.mxu0
    %6213 = vmatpush.bf16.msra.mxu0 %v5292
    %6214 = vmatpush.bf16.msra.mxu0 %v5284
    %6215 = vmatpush.bf16.msra.mxu0 %v5276
    %6216 = vmatpush.bf16.msra.mxu0 %v5268
    %6217 = vmatpush.bf16.msra.mxu0 %v5260
    %6218 = vmatpush.bf16.msra.mxu0 %v5252
    %6219 = vmatpush.bf16.msra.mxu0 %v5244
    %6220 = vmatpush.bf16.msra.mxu0 %v5236
    %6221 = vmatmul.bf16.gmra.mxu0 %v5866
    %v6222 = vpop.f32.mrf.mxu0
    %v6223 = vadd.f32 %v6209, %v6222
    %v6224 = vpop.f32.mrf.mxu0
    %v6225 = vadd.f32 %v6211, %v6224
    %6226 = vdwg.mxu0
    %6227 = vmatpush.bf16.msra.mxu0 %v5356
    %6228 = vmatpush.bf16.msra.mxu0 %v5348
    %6229 = vmatpush.bf16.msra.mxu0 %v5340
    %6230 = vmatpush.bf16.msra.mxu0 %v5332
    %6231 = vmatpush.bf16.msra.mxu0 %v5324
    %6232 = vmatpush.bf16.msra.mxu0 %v5316
    %6233 = vmatpush.bf16.msra.mxu0 %v5308
    %6234 = vmatpush.bf16.msra.mxu0 %v5300
    %6235 = vmatmul.bf16.gmra.mxu0 %v5867
    %v6236 = vpop.f32.mrf.mxu0
    %v6237 = vadd.f32 %v6223, %v6236
    %v6238 = vpop.f32.mrf.mxu0
    %v6239 = vadd.f32 %v6225, %v6238
    %6240 = vdwg.mxu0
    %6241 = vmatpush.bf16.msra.mxu0 %v5420
    %6242 = vmatpush.bf16.msra.mxu0 %v5412
    %6243 = vmatpush.bf16.msra.mxu0 %v5404
    %6244 = vmatpush.bf16.msra.mxu0 %v5396
    %6245 = vmatpush.bf16.msra.mxu0 %v5388
    %6246 = vmatpush.bf16.msra.mxu0 %v5380
    %6247 = vmatpush.bf16.msra.mxu0 %v5372
    %6248 = vmatpush.bf16.msra.mxu0 %v5364
    %6249 = vmatmul.bf16.gmra.mxu0 %v5868
    %v6250 = vpop.f32.mrf.mxu0
    %v6251 = vadd.f32 %v6237, %v6250
    %v6252 = vpop.f32.mrf.mxu0
    %v6253 = vadd.f32 %v6239, %v6252
    %6254 = vdwg.mxu0
    %6255 = vmatpush.bf16.msra.mxu0 %v5484
    %6256 = vmatpush.bf16.msra.mxu0 %v5476
    %6257 = vmatpush.bf16.msra.mxu0 %v5468
    %6258 = vmatpush.bf16.msra.mxu0 %v5460
    %6259 = vmatpush.bf16.msra.mxu0 %v5452
    %6260 = vmatpush.bf16.msra.mxu0 %v5444
    %6261 = vmatpush.bf16.msra.mxu0 %v5436
    %6262 = vmatpush.bf16.msra.mxu0 %v5428
    %6263 = vmatmul.bf16.gmra.mxu0 %v5869
    %v6264 = vpop.f32.mrf.mxu0
    %v6265 = vadd.f32 %v6251, %v6264
    %v6266 = vpop.f32.mrf.mxu0
    %v6267 = vadd.f32 %v6253, %v6266
    %6268 = vdwg.mxu0
    %6269 = vmatpush.bf16.msra.mxu0 %v5548
    %6270 = vmatpush.bf16.msra.mxu0 %v5540
    %6271 = vmatpush.bf16.msra.mxu0 %v5532
    %6272 = vmatpush.bf16.msra.mxu0 %v5524
    %6273 = vmatpush.bf16.msra.mxu0 %v5516
    %6274 = vmatpush.bf16.msra.mxu0 %v5508
    %6275 = vmatpush.bf16.msra.mxu0 %v5500
    %6276 = vmatpush.bf16.msra.mxu0 %v5492
    %6277 = vmatmul.bf16.gmra.mxu0 %v5870
    %v6278 = vpop.f32.mrf.mxu0
    %v6279 = vadd.f32 %v6265, %v6278
    %v6280 = vpop.f32.mrf.mxu0
    %v6281 = vadd.f32 %v6267, %v6280
    %6282 = vdwg.mxu0
    %6283 = vmatpush.bf16.msra.mxu0 %v5612
    %6284 = vmatpush.bf16.msra.mxu0 %v5604
    %6285 = vmatpush.bf16.msra.mxu0 %v5596
    %6286 = vmatpush.bf16.msra.mxu0 %v5588
    %6287 = vmatpush.bf16.msra.mxu0 %v5580
    %6288 = vmatpush.bf16.msra.mxu0 %v5572
    %6289 = vmatpush.bf16.msra.mxu0 %v5564
    %6290 = vmatpush.bf16.msra.mxu0 %v5556
    %6291 = vmatmul.bf16.gmra.mxu0 %v5871
    %v6292 = vpop.f32.mrf.mxu0
    %v6293 = vadd.f32 %v6279, %v6292
    %v6294 = vpop.f32.mrf.mxu0
    %v6295 = vadd.f32 %v6281, %v6294
    %6296 = vdwg.mxu0
    %6297 = vmatpush.bf16.msra.mxu0 %v5676
    %6298 = vmatpush.bf16.msra.mxu0 %v5668
    %6299 = vmatpush.bf16.msra.mxu0 %v5660
    %6300 = vmatpush.bf16.msra.mxu0 %v5652
    %6301 = vmatpush.bf16.msra.mxu0 %v5644
    %6302 = vmatpush.bf16.msra.mxu0 %v5636
    %6303 = vmatpush.bf16.msra.mxu0 %v5628
    %6304 = vmatpush.bf16.msra.mxu0 %v5620
    %6305 = vmatmul.bf16.gmra.mxu0 %v5872
    %v6306 = vpop.f32.mrf.mxu0
    %v6307 = vadd.f32 %v6293, %v6306
    %v6308 = vpop.f32.mrf.mxu0
    %v6309 = vadd.f32 %v6295, %v6308
    %6310 = vdwg.mxu0
    %6311 = vmatpush.bf16.msra.mxu0 %v5740
    %6312 = vmatpush.bf16.msra.mxu0 %v5732
    %6313 = vmatpush.bf16.msra.mxu0 %v5724
    %6314 = vmatpush.bf16.msra.mxu0 %v5716
    %6315 = vmatpush.bf16.msra.mxu0 %v5708
    %6316 = vmatpush.bf16.msra.mxu0 %v5700
    %6317 = vmatpush.bf16.msra.mxu0 %v5692
    %6318 = vmatpush.bf16.msra.mxu0 %v5684
    %6319 = vmatmul.bf16.gmra.mxu0 %v5873
    %v6320 = vpop.f32.mrf.mxu0
    %v6321 = vadd.f32 %v6307, %v6320
    %v6322 = vpop.f32.mrf.mxu0
    %v6323 = vadd.f32 %v6309, %v6322
    %6324 = vdwg.mxu0
    %6325 = vmatpush.bf16.msra.mxu0 %v5804
    %6326 = vmatpush.bf16.msra.mxu0 %v5796
    %6327 = vmatpush.bf16.msra.mxu0 %v5788
    %6328 = vmatpush.bf16.msra.mxu0 %v5780
    %6329 = vmatpush.bf16.msra.mxu0 %v5772
    %6330 = vmatpush.bf16.msra.mxu0 %v5764
    %6331 = vmatpush.bf16.msra.mxu0 %v5756
    %6332 = vmatpush.bf16.msra.mxu0 %v5748
    %6333 = vmatmul.bf16.gmra.mxu0 %v5874
    %v6334 = vpop.f32.mrf.mxu0
    %v6335 = vadd.f32 %v6321, %v6334
    %v6336 = vpop.f32.mrf.mxu0
    %v6337 = vadd.f32 %v6323, %v6336
    %6338 = vdwg.mxu0
    %6339 = vmatpush.bf16.msra.mxu0 %v4845
    %6340 = vmatpush.bf16.msra.mxu0 %v4837
    %6341 = vmatpush.bf16.msra.mxu0 %v4829
    %6342 = vmatpush.bf16.msra.mxu0 %v4821
    %6343 = vmatpush.bf16.msra.mxu0 %v4813
    %6344 = vmatpush.bf16.msra.mxu0 %v4805
    %6345 = vmatpush.bf16.msra.mxu0 %v4797
    %6346 = vmatpush.bf16.msra.mxu0 %v4789
    %6347 = vmatmul.bf16.gmra.mxu0 %v5859
    %v6348 = vpop.f32.mrf.mxu0
    %v6349 = vadd.f32 0.0, %v6348
    %v6350 = vpop.f32.mrf.mxu0
    %v6351 = vadd.f32 0.0, %v6350
    %6352 = vdwg.mxu0
    %6353 = vmatpush.bf16.msra.mxu0 %v4909
    %6354 = vmatpush.bf16.msra.mxu0 %v4901
    %6355 = vmatpush.bf16.msra.mxu0 %v4893
    %6356 = vmatpush.bf16.msra.mxu0 %v4885
    %6357 = vmatpush.bf16.msra.mxu0 %v4877
    %6358 = vmatpush.bf16.msra.mxu0 %v4869
    %6359 = vmatpush.bf16.msra.mxu0 %v4861
    %6360 = vmatpush.bf16.msra.mxu0 %v4853
    %6361 = vmatmul.bf16.gmra.mxu0 %v5860
    %v6362 = vpop.f32.mrf.mxu0
    %v6363 = vadd.f32 %v6349, %v6362
    %v6364 = vpop.f32.mrf.mxu0
    %v6365 = vadd.f32 %v6351, %v6364
    %6366 = vdwg.mxu0
    %6367 = vmatpush.bf16.msra.mxu0 %v4973
    %6368 = vmatpush.bf16.msra.mxu0 %v4965
    %6369 = vmatpush.bf16.msra.mxu0 %v4957
    %6370 = vmatpush.bf16.msra.mxu0 %v4949
    %6371 = vmatpush.bf16.msra.mxu0 %v4941
    %6372 = vmatpush.bf16.msra.mxu0 %v4933
    %6373 = vmatpush.bf16.msra.mxu0 %v4925
    %6374 = vmatpush.bf16.msra.mxu0 %v4917
    %6375 = vmatmul.bf16.gmra.mxu0 %v5861
    %v6376 = vpop.f32.mrf.mxu0
    %v6377 = vadd.f32 %v6363, %v6376
    %v6378 = vpop.f32.mrf.mxu0
    %v6379 = vadd.f32 %v6365, %v6378
    %6380 = vdwg.mxu0
    %6381 = vmatpush.bf16.msra.mxu0 %v5037
    %6382 = vmatpush.bf16.msra.mxu0 %v5029
    %6383 = vmatpush.bf16.msra.mxu0 %v5021
    %6384 = vmatpush.bf16.msra.mxu0 %v5013
    %6385 = vmatpush.bf16.msra.mxu0 %v5005
    %6386 = vmatpush.bf16.msra.mxu0 %v4997
    %6387 = vmatpush.bf16.msra.mxu0 %v4989
    %6388 = vmatpush.bf16.msra.mxu0 %v4981
    %6389 = vmatmul.bf16.gmra.mxu0 %v5862
    %v6390 = vpop.f32.mrf.mxu0
    %v6391 = vadd.f32 %v6377, %v6390
    %v6392 = vpop.f32.mrf.mxu0
    %v6393 = vadd.f32 %v6379, %v6392
    %6394 = vdwg.mxu0
    %6395 = vmatpush.bf16.msra.mxu0 %v5101
    %6396 = vmatpush.bf16.msra.mxu0 %v5093
    %6397 = vmatpush.bf16.msra.mxu0 %v5085
    %6398 = vmatpush.bf16.msra.mxu0 %v5077
    %6399 = vmatpush.bf16.msra.mxu0 %v5069
    %6400 = vmatpush.bf16.msra.mxu0 %v5061
    %6401 = vmatpush.bf16.msra.mxu0 %v5053
    %6402 = vmatpush.bf16.msra.mxu0 %v5045
    %6403 = vmatmul.bf16.gmra.mxu0 %v5863
    %v6404 = vpop.f32.mrf.mxu0
    %v6405 = vadd.f32 %v6391, %v6404
    %v6406 = vpop.f32.mrf.mxu0
    %v6407 = vadd.f32 %v6393, %v6406
    %6408 = vdwg.mxu0
    %6409 = vmatpush.bf16.msra.mxu0 %v5165
    %6410 = vmatpush.bf16.msra.mxu0 %v5157
    %6411 = vmatpush.bf16.msra.mxu0 %v5149
    %6412 = vmatpush.bf16.msra.mxu0 %v5141
    %6413 = vmatpush.bf16.msra.mxu0 %v5133
    %6414 = vmatpush.bf16.msra.mxu0 %v5125
    %6415 = vmatpush.bf16.msra.mxu0 %v5117
    %6416 = vmatpush.bf16.msra.mxu0 %v5109
    %6417 = vmatmul.bf16.gmra.mxu0 %v5864
    %v6418 = vpop.f32.mrf.mxu0
    %v6419 = vadd.f32 %v6405, %v6418
    %v6420 = vpop.f32.mrf.mxu0
    %v6421 = vadd.f32 %v6407, %v6420
    %6422 = vdwg.mxu0
    %6423 = vmatpush.bf16.msra.mxu0 %v5229
    %6424 = vmatpush.bf16.msra.mxu0 %v5221
    %6425 = vmatpush.bf16.msra.mxu0 %v5213
    %6426 = vmatpush.bf16.msra.mxu0 %v5205
    %6427 = vmatpush.bf16.msra.mxu0 %v5197
    %6428 = vmatpush.bf16.msra.mxu0 %v5189
    %6429 = vmatpush.bf16.msra.mxu0 %v5181
    %6430 = vmatpush.bf16.msra.mxu0 %v5173
    %6431 = vmatmul.bf16.gmra.mxu0 %v5865
    %v6432 = vpop.f32.mrf.mxu0
    %v6433 = vadd.f32 %v6419, %v6432
    %v6434 = vpop.f32.mrf.mxu0
    %v6435 = vadd.f32 %v6421, %v6434
    %6436 = vdwg.mxu0
    %6437 = vmatpush.bf16.msra.mxu0 %v5293
    %6438 = vmatpush.bf16.msra.mxu0 %v5285
    %6439 = vmatpush.bf16.msra.mxu0 %v5277
    %6440 = vmatpush.bf16.msra.mxu0 %v5269
    %6441 = vmatpush.bf16.msra.mxu0 %v5261
    %6442 = vmatpush.bf16.msra.mxu0 %v5253
    %6443 = vmatpush.bf16.msra.mxu0 %v5245
    %6444 = vmatpush.bf16.msra.mxu0 %v5237
    %6445 = vmatmul.bf16.gmra.mxu0 %v5866
    %v6446 = vpop.f32.mrf.mxu0
    %v6447 = vadd.f32 %v6433, %v6446
    %v6448 = vpop.f32.mrf.mxu0
    %v6449 = vadd.f32 %v6435, %v6448
    %6450 = vdwg.mxu0
    %6451 = vmatpush.bf16.msra.mxu0 %v5357
    %6452 = vmatpush.bf16.msra.mxu0 %v5349
    %6453 = vmatpush.bf16.msra.mxu0 %v5341
    %6454 = vmatpush.bf16.msra.mxu0 %v5333
    %6455 = vmatpush.bf16.msra.mxu0 %v5325
    %6456 = vmatpush.bf16.msra.mxu0 %v5317
    %6457 = vmatpush.bf16.msra.mxu0 %v5309
    %6458 = vmatpush.bf16.msra.mxu0 %v5301
    %6459 = vmatmul.bf16.gmra.mxu0 %v5867
    %v6460 = vpop.f32.mrf.mxu0
    %v6461 = vadd.f32 %v6447, %v6460
    %v6462 = vpop.f32.mrf.mxu0
    %v6463 = vadd.f32 %v6449, %v6462
    %6464 = vdwg.mxu0
    %6465 = vmatpush.bf16.msra.mxu0 %v5421
    %6466 = vmatpush.bf16.msra.mxu0 %v5413
    %6467 = vmatpush.bf16.msra.mxu0 %v5405
    %6468 = vmatpush.bf16.msra.mxu0 %v5397
    %6469 = vmatpush.bf16.msra.mxu0 %v5389
    %6470 = vmatpush.bf16.msra.mxu0 %v5381
    %6471 = vmatpush.bf16.msra.mxu0 %v5373
    %6472 = vmatpush.bf16.msra.mxu0 %v5365
    %6473 = vmatmul.bf16.gmra.mxu0 %v5868
    %v6474 = vpop.f32.mrf.mxu0
    %v6475 = vadd.f32 %v6461, %v6474
    %v6476 = vpop.f32.mrf.mxu0
    %v6477 = vadd.f32 %v6463, %v6476
    %6478 = vdwg.mxu0
    %6479 = vmatpush.bf16.msra.mxu0 %v5485
    %6480 = vmatpush.bf16.msra.mxu0 %v5477
    %6481 = vmatpush.bf16.msra.mxu0 %v5469
    %6482 = vmatpush.bf16.msra.mxu0 %v5461
    %6483 = vmatpush.bf16.msra.mxu0 %v5453
    %6484 = vmatpush.bf16.msra.mxu0 %v5445
    %6485 = vmatpush.bf16.msra.mxu0 %v5437
    %6486 = vmatpush.bf16.msra.mxu0 %v5429
    %6487 = vmatmul.bf16.gmra.mxu0 %v5869
    %v6488 = vpop.f32.mrf.mxu0
    %v6489 = vadd.f32 %v6475, %v6488
    %v6490 = vpop.f32.mrf.mxu0
    %v6491 = vadd.f32 %v6477, %v6490
    %6492 = vdwg.mxu0
    %6493 = vmatpush.bf16.msra.mxu0 %v5549
    %6494 = vmatpush.bf16.msra.mxu0 %v5541
    %6495 = vmatpush.bf16.msra.mxu0 %v5533
    %6496 = vmatpush.bf16.msra.mxu0 %v5525
    %6497 = vmatpush.bf16.msra.mxu0 %v5517
    %6498 = vmatpush.bf16.msra.mxu0 %v5509
    %6499 = vmatpush.bf16.msra.mxu0 %v5501
    %6500 = vmatpush.bf16.msra.mxu0 %v5493
    %6501 = vmatmul.bf16.gmra.mxu0 %v5870
    %v6502 = vpop.f32.mrf.mxu0
    %v6503 = vadd.f32 %v6489, %v6502
    %v6504 = vpop.f32.mrf.mxu0
    %v6505 = vadd.f32 %v6491, %v6504
    %6506 = vdwg.mxu0
    %6507 = vmatpush.bf16.msra.mxu0 %v5613
    %6508 = vmatpush.bf16.msra.mxu0 %v5605
    %6509 = vmatpush.bf16.msra.mxu0 %v5597
    %6510 = vmatpush.bf16.msra.mxu0 %v5589
    %6511 = vmatpush.bf16.msra.mxu0 %v5581
    %6512 = vmatpush.bf16.msra.mxu0 %v5573
    %6513 = vmatpush.bf16.msra.mxu0 %v5565
    %6514 = vmatpush.bf16.msra.mxu0 %v5557
    %6515 = vmatmul.bf16.gmra.mxu0 %v5871
    %v6516 = vpop.f32.mrf.mxu0
    %v6517 = vadd.f32 %v6503, %v6516
    %v6518 = vpop.f32.mrf.mxu0
    %v6519 = vadd.f32 %v6505, %v6518
    %6520 = vdwg.mxu0
    %6521 = vmatpush.bf16.msra.mxu0 %v5677
    %6522 = vmatpush.bf16.msra.mxu0 %v5669
    %6523 = vmatpush.bf16.msra.mxu0 %v5661
    %6524 = vmatpush.bf16.msra.mxu0 %v5653
    %6525 = vmatpush.bf16.msra.mxu0 %v5645
    %6526 = vmatpush.bf16.msra.mxu0 %v5637
    %6527 = vmatpush.bf16.msra.mxu0 %v5629
    %6528 = vmatpush.bf16.msra.mxu0 %v5621
    %6529 = vmatmul.bf16.gmra.mxu0 %v5872
    %v6530 = vpop.f32.mrf.mxu0
    %v6531 = vadd.f32 %v6517, %v6530
    %v6532 = vpop.f32.mrf.mxu0
    %v6533 = vadd.f32 %v6519, %v6532
    %6534 = vdwg.mxu0
    %6535 = vmatpush.bf16.msra.mxu0 %v5741
    %6536 = vmatpush.bf16.msra.mxu0 %v5733
    %6537 = vmatpush.bf16.msra.mxu0 %v5725
    %6538 = vmatpush.bf16.msra.mxu0 %v5717
    %6539 = vmatpush.bf16.msra.mxu0 %v5709
    %6540 = vmatpush.bf16.msra.mxu0 %v5701
    %6541 = vmatpush.bf16.msra.mxu0 %v5693
    %6542 = vmatpush.bf16.msra.mxu0 %v5685
    %6543 = vmatmul.bf16.gmra.mxu0 %v5873
    %v6544 = vpop.f32.mrf.mxu0
    %v6545 = vadd.f32 %v6531, %v6544
    %v6546 = vpop.f32.mrf.mxu0
    %v6547 = vadd.f32 %v6533, %v6546
    %6548 = vdwg.mxu0
    %6549 = vmatpush.bf16.msra.mxu0 %v5805
    %6550 = vmatpush.bf16.msra.mxu0 %v5797
    %6551 = vmatpush.bf16.msra.mxu0 %v5789
    %6552 = vmatpush.bf16.msra.mxu0 %v5781
    %6553 = vmatpush.bf16.msra.mxu0 %v5773
    %6554 = vmatpush.bf16.msra.mxu0 %v5765
    %6555 = vmatpush.bf16.msra.mxu0 %v5757
    %6556 = vmatpush.bf16.msra.mxu0 %v5749
    %6557 = vmatmul.bf16.gmra.mxu0 %v5874
    %v6558 = vpop.f32.mrf.mxu0
    %v6559 = vadd.f32 %v6545, %v6558
    %v6560 = vpop.f32.mrf.mxu0
    %v6561 = vadd.f32 %v6547, %v6560
    %6562 = vdwg.mxu0
    %6563 = vmatpush.bf16.msra.mxu0 %v4846
    %6564 = vmatpush.bf16.msra.mxu0 %v4838
    %6565 = vmatpush.bf16.msra.mxu0 %v4830
    %6566 = vmatpush.bf16.msra.mxu0 %v4822
    %6567 = vmatpush.bf16.msra.mxu0 %v4814
    %6568 = vmatpush.bf16.msra.mxu0 %v4806
    %6569 = vmatpush.bf16.msra.mxu0 %v4798
    %6570 = vmatpush.bf16.msra.mxu0 %v4790
    %6571 = vmatmul.bf16.gmra.mxu0 %v5859
    %v6572 = vpop.f32.mrf.mxu0
    %v6573 = vadd.f32 0.0, %v6572
    %v6574 = vpop.f32.mrf.mxu0
    %v6575 = vadd.f32 0.0, %v6574
    %6576 = vdwg.mxu0
    %6577 = vmatpush.bf16.msra.mxu0 %v4910
    %6578 = vmatpush.bf16.msra.mxu0 %v4902
    %6579 = vmatpush.bf16.msra.mxu0 %v4894
    %6580 = vmatpush.bf16.msra.mxu0 %v4886
    %6581 = vmatpush.bf16.msra.mxu0 %v4878
    %6582 = vmatpush.bf16.msra.mxu0 %v4870
    %6583 = vmatpush.bf16.msra.mxu0 %v4862
    %6584 = vmatpush.bf16.msra.mxu0 %v4854
    %6585 = vmatmul.bf16.gmra.mxu0 %v5860
    %v6586 = vpop.f32.mrf.mxu0
    %v6587 = vadd.f32 %v6573, %v6586
    %v6588 = vpop.f32.mrf.mxu0
    %v6589 = vadd.f32 %v6575, %v6588
    %6590 = vdwg.mxu0
    %6591 = vmatpush.bf16.msra.mxu0 %v4974
    %6592 = vmatpush.bf16.msra.mxu0 %v4966
    %6593 = vmatpush.bf16.msra.mxu0 %v4958
    %6594 = vmatpush.bf16.msra.mxu0 %v4950
    %6595 = vmatpush.bf16.msra.mxu0 %v4942
    %6596 = vmatpush.bf16.msra.mxu0 %v4934
    %6597 = vmatpush.bf16.msra.mxu0 %v4926
    %6598 = vmatpush.bf16.msra.mxu0 %v4918
    %6599 = vmatmul.bf16.gmra.mxu0 %v5861
    %v6600 = vpop.f32.mrf.mxu0
    %v6601 = vadd.f32 %v6587, %v6600
    %v6602 = vpop.f32.mrf.mxu0
    %v6603 = vadd.f32 %v6589, %v6602
    %6604 = vdwg.mxu0
    %6605 = vmatpush.bf16.msra.mxu0 %v5038
    %6606 = vmatpush.bf16.msra.mxu0 %v5030
    %6607 = vmatpush.bf16.msra.mxu0 %v5022
    %6608 = vmatpush.bf16.msra.mxu0 %v5014
    %6609 = vmatpush.bf16.msra.mxu0 %v5006
    %6610 = vmatpush.bf16.msra.mxu0 %v4998
    %6611 = vmatpush.bf16.msra.mxu0 %v4990
    %6612 = vmatpush.bf16.msra.mxu0 %v4982
    %6613 = vmatmul.bf16.gmra.mxu0 %v5862
    %v6614 = vpop.f32.mrf.mxu0
    %v6615 = vadd.f32 %v6601, %v6614
    %v6616 = vpop.f32.mrf.mxu0
    %v6617 = vadd.f32 %v6603, %v6616
    %6618 = vdwg.mxu0
    %6619 = vmatpush.bf16.msra.mxu0 %v5102
    %6620 = vmatpush.bf16.msra.mxu0 %v5094
    %6621 = vmatpush.bf16.msra.mxu0 %v5086
    %6622 = vmatpush.bf16.msra.mxu0 %v5078
    %6623 = vmatpush.bf16.msra.mxu0 %v5070
    %6624 = vmatpush.bf16.msra.mxu0 %v5062
    %6625 = vmatpush.bf16.msra.mxu0 %v5054
    %6626 = vmatpush.bf16.msra.mxu0 %v5046
    %6627 = vmatmul.bf16.gmra.mxu0 %v5863
    %v6628 = vpop.f32.mrf.mxu0
    %v6629 = vadd.f32 %v6615, %v6628
    %v6630 = vpop.f32.mrf.mxu0
    %v6631 = vadd.f32 %v6617, %v6630
    %6632 = vdwg.mxu0
    %6633 = vmatpush.bf16.msra.mxu0 %v5166
    %6634 = vmatpush.bf16.msra.mxu0 %v5158
    %6635 = vmatpush.bf16.msra.mxu0 %v5150
    %6636 = vmatpush.bf16.msra.mxu0 %v5142
    %6637 = vmatpush.bf16.msra.mxu0 %v5134
    %6638 = vmatpush.bf16.msra.mxu0 %v5126
    %6639 = vmatpush.bf16.msra.mxu0 %v5118
    %6640 = vmatpush.bf16.msra.mxu0 %v5110
    %6641 = vmatmul.bf16.gmra.mxu0 %v5864
    %v6642 = vpop.f32.mrf.mxu0
    %v6643 = vadd.f32 %v6629, %v6642
    %v6644 = vpop.f32.mrf.mxu0
    %v6645 = vadd.f32 %v6631, %v6644
    %6646 = vdwg.mxu0
    %6647 = vmatpush.bf16.msra.mxu0 %v5230
    %6648 = vmatpush.bf16.msra.mxu0 %v5222
    %6649 = vmatpush.bf16.msra.mxu0 %v5214
    %6650 = vmatpush.bf16.msra.mxu0 %v5206
    %6651 = vmatpush.bf16.msra.mxu0 %v5198
    %6652 = vmatpush.bf16.msra.mxu0 %v5190
    %6653 = vmatpush.bf16.msra.mxu0 %v5182
    %6654 = vmatpush.bf16.msra.mxu0 %v5174
    %6655 = vmatmul.bf16.gmra.mxu0 %v5865
    %v6656 = vpop.f32.mrf.mxu0
    %v6657 = vadd.f32 %v6643, %v6656
    %v6658 = vpop.f32.mrf.mxu0
    %v6659 = vadd.f32 %v6645, %v6658
    %6660 = vdwg.mxu0
    %6661 = vmatpush.bf16.msra.mxu0 %v5294
    %6662 = vmatpush.bf16.msra.mxu0 %v5286
    %6663 = vmatpush.bf16.msra.mxu0 %v5278
    %6664 = vmatpush.bf16.msra.mxu0 %v5270
    %6665 = vmatpush.bf16.msra.mxu0 %v5262
    %6666 = vmatpush.bf16.msra.mxu0 %v5254
    %6667 = vmatpush.bf16.msra.mxu0 %v5246
    %6668 = vmatpush.bf16.msra.mxu0 %v5238
    %6669 = vmatmul.bf16.gmra.mxu0 %v5866
    %v6670 = vpop.f32.mrf.mxu0
    %v6671 = vadd.f32 %v6657, %v6670
    %v6672 = vpop.f32.mrf.mxu0
    %v6673 = vadd.f32 %v6659, %v6672
    %6674 = vdwg.mxu0
    %6675 = vmatpush.bf16.msra.mxu0 %v5358
    %6676 = vmatpush.bf16.msra.mxu0 %v5350
    %6677 = vmatpush.bf16.msra.mxu0 %v5342
    %6678 = vmatpush.bf16.msra.mxu0 %v5334
    %6679 = vmatpush.bf16.msra.mxu0 %v5326
    %6680 = vmatpush.bf16.msra.mxu0 %v5318
    %6681 = vmatpush.bf16.msra.mxu0 %v5310
    %6682 = vmatpush.bf16.msra.mxu0 %v5302
    %6683 = vmatmul.bf16.gmra.mxu0 %v5867
    %v6684 = vpop.f32.mrf.mxu0
    %v6685 = vadd.f32 %v6671, %v6684
    %v6686 = vpop.f32.mrf.mxu0
    %v6687 = vadd.f32 %v6673, %v6686
    %6688 = vdwg.mxu0
    %6689 = vmatpush.bf16.msra.mxu0 %v5422
    %6690 = vmatpush.bf16.msra.mxu0 %v5414
    %6691 = vmatpush.bf16.msra.mxu0 %v5406
    %6692 = vmatpush.bf16.msra.mxu0 %v5398
    %6693 = vmatpush.bf16.msra.mxu0 %v5390
    %6694 = vmatpush.bf16.msra.mxu0 %v5382
    %6695 = vmatpush.bf16.msra.mxu0 %v5374
    %6696 = vmatpush.bf16.msra.mxu0 %v5366
    %6697 = vmatmul.bf16.gmra.mxu0 %v5868
    %v6698 = vpop.f32.mrf.mxu0
    %v6699 = vadd.f32 %v6685, %v6698
    %v6700 = vpop.f32.mrf.mxu0
    %v6701 = vadd.f32 %v6687, %v6700
    %6702 = vdwg.mxu0
    %6703 = vmatpush.bf16.msra.mxu0 %v5486
    %6704 = vmatpush.bf16.msra.mxu0 %v5478
    %6705 = vmatpush.bf16.msra.mxu0 %v5470
    %6706 = vmatpush.bf16.msra.mxu0 %v5462
    %6707 = vmatpush.bf16.msra.mxu0 %v5454
    %6708 = vmatpush.bf16.msra.mxu0 %v5446
    %6709 = vmatpush.bf16.msra.mxu0 %v5438
    %6710 = vmatpush.bf16.msra.mxu0 %v5430
    %6711 = vmatmul.bf16.gmra.mxu0 %v5869
    %v6712 = vpop.f32.mrf.mxu0
    %v6713 = vadd.f32 %v6699, %v6712
    %v6714 = vpop.f32.mrf.mxu0
    %v6715 = vadd.f32 %v6701, %v6714
    %6716 = vdwg.mxu0
    %6717 = vmatpush.bf16.msra.mxu0 %v5550
    %6718 = vmatpush.bf16.msra.mxu0 %v5542
    %6719 = vmatpush.bf16.msra.mxu0 %v5534
    %6720 = vmatpush.bf16.msra.mxu0 %v5526
    %6721 = vmatpush.bf16.msra.mxu0 %v5518
    %6722 = vmatpush.bf16.msra.mxu0 %v5510
    %6723 = vmatpush.bf16.msra.mxu0 %v5502
    %6724 = vmatpush.bf16.msra.mxu0 %v5494
    %6725 = vmatmul.bf16.gmra.mxu0 %v5870
    %v6726 = vpop.f32.mrf.mxu0
    %v6727 = vadd.f32 %v6713, %v6726
    %v6728 = vpop.f32.mrf.mxu0
    %v6729 = vadd.f32 %v6715, %v6728
    %6730 = vdwg.mxu0
    %6731 = vmatpush.bf16.msra.mxu0 %v5614
    %6732 = vmatpush.bf16.msra.mxu0 %v5606
    %6733 = vmatpush.bf16.msra.mxu0 %v5598
    %6734 = vmatpush.bf16.msra.mxu0 %v5590
    %6735 = vmatpush.bf16.msra.mxu0 %v5582
    %6736 = vmatpush.bf16.msra.mxu0 %v5574
    %6737 = vmatpush.bf16.msra.mxu0 %v5566
    %6738 = vmatpush.bf16.msra.mxu0 %v5558
    %6739 = vmatmul.bf16.gmra.mxu0 %v5871
    %v6740 = vpop.f32.mrf.mxu0
    %v6741 = vadd.f32 %v6727, %v6740
    %v6742 = vpop.f32.mrf.mxu0
    %v6743 = vadd.f32 %v6729, %v6742
    %6744 = vdwg.mxu0
    %6745 = vmatpush.bf16.msra.mxu0 %v5678
    %6746 = vmatpush.bf16.msra.mxu0 %v5670
    %6747 = vmatpush.bf16.msra.mxu0 %v5662
    %6748 = vmatpush.bf16.msra.mxu0 %v5654
    %6749 = vmatpush.bf16.msra.mxu0 %v5646
    %6750 = vmatpush.bf16.msra.mxu0 %v5638
    %6751 = vmatpush.bf16.msra.mxu0 %v5630
    %6752 = vmatpush.bf16.msra.mxu0 %v5622
    %6753 = vmatmul.bf16.gmra.mxu0 %v5872
    %v6754 = vpop.f32.mrf.mxu0
    %v6755 = vadd.f32 %v6741, %v6754
    %v6756 = vpop.f32.mrf.mxu0
    %v6757 = vadd.f32 %v6743, %v6756
    %6758 = vdwg.mxu0
    %6759 = vmatpush.bf16.msra.mxu0 %v5742
    %6760 = vmatpush.bf16.msra.mxu0 %v5734
    %6761 = vmatpush.bf16.msra.mxu0 %v5726
    %6762 = vmatpush.bf16.msra.mxu0 %v5718
    %6763 = vmatpush.bf16.msra.mxu0 %v5710
    %6764 = vmatpush.bf16.msra.mxu0 %v5702
    %6765 = vmatpush.bf16.msra.mxu0 %v5694
    %6766 = vmatpush.bf16.msra.mxu0 %v5686
    %6767 = vmatmul.bf16.gmra.mxu0 %v5873
    %v6768 = vpop.f32.mrf.mxu0
    %v6769 = vadd.f32 %v6755, %v6768
    %v6770 = vpop.f32.mrf.mxu0
    %v6771 = vadd.f32 %v6757, %v6770
    %6772 = vdwg.mxu0
    %6773 = vmatpush.bf16.msra.mxu0 %v5806
    %6774 = vmatpush.bf16.msra.mxu0 %v5798
    %6775 = vmatpush.bf16.msra.mxu0 %v5790
    %6776 = vmatpush.bf16.msra.mxu0 %v5782
    %6777 = vmatpush.bf16.msra.mxu0 %v5774
    %6778 = vmatpush.bf16.msra.mxu0 %v5766
    %6779 = vmatpush.bf16.msra.mxu0 %v5758
    %6780 = vmatpush.bf16.msra.mxu0 %v5750
    %6781 = vmatmul.bf16.gmra.mxu0 %v5874
    %v6782 = vpop.f32.mrf.mxu0
    %v6783 = vadd.f32 %v6769, %v6782
    %v6784 = vpop.f32.mrf.mxu0
    %v6785 = vadd.f32 %v6771, %v6784
    %6786 = vdwg.mxu0
    %6787 = vmatpush.bf16.msra.mxu0 %v4847
    %6788 = vmatpush.bf16.msra.mxu0 %v4839
    %6789 = vmatpush.bf16.msra.mxu0 %v4831
    %6790 = vmatpush.bf16.msra.mxu0 %v4823
    %6791 = vmatpush.bf16.msra.mxu0 %v4815
    %6792 = vmatpush.bf16.msra.mxu0 %v4807
    %6793 = vmatpush.bf16.msra.mxu0 %v4799
    %6794 = vmatpush.bf16.msra.mxu0 %v4791
    %6795 = vmatmul.bf16.gmra.mxu0 %v5859
    %v6796 = vpop.f32.mrf.mxu0
    %v6797 = vadd.f32 0.0, %v6796
    %v6798 = vpop.f32.mrf.mxu0
    %v6799 = vadd.f32 0.0, %v6798
    %6800 = vdwg.mxu0
    %6801 = vmatpush.bf16.msra.mxu0 %v4911
    %6802 = vmatpush.bf16.msra.mxu0 %v4903
    %6803 = vmatpush.bf16.msra.mxu0 %v4895
    %6804 = vmatpush.bf16.msra.mxu0 %v4887
    %6805 = vmatpush.bf16.msra.mxu0 %v4879
    %6806 = vmatpush.bf16.msra.mxu0 %v4871
    %6807 = vmatpush.bf16.msra.mxu0 %v4863
    %6808 = vmatpush.bf16.msra.mxu0 %v4855
    %6809 = vmatmul.bf16.gmra.mxu0 %v5860
    %v6810 = vpop.f32.mrf.mxu0
    %v6811 = vadd.f32 %v6797, %v6810
    %v6812 = vpop.f32.mrf.mxu0
    %v6813 = vadd.f32 %v6799, %v6812
    %6814 = vdwg.mxu0
    %6815 = vmatpush.bf16.msra.mxu0 %v4975
    %6816 = vmatpush.bf16.msra.mxu0 %v4967
    %6817 = vmatpush.bf16.msra.mxu0 %v4959
    %6818 = vmatpush.bf16.msra.mxu0 %v4951
    %6819 = vmatpush.bf16.msra.mxu0 %v4943
    %6820 = vmatpush.bf16.msra.mxu0 %v4935
    %6821 = vmatpush.bf16.msra.mxu0 %v4927
    %6822 = vmatpush.bf16.msra.mxu0 %v4919
    %6823 = vmatmul.bf16.gmra.mxu0 %v5861
    %v6824 = vpop.f32.mrf.mxu0
    %v6825 = vadd.f32 %v6811, %v6824
    %v6826 = vpop.f32.mrf.mxu0
    %v6827 = vadd.f32 %v6813, %v6826
    %6828 = vdwg.mxu0
    %6829 = vmatpush.bf16.msra.mxu0 %v5039
    %6830 = vmatpush.bf16.msra.mxu0 %v5031
    %6831 = vmatpush.bf16.msra.mxu0 %v5023
    %6832 = vmatpush.bf16.msra.mxu0 %v5015
    %6833 = vmatpush.bf16.msra.mxu0 %v5007
    %6834 = vmatpush.bf16.msra.mxu0 %v4999
    %6835 = vmatpush.bf16.msra.mxu0 %v4991
    %6836 = vmatpush.bf16.msra.mxu0 %v4983
    %6837 = vmatmul.bf16.gmra.mxu0 %v5862
    %v6838 = vpop.f32.mrf.mxu0
    %v6839 = vadd.f32 %v6825, %v6838
    %v6840 = vpop.f32.mrf.mxu0
    %v6841 = vadd.f32 %v6827, %v6840
    %6842 = vdwg.mxu0
    %6843 = vmatpush.bf16.msra.mxu0 %v5103
    %6844 = vmatpush.bf16.msra.mxu0 %v5095
    %6845 = vmatpush.bf16.msra.mxu0 %v5087
    %6846 = vmatpush.bf16.msra.mxu0 %v5079
    %6847 = vmatpush.bf16.msra.mxu0 %v5071
    %6848 = vmatpush.bf16.msra.mxu0 %v5063
    %6849 = vmatpush.bf16.msra.mxu0 %v5055
    %6850 = vmatpush.bf16.msra.mxu0 %v5047
    %6851 = vmatmul.bf16.gmra.mxu0 %v5863
    %v6852 = vpop.f32.mrf.mxu0
    %v6853 = vadd.f32 %v6839, %v6852
    %v6854 = vpop.f32.mrf.mxu0
    %v6855 = vadd.f32 %v6841, %v6854
    %6856 = vdwg.mxu0
    %6857 = vmatpush.bf16.msra.mxu0 %v5167
    %6858 = vmatpush.bf16.msra.mxu0 %v5159
    %6859 = vmatpush.bf16.msra.mxu0 %v5151
    %6860 = vmatpush.bf16.msra.mxu0 %v5143
    %6861 = vmatpush.bf16.msra.mxu0 %v5135
    %6862 = vmatpush.bf16.msra.mxu0 %v5127
    %6863 = vmatpush.bf16.msra.mxu0 %v5119
    %6864 = vmatpush.bf16.msra.mxu0 %v5111
    %6865 = vmatmul.bf16.gmra.mxu0 %v5864
    %v6866 = vpop.f32.mrf.mxu0
    %v6867 = vadd.f32 %v6853, %v6866
    %v6868 = vpop.f32.mrf.mxu0
    %v6869 = vadd.f32 %v6855, %v6868
    %6870 = vdwg.mxu0
    %6871 = vmatpush.bf16.msra.mxu0 %v5231
    %6872 = vmatpush.bf16.msra.mxu0 %v5223
    %6873 = vmatpush.bf16.msra.mxu0 %v5215
    %6874 = vmatpush.bf16.msra.mxu0 %v5207
    %6875 = vmatpush.bf16.msra.mxu0 %v5199
    %6876 = vmatpush.bf16.msra.mxu0 %v5191
    %6877 = vmatpush.bf16.msra.mxu0 %v5183
    %6878 = vmatpush.bf16.msra.mxu0 %v5175
    %6879 = vmatmul.bf16.gmra.mxu0 %v5865
    %v6880 = vpop.f32.mrf.mxu0
    %v6881 = vadd.f32 %v6867, %v6880
    %v6882 = vpop.f32.mrf.mxu0
    %v6883 = vadd.f32 %v6869, %v6882
    %6884 = vdwg.mxu0
    %6885 = vmatpush.bf16.msra.mxu0 %v5295
    %6886 = vmatpush.bf16.msra.mxu0 %v5287
    %6887 = vmatpush.bf16.msra.mxu0 %v5279
    %6888 = vmatpush.bf16.msra.mxu0 %v5271
    %6889 = vmatpush.bf16.msra.mxu0 %v5263
    %6890 = vmatpush.bf16.msra.mxu0 %v5255
    %6891 = vmatpush.bf16.msra.mxu0 %v5247
    %6892 = vmatpush.bf16.msra.mxu0 %v5239
    %6893 = vmatmul.bf16.gmra.mxu0 %v5866
    %v6894 = vpop.f32.mrf.mxu0
    %v6895 = vadd.f32 %v6881, %v6894
    %v6896 = vpop.f32.mrf.mxu0
    %v6897 = vadd.f32 %v6883, %v6896
    %6898 = vdwg.mxu0
    %6899 = vmatpush.bf16.msra.mxu0 %v5359
    %6900 = vmatpush.bf16.msra.mxu0 %v5351
    %6901 = vmatpush.bf16.msra.mxu0 %v5343
    %6902 = vmatpush.bf16.msra.mxu0 %v5335
    %6903 = vmatpush.bf16.msra.mxu0 %v5327
    %6904 = vmatpush.bf16.msra.mxu0 %v5319
    %6905 = vmatpush.bf16.msra.mxu0 %v5311
    %6906 = vmatpush.bf16.msra.mxu0 %v5303
    %6907 = vmatmul.bf16.gmra.mxu0 %v5867
    %v6908 = vpop.f32.mrf.mxu0
    %v6909 = vadd.f32 %v6895, %v6908
    %v6910 = vpop.f32.mrf.mxu0
    %v6911 = vadd.f32 %v6897, %v6910
    %6912 = vdwg.mxu0
    %6913 = vmatpush.bf16.msra.mxu0 %v5423
    %6914 = vmatpush.bf16.msra.mxu0 %v5415
    %6915 = vmatpush.bf16.msra.mxu0 %v5407
    %6916 = vmatpush.bf16.msra.mxu0 %v5399
    %6917 = vmatpush.bf16.msra.mxu0 %v5391
    %6918 = vmatpush.bf16.msra.mxu0 %v5383
    %6919 = vmatpush.bf16.msra.mxu0 %v5375
    %6920 = vmatpush.bf16.msra.mxu0 %v5367
    %6921 = vmatmul.bf16.gmra.mxu0 %v5868
    %v6922 = vpop.f32.mrf.mxu0
    %v6923 = vadd.f32 %v6909, %v6922
    %v6924 = vpop.f32.mrf.mxu0
    %v6925 = vadd.f32 %v6911, %v6924
    %6926 = vdwg.mxu0
    %6927 = vmatpush.bf16.msra.mxu0 %v5487
    %6928 = vmatpush.bf16.msra.mxu0 %v5479
    %6929 = vmatpush.bf16.msra.mxu0 %v5471
    %6930 = vmatpush.bf16.msra.mxu0 %v5463
    %6931 = vmatpush.bf16.msra.mxu0 %v5455
    %6932 = vmatpush.bf16.msra.mxu0 %v5447
    %6933 = vmatpush.bf16.msra.mxu0 %v5439
    %6934 = vmatpush.bf16.msra.mxu0 %v5431
    %6935 = vmatmul.bf16.gmra.mxu0 %v5869
    %v6936 = vpop.f32.mrf.mxu0
    %v6937 = vadd.f32 %v6923, %v6936
    %v6938 = vpop.f32.mrf.mxu0
    %v6939 = vadd.f32 %v6925, %v6938
    %6940 = vdwg.mxu0
    %6941 = vmatpush.bf16.msra.mxu0 %v5551
    %6942 = vmatpush.bf16.msra.mxu0 %v5543
    %6943 = vmatpush.bf16.msra.mxu0 %v5535
    %6944 = vmatpush.bf16.msra.mxu0 %v5527
    %6945 = vmatpush.bf16.msra.mxu0 %v5519
    %6946 = vmatpush.bf16.msra.mxu0 %v5511
    %6947 = vmatpush.bf16.msra.mxu0 %v5503
    %6948 = vmatpush.bf16.msra.mxu0 %v5495
    %6949 = vmatmul.bf16.gmra.mxu0 %v5870
    %v6950 = vpop.f32.mrf.mxu0
    %v6951 = vadd.f32 %v6937, %v6950
    %v6952 = vpop.f32.mrf.mxu0
    %v6953 = vadd.f32 %v6939, %v6952
    %6954 = vdwg.mxu0
    %6955 = vmatpush.bf16.msra.mxu0 %v5615
    %6956 = vmatpush.bf16.msra.mxu0 %v5607
    %6957 = vmatpush.bf16.msra.mxu0 %v5599
    %6958 = vmatpush.bf16.msra.mxu0 %v5591
    %6959 = vmatpush.bf16.msra.mxu0 %v5583
    %6960 = vmatpush.bf16.msra.mxu0 %v5575
    %6961 = vmatpush.bf16.msra.mxu0 %v5567
    %6962 = vmatpush.bf16.msra.mxu0 %v5559
    %6963 = vmatmul.bf16.gmra.mxu0 %v5871
    %v6964 = vpop.f32.mrf.mxu0
    %v6965 = vadd.f32 %v6951, %v6964
    %v6966 = vpop.f32.mrf.mxu0
    %v6967 = vadd.f32 %v6953, %v6966
    %6968 = vdwg.mxu0
    %6969 = vmatpush.bf16.msra.mxu0 %v5679
    %6970 = vmatpush.bf16.msra.mxu0 %v5671
    %6971 = vmatpush.bf16.msra.mxu0 %v5663
    %6972 = vmatpush.bf16.msra.mxu0 %v5655
    %6973 = vmatpush.bf16.msra.mxu0 %v5647
    %6974 = vmatpush.bf16.msra.mxu0 %v5639
    %6975 = vmatpush.bf16.msra.mxu0 %v5631
    %6976 = vmatpush.bf16.msra.mxu0 %v5623
    %6977 = vmatmul.bf16.gmra.mxu0 %v5872
    %v6978 = vpop.f32.mrf.mxu0
    %v6979 = vadd.f32 %v6965, %v6978
    %v6980 = vpop.f32.mrf.mxu0
    %v6981 = vadd.f32 %v6967, %v6980
    %6982 = vdwg.mxu0
    %6983 = vmatpush.bf16.msra.mxu0 %v5743
    %6984 = vmatpush.bf16.msra.mxu0 %v5735
    %6985 = vmatpush.bf16.msra.mxu0 %v5727
    %6986 = vmatpush.bf16.msra.mxu0 %v5719
    %6987 = vmatpush.bf16.msra.mxu0 %v5711
    %6988 = vmatpush.bf16.msra.mxu0 %v5703
    %6989 = vmatpush.bf16.msra.mxu0 %v5695
    %6990 = vmatpush.bf16.msra.mxu0 %v5687
    %6991 = vmatmul.bf16.gmra.mxu0 %v5873
    %v6992 = vpop.f32.mrf.mxu0
    %v6993 = vadd.f32 %v6979, %v6992
    %v6994 = vpop.f32.mrf.mxu0
    %v6995 = vadd.f32 %v6981, %v6994
    %6996 = vdwg.mxu0
    %6997 = vmatpush.bf16.msra.mxu0 %v5807
    %6998 = vmatpush.bf16.msra.mxu0 %v5799
    %6999 = vmatpush.bf16.msra.mxu0 %v5791
    %7000 = vmatpush.bf16.msra.mxu0 %v5783
    %7001 = vmatpush.bf16.msra.mxu0 %v5775
    %7002 = vmatpush.bf16.msra.mxu0 %v5767
    %7003 = vmatpush.bf16.msra.mxu0 %v5759
    %7004 = vmatpush.bf16.msra.mxu0 %v5751
    %7005 = vmatmul.bf16.gmra.mxu0 %v5874
    %v7006 = vpop.f32.mrf.mxu0
    %v7007 = vadd.f32 %v6993, %v7006
    %v7008 = vpop.f32.mrf.mxu0
    %v7009 = vadd.f32 %v6995, %v7008
    %7010 = vdwg.mxu0
    %7011 = vmatpush.bf16.msra.mxu0 %v4848
    %7012 = vmatpush.bf16.msra.mxu0 %v4840
    %7013 = vmatpush.bf16.msra.mxu0 %v4832
    %7014 = vmatpush.bf16.msra.mxu0 %v4824
    %7015 = vmatpush.bf16.msra.mxu0 %v4816
    %7016 = vmatpush.bf16.msra.mxu0 %v4808
    %7017 = vmatpush.bf16.msra.mxu0 %v4800
    %7018 = vmatpush.bf16.msra.mxu0 %v4792
    %7019 = vmatmul.bf16.gmra.mxu0 %v5859
    %v7020 = vpop.f32.mrf.mxu0
    %v7021 = vadd.f32 0.0, %v7020
    %v7022 = vpop.f32.mrf.mxu0
    %v7023 = vadd.f32 0.0, %v7022
    %7024 = vdwg.mxu0
    %7025 = vmatpush.bf16.msra.mxu0 %v4912
    %7026 = vmatpush.bf16.msra.mxu0 %v4904
    %7027 = vmatpush.bf16.msra.mxu0 %v4896
    %7028 = vmatpush.bf16.msra.mxu0 %v4888
    %7029 = vmatpush.bf16.msra.mxu0 %v4880
    %7030 = vmatpush.bf16.msra.mxu0 %v4872
    %7031 = vmatpush.bf16.msra.mxu0 %v4864
    %7032 = vmatpush.bf16.msra.mxu0 %v4856
    %7033 = vmatmul.bf16.gmra.mxu0 %v5860
    %v7034 = vpop.f32.mrf.mxu0
    %v7035 = vadd.f32 %v7021, %v7034
    %v7036 = vpop.f32.mrf.mxu0
    %v7037 = vadd.f32 %v7023, %v7036
    %7038 = vdwg.mxu0
    %7039 = vmatpush.bf16.msra.mxu0 %v4976
    %7040 = vmatpush.bf16.msra.mxu0 %v4968
    %7041 = vmatpush.bf16.msra.mxu0 %v4960
    %7042 = vmatpush.bf16.msra.mxu0 %v4952
    %7043 = vmatpush.bf16.msra.mxu0 %v4944
    %7044 = vmatpush.bf16.msra.mxu0 %v4936
    %7045 = vmatpush.bf16.msra.mxu0 %v4928
    %7046 = vmatpush.bf16.msra.mxu0 %v4920
    %7047 = vmatmul.bf16.gmra.mxu0 %v5861
    %v7048 = vpop.f32.mrf.mxu0
    %v7049 = vadd.f32 %v7035, %v7048
    %v7050 = vpop.f32.mrf.mxu0
    %v7051 = vadd.f32 %v7037, %v7050
    %7052 = vdwg.mxu0
    %7053 = vmatpush.bf16.msra.mxu0 %v5040
    %7054 = vmatpush.bf16.msra.mxu0 %v5032
    %7055 = vmatpush.bf16.msra.mxu0 %v5024
    %7056 = vmatpush.bf16.msra.mxu0 %v5016
    %7057 = vmatpush.bf16.msra.mxu0 %v5008
    %7058 = vmatpush.bf16.msra.mxu0 %v5000
    %7059 = vmatpush.bf16.msra.mxu0 %v4992
    %7060 = vmatpush.bf16.msra.mxu0 %v4984
    %7061 = vmatmul.bf16.gmra.mxu0 %v5862
    %v7062 = vpop.f32.mrf.mxu0
    %v7063 = vadd.f32 %v7049, %v7062
    %v7064 = vpop.f32.mrf.mxu0
    %v7065 = vadd.f32 %v7051, %v7064
    %7066 = vdwg.mxu0
    %7067 = vmatpush.bf16.msra.mxu0 %v5104
    %7068 = vmatpush.bf16.msra.mxu0 %v5096
    %7069 = vmatpush.bf16.msra.mxu0 %v5088
    %7070 = vmatpush.bf16.msra.mxu0 %v5080
    %7071 = vmatpush.bf16.msra.mxu0 %v5072
    %7072 = vmatpush.bf16.msra.mxu0 %v5064
    %7073 = vmatpush.bf16.msra.mxu0 %v5056
    %7074 = vmatpush.bf16.msra.mxu0 %v5048
    %7075 = vmatmul.bf16.gmra.mxu0 %v5863
    %v7076 = vpop.f32.mrf.mxu0
    %v7077 = vadd.f32 %v7063, %v7076
    %v7078 = vpop.f32.mrf.mxu0
    %v7079 = vadd.f32 %v7065, %v7078
    %7080 = vdwg.mxu0
    %7081 = vmatpush.bf16.msra.mxu0 %v5168
    %7082 = vmatpush.bf16.msra.mxu0 %v5160
    %7083 = vmatpush.bf16.msra.mxu0 %v5152
    %7084 = vmatpush.bf16.msra.mxu0 %v5144
    %7085 = vmatpush.bf16.msra.mxu0 %v5136
    %7086 = vmatpush.bf16.msra.mxu0 %v5128
    %7087 = vmatpush.bf16.msra.mxu0 %v5120
    %7088 = vmatpush.bf16.msra.mxu0 %v5112
    %7089 = vmatmul.bf16.gmra.mxu0 %v5864
    %v7090 = vpop.f32.mrf.mxu0
    %v7091 = vadd.f32 %v7077, %v7090
    %v7092 = vpop.f32.mrf.mxu0
    %v7093 = vadd.f32 %v7079, %v7092
    %7094 = vdwg.mxu0
    %7095 = vmatpush.bf16.msra.mxu0 %v5232
    %7096 = vmatpush.bf16.msra.mxu0 %v5224
    %7097 = vmatpush.bf16.msra.mxu0 %v5216
    %7098 = vmatpush.bf16.msra.mxu0 %v5208
    %7099 = vmatpush.bf16.msra.mxu0 %v5200
    %7100 = vmatpush.bf16.msra.mxu0 %v5192
    %7101 = vmatpush.bf16.msra.mxu0 %v5184
    %7102 = vmatpush.bf16.msra.mxu0 %v5176
    %7103 = vmatmul.bf16.gmra.mxu0 %v5865
    %v7104 = vpop.f32.mrf.mxu0
    %v7105 = vadd.f32 %v7091, %v7104
    %v7106 = vpop.f32.mrf.mxu0
    %v7107 = vadd.f32 %v7093, %v7106
    %7108 = vdwg.mxu0
    %7109 = vmatpush.bf16.msra.mxu0 %v5296
    %7110 = vmatpush.bf16.msra.mxu0 %v5288
    %7111 = vmatpush.bf16.msra.mxu0 %v5280
    %7112 = vmatpush.bf16.msra.mxu0 %v5272
    %7113 = vmatpush.bf16.msra.mxu0 %v5264
    %7114 = vmatpush.bf16.msra.mxu0 %v5256
    %7115 = vmatpush.bf16.msra.mxu0 %v5248
    %7116 = vmatpush.bf16.msra.mxu0 %v5240
    %7117 = vmatmul.bf16.gmra.mxu0 %v5866
    %v7118 = vpop.f32.mrf.mxu0
    %v7119 = vadd.f32 %v7105, %v7118
    %v7120 = vpop.f32.mrf.mxu0
    %v7121 = vadd.f32 %v7107, %v7120
    %7122 = vdwg.mxu0
    %7123 = vmatpush.bf16.msra.mxu0 %v5360
    %7124 = vmatpush.bf16.msra.mxu0 %v5352
    %7125 = vmatpush.bf16.msra.mxu0 %v5344
    %7126 = vmatpush.bf16.msra.mxu0 %v5336
    %7127 = vmatpush.bf16.msra.mxu0 %v5328
    %7128 = vmatpush.bf16.msra.mxu0 %v5320
    %7129 = vmatpush.bf16.msra.mxu0 %v5312
    %7130 = vmatpush.bf16.msra.mxu0 %v5304
    %7131 = vmatmul.bf16.gmra.mxu0 %v5867
    %v7132 = vpop.f32.mrf.mxu0
    %v7133 = vadd.f32 %v7119, %v7132
    %v7134 = vpop.f32.mrf.mxu0
    %v7135 = vadd.f32 %v7121, %v7134
    %7136 = vdwg.mxu0
    %7137 = vmatpush.bf16.msra.mxu0 %v5424
    %7138 = vmatpush.bf16.msra.mxu0 %v5416
    %7139 = vmatpush.bf16.msra.mxu0 %v5408
    %7140 = vmatpush.bf16.msra.mxu0 %v5400
    %7141 = vmatpush.bf16.msra.mxu0 %v5392
    %7142 = vmatpush.bf16.msra.mxu0 %v5384
    %7143 = vmatpush.bf16.msra.mxu0 %v5376
    %7144 = vmatpush.bf16.msra.mxu0 %v5368
    %7145 = vmatmul.bf16.gmra.mxu0 %v5868
    %v7146 = vpop.f32.mrf.mxu0
    %v7147 = vadd.f32 %v7133, %v7146
    %v7148 = vpop.f32.mrf.mxu0
    %v7149 = vadd.f32 %v7135, %v7148
    %7150 = vdwg.mxu0
    %7151 = vmatpush.bf16.msra.mxu0 %v5488
    %7152 = vmatpush.bf16.msra.mxu0 %v5480
    %7153 = vmatpush.bf16.msra.mxu0 %v5472
    %7154 = vmatpush.bf16.msra.mxu0 %v5464
    %7155 = vmatpush.bf16.msra.mxu0 %v5456
    %7156 = vmatpush.bf16.msra.mxu0 %v5448
    %7157 = vmatpush.bf16.msra.mxu0 %v5440
    %7158 = vmatpush.bf16.msra.mxu0 %v5432
    %7159 = vmatmul.bf16.gmra.mxu0 %v5869
    %v7160 = vpop.f32.mrf.mxu0
    %v7161 = vadd.f32 %v7147, %v7160
    %v7162 = vpop.f32.mrf.mxu0
    %v7163 = vadd.f32 %v7149, %v7162
    %7164 = vdwg.mxu0
    %7165 = vmatpush.bf16.msra.mxu0 %v5552
    %7166 = vmatpush.bf16.msra.mxu0 %v5544
    %7167 = vmatpush.bf16.msra.mxu0 %v5536
    %7168 = vmatpush.bf16.msra.mxu0 %v5528
    %7169 = vmatpush.bf16.msra.mxu0 %v5520
    %7170 = vmatpush.bf16.msra.mxu0 %v5512
    %7171 = vmatpush.bf16.msra.mxu0 %v5504
    %7172 = vmatpush.bf16.msra.mxu0 %v5496
    %7173 = vmatmul.bf16.gmra.mxu0 %v5870
    %v7174 = vpop.f32.mrf.mxu0
    %v7175 = vadd.f32 %v7161, %v7174
    %v7176 = vpop.f32.mrf.mxu0
    %v7177 = vadd.f32 %v7163, %v7176
    %7178 = vdwg.mxu0
    %7179 = vmatpush.bf16.msra.mxu0 %v5616
    %7180 = vmatpush.bf16.msra.mxu0 %v5608
    %7181 = vmatpush.bf16.msra.mxu0 %v5600
    %7182 = vmatpush.bf16.msra.mxu0 %v5592
    %7183 = vmatpush.bf16.msra.mxu0 %v5584
    %7184 = vmatpush.bf16.msra.mxu0 %v5576
    %7185 = vmatpush.bf16.msra.mxu0 %v5568
    %7186 = vmatpush.bf16.msra.mxu0 %v5560
    %7187 = vmatmul.bf16.gmra.mxu0 %v5871
    %v7188 = vpop.f32.mrf.mxu0
    %v7189 = vadd.f32 %v7175, %v7188
    %v7190 = vpop.f32.mrf.mxu0
    %v7191 = vadd.f32 %v7177, %v7190
    %7192 = vdwg.mxu0
    %7193 = vmatpush.bf16.msra.mxu0 %v5680
    %7194 = vmatpush.bf16.msra.mxu0 %v5672
    %7195 = vmatpush.bf16.msra.mxu0 %v5664
    %7196 = vmatpush.bf16.msra.mxu0 %v5656
    %7197 = vmatpush.bf16.msra.mxu0 %v5648
    %7198 = vmatpush.bf16.msra.mxu0 %v5640
    %7199 = vmatpush.bf16.msra.mxu0 %v5632
    %7200 = vmatpush.bf16.msra.mxu0 %v5624
    %7201 = vmatmul.bf16.gmra.mxu0 %v5872
    %v7202 = vpop.f32.mrf.mxu0
    %v7203 = vadd.f32 %v7189, %v7202
    %v7204 = vpop.f32.mrf.mxu0
    %v7205 = vadd.f32 %v7191, %v7204
    %7206 = vdwg.mxu0
    %7207 = vmatpush.bf16.msra.mxu0 %v5744
    %7208 = vmatpush.bf16.msra.mxu0 %v5736
    %7209 = vmatpush.bf16.msra.mxu0 %v5728
    %7210 = vmatpush.bf16.msra.mxu0 %v5720
    %7211 = vmatpush.bf16.msra.mxu0 %v5712
    %7212 = vmatpush.bf16.msra.mxu0 %v5704
    %7213 = vmatpush.bf16.msra.mxu0 %v5696
    %7214 = vmatpush.bf16.msra.mxu0 %v5688
    %7215 = vmatmul.bf16.gmra.mxu0 %v5873
    %v7216 = vpop.f32.mrf.mxu0
    %v7217 = vadd.f32 %v7203, %v7216
    %v7218 = vpop.f32.mrf.mxu0
    %v7219 = vadd.f32 %v7205, %v7218
    %7220 = vdwg.mxu0
    %7221 = vmatpush.bf16.msra.mxu0 %v5808
    %7222 = vmatpush.bf16.msra.mxu0 %v5800
    %7223 = vmatpush.bf16.msra.mxu0 %v5792
    %7224 = vmatpush.bf16.msra.mxu0 %v5784
    %7225 = vmatpush.bf16.msra.mxu0 %v5776
    %7226 = vmatpush.bf16.msra.mxu0 %v5768
    %7227 = vmatpush.bf16.msra.mxu0 %v5760
    %7228 = vmatpush.bf16.msra.mxu0 %v5752
    %7229 = vmatmul.bf16.gmra.mxu0 %v5874
    %v7230 = vpop.f32.mrf.mxu0
    %v7231 = vadd.f32 %v7217, %v7230
    %v7232 = vpop.f32.mrf.mxu0
    %v7233 = vadd.f32 %v7219, %v7232
    %7234 = vdwg.mxu0
    %7235 = vmatpush.bf16.msra.mxu0 %v4849
    %7236 = vmatpush.bf16.msra.mxu0 %v4841
    %7237 = vmatpush.bf16.msra.mxu0 %v4833
    %7238 = vmatpush.bf16.msra.mxu0 %v4825
    %7239 = vmatpush.bf16.msra.mxu0 %v4817
    %7240 = vmatpush.bf16.msra.mxu0 %v4809
    %7241 = vmatpush.bf16.msra.mxu0 %v4801
    %7242 = vmatpush.bf16.msra.mxu0 %v4793
    %7243 = vmatmul.bf16.gmra.mxu0 %v5859
    %v7244 = vpop.f32.mrf.mxu0
    %v7245 = vadd.f32 0.0, %v7244
    %v7246 = vpop.f32.mrf.mxu0
    %v7247 = vadd.f32 0.0, %v7246
    %7248 = vdwg.mxu0
    %7249 = vmatpush.bf16.msra.mxu0 %v4913
    %7250 = vmatpush.bf16.msra.mxu0 %v4905
    %7251 = vmatpush.bf16.msra.mxu0 %v4897
    %7252 = vmatpush.bf16.msra.mxu0 %v4889
    %7253 = vmatpush.bf16.msra.mxu0 %v4881
    %7254 = vmatpush.bf16.msra.mxu0 %v4873
    %7255 = vmatpush.bf16.msra.mxu0 %v4865
    %7256 = vmatpush.bf16.msra.mxu0 %v4857
    %7257 = vmatmul.bf16.gmra.mxu0 %v5860
    %v7258 = vpop.f32.mrf.mxu0
    %v7259 = vadd.f32 %v7245, %v7258
    %v7260 = vpop.f32.mrf.mxu0
    %v7261 = vadd.f32 %v7247, %v7260
    %7262 = vdwg.mxu0
    %7263 = vmatpush.bf16.msra.mxu0 %v4977
    %7264 = vmatpush.bf16.msra.mxu0 %v4969
    %7265 = vmatpush.bf16.msra.mxu0 %v4961
    %7266 = vmatpush.bf16.msra.mxu0 %v4953
    %7267 = vmatpush.bf16.msra.mxu0 %v4945
    %7268 = vmatpush.bf16.msra.mxu0 %v4937
    %7269 = vmatpush.bf16.msra.mxu0 %v4929
    %7270 = vmatpush.bf16.msra.mxu0 %v4921
    %7271 = vmatmul.bf16.gmra.mxu0 %v5861
    %v7272 = vpop.f32.mrf.mxu0
    %v7273 = vadd.f32 %v7259, %v7272
    %v7274 = vpop.f32.mrf.mxu0
    %v7275 = vadd.f32 %v7261, %v7274
    %7276 = vdwg.mxu0
    %7277 = vmatpush.bf16.msra.mxu0 %v5041
    %7278 = vmatpush.bf16.msra.mxu0 %v5033
    %7279 = vmatpush.bf16.msra.mxu0 %v5025
    %7280 = vmatpush.bf16.msra.mxu0 %v5017
    %7281 = vmatpush.bf16.msra.mxu0 %v5009
    %7282 = vmatpush.bf16.msra.mxu0 %v5001
    %7283 = vmatpush.bf16.msra.mxu0 %v4993
    %7284 = vmatpush.bf16.msra.mxu0 %v4985
    %7285 = vmatmul.bf16.gmra.mxu0 %v5862
    %v7286 = vpop.f32.mrf.mxu0
    %v7287 = vadd.f32 %v7273, %v7286
    %v7288 = vpop.f32.mrf.mxu0
    %v7289 = vadd.f32 %v7275, %v7288
    %7290 = vdwg.mxu0
    %7291 = vmatpush.bf16.msra.mxu0 %v5105
    %7292 = vmatpush.bf16.msra.mxu0 %v5097
    %7293 = vmatpush.bf16.msra.mxu0 %v5089
    %7294 = vmatpush.bf16.msra.mxu0 %v5081
    %7295 = vmatpush.bf16.msra.mxu0 %v5073
    %7296 = vmatpush.bf16.msra.mxu0 %v5065
    %7297 = vmatpush.bf16.msra.mxu0 %v5057
    %7298 = vmatpush.bf16.msra.mxu0 %v5049
    %7299 = vmatmul.bf16.gmra.mxu0 %v5863
    %v7300 = vpop.f32.mrf.mxu0
    %v7301 = vadd.f32 %v7287, %v7300
    %v7302 = vpop.f32.mrf.mxu0
    %v7303 = vadd.f32 %v7289, %v7302
    %7304 = vdwg.mxu0
    %7305 = vmatpush.bf16.msra.mxu0 %v5169
    %7306 = vmatpush.bf16.msra.mxu0 %v5161
    %7307 = vmatpush.bf16.msra.mxu0 %v5153
    %7308 = vmatpush.bf16.msra.mxu0 %v5145
    %7309 = vmatpush.bf16.msra.mxu0 %v5137
    %7310 = vmatpush.bf16.msra.mxu0 %v5129
    %7311 = vmatpush.bf16.msra.mxu0 %v5121
    %7312 = vmatpush.bf16.msra.mxu0 %v5113
    %7313 = vmatmul.bf16.gmra.mxu0 %v5864
    %v7314 = vpop.f32.mrf.mxu0
    %v7315 = vadd.f32 %v7301, %v7314
    %v7316 = vpop.f32.mrf.mxu0
    %v7317 = vadd.f32 %v7303, %v7316
    %7318 = vdwg.mxu0
    %7319 = vmatpush.bf16.msra.mxu0 %v5233
    %7320 = vmatpush.bf16.msra.mxu0 %v5225
    %7321 = vmatpush.bf16.msra.mxu0 %v5217
    %7322 = vmatpush.bf16.msra.mxu0 %v5209
    %7323 = vmatpush.bf16.msra.mxu0 %v5201
    %7324 = vmatpush.bf16.msra.mxu0 %v5193
    %7325 = vmatpush.bf16.msra.mxu0 %v5185
    %7326 = vmatpush.bf16.msra.mxu0 %v5177
    %7327 = vmatmul.bf16.gmra.mxu0 %v5865
    %v7328 = vpop.f32.mrf.mxu0
    %v7329 = vadd.f32 %v7315, %v7328
    %v7330 = vpop.f32.mrf.mxu0
    %v7331 = vadd.f32 %v7317, %v7330
    %7332 = vdwg.mxu0
    %7333 = vmatpush.bf16.msra.mxu0 %v5297
    %7334 = vmatpush.bf16.msra.mxu0 %v5289
    %7335 = vmatpush.bf16.msra.mxu0 %v5281
    %7336 = vmatpush.bf16.msra.mxu0 %v5273
    %7337 = vmatpush.bf16.msra.mxu0 %v5265
    %7338 = vmatpush.bf16.msra.mxu0 %v5257
    %7339 = vmatpush.bf16.msra.mxu0 %v5249
    %7340 = vmatpush.bf16.msra.mxu0 %v5241
    %7341 = vmatmul.bf16.gmra.mxu0 %v5866
    %v7342 = vpop.f32.mrf.mxu0
    %v7343 = vadd.f32 %v7329, %v7342
    %v7344 = vpop.f32.mrf.mxu0
    %v7345 = vadd.f32 %v7331, %v7344
    %7346 = vdwg.mxu0
    %7347 = vmatpush.bf16.msra.mxu0 %v5361
    %7348 = vmatpush.bf16.msra.mxu0 %v5353
    %7349 = vmatpush.bf16.msra.mxu0 %v5345
    %7350 = vmatpush.bf16.msra.mxu0 %v5337
    %7351 = vmatpush.bf16.msra.mxu0 %v5329
    %7352 = vmatpush.bf16.msra.mxu0 %v5321
    %7353 = vmatpush.bf16.msra.mxu0 %v5313
    %7354 = vmatpush.bf16.msra.mxu0 %v5305
    %7355 = vmatmul.bf16.gmra.mxu0 %v5867
    %v7356 = vpop.f32.mrf.mxu0
    %v7357 = vadd.f32 %v7343, %v7356
    %v7358 = vpop.f32.mrf.mxu0
    %v7359 = vadd.f32 %v7345, %v7358
    %7360 = vdwg.mxu0
    %7361 = vmatpush.bf16.msra.mxu0 %v5425
    %7362 = vmatpush.bf16.msra.mxu0 %v5417
    %7363 = vmatpush.bf16.msra.mxu0 %v5409
    %7364 = vmatpush.bf16.msra.mxu0 %v5401
    %7365 = vmatpush.bf16.msra.mxu0 %v5393
    %7366 = vmatpush.bf16.msra.mxu0 %v5385
    %7367 = vmatpush.bf16.msra.mxu0 %v5377
    %7368 = vmatpush.bf16.msra.mxu0 %v5369
    %7369 = vmatmul.bf16.gmra.mxu0 %v5868
    %v7370 = vpop.f32.mrf.mxu0
    %v7371 = vadd.f32 %v7357, %v7370
    %v7372 = vpop.f32.mrf.mxu0
    %v7373 = vadd.f32 %v7359, %v7372
    %7374 = vdwg.mxu0
    %7375 = vmatpush.bf16.msra.mxu0 %v5489
    %7376 = vmatpush.bf16.msra.mxu0 %v5481
    %7377 = vmatpush.bf16.msra.mxu0 %v5473
    %7378 = vmatpush.bf16.msra.mxu0 %v5465
    %7379 = vmatpush.bf16.msra.mxu0 %v5457
    %7380 = vmatpush.bf16.msra.mxu0 %v5449
    %7381 = vmatpush.bf16.msra.mxu0 %v5441
    %7382 = vmatpush.bf16.msra.mxu0 %v5433
    %7383 = vmatmul.bf16.gmra.mxu0 %v5869
    %v7384 = vpop.f32.mrf.mxu0
    %v7385 = vadd.f32 %v7371, %v7384
    %v7386 = vpop.f32.mrf.mxu0
    %v7387 = vadd.f32 %v7373, %v7386
    %7388 = vdwg.mxu0
    %7389 = vmatpush.bf16.msra.mxu0 %v5553
    %7390 = vmatpush.bf16.msra.mxu0 %v5545
    %7391 = vmatpush.bf16.msra.mxu0 %v5537
    %7392 = vmatpush.bf16.msra.mxu0 %v5529
    %7393 = vmatpush.bf16.msra.mxu0 %v5521
    %7394 = vmatpush.bf16.msra.mxu0 %v5513
    %7395 = vmatpush.bf16.msra.mxu0 %v5505
    %7396 = vmatpush.bf16.msra.mxu0 %v5497
    %7397 = vmatmul.bf16.gmra.mxu0 %v5870
    %v7398 = vpop.f32.mrf.mxu0
    %v7399 = vadd.f32 %v7385, %v7398
    %v7400 = vpop.f32.mrf.mxu0
    %v7401 = vadd.f32 %v7387, %v7400
    %7402 = vdwg.mxu0
    %7403 = vmatpush.bf16.msra.mxu0 %v5617
    %7404 = vmatpush.bf16.msra.mxu0 %v5609
    %7405 = vmatpush.bf16.msra.mxu0 %v5601
    %7406 = vmatpush.bf16.msra.mxu0 %v5593
    %7407 = vmatpush.bf16.msra.mxu0 %v5585
    %7408 = vmatpush.bf16.msra.mxu0 %v5577
    %7409 = vmatpush.bf16.msra.mxu0 %v5569
    %7410 = vmatpush.bf16.msra.mxu0 %v5561
    %7411 = vmatmul.bf16.gmra.mxu0 %v5871
    %v7412 = vpop.f32.mrf.mxu0
    %v7413 = vadd.f32 %v7399, %v7412
    %v7414 = vpop.f32.mrf.mxu0
    %v7415 = vadd.f32 %v7401, %v7414
    %7416 = vdwg.mxu0
    %7417 = vmatpush.bf16.msra.mxu0 %v5681
    %7418 = vmatpush.bf16.msra.mxu0 %v5673
    %7419 = vmatpush.bf16.msra.mxu0 %v5665
    %7420 = vmatpush.bf16.msra.mxu0 %v5657
    %7421 = vmatpush.bf16.msra.mxu0 %v5649
    %7422 = vmatpush.bf16.msra.mxu0 %v5641
    %7423 = vmatpush.bf16.msra.mxu0 %v5633
    %7424 = vmatpush.bf16.msra.mxu0 %v5625
    %7425 = vmatmul.bf16.gmra.mxu0 %v5872
    %v7426 = vpop.f32.mrf.mxu0
    %v7427 = vadd.f32 %v7413, %v7426
    %v7428 = vpop.f32.mrf.mxu0
    %v7429 = vadd.f32 %v7415, %v7428
    %7430 = vdwg.mxu0
    %7431 = vmatpush.bf16.msra.mxu0 %v5745
    %7432 = vmatpush.bf16.msra.mxu0 %v5737
    %7433 = vmatpush.bf16.msra.mxu0 %v5729
    %7434 = vmatpush.bf16.msra.mxu0 %v5721
    %7435 = vmatpush.bf16.msra.mxu0 %v5713
    %7436 = vmatpush.bf16.msra.mxu0 %v5705
    %7437 = vmatpush.bf16.msra.mxu0 %v5697
    %7438 = vmatpush.bf16.msra.mxu0 %v5689
    %7439 = vmatmul.bf16.gmra.mxu0 %v5873
    %v7440 = vpop.f32.mrf.mxu0
    %v7441 = vadd.f32 %v7427, %v7440
    %v7442 = vpop.f32.mrf.mxu0
    %v7443 = vadd.f32 %v7429, %v7442
    %7444 = vdwg.mxu0
    %7445 = vmatpush.bf16.msra.mxu0 %v5809
    %7446 = vmatpush.bf16.msra.mxu0 %v5801
    %7447 = vmatpush.bf16.msra.mxu0 %v5793
    %7448 = vmatpush.bf16.msra.mxu0 %v5785
    %7449 = vmatpush.bf16.msra.mxu0 %v5777
    %7450 = vmatpush.bf16.msra.mxu0 %v5769
    %7451 = vmatpush.bf16.msra.mxu0 %v5761
    %7452 = vmatpush.bf16.msra.mxu0 %v5753
    %7453 = vmatmul.bf16.gmra.mxu0 %v5874
    %v7454 = vpop.f32.mrf.mxu0
    %v7455 = vadd.f32 %v7441, %v7454
    %v7456 = vpop.f32.mrf.mxu0
    %v7457 = vadd.f32 %v7443, %v7456
    %7458 = vdwg.mxu0
    %7459 = vmatpush.bf16.msra.mxu0 %v4850
    %7460 = vmatpush.bf16.msra.mxu0 %v4842
    %7461 = vmatpush.bf16.msra.mxu0 %v4834
    %7462 = vmatpush.bf16.msra.mxu0 %v4826
    %7463 = vmatpush.bf16.msra.mxu0 %v4818
    %7464 = vmatpush.bf16.msra.mxu0 %v4810
    %7465 = vmatpush.bf16.msra.mxu0 %v4802
    %7466 = vmatpush.bf16.msra.mxu0 %v4794
    %7467 = vmatmul.bf16.gmra.mxu0 %v5859
    %v7468 = vpop.f32.mrf.mxu0
    %v7469 = vadd.f32 0.0, %v7468
    %v7470 = vpop.f32.mrf.mxu0
    %v7471 = vadd.f32 0.0, %v7470
    %7472 = vdwg.mxu0
    %7473 = vmatpush.bf16.msra.mxu0 %v4914
    %7474 = vmatpush.bf16.msra.mxu0 %v4906
    %7475 = vmatpush.bf16.msra.mxu0 %v4898
    %7476 = vmatpush.bf16.msra.mxu0 %v4890
    %7477 = vmatpush.bf16.msra.mxu0 %v4882
    %7478 = vmatpush.bf16.msra.mxu0 %v4874
    %7479 = vmatpush.bf16.msra.mxu0 %v4866
    %7480 = vmatpush.bf16.msra.mxu0 %v4858
    %7481 = vmatmul.bf16.gmra.mxu0 %v5860
    %v7482 = vpop.f32.mrf.mxu0
    %v7483 = vadd.f32 %v7469, %v7482
    %v7484 = vpop.f32.mrf.mxu0
    %v7485 = vadd.f32 %v7471, %v7484
    %7486 = vdwg.mxu0
    %7487 = vmatpush.bf16.msra.mxu0 %v4978
    %7488 = vmatpush.bf16.msra.mxu0 %v4970
    %7489 = vmatpush.bf16.msra.mxu0 %v4962
    %7490 = vmatpush.bf16.msra.mxu0 %v4954
    %7491 = vmatpush.bf16.msra.mxu0 %v4946
    %7492 = vmatpush.bf16.msra.mxu0 %v4938
    %7493 = vmatpush.bf16.msra.mxu0 %v4930
    %7494 = vmatpush.bf16.msra.mxu0 %v4922
    %7495 = vmatmul.bf16.gmra.mxu0 %v5861
    %v7496 = vpop.f32.mrf.mxu0
    %v7497 = vadd.f32 %v7483, %v7496
    %v7498 = vpop.f32.mrf.mxu0
    %v7499 = vadd.f32 %v7485, %v7498
    %7500 = vdwg.mxu0
    %7501 = vmatpush.bf16.msra.mxu0 %v5042
    %7502 = vmatpush.bf16.msra.mxu0 %v5034
    %7503 = vmatpush.bf16.msra.mxu0 %v5026
    %7504 = vmatpush.bf16.msra.mxu0 %v5018
    %7505 = vmatpush.bf16.msra.mxu0 %v5010
    %7506 = vmatpush.bf16.msra.mxu0 %v5002
    %7507 = vmatpush.bf16.msra.mxu0 %v4994
    %7508 = vmatpush.bf16.msra.mxu0 %v4986
    %7509 = vmatmul.bf16.gmra.mxu0 %v5862
    %v7510 = vpop.f32.mrf.mxu0
    %v7511 = vadd.f32 %v7497, %v7510
    %v7512 = vpop.f32.mrf.mxu0
    %v7513 = vadd.f32 %v7499, %v7512
    %7514 = vdwg.mxu0
    %7515 = vmatpush.bf16.msra.mxu0 %v5106
    %7516 = vmatpush.bf16.msra.mxu0 %v5098
    %7517 = vmatpush.bf16.msra.mxu0 %v5090
    %7518 = vmatpush.bf16.msra.mxu0 %v5082
    %7519 = vmatpush.bf16.msra.mxu0 %v5074
    %7520 = vmatpush.bf16.msra.mxu0 %v5066
    %7521 = vmatpush.bf16.msra.mxu0 %v5058
    %7522 = vmatpush.bf16.msra.mxu0 %v5050
    %7523 = vmatmul.bf16.gmra.mxu0 %v5863
    %v7524 = vpop.f32.mrf.mxu0
    %v7525 = vadd.f32 %v7511, %v7524
    %v7526 = vpop.f32.mrf.mxu0
    %v7527 = vadd.f32 %v7513, %v7526
    %7528 = vdwg.mxu0
    %7529 = vmatpush.bf16.msra.mxu0 %v5170
    %7530 = vmatpush.bf16.msra.mxu0 %v5162
    %7531 = vmatpush.bf16.msra.mxu0 %v5154
    %7532 = vmatpush.bf16.msra.mxu0 %v5146
    %7533 = vmatpush.bf16.msra.mxu0 %v5138
    %7534 = vmatpush.bf16.msra.mxu0 %v5130
    %7535 = vmatpush.bf16.msra.mxu0 %v5122
    %7536 = vmatpush.bf16.msra.mxu0 %v5114
    %7537 = vmatmul.bf16.gmra.mxu0 %v5864
    %v7538 = vpop.f32.mrf.mxu0
    %v7539 = vadd.f32 %v7525, %v7538
    %v7540 = vpop.f32.mrf.mxu0
    %v7541 = vadd.f32 %v7527, %v7540
    %7542 = vdwg.mxu0
    %7543 = vmatpush.bf16.msra.mxu0 %v5234
    %7544 = vmatpush.bf16.msra.mxu0 %v5226
    %7545 = vmatpush.bf16.msra.mxu0 %v5218
    %7546 = vmatpush.bf16.msra.mxu0 %v5210
    %7547 = vmatpush.bf16.msra.mxu0 %v5202
    %7548 = vmatpush.bf16.msra.mxu0 %v5194
    %7549 = vmatpush.bf16.msra.mxu0 %v5186
    %7550 = vmatpush.bf16.msra.mxu0 %v5178
    %7551 = vmatmul.bf16.gmra.mxu0 %v5865
    %v7552 = vpop.f32.mrf.mxu0
    %v7553 = vadd.f32 %v7539, %v7552
    %v7554 = vpop.f32.mrf.mxu0
    %v7555 = vadd.f32 %v7541, %v7554
    %7556 = vdwg.mxu0
    %7557 = vmatpush.bf16.msra.mxu0 %v5298
    %7558 = vmatpush.bf16.msra.mxu0 %v5290
    %7559 = vmatpush.bf16.msra.mxu0 %v5282
    %7560 = vmatpush.bf16.msra.mxu0 %v5274
    %7561 = vmatpush.bf16.msra.mxu0 %v5266
    %7562 = vmatpush.bf16.msra.mxu0 %v5258
    %7563 = vmatpush.bf16.msra.mxu0 %v5250
    %7564 = vmatpush.bf16.msra.mxu0 %v5242
    %7565 = vmatmul.bf16.gmra.mxu0 %v5866
    %v7566 = vpop.f32.mrf.mxu0
    %v7567 = vadd.f32 %v7553, %v7566
    %v7568 = vpop.f32.mrf.mxu0
    %v7569 = vadd.f32 %v7555, %v7568
    %7570 = vdwg.mxu0
    %7571 = vmatpush.bf16.msra.mxu0 %v5362
    %7572 = vmatpush.bf16.msra.mxu0 %v5354
    %7573 = vmatpush.bf16.msra.mxu0 %v5346
    %7574 = vmatpush.bf16.msra.mxu0 %v5338
    %7575 = vmatpush.bf16.msra.mxu0 %v5330
    %7576 = vmatpush.bf16.msra.mxu0 %v5322
    %7577 = vmatpush.bf16.msra.mxu0 %v5314
    %7578 = vmatpush.bf16.msra.mxu0 %v5306
    %7579 = vmatmul.bf16.gmra.mxu0 %v5867
    %v7580 = vpop.f32.mrf.mxu0
    %v7581 = vadd.f32 %v7567, %v7580
    %v7582 = vpop.f32.mrf.mxu0
    %v7583 = vadd.f32 %v7569, %v7582
    %7584 = vdwg.mxu0
    %7585 = vmatpush.bf16.msra.mxu0 %v5426
    %7586 = vmatpush.bf16.msra.mxu0 %v5418
    %7587 = vmatpush.bf16.msra.mxu0 %v5410
    %7588 = vmatpush.bf16.msra.mxu0 %v5402
    %7589 = vmatpush.bf16.msra.mxu0 %v5394
    %7590 = vmatpush.bf16.msra.mxu0 %v5386
    %7591 = vmatpush.bf16.msra.mxu0 %v5378
    %7592 = vmatpush.bf16.msra.mxu0 %v5370
    %7593 = vmatmul.bf16.gmra.mxu0 %v5868
    %v7594 = vpop.f32.mrf.mxu0
    %v7595 = vadd.f32 %v7581, %v7594
    %v7596 = vpop.f32.mrf.mxu0
    %v7597 = vadd.f32 %v7583, %v7596
    %7598 = vdwg.mxu0
    %7599 = vmatpush.bf16.msra.mxu0 %v5490
    %7600 = vmatpush.bf16.msra.mxu0 %v5482
    %7601 = vmatpush.bf16.msra.mxu0 %v5474
    %7602 = vmatpush.bf16.msra.mxu0 %v5466
    %7603 = vmatpush.bf16.msra.mxu0 %v5458
    %7604 = vmatpush.bf16.msra.mxu0 %v5450
    %7605 = vmatpush.bf16.msra.mxu0 %v5442
    %7606 = vmatpush.bf16.msra.mxu0 %v5434
    %7607 = vmatmul.bf16.gmra.mxu0 %v5869
    %v7608 = vpop.f32.mrf.mxu0
    %v7609 = vadd.f32 %v7595, %v7608
    %v7610 = vpop.f32.mrf.mxu0
    %v7611 = vadd.f32 %v7597, %v7610
    %7612 = vdwg.mxu0
    %7613 = vmatpush.bf16.msra.mxu0 %v5554
    %7614 = vmatpush.bf16.msra.mxu0 %v5546
    %7615 = vmatpush.bf16.msra.mxu0 %v5538
    %7616 = vmatpush.bf16.msra.mxu0 %v5530
    %7617 = vmatpush.bf16.msra.mxu0 %v5522
    %7618 = vmatpush.bf16.msra.mxu0 %v5514
    %7619 = vmatpush.bf16.msra.mxu0 %v5506
    %7620 = vmatpush.bf16.msra.mxu0 %v5498
    %7621 = vmatmul.bf16.gmra.mxu0 %v5870
    %v7622 = vpop.f32.mrf.mxu0
    %v7623 = vadd.f32 %v7609, %v7622
    %v7624 = vpop.f32.mrf.mxu0
    %v7625 = vadd.f32 %v7611, %v7624
    %7626 = vdwg.mxu0
    %7627 = vmatpush.bf16.msra.mxu0 %v5618
    %7628 = vmatpush.bf16.msra.mxu0 %v5610
    %7629 = vmatpush.bf16.msra.mxu0 %v5602
    %7630 = vmatpush.bf16.msra.mxu0 %v5594
    %7631 = vmatpush.bf16.msra.mxu0 %v5586
    %7632 = vmatpush.bf16.msra.mxu0 %v5578
    %7633 = vmatpush.bf16.msra.mxu0 %v5570
    %7634 = vmatpush.bf16.msra.mxu0 %v5562
    %7635 = vmatmul.bf16.gmra.mxu0 %v5871
    %v7636 = vpop.f32.mrf.mxu0
    %v7637 = vadd.f32 %v7623, %v7636
    %v7638 = vpop.f32.mrf.mxu0
    %v7639 = vadd.f32 %v7625, %v7638
    %7640 = vdwg.mxu0
    %7641 = vmatpush.bf16.msra.mxu0 %v5682
    %7642 = vmatpush.bf16.msra.mxu0 %v5674
    %7643 = vmatpush.bf16.msra.mxu0 %v5666
    %7644 = vmatpush.bf16.msra.mxu0 %v5658
    %7645 = vmatpush.bf16.msra.mxu0 %v5650
    %7646 = vmatpush.bf16.msra.mxu0 %v5642
    %7647 = vmatpush.bf16.msra.mxu0 %v5634
    %7648 = vmatpush.bf16.msra.mxu0 %v5626
    %7649 = vmatmul.bf16.gmra.mxu0 %v5872
    %v7650 = vpop.f32.mrf.mxu0
    %v7651 = vadd.f32 %v7637, %v7650
    %v7652 = vpop.f32.mrf.mxu0
    %v7653 = vadd.f32 %v7639, %v7652
    %7654 = vdwg.mxu0
    %7655 = vmatpush.bf16.msra.mxu0 %v5746
    %7656 = vmatpush.bf16.msra.mxu0 %v5738
    %7657 = vmatpush.bf16.msra.mxu0 %v5730
    %7658 = vmatpush.bf16.msra.mxu0 %v5722
    %7659 = vmatpush.bf16.msra.mxu0 %v5714
    %7660 = vmatpush.bf16.msra.mxu0 %v5706
    %7661 = vmatpush.bf16.msra.mxu0 %v5698
    %7662 = vmatpush.bf16.msra.mxu0 %v5690
    %7663 = vmatmul.bf16.gmra.mxu0 %v5873
    %v7664 = vpop.f32.mrf.mxu0
    %v7665 = vadd.f32 %v7651, %v7664
    %v7666 = vpop.f32.mrf.mxu0
    %v7667 = vadd.f32 %v7653, %v7666
    %7668 = vdwg.mxu0
    %7669 = vmatpush.bf16.msra.mxu0 %v5810
    %7670 = vmatpush.bf16.msra.mxu0 %v5802
    %7671 = vmatpush.bf16.msra.mxu0 %v5794
    %7672 = vmatpush.bf16.msra.mxu0 %v5786
    %7673 = vmatpush.bf16.msra.mxu0 %v5778
    %7674 = vmatpush.bf16.msra.mxu0 %v5770
    %7675 = vmatpush.bf16.msra.mxu0 %v5762
    %7676 = vmatpush.bf16.msra.mxu0 %v5754
    %7677 = vmatmul.bf16.gmra.mxu0 %v5874
    %v7678 = vpop.f32.mrf.mxu0
    %v7679 = vadd.f32 %v7665, %v7678
    %v7680 = vpop.f32.mrf.mxu0
    %v7681 = vadd.f32 %v7667, %v7680
    %7682 = vdwg.mxu0
    %v7683 = vld [vmem:[#allocation4] sm:$0xff]
    %v7685 = vperm.slane %v7683, 0
    %v7686 = vperm.slane %v7683, 1
    %v7687 = vperm.slane %v7683, 2
    %v7688 = vperm.slane %v7683, 3
    %v7689 = vperm.slane %v7683, 4
    %v7690 = vperm.slane %v7683, 5
    %v7691 = vperm.slane %v7683, 6
    %v7692 = vperm.slane %v7683, 7
    %v7701 = vmul.f32 %v6111, %v7685
    %v7702 = vmul.f32 %v6335, %v7686
    %v7703 = vmul.f32 %v6559, %v7687
    %v7704 = vmul.f32 %v6783, %v7688
    %v7705 = vmul.f32 %v7007, %v7689
    %v7706 = vmul.f32 %v7231, %v7690
    %v7707 = vmul.f32 %v7455, %v7691
    %v7708 = vmul.f32 %v7679, %v7692
    %v7709 = vmul.f32 %v6113, %v7685
    %v7710 = vmul.f32 %v6337, %v7686
    %v7711 = vmul.f32 %v6561, %v7687
    %v7712 = vmul.f32 %v6785, %v7688
    %v7713 = vmul.f32 %v7009, %v7689
    %v7714 = vmul.f32 %v7233, %v7690
    %v7715 = vmul.f32 %v7457, %v7691
    %v7716 = vmul.f32 %v7681, %v7692
    %v7717 = vld [vmem:[#allocation6] sm:$0xff]
    %v7719 = vperm.slane %v7717, 0
    %v7720 = vperm.slane %v7717, 1
    %v7721 = vperm.slane %v7717, 2
    %v7722 = vperm.slane %v7717, 3
    %v7723 = vperm.slane %v7717, 4
    %v7724 = vperm.slane %v7717, 5
    %v7725 = vperm.slane %v7717, 6
    %v7726 = vperm.slane %v7717, 7
    %v7735 = vadd.f32 %v7701, %v7719
    %v7736 = vadd.f32 %v7702, %v7720
    %v7737 = vadd.f32 %v7703, %v7721
    %v7738 = vadd.f32 %v7704, %v7722
    %v7739 = vadd.f32 %v7705, %v7723
    %v7740 = vadd.f32 %v7706, %v7724
    %v7741 = vadd.f32 %v7707, %v7725
    %v7742 = vadd.f32 %v7708, %v7726
    %v7743 = vadd.f32 %v7709, %v7719
    %v7744 = vadd.f32 %v7710, %v7720
    %v7745 = vadd.f32 %v7711, %v7721
    %v7746 = vadd.f32 %v7712, %v7722
    %v7747 = vadd.f32 %v7713, %v7723
    %v7748 = vadd.f32 %v7714, %v7724
    %v7749 = vadd.f32 %v7715, %v7725
    %v7750 = vadd.f32 %v7716, %v7726
    %v7751 = vmax.f32 %v7735, 0.0
    %v7752 = vmax.f32 %v7736, 0.0
    %v7753 = vmax.f32 %v7737, 0.0
    %v7754 = vmax.f32 %v7738, 0.0
    %v7755 = vmax.f32 %v7739, 0.0
    %v7756 = vmax.f32 %v7740, 0.0
    %v7757 = vmax.f32 %v7741, 0.0
    %v7758 = vmax.f32 %v7742, 0.0
    %v7759 = vmax.f32 %v7743, 0.0
    %v7760 = vmax.f32 %v7744, 0.0
    %v7761 = vmax.f32 %v7745, 0.0
    %v7762 = vmax.f32 %v7746, 0.0
    %v7763 = vmax.f32 %v7747, 0.0
    %v7764 = vmax.f32 %v7748, 0.0
    %v7765 = vmax.f32 %v7749, 0.0
    %v7766 = vmax.f32 %v7750, 0.0
    %v7767 = vpack.c.bf16 %v7759, %v7751
    %v7768 = vpack.c.bf16 %v7760, %v7752
    %v7769 = vpack.c.bf16 %v7761, %v7753
    %v7770 = vpack.c.bf16 %v7762, %v7754
    %v7771 = vpack.c.bf16 %v7763, %v7755
    %v7772 = vpack.c.bf16 %v7764, %v7756
    %v7773 = vpack.c.bf16 %v7765, %v7757
    %v7774 = vpack.c.bf16 %v7766, %v7758
    %v7775 = vld [vmem:[#allocation7] sm:$0xff]
    %v7776 = vld [vmem:[#allocation7 + $0x8] sm:$0xff]
    %v7777 = vld [vmem:[#allocation7 + $0x10] sm:$0xff]
    %v7778 = vld [vmem:[#allocation7 + $0x18] sm:$0xff]
    %v7779 = vld [vmem:[#allocation7 + $0x20] sm:$0xff]
    %v7780 = vld [vmem:[#allocation7 + $0x28] sm:$0xff]
    %v7781 = vld [vmem:[#allocation7 + $0x30] sm:$0xff]
    %v7782 = vld [vmem:[#allocation7 + $0x38] sm:$0xff]
    %v7783 = vld [vmem:[#allocation7 + $0x40] sm:$0xff]
    %v7784 = vld [vmem:[#allocation7 + $0x48] sm:$0xff]
    %v7785 = vld [vmem:[#allocation7 + $0x50] sm:$0xff]
    %v7786 = vld [vmem:[#allocation7 + $0x58] sm:$0xff]
    %v7787 = vld [vmem:[#allocation7 + $0x60] sm:$0xff]
    %v7788 = vld [vmem:[#allocation7 + $0x68] sm:$0xff]
    %v7789 = vld [vmem:[#allocation7 + $0x70] sm:$0xff]
    %v7790 = vld [vmem:[#allocation7 + $0x78] sm:$0xff]
    %v7791 = vld [vmem:[#allocation7 + $0x80] sm:$0xff]
    %v7792 = vld [vmem:[#allocation7 + $0x88] sm:$0xff]
    %v7793 = vld [vmem:[#allocation7 + $0x90] sm:$0xff]
    %v7794 = vld [vmem:[#allocation7 + $0x98] sm:$0xff]
    %v7795 = vld [vmem:[#allocation7 + $0xa0] sm:$0xff]
    %v7796 = vld [vmem:[#allocation7 + $0xa8] sm:$0xff]
    %v7797 = vld [vmem:[#allocation7 + $0xb0] sm:$0xff]
    %v7798 = vld [vmem:[#allocation7 + $0xb8] sm:$0xff]
    %v7799 = vld [vmem:[#allocation7 + $0xc0] sm:$0xff]
    %v7800 = vld [vmem:[#allocation7 + $0xc8] sm:$0xff]
    %v7801 = vld [vmem:[#allocation7 + $0xd0] sm:$0xff]
    %v7802 = vld [vmem:[#allocation7 + $0xd8] sm:$0xff]
    %v7803 = vld [vmem:[#allocation7 + $0xe0] sm:$0xff]
    %v7804 = vld [vmem:[#allocation7 + $0xe8] sm:$0xff]
    %v7805 = vld [vmem:[#allocation7 + $0xf0] sm:$0xff]
    %v7806 = vld [vmem:[#allocation7 + $0xf8] sm:$0xff]
    %v7807 = vld [vmem:[#allocation7 + $0x100] sm:$0xff]
    %v7808 = vld [vmem:[#allocation7 + $0x108] sm:$0xff]
    %v7809 = vld [vmem:[#allocation7 + $0x110] sm:$0xff]
    %v7810 = vld [vmem:[#allocation7 + $0x118] sm:$0xff]
    %v7811 = vld [vmem:[#allocation7 + $0x120] sm:$0xff]
    %v7812 = vld [vmem:[#allocation7 + $0x128] sm:$0xff]
    %v7813 = vld [vmem:[#allocation7 + $0x130] sm:$0xff]
    %v7814 = vld [vmem:[#allocation7 + $0x138] sm:$0xff]
    %v7815 = vld [vmem:[#allocation7 + $0x140] sm:$0xff]
    %v7816 = vld [vmem:[#allocation7 + $0x148] sm:$0xff]
    %v7817 = vld [vmem:[#allocation7 + $0x150] sm:$0xff]
    %v7818 = vld [vmem:[#allocation7 + $0x158] sm:$0xff]
    %v7819 = vld [vmem:[#allocation7 + $0x160] sm:$0xff]
    %v7820 = vld [vmem:[#allocation7 + $0x168] sm:$0xff]
    %v7821 = vld [vmem:[#allocation7 + $0x170] sm:$0xff]
    %v7822 = vld [vmem:[#allocation7 + $0x178] sm:$0xff]
    %v7823 = vld [vmem:[#allocation7 + $0x180] sm:$0xff]
    %v7824 = vld [vmem:[#allocation7 + $0x188] sm:$0xff]
    %v7825 = vld [vmem:[#allocation7 + $0x190] sm:$0xff]
    %v7826 = vld [vmem:[#allocation7 + $0x198] sm:$0xff]
    %v7827 = vld [vmem:[#allocation7 + $0x1a0] sm:$0xff]
    %v7828 = vld [vmem:[#allocation7 + $0x1a8] sm:$0xff]
    %v7829 = vld [vmem:[#allocation7 + $0x1b0] sm:$0xff]
    %v7830 = vld [vmem:[#allocation7 + $0x1b8] sm:$0xff]
    %v7831 = vld [vmem:[#allocation7 + $0x1c0] sm:$0xff]
    %v7832 = vld [vmem:[#allocation7 + $0x1c8] sm:$0xff]
    %v7833 = vld [vmem:[#allocation7 + $0x1d0] sm:$0xff]
    %v7834 = vld [vmem:[#allocation7 + $0x1d8] sm:$0xff]
    %v7835 = vld [vmem:[#allocation7 + $0x1e0] sm:$0xff]
    %v7836 = vld [vmem:[#allocation7 + $0x1e8] sm:$0xff]
    %v7837 = vld [vmem:[#allocation7 + $0x1f0] sm:$0xff]
    %v7838 = vld [vmem:[#allocation7 + $0x1f8] sm:$0xff]
    %v7839 = vld [vmem:[#allocation7 + $0x200] sm:$0xff]
    %v7840 = vld [vmem:[#allocation7 + $0x208] sm:$0xff]
    %v7841 = vld [vmem:[#allocation7 + $0x210] sm:$0xff]
    %v7842 = vld [vmem:[#allocation7 + $0x218] sm:$0xff]
    %v7843 = vld [vmem:[#allocation7 + $0x220] sm:$0xff]
    %v7844 = vld [vmem:[#allocation7 + $0x228] sm:$0xff]
    %v7845 = vld [vmem:[#allocation7 + $0x230] sm:$0xff]
    %v7846 = vld [vmem:[#allocation7 + $0x238] sm:$0xff]
    %v7847 = vld [vmem:[#allocation7 + $0x240] sm:$0xff]
    %v7848 = vld [vmem:[#allocation7 + $0x248] sm:$0xff]
    %v7849 = vld [vmem:[#allocation7 + $0x250] sm:$0xff]
    %v7850 = vld [vmem:[#allocation7 + $0x258] sm:$0xff]
    %v7851 = vld [vmem:[#allocation7 + $0x260] sm:$0xff]
    %v7852 = vld [vmem:[#allocation7 + $0x268] sm:$0xff]
    %v7853 = vld [vmem:[#allocation7 + $0x270] sm:$0xff]
    %v7854 = vld [vmem:[#allocation7 + $0x278] sm:$0xff]
    %v7855 = vld [vmem:[#allocation7 + $0x280] sm:$0xff]
    %v7856 = vld [vmem:[#allocation7 + $0x288] sm:$0xff]
    %v7857 = vld [vmem:[#allocation7 + $0x290] sm:$0xff]
    %v7858 = vld [vmem:[#allocation7 + $0x298] sm:$0xff]
    %v7859 = vld [vmem:[#allocation7 + $0x2a0] sm:$0xff]
    %v7860 = vld [vmem:[#allocation7 + $0x2a8] sm:$0xff]
    %v7861 = vld [vmem:[#allocation7 + $0x2b0] sm:$0xff]
    %v7862 = vld [vmem:[#allocation7 + $0x2b8] sm:$0xff]
    %v7863 = vld [vmem:[#allocation7 + $0x2c0] sm:$0xff]
    %v7864 = vld [vmem:[#allocation7 + $0x2c8] sm:$0xff]
    %v7865 = vld [vmem:[#allocation7 + $0x2d0] sm:$0xff]
    %v7866 = vld [vmem:[#allocation7 + $0x2d8] sm:$0xff]
    %v7867 = vld [vmem:[#allocation7 + $0x2e0] sm:$0xff]
    %v7868 = vld [vmem:[#allocation7 + $0x2e8] sm:$0xff]
    %v7869 = vld [vmem:[#allocation7 + $0x2f0] sm:$0xff]
    %v7870 = vld [vmem:[#allocation7 + $0x2f8] sm:$0xff]
    %v7871 = vld [vmem:[#allocation7 + $0x300] sm:$0xff]
    %v7872 = vld [vmem:[#allocation7 + $0x308] sm:$0xff]
    %v7873 = vld [vmem:[#allocation7 + $0x310] sm:$0xff]
    %v7874 = vld [vmem:[#allocation7 + $0x318] sm:$0xff]
    %v7875 = vld [vmem:[#allocation7 + $0x320] sm:$0xff]
    %v7876 = vld [vmem:[#allocation7 + $0x328] sm:$0xff]
    %v7877 = vld [vmem:[#allocation7 + $0x330] sm:$0xff]
    %v7878 = vld [vmem:[#allocation7 + $0x338] sm:$0xff]
    %v7879 = vld [vmem:[#allocation7 + $0x340] sm:$0xff]
    %v7880 = vld [vmem:[#allocation7 + $0x348] sm:$0xff]
    %v7881 = vld [vmem:[#allocation7 + $0x350] sm:$0xff]
    %v7882 = vld [vmem:[#allocation7 + $0x358] sm:$0xff]
    %v7883 = vld [vmem:[#allocation7 + $0x360] sm:$0xff]
    %v7884 = vld [vmem:[#allocation7 + $0x368] sm:$0xff]
    %v7885 = vld [vmem:[#allocation7 + $0x370] sm:$0xff]
    %v7886 = vld [vmem:[#allocation7 + $0x378] sm:$0xff]
    %v7887 = vld [vmem:[#allocation7 + $0x380] sm:$0xff]
    %v7888 = vld [vmem:[#allocation7 + $0x388] sm:$0xff]
    %v7889 = vld [vmem:[#allocation7 + $0x390] sm:$0xff]
    %v7890 = vld [vmem:[#allocation7 + $0x398] sm:$0xff]
    %v7891 = vld [vmem:[#allocation7 + $0x3a0] sm:$0xff]
    %v7892 = vld [vmem:[#allocation7 + $0x3a8] sm:$0xff]
    %v7893 = vld [vmem:[#allocation7 + $0x3b0] sm:$0xff]
    %v7894 = vld [vmem:[#allocation7 + $0x3b8] sm:$0xff]
    %v7895 = vld [vmem:[#allocation7 + $0x3c0] sm:$0xff]
    %v7896 = vld [vmem:[#allocation7 + $0x3c8] sm:$0xff]
    %v7897 = vld [vmem:[#allocation7 + $0x3d0] sm:$0xff]
    %v7898 = vld [vmem:[#allocation7 + $0x3d8] sm:$0xff]
    %v7899 = vld [vmem:[#allocation7 + $0x3e0] sm:$0xff]
    %v7900 = vld [vmem:[#allocation7 + $0x3e8] sm:$0xff]
    %v7901 = vld [vmem:[#allocation7 + $0x3f0] sm:$0xff]
    %v7902 = vld [vmem:[#allocation7 + $0x3f8] sm:$0xff]
    %v7903 = vunpack.c.0.s8 %v7775
    %v7904 = vunpack.c.0.s8 %v7776
    %v7905 = vunpack.c.0.s8 %v7777
    %v7906 = vunpack.c.0.s8 %v7778
    %v7907 = vunpack.c.1.s8 %v7775
    %v7908 = vunpack.c.1.s8 %v7776
    %v7909 = vunpack.c.1.s8 %v7777
    %v7910 = vunpack.c.1.s8 %v7778
    %v7911 = vunpack.c.2.s8 %v7775
    %v7912 = vunpack.c.2.s8 %v7776
    %v7913 = vunpack.c.2.s8 %v7777
    %v7914 = vunpack.c.2.s8 %v7778
    %v7915 = vunpack.c.3.s8 %v7775
    %v7916 = vunpack.c.3.s8 %v7776
    %v7917 = vunpack.c.3.s8 %v7777
    %v7918 = vunpack.c.3.s8 %v7778
    %v7919 = vunpack.c.0.s8 %v7779
    %v7920 = vunpack.c.0.s8 %v7780
    %v7921 = vunpack.c.0.s8 %v7781
    %v7922 = vunpack.c.0.s8 %v7782
    %v7923 = vunpack.c.1.s8 %v7779
    %v7924 = vunpack.c.1.s8 %v7780
    %v7925 = vunpack.c.1.s8 %v7781
    %v7926 = vunpack.c.1.s8 %v7782
    %v7927 = vunpack.c.2.s8 %v7779
    %v7928 = vunpack.c.2.s8 %v7780
    %v7929 = vunpack.c.2.s8 %v7781
    %v7930 = vunpack.c.2.s8 %v7782
    %v7931 = vunpack.c.3.s8 %v7779
    %v7932 = vunpack.c.3.s8 %v7780
    %v7933 = vunpack.c.3.s8 %v7781
    %v7934 = vunpack.c.3.s8 %v7782
    %v7935 = vunpack.c.0.s8 %v7783
    %v7936 = vunpack.c.0.s8 %v7784
    %v7937 = vunpack.c.0.s8 %v7785
    %v7938 = vunpack.c.0.s8 %v7786
    %v7939 = vunpack.c.1.s8 %v7783
    %v7940 = vunpack.c.1.s8 %v7784
    %v7941 = vunpack.c.1.s8 %v7785
    %v7942 = vunpack.c.1.s8 %v7786
    %v7943 = vunpack.c.2.s8 %v7783
    %v7944 = vunpack.c.2.s8 %v7784
    %v7945 = vunpack.c.2.s8 %v7785
    %v7946 = vunpack.c.2.s8 %v7786
    %v7947 = vunpack.c.3.s8 %v7783
    %v7948 = vunpack.c.3.s8 %v7784
    %v7949 = vunpack.c.3.s8 %v7785
    %v7950 = vunpack.c.3.s8 %v7786
    %v7951 = vunpack.c.0.s8 %v7787
    %v7952 = vunpack.c.0.s8 %v7788
    %v7953 = vunpack.c.0.s8 %v7789
    %v7954 = vunpack.c.0.s8 %v7790
    %v7955 = vunpack.c.1.s8 %v7787
    %v7956 = vunpack.c.1.s8 %v7788
    %v7957 = vunpack.c.1.s8 %v7789
    %v7958 = vunpack.c.1.s8 %v7790
    %v7959 = vunpack.c.2.s8 %v7787
    %v7960 = vunpack.c.2.s8 %v7788
    %v7961 = vunpack.c.2.s8 %v7789
    %v7962 = vunpack.c.2.s8 %v7790
    %v7963 = vunpack.c.3.s8 %v7787
    %v7964 = vunpack.c.3.s8 %v7788
    %v7965 = vunpack.c.3.s8 %v7789
    %v7966 = vunpack.c.3.s8 %v7790
    %v7967 = vunpack.c.0.s8 %v7791
    %v7968 = vunpack.c.0.s8 %v7792
    %v7969 = vunpack.c.0.s8 %v7793
    %v7970 = vunpack.c.0.s8 %v7794
    %v7971 = vunpack.c.1.s8 %v7791
    %v7972 = vunpack.c.1.s8 %v7792
    %v7973 = vunpack.c.1.s8 %v7793
    %v7974 = vunpack.c.1.s8 %v7794
    %v7975 = vunpack.c.2.s8 %v7791
    %v7976 = vunpack.c.2.s8 %v7792
    %v7977 = vunpack.c.2.s8 %v7793
    %v7978 = vunpack.c.2.s8 %v7794
    %v7979 = vunpack.c.3.s8 %v7791
    %v7980 = vunpack.c.3.s8 %v7792
    %v7981 = vunpack.c.3.s8 %v7793
    %v7982 = vunpack.c.3.s8 %v7794
    %v7983 = vunpack.c.0.s8 %v7795
    %v7984 = vunpack.c.0.s8 %v7796
    %v7985 = vunpack.c.0.s8 %v7797
    %v7986 = vunpack.c.0.s8 %v7798
    %v7987 = vunpack.c.1.s8 %v7795
    %v7988 = vunpack.c.1.s8 %v7796
    %v7989 = vunpack.c.1.s8 %v7797
    %v7990 = vunpack.c.1.s8 %v7798
    %v7991 = vunpack.c.2.s8 %v7795
    %v7992 = vunpack.c.2.s8 %v7796
    %v7993 = vunpack.c.2.s8 %v7797
    %v7994 = vunpack.c.2.s8 %v7798
    %v7995 = vunpack.c.3.s8 %v7795
    %v7996 = vunpack.c.3.s8 %v7796
    %v7997 = vunpack.c.3.s8 %v7797
    %v7998 = vunpack.c.3.s8 %v7798
    %v7999 = vunpack.c.0.s8 %v7799
    %v8000 = vunpack.c.0.s8 %v7800
    %v8001 = vunpack.c.0.s8 %v7801
    %v8002 = vunpack.c.0.s8 %v7802
    %v8003 = vunpack.c.1.s8 %v7799
    %v8004 = vunpack.c.1.s8 %v7800
    %v8005 = vunpack.c.1.s8 %v7801
    %v8006 = vunpack.c.1.s8 %v7802
    %v8007 = vunpack.c.2.s8 %v7799
    %v8008 = vunpack.c.2.s8 %v7800
    %v8009 = vunpack.c.2.s8 %v7801
    %v8010 = vunpack.c.2.s8 %v7802
    %v8011 = vunpack.c.3.s8 %v7799
    %v8012 = vunpack.c.3.s8 %v7800
    %v8013 = vunpack.c.3.s8 %v7801
    %v8014 = vunpack.c.3.s8 %v7802
    %v8015 = vunpack.c.0.s8 %v7803
    %v8016 = vunpack.c.0.s8 %v7804
    %v8017 = vunpack.c.0.s8 %v7805
    %v8018 = vunpack.c.0.s8 %v7806
    %v8019 = vunpack.c.1.s8 %v7803
    %v8020 = vunpack.c.1.s8 %v7804
    %v8021 = vunpack.c.1.s8 %v7805
    %v8022 = vunpack.c.1.s8 %v7806
    %v8023 = vunpack.c.2.s8 %v7803
    %v8024 = vunpack.c.2.s8 %v7804
    %v8025 = vunpack.c.2.s8 %v7805
    %v8026 = vunpack.c.2.s8 %v7806
    %v8027 = vunpack.c.3.s8 %v7803
    %v8028 = vunpack.c.3.s8 %v7804
    %v8029 = vunpack.c.3.s8 %v7805
    %v8030 = vunpack.c.3.s8 %v7806
    %v8031 = vunpack.c.0.s8 %v7807
    %v8032 = vunpack.c.0.s8 %v7808
    %v8033 = vunpack.c.0.s8 %v7809
    %v8034 = vunpack.c.0.s8 %v7810
    %v8035 = vunpack.c.1.s8 %v7807
    %v8036 = vunpack.c.1.s8 %v7808
    %v8037 = vunpack.c.1.s8 %v7809
    %v8038 = vunpack.c.1.s8 %v7810
    %v8039 = vunpack.c.2.s8 %v7807
    %v8040 = vunpack.c.2.s8 %v7808
    %v8041 = vunpack.c.2.s8 %v7809
    %v8042 = vunpack.c.2.s8 %v7810
    %v8043 = vunpack.c.3.s8 %v7807
    %v8044 = vunpack.c.3.s8 %v7808
    %v8045 = vunpack.c.3.s8 %v7809
    %v8046 = vunpack.c.3.s8 %v7810
    %v8047 = vunpack.c.0.s8 %v7811
    %v8048 = vunpack.c.0.s8 %v7812
    %v8049 = vunpack.c.0.s8 %v7813
    %v8050 = vunpack.c.0.s8 %v7814
    %v8051 = vunpack.c.1.s8 %v7811
    %v8052 = vunpack.c.1.s8 %v7812
    %v8053 = vunpack.c.1.s8 %v7813
    %v8054 = vunpack.c.1.s8 %v7814
    %v8055 = vunpack.c.2.s8 %v7811
    %v8056 = vunpack.c.2.s8 %v7812
    %v8057 = vunpack.c.2.s8 %v7813
    %v8058 = vunpack.c.2.s8 %v7814
    %v8059 = vunpack.c.3.s8 %v7811
    %v8060 = vunpack.c.3.s8 %v7812
    %v8061 = vunpack.c.3.s8 %v7813
    %v8062 = vunpack.c.3.s8 %v7814
    %v8063 = vunpack.c.0.s8 %v7815
    %v8064 = vunpack.c.0.s8 %v7816
    %v8065 = vunpack.c.0.s8 %v7817
    %v8066 = vunpack.c.0.s8 %v7818
    %v8067 = vunpack.c.1.s8 %v7815
    %v8068 = vunpack.c.1.s8 %v7816
    %v8069 = vunpack.c.1.s8 %v7817
    %v8070 = vunpack.c.1.s8 %v7818
    %v8071 = vunpack.c.2.s8 %v7815
    %v8072 = vunpack.c.2.s8 %v7816
    %v8073 = vunpack.c.2.s8 %v7817
    %v8074 = vunpack.c.2.s8 %v7818
    %v8075 = vunpack.c.3.s8 %v7815
    %v8076 = vunpack.c.3.s8 %v7816
    %v8077 = vunpack.c.3.s8 %v7817
    %v8078 = vunpack.c.3.s8 %v7818
    %v8079 = vunpack.c.0.s8 %v7819
    %v8080 = vunpack.c.0.s8 %v7820
    %v8081 = vunpack.c.0.s8 %v7821
    %v8082 = vunpack.c.0.s8 %v7822
    %v8083 = vunpack.c.1.s8 %v7819
    %v8084 = vunpack.c.1.s8 %v7820
    %v8085 = vunpack.c.1.s8 %v7821
    %v8086 = vunpack.c.1.s8 %v7822
    %v8087 = vunpack.c.2.s8 %v7819
    %v8088 = vunpack.c.2.s8 %v7820
    %v8089 = vunpack.c.2.s8 %v7821
    %v8090 = vunpack.c.2.s8 %v7822
    %v8091 = vunpack.c.3.s8 %v7819
    %v8092 = vunpack.c.3.s8 %v7820
    %v8093 = vunpack.c.3.s8 %v7821
    %v8094 = vunpack.c.3.s8 %v7822
    %v8095 = vunpack.c.0.s8 %v7823
    %v8096 = vunpack.c.0.s8 %v7824
    %v8097 = vunpack.c.0.s8 %v7825
    %v8098 = vunpack.c.0.s8 %v7826
    %v8099 = vunpack.c.1.s8 %v7823
    %v8100 = vunpack.c.1.s8 %v7824
    %v8101 = vunpack.c.1.s8 %v7825
    %v8102 = vunpack.c.1.s8 %v7826
    %v8103 = vunpack.c.2.s8 %v7823
    %v8104 = vunpack.c.2.s8 %v7824
    %v8105 = vunpack.c.2.s8 %v7825
    %v8106 = vunpack.c.2.s8 %v7826
    %v8107 = vunpack.c.3.s8 %v7823
    %v8108 = vunpack.c.3.s8 %v7824
    %v8109 = vunpack.c.3.s8 %v7825
    %v8110 = vunpack.c.3.s8 %v7826
    %v8111 = vunpack.c.0.s8 %v7827
    %v8112 = vunpack.c.0.s8 %v7828
    %v8113 = vunpack.c.0.s8 %v7829
    %v8114 = vunpack.c.0.s8 %v7830
    %v8115 = vunpack.c.1.s8 %v7827
    %v8116 = vunpack.c.1.s8 %v7828
    %v8117 = vunpack.c.1.s8 %v7829
    %v8118 = vunpack.c.1.s8 %v7830
    %v8119 = vunpack.c.2.s8 %v7827
    %v8120 = vunpack.c.2.s8 %v7828
    %v8121 = vunpack.c.2.s8 %v7829
    %v8122 = vunpack.c.2.s8 %v7830
    %v8123 = vunpack.c.3.s8 %v7827
    %v8124 = vunpack.c.3.s8 %v7828
    %v8125 = vunpack.c.3.s8 %v7829
    %v8126 = vunpack.c.3.s8 %v7830
    %v8127 = vunpack.c.0.s8 %v7831
    %v8128 = vunpack.c.0.s8 %v7832
    %v8129 = vunpack.c.0.s8 %v7833
    %v8130 = vunpack.c.0.s8 %v7834
    %v8131 = vunpack.c.1.s8 %v7831
    %v8132 = vunpack.c.1.s8 %v7832
    %v8133 = vunpack.c.1.s8 %v7833
    %v8134 = vunpack.c.1.s8 %v7834
    %v8135 = vunpack.c.2.s8 %v7831
    %v8136 = vunpack.c.2.s8 %v7832
    %v8137 = vunpack.c.2.s8 %v7833
    %v8138 = vunpack.c.2.s8 %v7834
    %v8139 = vunpack.c.3.s8 %v7831
    %v8140 = vunpack.c.3.s8 %v7832
    %v8141 = vunpack.c.3.s8 %v7833
    %v8142 = vunpack.c.3.s8 %v7834
    %v8143 = vunpack.c.0.s8 %v7835
    %v8144 = vunpack.c.0.s8 %v7836
    %v8145 = vunpack.c.0.s8 %v7837
    %v8146 = vunpack.c.0.s8 %v7838
    %v8147 = vunpack.c.1.s8 %v7835
    %v8148 = vunpack.c.1.s8 %v7836
    %v8149 = vunpack.c.1.s8 %v7837
    %v8150 = vunpack.c.1.s8 %v7838
    %v8151 = vunpack.c.2.s8 %v7835
    %v8152 = vunpack.c.2.s8 %v7836
    %v8153 = vunpack.c.2.s8 %v7837
    %v8154 = vunpack.c.2.s8 %v7838
    %v8155 = vunpack.c.3.s8 %v7835
    %v8156 = vunpack.c.3.s8 %v7836
    %v8157 = vunpack.c.3.s8 %v7837
    %v8158 = vunpack.c.3.s8 %v7838
    %v8159 = vunpack.c.0.s8 %v7839
    %v8160 = vunpack.c.0.s8 %v7840
    %v8161 = vunpack.c.0.s8 %v7841
    %v8162 = vunpack.c.0.s8 %v7842
    %v8163 = vunpack.c.1.s8 %v7839
    %v8164 = vunpack.c.1.s8 %v7840
    %v8165 = vunpack.c.1.s8 %v7841
    %v8166 = vunpack.c.1.s8 %v7842
    %v8167 = vunpack.c.2.s8 %v7839
    %v8168 = vunpack.c.2.s8 %v7840
    %v8169 = vunpack.c.2.s8 %v7841
    %v8170 = vunpack.c.2.s8 %v7842
    %v8171 = vunpack.c.3.s8 %v7839
    %v8172 = vunpack.c.3.s8 %v7840
    %v8173 = vunpack.c.3.s8 %v7841
    %v8174 = vunpack.c.3.s8 %v7842
    %v8175 = vunpack.c.0.s8 %v7843
    %v8176 = vunpack.c.0.s8 %v7844
    %v8177 = vunpack.c.0.s8 %v7845
    %v8178 = vunpack.c.0.s8 %v7846
    %v8179 = vunpack.c.1.s8 %v7843
    %v8180 = vunpack.c.1.s8 %v7844
    %v8181 = vunpack.c.1.s8 %v7845
    %v8182 = vunpack.c.1.s8 %v7846
    %v8183 = vunpack.c.2.s8 %v7843
    %v8184 = vunpack.c.2.s8 %v7844
    %v8185 = vunpack.c.2.s8 %v7845
    %v8186 = vunpack.c.2.s8 %v7846
    %v8187 = vunpack.c.3.s8 %v7843
    %v8188 = vunpack.c.3.s8 %v7844
    %v8189 = vunpack.c.3.s8 %v7845
    %v8190 = vunpack.c.3.s8 %v7846
    %v8191 = vunpack.c.0.s8 %v7847
    %v8192 = vunpack.c.0.s8 %v7848
    %v8193 = vunpack.c.0.s8 %v7849
    %v8194 = vunpack.c.0.s8 %v7850
    %v8195 = vunpack.c.1.s8 %v7847
    %v8196 = vunpack.c.1.s8 %v7848
    %v8197 = vunpack.c.1.s8 %v7849
    %v8198 = vunpack.c.1.s8 %v7850
    %v8199 = vunpack.c.2.s8 %v7847
    %v8200 = vunpack.c.2.s8 %v7848
    %v8201 = vunpack.c.2.s8 %v7849
    %v8202 = vunpack.c.2.s8 %v7850
    %v8203 = vunpack.c.3.s8 %v7847
    %v8204 = vunpack.c.3.s8 %v7848
    %v8205 = vunpack.c.3.s8 %v7849
    %v8206 = vunpack.c.3.s8 %v7850
    %v8207 = vunpack.c.0.s8 %v7851
    %v8208 = vunpack.c.0.s8 %v7852
    %v8209 = vunpack.c.0.s8 %v7853
    %v8210 = vunpack.c.0.s8 %v7854
    %v8211 = vunpack.c.1.s8 %v7851
    %v8212 = vunpack.c.1.s8 %v7852
    %v8213 = vunpack.c.1.s8 %v7853
    %v8214 = vunpack.c.1.s8 %v7854
    %v8215 = vunpack.c.2.s8 %v7851
    %v8216 = vunpack.c.2.s8 %v7852
    %v8217 = vunpack.c.2.s8 %v7853
    %v8218 = vunpack.c.2.s8 %v7854
    %v8219 = vunpack.c.3.s8 %v7851
    %v8220 = vunpack.c.3.s8 %v7852
    %v8221 = vunpack.c.3.s8 %v7853
    %v8222 = vunpack.c.3.s8 %v7854
    %v8223 = vunpack.c.0.s8 %v7855
    %v8224 = vunpack.c.0.s8 %v7856
    %v8225 = vunpack.c.0.s8 %v7857
    %v8226 = vunpack.c.0.s8 %v7858
    %v8227 = vunpack.c.1.s8 %v7855
    %v8228 = vunpack.c.1.s8 %v7856
    %v8229 = vunpack.c.1.s8 %v7857
    %v8230 = vunpack.c.1.s8 %v7858
    %v8231 = vunpack.c.2.s8 %v7855
    %v8232 = vunpack.c.2.s8 %v7856
    %v8233 = vunpack.c.2.s8 %v7857
    %v8234 = vunpack.c.2.s8 %v7858
    %v8235 = vunpack.c.3.s8 %v7855
    %v8236 = vunpack.c.3.s8 %v7856
    %v8237 = vunpack.c.3.s8 %v7857
    %v8238 = vunpack.c.3.s8 %v7858
    %v8239 = vunpack.c.0.s8 %v7859
    %v8240 = vunpack.c.0.s8 %v7860
    %v8241 = vunpack.c.0.s8 %v7861
    %v8242 = vunpack.c.0.s8 %v7862
    %v8243 = vunpack.c.1.s8 %v7859
    %v8244 = vunpack.c.1.s8 %v7860
    %v8245 = vunpack.c.1.s8 %v7861
    %v8246 = vunpack.c.1.s8 %v7862
    %v8247 = vunpack.c.2.s8 %v7859
    %v8248 = vunpack.c.2.s8 %v7860
    %v8249 = vunpack.c.2.s8 %v7861
    %v8250 = vunpack.c.2.s8 %v7862
    %v8251 = vunpack.c.3.s8 %v7859
    %v8252 = vunpack.c.3.s8 %v7860
    %v8253 = vunpack.c.3.s8 %v7861
    %v8254 = vunpack.c.3.s8 %v7862
    %v8255 = vunpack.c.0.s8 %v7863
    %v8256 = vunpack.c.0.s8 %v7864
    %v8257 = vunpack.c.0.s8 %v7865
    %v8258 = vunpack.c.0.s8 %v7866
    %v8259 = vunpack.c.1.s8 %v7863
    %v8260 = vunpack.c.1.s8 %v7864
    %v8261 = vunpack.c.1.s8 %v7865
    %v8262 = vunpack.c.1.s8 %v7866
    %v8263 = vunpack.c.2.s8 %v7863
    %v8264 = vunpack.c.2.s8 %v7864
    %v8265 = vunpack.c.2.s8 %v7865
    %v8266 = vunpack.c.2.s8 %v7866
    %v8267 = vunpack.c.3.s8 %v7863
    %v8268 = vunpack.c.3.s8 %v7864
    %v8269 = vunpack.c.3.s8 %v7865
    %v8270 = vunpack.c.3.s8 %v7866
    %v8271 = vunpack.c.0.s8 %v7867
    %v8272 = vunpack.c.0.s8 %v7868
    %v8273 = vunpack.c.0.s8 %v7869
    %v8274 = vunpack.c.0.s8 %v7870
    %v8275 = vunpack.c.1.s8 %v7867
    %v8276 = vunpack.c.1.s8 %v7868
    %v8277 = vunpack.c.1.s8 %v7869
    %v8278 = vunpack.c.1.s8 %v7870
    %v8279 = vunpack.c.2.s8 %v7867
    %v8280 = vunpack.c.2.s8 %v7868
    %v8281 = vunpack.c.2.s8 %v7869
    %v8282 = vunpack.c.2.s8 %v7870
    %v8283 = vunpack.c.3.s8 %v7867
    %v8284 = vunpack.c.3.s8 %v7868
    %v8285 = vunpack.c.3.s8 %v7869
    %v8286 = vunpack.c.3.s8 %v7870
    %v8287 = vunpack.c.0.s8 %v7871
    %v8288 = vunpack.c.0.s8 %v7872
    %v8289 = vunpack.c.0.s8 %v7873
    %v8290 = vunpack.c.0.s8 %v7874
    %v8291 = vunpack.c.1.s8 %v7871
    %v8292 = vunpack.c.1.s8 %v7872
    %v8293 = vunpack.c.1.s8 %v7873
    %v8294 = vunpack.c.1.s8 %v7874
    %v8295 = vunpack.c.2.s8 %v7871
    %v8296 = vunpack.c.2.s8 %v7872
    %v8297 = vunpack.c.2.s8 %v7873
    %v8298 = vunpack.c.2.s8 %v7874
    %v8299 = vunpack.c.3.s8 %v7871
    %v8300 = vunpack.c.3.s8 %v7872
    %v8301 = vunpack.c.3.s8 %v7873
    %v8302 = vunpack.c.3.s8 %v7874
    %v8303 = vunpack.c.0.s8 %v7875
    %v8304 = vunpack.c.0.s8 %v7876
    %v8305 = vunpack.c.0.s8 %v7877
    %v8306 = vunpack.c.0.s8 %v7878
    %v8307 = vunpack.c.1.s8 %v7875
    %v8308 = vunpack.c.1.s8 %v7876
    %v8309 = vunpack.c.1.s8 %v7877
    %v8310 = vunpack.c.1.s8 %v7878
    %v8311 = vunpack.c.2.s8 %v7875
    %v8312 = vunpack.c.2.s8 %v7876
    %v8313 = vunpack.c.2.s8 %v7877
    %v8314 = vunpack.c.2.s8 %v7878
    %v8315 = vunpack.c.3.s8 %v7875
    %v8316 = vunpack.c.3.s8 %v7876
    %v8317 = vunpack.c.3.s8 %v7877
    %v8318 = vunpack.c.3.s8 %v7878
    %v8319 = vunpack.c.0.s8 %v7879
    %v8320 = vunpack.c.0.s8 %v7880
    %v8321 = vunpack.c.0.s8 %v7881
    %v8322 = vunpack.c.0.s8 %v7882
    %v8323 = vunpack.c.1.s8 %v7879
    %v8324 = vunpack.c.1.s8 %v7880
    %v8325 = vunpack.c.1.s8 %v7881
    %v8326 = vunpack.c.1.s8 %v7882
    %v8327 = vunpack.c.2.s8 %v7879
    %v8328 = vunpack.c.2.s8 %v7880
    %v8329 = vunpack.c.2.s8 %v7881
    %v8330 = vunpack.c.2.s8 %v7882
    %v8331 = vunpack.c.3.s8 %v7879
    %v8332 = vunpack.c.3.s8 %v7880
    %v8333 = vunpack.c.3.s8 %v7881
    %v8334 = vunpack.c.3.s8 %v7882
    %v8335 = vunpack.c.0.s8 %v7883
    %v8336 = vunpack.c.0.s8 %v7884
    %v8337 = vunpack.c.0.s8 %v7885
    %v8338 = vunpack.c.0.s8 %v7886
    %v8339 = vunpack.c.1.s8 %v7883
    %v8340 = vunpack.c.1.s8 %v7884
    %v8341 = vunpack.c.1.s8 %v7885
    %v8342 = vunpack.c.1.s8 %v7886
    %v8343 = vunpack.c.2.s8 %v7883
    %v8344 = vunpack.c.2.s8 %v7884
    %v8345 = vunpack.c.2.s8 %v7885
    %v8346 = vunpack.c.2.s8 %v7886
    %v8347 = vunpack.c.3.s8 %v7883
    %v8348 = vunpack.c.3.s8 %v7884
    %v8349 = vunpack.c.3.s8 %v7885
    %v8350 = vunpack.c.3.s8 %v7886
    %v8351 = vunpack.c.0.s8 %v7887
    %v8352 = vunpack.c.0.s8 %v7888
    %v8353 = vunpack.c.0.s8 %v7889
    %v8354 = vunpack.c.0.s8 %v7890
    %v8355 = vunpack.c.1.s8 %v7887
    %v8356 = vunpack.c.1.s8 %v7888
    %v8357 = vunpack.c.1.s8 %v7889
    %v8358 = vunpack.c.1.s8 %v7890
    %v8359 = vunpack.c.2.s8 %v7887
    %v8360 = vunpack.c.2.s8 %v7888
    %v8361 = vunpack.c.2.s8 %v7889
    %v8362 = vunpack.c.2.s8 %v7890
    %v8363 = vunpack.c.3.s8 %v7887
    %v8364 = vunpack.c.3.s8 %v7888
    %v8365 = vunpack.c.3.s8 %v7889
    %v8366 = vunpack.c.3.s8 %v7890
    %v8367 = vunpack.c.0.s8 %v7891
    %v8368 = vunpack.c.0.s8 %v7892
    %v8369 = vunpack.c.0.s8 %v7893
    %v8370 = vunpack.c.0.s8 %v7894
    %v8371 = vunpack.c.1.s8 %v7891
    %v8372 = vunpack.c.1.s8 %v7892
    %v8373 = vunpack.c.1.s8 %v7893
    %v8374 = vunpack.c.1.s8 %v7894
    %v8375 = vunpack.c.2.s8 %v7891
    %v8376 = vunpack.c.2.s8 %v7892
    %v8377 = vunpack.c.2.s8 %v7893
    %v8378 = vunpack.c.2.s8 %v7894
    %v8379 = vunpack.c.3.s8 %v7891
    %v8380 = vunpack.c.3.s8 %v7892
    %v8381 = vunpack.c.3.s8 %v7893
    %v8382 = vunpack.c.3.s8 %v7894
    %v8383 = vunpack.c.0.s8 %v7895
    %v8384 = vunpack.c.0.s8 %v7896
    %v8385 = vunpack.c.0.s8 %v7897
    %v8386 = vunpack.c.0.s8 %v7898
    %v8387 = vunpack.c.1.s8 %v7895
    %v8388 = vunpack.c.1.s8 %v7896
    %v8389 = vunpack.c.1.s8 %v7897
    %v8390 = vunpack.c.1.s8 %v7898
    %v8391 = vunpack.c.2.s8 %v7895
    %v8392 = vunpack.c.2.s8 %v7896
    %v8393 = vunpack.c.2.s8 %v7897
    %v8394 = vunpack.c.2.s8 %v7898
    %v8395 = vunpack.c.3.s8 %v7895
    %v8396 = vunpack.c.3.s8 %v7896
    %v8397 = vunpack.c.3.s8 %v7897
    %v8398 = vunpack.c.3.s8 %v7898
    %v8399 = vunpack.c.0.s8 %v7899
    %v8400 = vunpack.c.0.s8 %v7900
    %v8401 = vunpack.c.0.s8 %v7901
    %v8402 = vunpack.c.0.s8 %v7902
    %v8403 = vunpack.c.1.s8 %v7899
    %v8404 = vunpack.c.1.s8 %v7900
    %v8405 = vunpack.c.1.s8 %v7901
    %v8406 = vunpack.c.1.s8 %v7902
    %v8407 = vunpack.c.2.s8 %v7899
    %v8408 = vunpack.c.2.s8 %v7900
    %v8409 = vunpack.c.2.s8 %v7901
    %v8410 = vunpack.c.2.s8 %v7902
    %v8411 = vunpack.c.3.s8 %v7899
    %v8412 = vunpack.c.3.s8 %v7900
    %v8413 = vunpack.c.3.s8 %v7901
    %v8414 = vunpack.c.3.s8 %v7902
    %v8415 = vcvt.s32.f32 %v7903
    %v8416 = vcvt.s32.f32 %v7904
    %v8417 = vcvt.s32.f32 %v7905
    %v8418 = vcvt.s32.f32 %v7906
    %v8419 = vcvt.s32.f32 %v7907
    %v8420 = vcvt.s32.f32 %v7908
    %v8421 = vcvt.s32.f32 %v7909
    %v8422 = vcvt.s32.f32 %v7910
    %v8423 = vcvt.s32.f32 %v7911
    %v8424 = vcvt.s32.f32 %v7912
    %v8425 = vcvt.s32.f32 %v7913
    %v8426 = vcvt.s32.f32 %v7914
    %v8427 = vcvt.s32.f32 %v7915
    %v8428 = vcvt.s32.f32 %v7916
    %v8429 = vcvt.s32.f32 %v7917
    %v8430 = vcvt.s32.f32 %v7918
    %v8431 = vcvt.s32.f32 %v7919
    %v8432 = vcvt.s32.f32 %v7920
    %v8433 = vcvt.s32.f32 %v7921
    %v8434 = vcvt.s32.f32 %v7922
    %v8435 = vcvt.s32.f32 %v7923
    %v8436 = vcvt.s32.f32 %v7924
    %v8437 = vcvt.s32.f32 %v7925
    %v8438 = vcvt.s32.f32 %v7926
    %v8439 = vcvt.s32.f32 %v7927
    %v8440 = vcvt.s32.f32 %v7928
    %v8441 = vcvt.s32.f32 %v7929
    %v8442 = vcvt.s32.f32 %v7930
    %v8443 = vcvt.s32.f32 %v7931
    %v8444 = vcvt.s32.f32 %v7932
    %v8445 = vcvt.s32.f32 %v7933
    %v8446 = vcvt.s32.f32 %v7934
    %v8447 = vcvt.s32.f32 %v7935
    %v8448 = vcvt.s32.f32 %v7936
    %v8449 = vcvt.s32.f32 %v7937
    %v8450 = vcvt.s32.f32 %v7938
    %v8451 = vcvt.s32.f32 %v7939
    %v8452 = vcvt.s32.f32 %v7940
    %v8453 = vcvt.s32.f32 %v7941
    %v8454 = vcvt.s32.f32 %v7942
    %v8455 = vcvt.s32.f32 %v7943
    %v8456 = vcvt.s32.f32 %v7944
    %v8457 = vcvt.s32.f32 %v7945
    %v8458 = vcvt.s32.f32 %v7946
    %v8459 = vcvt.s32.f32 %v7947
    %v8460 = vcvt.s32.f32 %v7948
    %v8461 = vcvt.s32.f32 %v7949
    %v8462 = vcvt.s32.f32 %v7950
    %v8463 = vcvt.s32.f32 %v7951
    %v8464 = vcvt.s32.f32 %v7952
    %v8465 = vcvt.s32.f32 %v7953
    %v8466 = vcvt.s32.f32 %v7954
    %v8467 = vcvt.s32.f32 %v7955
    %v8468 = vcvt.s32.f32 %v7956
    %v8469 = vcvt.s32.f32 %v7957
    %v8470 = vcvt.s32.f32 %v7958
    %v8471 = vcvt.s32.f32 %v7959
    %v8472 = vcvt.s32.f32 %v7960
    %v8473 = vcvt.s32.f32 %v7961
    %v8474 = vcvt.s32.f32 %v7962
    %v8475 = vcvt.s32.f32 %v7963
    %v8476 = vcvt.s32.f32 %v7964
    %v8477 = vcvt.s32.f32 %v7965
    %v8478 = vcvt.s32.f32 %v7966
    %v8479 = vcvt.s32.f32 %v7967
    %v8480 = vcvt.s32.f32 %v7968
    %v8481 = vcvt.s32.f32 %v7969
    %v8482 = vcvt.s32.f32 %v7970
    %v8483 = vcvt.s32.f32 %v7971
    %v8484 = vcvt.s32.f32 %v7972
    %v8485 = vcvt.s32.f32 %v7973
    %v8486 = vcvt.s32.f32 %v7974
    %v8487 = vcvt.s32.f32 %v7975
    %v8488 = vcvt.s32.f32 %v7976
    %v8489 = vcvt.s32.f32 %v7977
    %v8490 = vcvt.s32.f32 %v7978
    %v8491 = vcvt.s32.f32 %v7979
    %v8492 = vcvt.s32.f32 %v7980
    %v8493 = vcvt.s32.f32 %v7981
    %v8494 = vcvt.s32.f32 %v7982
    %v8495 = vcvt.s32.f32 %v7983
    %v8496 = vcvt.s32.f32 %v7984
    %v8497 = vcvt.s32.f32 %v7985
    %v8498 = vcvt.s32.f32 %v7986
    %v8499 = vcvt.s32.f32 %v7987
    %v8500 = vcvt.s32.f32 %v7988
    %v8501 = vcvt.s32.f32 %v7989
    %v8502 = vcvt.s32.f32 %v7990
    %v8503 = vcvt.s32.f32 %v7991
    %v8504 = vcvt.s32.f32 %v7992
    %v8505 = vcvt.s32.f32 %v7993
    %v8506 = vcvt.s32.f32 %v7994
    %v8507 = vcvt.s32.f32 %v7995
    %v8508 = vcvt.s32.f32 %v7996
    %v8509 = vcvt.s32.f32 %v7997
    %v8510 = vcvt.s32.f32 %v7998
    %v8511 = vcvt.s32.f32 %v7999
    %v8512 = vcvt.s32.f32 %v8000
    %v8513 = vcvt.s32.f32 %v8001
    %v8514 = vcvt.s32.f32 %v8002
    %v8515 = vcvt.s32.f32 %v8003
    %v8516 = vcvt.s32.f32 %v8004
    %v8517 = vcvt.s32.f32 %v8005
    %v8518 = vcvt.s32.f32 %v8006
    %v8519 = vcvt.s32.f32 %v8007
    %v8520 = vcvt.s32.f32 %v8008
    %v8521 = vcvt.s32.f32 %v8009
    %v8522 = vcvt.s32.f32 %v8010
    %v8523 = vcvt.s32.f32 %v8011
    %v8524 = vcvt.s32.f32 %v8012
    %v8525 = vcvt.s32.f32 %v8013
    %v8526 = vcvt.s32.f32 %v8014
    %v8527 = vcvt.s32.f32 %v8015
    %v8528 = vcvt.s32.f32 %v8016
    %v8529 = vcvt.s32.f32 %v8017
    %v8530 = vcvt.s32.f32 %v8018
    %v8531 = vcvt.s32.f32 %v8019
    %v8532 = vcvt.s32.f32 %v8020
    %v8533 = vcvt.s32.f32 %v8021
    %v8534 = vcvt.s32.f32 %v8022
    %v8535 = vcvt.s32.f32 %v8023
    %v8536 = vcvt.s32.f32 %v8024
    %v8537 = vcvt.s32.f32 %v8025
    %v8538 = vcvt.s32.f32 %v8026
    %v8539 = vcvt.s32.f32 %v8027
    %v8540 = vcvt.s32.f32 %v8028
    %v8541 = vcvt.s32.f32 %v8029
    %v8542 = vcvt.s32.f32 %v8030
    %v8543 = vcvt.s32.f32 %v8031
    %v8544 = vcvt.s32.f32 %v8032
    %v8545 = vcvt.s32.f32 %v8033
    %v8546 = vcvt.s32.f32 %v8034
    %v8547 = vcvt.s32.f32 %v8035
    %v8548 = vcvt.s32.f32 %v8036
    %v8549 = vcvt.s32.f32 %v8037
    %v8550 = vcvt.s32.f32 %v8038
    %v8551 = vcvt.s32.f32 %v8039
    %v8552 = vcvt.s32.f32 %v8040
    %v8553 = vcvt.s32.f32 %v8041
    %v8554 = vcvt.s32.f32 %v8042
    %v8555 = vcvt.s32.f32 %v8043
    %v8556 = vcvt.s32.f32 %v8044
    %v8557 = vcvt.s32.f32 %v8045
    %v8558 = vcvt.s32.f32 %v8046
    %v8559 = vcvt.s32.f32 %v8047
    %v8560 = vcvt.s32.f32 %v8048
    %v8561 = vcvt.s32.f32 %v8049
    %v8562 = vcvt.s32.f32 %v8050
    %v8563 = vcvt.s32.f32 %v8051
    %v8564 = vcvt.s32.f32 %v8052
    %v8565 = vcvt.s32.f32 %v8053
    %v8566 = vcvt.s32.f32 %v8054
    %v8567 = vcvt.s32.f32 %v8055
    %v8568 = vcvt.s32.f32 %v8056
    %v8569 = vcvt.s32.f32 %v8057
    %v8570 = vcvt.s32.f32 %v8058
    %v8571 = vcvt.s32.f32 %v8059
    %v8572 = vcvt.s32.f32 %v8060
    %v8573 = vcvt.s32.f32 %v8061
    %v8574 = vcvt.s32.f32 %v8062
    %v8575 = vcvt.s32.f32 %v8063
    %v8576 = vcvt.s32.f32 %v8064
    %v8577 = vcvt.s32.f32 %v8065
    %v8578 = vcvt.s32.f32 %v8066
    %v8579 = vcvt.s32.f32 %v8067
    %v8580 = vcvt.s32.f32 %v8068
    %v8581 = vcvt.s32.f32 %v8069
    %v8582 = vcvt.s32.f32 %v8070
    %v8583 = vcvt.s32.f32 %v8071
    %v8584 = vcvt.s32.f32 %v8072
    %v8585 = vcvt.s32.f32 %v8073
    %v8586 = vcvt.s32.f32 %v8074
    %v8587 = vcvt.s32.f32 %v8075
    %v8588 = vcvt.s32.f32 %v8076
    %v8589 = vcvt.s32.f32 %v8077
    %v8590 = vcvt.s32.f32 %v8078
    %v8591 = vcvt.s32.f32 %v8079
    %v8592 = vcvt.s32.f32 %v8080
    %v8593 = vcvt.s32.f32 %v8081
    %v8594 = vcvt.s32.f32 %v8082
    %v8595 = vcvt.s32.f32 %v8083
    %v8596 = vcvt.s32.f32 %v8084
    %v8597 = vcvt.s32.f32 %v8085
    %v8598 = vcvt.s32.f32 %v8086
    %v8599 = vcvt.s32.f32 %v8087
    %v8600 = vcvt.s32.f32 %v8088
    %v8601 = vcvt.s32.f32 %v8089
    %v8602 = vcvt.s32.f32 %v8090
    %v8603 = vcvt.s32.f32 %v8091
    %v8604 = vcvt.s32.f32 %v8092
    %v8605 = vcvt.s32.f32 %v8093
    %v8606 = vcvt.s32.f32 %v8094
    %v8607 = vcvt.s32.f32 %v8095
    %v8608 = vcvt.s32.f32 %v8096
    %v8609 = vcvt.s32.f32 %v8097
    %v8610 = vcvt.s32.f32 %v8098
    %v8611 = vcvt.s32.f32 %v8099
    %v8612 = vcvt.s32.f32 %v8100
    %v8613 = vcvt.s32.f32 %v8101
    %v8614 = vcvt.s32.f32 %v8102
    %v8615 = vcvt.s32.f32 %v8103
    %v8616 = vcvt.s32.f32 %v8104
    %v8617 = vcvt.s32.f32 %v8105
    %v8618 = vcvt.s32.f32 %v8106
    %v8619 = vcvt.s32.f32 %v8107
    %v8620 = vcvt.s32.f32 %v8108
    %v8621 = vcvt.s32.f32 %v8109
    %v8622 = vcvt.s32.f32 %v8110
    %v8623 = vcvt.s32.f32 %v8111
    %v8624 = vcvt.s32.f32 %v8112
    %v8625 = vcvt.s32.f32 %v8113
    %v8626 = vcvt.s32.f32 %v8114
    %v8627 = vcvt.s32.f32 %v8115
    %v8628 = vcvt.s32.f32 %v8116
    %v8629 = vcvt.s32.f32 %v8117
    %v8630 = vcvt.s32.f32 %v8118
    %v8631 = vcvt.s32.f32 %v8119
    %v8632 = vcvt.s32.f32 %v8120
    %v8633 = vcvt.s32.f32 %v8121
    %v8634 = vcvt.s32.f32 %v8122
    %v8635 = vcvt.s32.f32 %v8123
    %v8636 = vcvt.s32.f32 %v8124
    %v8637 = vcvt.s32.f32 %v8125
    %v8638 = vcvt.s32.f32 %v8126
    %v8639 = vcvt.s32.f32 %v8127
    %v8640 = vcvt.s32.f32 %v8128
    %v8641 = vcvt.s32.f32 %v8129
    %v8642 = vcvt.s32.f32 %v8130
    %v8643 = vcvt.s32.f32 %v8131
    %v8644 = vcvt.s32.f32 %v8132
    %v8645 = vcvt.s32.f32 %v8133
    %v8646 = vcvt.s32.f32 %v8134
    %v8647 = vcvt.s32.f32 %v8135
    %v8648 = vcvt.s32.f32 %v8136
    %v8649 = vcvt.s32.f32 %v8137
    %v8650 = vcvt.s32.f32 %v8138
    %v8651 = vcvt.s32.f32 %v8139
    %v8652 = vcvt.s32.f32 %v8140
    %v8653 = vcvt.s32.f32 %v8141
    %v8654 = vcvt.s32.f32 %v8142
    %v8655 = vcvt.s32.f32 %v8143
    %v8656 = vcvt.s32.f32 %v8144
    %v8657 = vcvt.s32.f32 %v8145
    %v8658 = vcvt.s32.f32 %v8146
    %v8659 = vcvt.s32.f32 %v8147
    %v8660 = vcvt.s32.f32 %v8148
    %v8661 = vcvt.s32.f32 %v8149
    %v8662 = vcvt.s32.f32 %v8150
    %v8663 = vcvt.s32.f32 %v8151
    %v8664 = vcvt.s32.f32 %v8152
    %v8665 = vcvt.s32.f32 %v8153
    %v8666 = vcvt.s32.f32 %v8154
    %v8667 = vcvt.s32.f32 %v8155
    %v8668 = vcvt.s32.f32 %v8156
    %v8669 = vcvt.s32.f32 %v8157
    %v8670 = vcvt.s32.f32 %v8158
    %v8671 = vcvt.s32.f32 %v8159
    %v8672 = vcvt.s32.f32 %v8160
    %v8673 = vcvt.s32.f32 %v8161
    %v8674 = vcvt.s32.f32 %v8162
    %v8675 = vcvt.s32.f32 %v8163
    %v8676 = vcvt.s32.f32 %v8164
    %v8677 = vcvt.s32.f32 %v8165
    %v8678 = vcvt.s32.f32 %v8166
    %v8679 = vcvt.s32.f32 %v8167
    %v8680 = vcvt.s32.f32 %v8168
    %v8681 = vcvt.s32.f32 %v8169
    %v8682 = vcvt.s32.f32 %v8170
    %v8683 = vcvt.s32.f32 %v8171
    %v8684 = vcvt.s32.f32 %v8172
    %v8685 = vcvt.s32.f32 %v8173
    %v8686 = vcvt.s32.f32 %v8174
    %v8687 = vcvt.s32.f32 %v8175
    %v8688 = vcvt.s32.f32 %v8176
    %v8689 = vcvt.s32.f32 %v8177
    %v8690 = vcvt.s32.f32 %v8178
    %v8691 = vcvt.s32.f32 %v8179
    %v8692 = vcvt.s32.f32 %v8180
    %v8693 = vcvt.s32.f32 %v8181
    %v8694 = vcvt.s32.f32 %v8182
    %v8695 = vcvt.s32.f32 %v8183
    %v8696 = vcvt.s32.f32 %v8184
    %v8697 = vcvt.s32.f32 %v8185
    %v8698 = vcvt.s32.f32 %v8186
    %v8699 = vcvt.s32.f32 %v8187
    %v8700 = vcvt.s32.f32 %v8188
    %v8701 = vcvt.s32.f32 %v8189
    %v8702 = vcvt.s32.f32 %v8190
    %v8703 = vcvt.s32.f32 %v8191
    %v8704 = vcvt.s32.f32 %v8192
    %v8705 = vcvt.s32.f32 %v8193
    %v8706 = vcvt.s32.f32 %v8194
    %v8707 = vcvt.s32.f32 %v8195
    %v8708 = vcvt.s32.f32 %v8196
    %v8709 = vcvt.s32.f32 %v8197
    %v8710 = vcvt.s32.f32 %v8198
    %v8711 = vcvt.s32.f32 %v8199
    %v8712 = vcvt.s32.f32 %v8200
    %v8713 = vcvt.s32.f32 %v8201
    %v8714 = vcvt.s32.f32 %v8202
    %v8715 = vcvt.s32.f32 %v8203
    %v8716 = vcvt.s32.f32 %v8204
    %v8717 = vcvt.s32.f32 %v8205
    %v8718 = vcvt.s32.f32 %v8206
    %v8719 = vcvt.s32.f32 %v8207
    %v8720 = vcvt.s32.f32 %v8208
    %v8721 = vcvt.s32.f32 %v8209
    %v8722 = vcvt.s32.f32 %v8210
    %v8723 = vcvt.s32.f32 %v8211
    %v8724 = vcvt.s32.f32 %v8212
    %v8725 = vcvt.s32.f32 %v8213
    %v8726 = vcvt.s32.f32 %v8214
    %v8727 = vcvt.s32.f32 %v8215
    %v8728 = vcvt.s32.f32 %v8216
    %v8729 = vcvt.s32.f32 %v8217
    %v8730 = vcvt.s32.f32 %v8218
    %v8731 = vcvt.s32.f32 %v8219
    %v8732 = vcvt.s32.f32 %v8220
    %v8733 = vcvt.s32.f32 %v8221
    %v8734 = vcvt.s32.f32 %v8222
    %v8735 = vcvt.s32.f32 %v8223
    %v8736 = vcvt.s32.f32 %v8224
    %v8737 = vcvt.s32.f32 %v8225
    %v8738 = vcvt.s32.f32 %v8226
    %v8739 = vcvt.s32.f32 %v8227
    %v8740 = vcvt.s32.f32 %v8228
    %v8741 = vcvt.s32.f32 %v8229
    %v8742 = vcvt.s32.f32 %v8230
    %v8743 = vcvt.s32.f32 %v8231
    %v8744 = vcvt.s32.f32 %v8232
    %v8745 = vcvt.s32.f32 %v8233
    %v8746 = vcvt.s32.f32 %v8234
    %v8747 = vcvt.s32.f32 %v8235
    %v8748 = vcvt.s32.f32 %v8236
    %v8749 = vcvt.s32.f32 %v8237
    %v8750 = vcvt.s32.f32 %v8238
    %v8751 = vcvt.s32.f32 %v8239
    %v8752 = vcvt.s32.f32 %v8240
    %v8753 = vcvt.s32.f32 %v8241
    %v8754 = vcvt.s32.f32 %v8242
    %v8755 = vcvt.s32.f32 %v8243
    %v8756 = vcvt.s32.f32 %v8244
    %v8757 = vcvt.s32.f32 %v8245
    %v8758 = vcvt.s32.f32 %v8246
    %v8759 = vcvt.s32.f32 %v8247
    %v8760 = vcvt.s32.f32 %v8248
    %v8761 = vcvt.s32.f32 %v8249
    %v8762 = vcvt.s32.f32 %v8250
    %v8763 = vcvt.s32.f32 %v8251
    %v8764 = vcvt.s32.f32 %v8252
    %v8765 = vcvt.s32.f32 %v8253
    %v8766 = vcvt.s32.f32 %v8254
    %v8767 = vcvt.s32.f32 %v8255
    %v8768 = vcvt.s32.f32 %v8256
    %v8769 = vcvt.s32.f32 %v8257
    %v8770 = vcvt.s32.f32 %v8258
    %v8771 = vcvt.s32.f32 %v8259
    %v8772 = vcvt.s32.f32 %v8260
    %v8773 = vcvt.s32.f32 %v8261
    %v8774 = vcvt.s32.f32 %v8262
    %v8775 = vcvt.s32.f32 %v8263
    %v8776 = vcvt.s32.f32 %v8264
    %v8777 = vcvt.s32.f32 %v8265
    %v8778 = vcvt.s32.f32 %v8266
    %v8779 = vcvt.s32.f32 %v8267
    %v8780 = vcvt.s32.f32 %v8268
    %v8781 = vcvt.s32.f32 %v8269
    %v8782 = vcvt.s32.f32 %v8270
    %v8783 = vcvt.s32.f32 %v8271
    %v8784 = vcvt.s32.f32 %v8272
    %v8785 = vcvt.s32.f32 %v8273
    %v8786 = vcvt.s32.f32 %v8274
    %v8787 = vcvt.s32.f32 %v8275
    %v8788 = vcvt.s32.f32 %v8276
    %v8789 = vcvt.s32.f32 %v8277
    %v8790 = vcvt.s32.f32 %v8278
    %v8791 = vcvt.s32.f32 %v8279
    %v8792 = vcvt.s32.f32 %v8280
    %v8793 = vcvt.s32.f32 %v8281
    %v8794 = vcvt.s32.f32 %v8282
    %v8795 = vcvt.s32.f32 %v8283
    %v8796 = vcvt.s32.f32 %v8284
    %v8797 = vcvt.s32.f32 %v8285
    %v8798 = vcvt.s32.f32 %v8286
    %v8799 = vcvt.s32.f32 %v8287
    %v8800 = vcvt.s32.f32 %v8288
    %v8801 = vcvt.s32.f32 %v8289
    %v8802 = vcvt.s32.f32 %v8290
    %v8803 = vcvt.s32.f32 %v8291
    %v8804 = vcvt.s32.f32 %v8292
    %v8805 = vcvt.s32.f32 %v8293
    %v8806 = vcvt.s32.f32 %v8294
    %v8807 = vcvt.s32.f32 %v8295
    %v8808 = vcvt.s32.f32 %v8296
    %v8809 = vcvt.s32.f32 %v8297
    %v8810 = vcvt.s32.f32 %v8298
    %v8811 = vcvt.s32.f32 %v8299
    %v8812 = vcvt.s32.f32 %v8300
    %v8813 = vcvt.s32.f32 %v8301
    %v8814 = vcvt.s32.f32 %v8302
    %v8815 = vcvt.s32.f32 %v8303
    %v8816 = vcvt.s32.f32 %v8304
    %v8817 = vcvt.s32.f32 %v8305
    %v8818 = vcvt.s32.f32 %v8306
    %v8819 = vcvt.s32.f32 %v8307
    %v8820 = vcvt.s32.f32 %v8308
    %v8821 = vcvt.s32.f32 %v8309
    %v8822 = vcvt.s32.f32 %v8310
    %v8823 = vcvt.s32.f32 %v8311
    %v8824 = vcvt.s32.f32 %v8312
    %v8825 = vcvt.s32.f32 %v8313
    %v8826 = vcvt.s32.f32 %v8314
    %v8827 = vcvt.s32.f32 %v8315
    %v8828 = vcvt.s32.f32 %v8316
    %v8829 = vcvt.s32.f32 %v8317
    %v8830 = vcvt.s32.f32 %v8318
    %v8831 = vcvt.s32.f32 %v8319
    %v8832 = vcvt.s32.f32 %v8320
    %v8833 = vcvt.s32.f32 %v8321
    %v8834 = vcvt.s32.f32 %v8322
    %v8835 = vcvt.s32.f32 %v8323
    %v8836 = vcvt.s32.f32 %v8324
    %v8837 = vcvt.s32.f32 %v8325
    %v8838 = vcvt.s32.f32 %v8326
    %v8839 = vcvt.s32.f32 %v8327
    %v8840 = vcvt.s32.f32 %v8328
    %v8841 = vcvt.s32.f32 %v8329
    %v8842 = vcvt.s32.f32 %v8330
    %v8843 = vcvt.s32.f32 %v8331
    %v8844 = vcvt.s32.f32 %v8332
    %v8845 = vcvt.s32.f32 %v8333
    %v8846 = vcvt.s32.f32 %v8334
    %v8847 = vcvt.s32.f32 %v8335
    %v8848 = vcvt.s32.f32 %v8336
    %v8849 = vcvt.s32.f32 %v8337
    %v8850 = vcvt.s32.f32 %v8338
    %v8851 = vcvt.s32.f32 %v8339
    %v8852 = vcvt.s32.f32 %v8340
    %v8853 = vcvt.s32.f32 %v8341
    %v8854 = vcvt.s32.f32 %v8342
    %v8855 = vcvt.s32.f32 %v8343
    %v8856 = vcvt.s32.f32 %v8344
    %v8857 = vcvt.s32.f32 %v8345
    %v8858 = vcvt.s32.f32 %v8346
    %v8859 = vcvt.s32.f32 %v8347
    %v8860 = vcvt.s32.f32 %v8348
    %v8861 = vcvt.s32.f32 %v8349
    %v8862 = vcvt.s32.f32 %v8350
    %v8863 = vcvt.s32.f32 %v8351
    %v8864 = vcvt.s32.f32 %v8352
    %v8865 = vcvt.s32.f32 %v8353
    %v8866 = vcvt.s32.f32 %v8354
    %v8867 = vcvt.s32.f32 %v8355
    %v8868 = vcvt.s32.f32 %v8356
    %v8869 = vcvt.s32.f32 %v8357
    %v8870 = vcvt.s32.f32 %v8358
    %v8871 = vcvt.s32.f32 %v8359
    %v8872 = vcvt.s32.f32 %v8360
    %v8873 = vcvt.s32.f32 %v8361
    %v8874 = vcvt.s32.f32 %v8362
    %v8875 = vcvt.s32.f32 %v8363
    %v8876 = vcvt.s32.f32 %v8364
    %v8877 = vcvt.s32.f32 %v8365
    %v8878 = vcvt.s32.f32 %v8366
    %v8879 = vcvt.s32.f32 %v8367
    %v8880 = vcvt.s32.f32 %v8368
    %v8881 = vcvt.s32.f32 %v8369
    %v8882 = vcvt.s32.f32 %v8370
    %v8883 = vcvt.s32.f32 %v8371
    %v8884 = vcvt.s32.f32 %v8372
    %v8885 = vcvt.s32.f32 %v8373
    %v8886 = vcvt.s32.f32 %v8374
    %v8887 = vcvt.s32.f32 %v8375
    %v8888 = vcvt.s32.f32 %v8376
    %v8889 = vcvt.s32.f32 %v8377
    %v8890 = vcvt.s32.f32 %v8378
    %v8891 = vcvt.s32.f32 %v8379
    %v8892 = vcvt.s32.f32 %v8380
    %v8893 = vcvt.s32.f32 %v8381
    %v8894 = vcvt.s32.f32 %v8382
    %v8895 = vcvt.s32.f32 %v8383
    %v8896 = vcvt.s32.f32 %v8384
    %v8897 = vcvt.s32.f32 %v8385
    %v8898 = vcvt.s32.f32 %v8386
    %v8899 = vcvt.s32.f32 %v8387
    %v8900 = vcvt.s32.f32 %v8388
    %v8901 = vcvt.s32.f32 %v8389
    %v8902 = vcvt.s32.f32 %v8390
    %v8903 = vcvt.s32.f32 %v8391
    %v8904 = vcvt.s32.f32 %v8392
    %v8905 = vcvt.s32.f32 %v8393
    %v8906 = vcvt.s32.f32 %v8394
    %v8907 = vcvt.s32.f32 %v8395
    %v8908 = vcvt.s32.f32 %v8396
    %v8909 = vcvt.s32.f32 %v8397
    %v8910 = vcvt.s32.f32 %v8398
    %v8911 = vcvt.s32.f32 %v8399
    %v8912 = vcvt.s32.f32 %v8400
    %v8913 = vcvt.s32.f32 %v8401
    %v8914 = vcvt.s32.f32 %v8402
    %v8915 = vcvt.s32.f32 %v8403
    %v8916 = vcvt.s32.f32 %v8404
    %v8917 = vcvt.s32.f32 %v8405
    %v8918 = vcvt.s32.f32 %v8406
    %v8919 = vcvt.s32.f32 %v8407
    %v8920 = vcvt.s32.f32 %v8408
    %v8921 = vcvt.s32.f32 %v8409
    %v8922 = vcvt.s32.f32 %v8410
    %v8923 = vcvt.s32.f32 %v8411
    %v8924 = vcvt.s32.f32 %v8412
    %v8925 = vcvt.s32.f32 %v8413
    %v8926 = vcvt.s32.f32 %v8414
    %v8927 = vpack.c.bf16 %v8419, %v8415
    %v8928 = vpack.c.bf16 %v8420, %v8416
    %v8929 = vpack.c.bf16 %v8421, %v8417
    %v8930 = vpack.c.bf16 %v8422, %v8418
    %v8931 = vpack.c.bf16 %v8427, %v8423
    %v8932 = vpack.c.bf16 %v8428, %v8424
    %v8933 = vpack.c.bf16 %v8429, %v8425
    %v8934 = vpack.c.bf16 %v8430, %v8426
    %v8935 = vpack.c.bf16 %v8435, %v8431
    %v8936 = vpack.c.bf16 %v8436, %v8432
    %v8937 = vpack.c.bf16 %v8437, %v8433
    %v8938 = vpack.c.bf16 %v8438, %v8434
    %v8939 = vpack.c.bf16 %v8443, %v8439
    %v8940 = vpack.c.bf16 %v8444, %v8440
    %v8941 = vpack.c.bf16 %v8445, %v8441
    %v8942 = vpack.c.bf16 %v8446, %v8442
    %v8943 = vpack.c.bf16 %v8451, %v8447
    %v8944 = vpack.c.bf16 %v8452, %v8448
    %v8945 = vpack.c.bf16 %v8453, %v8449
    %v8946 = vpack.c.bf16 %v8454, %v8450
    %v8947 = vpack.c.bf16 %v8459, %v8455
    %v8948 = vpack.c.bf16 %v8460, %v8456
    %v8949 = vpack.c.bf16 %v8461, %v8457
    %v8950 = vpack.c.bf16 %v8462, %v8458
    %v8951 = vpack.c.bf16 %v8467, %v8463
    %v8952 = vpack.c.bf16 %v8468, %v8464
    %v8953 = vpack.c.bf16 %v8469, %v8465
    %v8954 = vpack.c.bf16 %v8470, %v8466
    %v8955 = vpack.c.bf16 %v8475, %v8471
    %v8956 = vpack.c.bf16 %v8476, %v8472
    %v8957 = vpack.c.bf16 %v8477, %v8473
    %v8958 = vpack.c.bf16 %v8478, %v8474
    %v8959 = vpack.c.bf16 %v8483, %v8479
    %v8960 = vpack.c.bf16 %v8484, %v8480
    %v8961 = vpack.c.bf16 %v8485, %v8481
    %v8962 = vpack.c.bf16 %v8486, %v8482
    %v8963 = vpack.c.bf16 %v8491, %v8487
    %v8964 = vpack.c.bf16 %v8492, %v8488
    %v8965 = vpack.c.bf16 %v8493, %v8489
    %v8966 = vpack.c.bf16 %v8494, %v8490
    %v8967 = vpack.c.bf16 %v8499, %v8495
    %v8968 = vpack.c.bf16 %v8500, %v8496
    %v8969 = vpack.c.bf16 %v8501, %v8497
    %v8970 = vpack.c.bf16 %v8502, %v8498
    %v8971 = vpack.c.bf16 %v8507, %v8503
    %v8972 = vpack.c.bf16 %v8508, %v8504
    %v8973 = vpack.c.bf16 %v8509, %v8505
    %v8974 = vpack.c.bf16 %v8510, %v8506
    %v8975 = vpack.c.bf16 %v8515, %v8511
    %v8976 = vpack.c.bf16 %v8516, %v8512
    %v8977 = vpack.c.bf16 %v8517, %v8513
    %v8978 = vpack.c.bf16 %v8518, %v8514
    %v8979 = vpack.c.bf16 %v8523, %v8519
    %v8980 = vpack.c.bf16 %v8524, %v8520
    %v8981 = vpack.c.bf16 %v8525, %v8521
    %v8982 = vpack.c.bf16 %v8526, %v8522
    %v8983 = vpack.c.bf16 %v8531, %v8527
    %v8984 = vpack.c.bf16 %v8532, %v8528
    %v8985 = vpack.c.bf16 %v8533, %v8529
    %v8986 = vpack.c.bf16 %v8534, %v8530
    %v8987 = vpack.c.bf16 %v8539, %v8535
    %v8988 = vpack.c.bf16 %v8540, %v8536
    %v8989 = vpack.c.bf16 %v8541, %v8537
    %v8990 = vpack.c.bf16 %v8542, %v8538
    %v8991 = vpack.c.bf16 %v8547, %v8543
    %v8992 = vpack.c.bf16 %v8548, %v8544
    %v8993 = vpack.c.bf16 %v8549, %v8545
    %v8994 = vpack.c.bf16 %v8550, %v8546
    %v8995 = vpack.c.bf16 %v8555, %v8551
    %v8996 = vpack.c.bf16 %v8556, %v8552
    %v8997 = vpack.c.bf16 %v8557, %v8553
    %v8998 = vpack.c.bf16 %v8558, %v8554
    %v8999 = vpack.c.bf16 %v8563, %v8559
    %v9000 = vpack.c.bf16 %v8564, %v8560
    %v9001 = vpack.c.bf16 %v8565, %v8561
    %v9002 = vpack.c.bf16 %v8566, %v8562
    %v9003 = vpack.c.bf16 %v8571, %v8567
    %v9004 = vpack.c.bf16 %v8572, %v8568
    %v9005 = vpack.c.bf16 %v8573, %v8569
    %v9006 = vpack.c.bf16 %v8574, %v8570
    %v9007 = vpack.c.bf16 %v8579, %v8575
    %v9008 = vpack.c.bf16 %v8580, %v8576
    %v9009 = vpack.c.bf16 %v8581, %v8577
    %v9010 = vpack.c.bf16 %v8582, %v8578
    %v9011 = vpack.c.bf16 %v8587, %v8583
    %v9012 = vpack.c.bf16 %v8588, %v8584
    %v9013 = vpack.c.bf16 %v8589, %v8585
    %v9014 = vpack.c.bf16 %v8590, %v8586
    %v9015 = vpack.c.bf16 %v8595, %v8591
    %v9016 = vpack.c.bf16 %v8596, %v8592
    %v9017 = vpack.c.bf16 %v8597, %v8593
    %v9018 = vpack.c.bf16 %v8598, %v8594
    %v9019 = vpack.c.bf16 %v8603, %v8599
    %v9020 = vpack.c.bf16 %v8604, %v8600
    %v9021 = vpack.c.bf16 %v8605, %v8601
    %v9022 = vpack.c.bf16 %v8606, %v8602
    %v9023 = vpack.c.bf16 %v8611, %v8607
    %v9024 = vpack.c.bf16 %v8612, %v8608
    %v9025 = vpack.c.bf16 %v8613, %v8609
    %v9026 = vpack.c.bf16 %v8614, %v8610
    %v9027 = vpack.c.bf16 %v8619, %v8615
    %v9028 = vpack.c.bf16 %v8620, %v8616
    %v9029 = vpack.c.bf16 %v8621, %v8617
    %v9030 = vpack.c.bf16 %v8622, %v8618
    %v9031 = vpack.c.bf16 %v8627, %v8623
    %v9032 = vpack.c.bf16 %v8628, %v8624
    %v9033 = vpack.c.bf16 %v8629, %v8625
    %v9034 = vpack.c.bf16 %v8630, %v8626
    %v9035 = vpack.c.bf16 %v8635, %v8631
    %v9036 = vpack.c.bf16 %v8636, %v8632
    %v9037 = vpack.c.bf16 %v8637, %v8633
    %v9038 = vpack.c.bf16 %v8638, %v8634
    %v9039 = vpack.c.bf16 %v8643, %v8639
    %v9040 = vpack.c.bf16 %v8644, %v8640
    %v9041 = vpack.c.bf16 %v8645, %v8641
    %v9042 = vpack.c.bf16 %v8646, %v8642
    %v9043 = vpack.c.bf16 %v8651, %v8647
    %v9044 = vpack.c.bf16 %v8652, %v8648
    %v9045 = vpack.c.bf16 %v8653, %v8649
    %v9046 = vpack.c.bf16 %v8654, %v8650
    %v9047 = vpack.c.bf16 %v8659, %v8655
    %v9048 = vpack.c.bf16 %v8660, %v8656
    %v9049 = vpack.c.bf16 %v8661, %v8657
    %v9050 = vpack.c.bf16 %v8662, %v8658
    %v9051 = vpack.c.bf16 %v8667, %v8663
    %v9052 = vpack.c.bf16 %v8668, %v8664
    %v9053 = vpack.c.bf16 %v8669, %v8665
    %v9054 = vpack.c.bf16 %v8670, %v8666
    %v9055 = vpack.c.bf16 %v8675, %v8671
    %v9056 = vpack.c.bf16 %v8676, %v8672
    %v9057 = vpack.c.bf16 %v8677, %v8673
    %v9058 = vpack.c.bf16 %v8678, %v8674
    %v9059 = vpack.c.bf16 %v8683, %v8679
    %v9060 = vpack.c.bf16 %v8684, %v8680
    %v9061 = vpack.c.bf16 %v8685, %v8681
    %v9062 = vpack.c.bf16 %v8686, %v8682
    %v9063 = vpack.c.bf16 %v8691, %v8687
    %v9064 = vpack.c.bf16 %v8692, %v8688
    %v9065 = vpack.c.bf16 %v8693, %v8689
    %v9066 = vpack.c.bf16 %v8694, %v8690
    %v9067 = vpack.c.bf16 %v8699, %v8695
    %v9068 = vpack.c.bf16 %v8700, %v8696
    %v9069 = vpack.c.bf16 %v8701, %v8697
    %v9070 = vpack.c.bf16 %v8702, %v8698
    %v9071 = vpack.c.bf16 %v8707, %v8703
    %v9072 = vpack.c.bf16 %v8708, %v8704
    %v9073 = vpack.c.bf16 %v8709, %v8705
    %v9074 = vpack.c.bf16 %v8710, %v8706
    %v9075 = vpack.c.bf16 %v8715, %v8711
    %v9076 = vpack.c.bf16 %v8716, %v8712
    %v9077 = vpack.c.bf16 %v8717, %v8713
    %v9078 = vpack.c.bf16 %v8718, %v8714
    %v9079 = vpack.c.bf16 %v8723, %v8719
    %v9080 = vpack.c.bf16 %v8724, %v8720
    %v9081 = vpack.c.bf16 %v8725, %v8721
    %v9082 = vpack.c.bf16 %v8726, %v8722
    %v9083 = vpack.c.bf16 %v8731, %v8727
    %v9084 = vpack.c.bf16 %v8732, %v8728
    %v9085 = vpack.c.bf16 %v8733, %v8729
    %v9086 = vpack.c.bf16 %v8734, %v8730
    %v9087 = vpack.c.bf16 %v8739, %v8735
    %v9088 = vpack.c.bf16 %v8740, %v8736
    %v9089 = vpack.c.bf16 %v8741, %v8737
    %v9090 = vpack.c.bf16 %v8742, %v8738
    %v9091 = vpack.c.bf16 %v8747, %v8743
    %v9092 = vpack.c.bf16 %v8748, %v8744
    %v9093 = vpack.c.bf16 %v8749, %v8745
    %v9094 = vpack.c.bf16 %v8750, %v8746
    %v9095 = vpack.c.bf16 %v8755, %v8751
    %v9096 = vpack.c.bf16 %v8756, %v8752
    %v9097 = vpack.c.bf16 %v8757, %v8753
    %v9098 = vpack.c.bf16 %v8758, %v8754
    %v9099 = vpack.c.bf16 %v8763, %v8759
    %v9100 = vpack.c.bf16 %v8764, %v8760
    %v9101 = vpack.c.bf16 %v8765, %v8761
    %v9102 = vpack.c.bf16 %v8766, %v8762
    %v9103 = vpack.c.bf16 %v8771, %v8767
    %v9104 = vpack.c.bf16 %v8772, %v8768
    %v9105 = vpack.c.bf16 %v8773, %v8769
    %v9106 = vpack.c.bf16 %v8774, %v8770
    %v9107 = vpack.c.bf16 %v8779, %v8775
    %v9108 = vpack.c.bf16 %v8780, %v8776
    %v9109 = vpack.c.bf16 %v8781, %v8777
    %v9110 = vpack.c.bf16 %v8782, %v8778
    %v9111 = vpack.c.bf16 %v8787, %v8783
    %v9112 = vpack.c.bf16 %v8788, %v8784
    %v9113 = vpack.c.bf16 %v8789, %v8785
    %v9114 = vpack.c.bf16 %v8790, %v8786
    %v9115 = vpack.c.bf16 %v8795, %v8791
    %v9116 = vpack.c.bf16 %v8796, %v8792
    %v9117 = vpack.c.bf16 %v8797, %v8793
    %v9118 = vpack.c.bf16 %v8798, %v8794
    %v9119 = vpack.c.bf16 %v8803, %v8799
    %v9120 = vpack.c.bf16 %v8804, %v8800
    %v9121 = vpack.c.bf16 %v8805, %v8801
    %v9122 = vpack.c.bf16 %v8806, %v8802
    %v9123 = vpack.c.bf16 %v8811, %v8807
    %v9124 = vpack.c.bf16 %v8812, %v8808
    %v9125 = vpack.c.bf16 %v8813, %v8809
    %v9126 = vpack.c.bf16 %v8814, %v8810
    %v9127 = vpack.c.bf16 %v8819, %v8815
    %v9128 = vpack.c.bf16 %v8820, %v8816
    %v9129 = vpack.c.bf16 %v8821, %v8817
    %v9130 = vpack.c.bf16 %v8822, %v8818
    %v9131 = vpack.c.bf16 %v8827, %v8823
    %v9132 = vpack.c.bf16 %v8828, %v8824
    %v9133 = vpack.c.bf16 %v8829, %v8825
    %v9134 = vpack.c.bf16 %v8830, %v8826
    %v9135 = vpack.c.bf16 %v8835, %v8831
    %v9136 = vpack.c.bf16 %v8836, %v8832
    %v9137 = vpack.c.bf16 %v8837, %v8833
    %v9138 = vpack.c.bf16 %v8838, %v8834
    %v9139 = vpack.c.bf16 %v8843, %v8839
    %v9140 = vpack.c.bf16 %v8844, %v8840
    %v9141 = vpack.c.bf16 %v8845, %v8841
    %v9142 = vpack.c.bf16 %v8846, %v8842
    %v9143 = vpack.c.bf16 %v8851, %v8847
    %v9144 = vpack.c.bf16 %v8852, %v8848
    %v9145 = vpack.c.bf16 %v8853, %v8849
    %v9146 = vpack.c.bf16 %v8854, %v8850
    %v9147 = vpack.c.bf16 %v8859, %v8855
    %v9148 = vpack.c.bf16 %v8860, %v8856
    %v9149 = vpack.c.bf16 %v8861, %v8857
    %v9150 = vpack.c.bf16 %v8862, %v8858
    %v9151 = vpack.c.bf16 %v8867, %v8863
    %v9152 = vpack.c.bf16 %v8868, %v8864
    %v9153 = vpack.c.bf16 %v8869, %v8865
    %v9154 = vpack.c.bf16 %v8870, %v8866
    %v9155 = vpack.c.bf16 %v8875, %v8871
    %v9156 = vpack.c.bf16 %v8876, %v8872
    %v9157 = vpack.c.bf16 %v8877, %v8873
    %v9158 = vpack.c.bf16 %v8878, %v8874
    %v9159 = vpack.c.bf16 %v8883, %v8879
    %v9160 = vpack.c.bf16 %v8884, %v8880
    %v9161 = vpack.c.bf16 %v8885, %v8881
    %v9162 = vpack.c.bf16 %v8886, %v8882
    %v9163 = vpack.c.bf16 %v8891, %v8887
    %v9164 = vpack.c.bf16 %v8892, %v8888
    %v9165 = vpack.c.bf16 %v8893, %v8889
    %v9166 = vpack.c.bf16 %v8894, %v8890
    %v9167 = vpack.c.bf16 %v8899, %v8895
    %v9168 = vpack.c.bf16 %v8900, %v8896
    %v9169 = vpack.c.bf16 %v8901, %v8897
    %v9170 = vpack.c.bf16 %v8902, %v8898
    %v9171 = vpack.c.bf16 %v8907, %v8903
    %v9172 = vpack.c.bf16 %v8908, %v8904
    %v9173 = vpack.c.bf16 %v8909, %v8905
    %v9174 = vpack.c.bf16 %v8910, %v8906
    %v9175 = vpack.c.bf16 %v8915, %v8911
    %v9176 = vpack.c.bf16 %v8916, %v8912
    %v9177 = vpack.c.bf16 %v8917, %v8913
    %v9178 = vpack.c.bf16 %v8918, %v8914
    %v9179 = vpack.c.bf16 %v8923, %v8919
    %v9180 = vpack.c.bf16 %v8924, %v8920
    %v9181 = vpack.c.bf16 %v8925, %v8921
    %v9182 = vpack.c.bf16 %v8926, %v8922
    %9183 = vmatpush.bf16.msra.mxu0 %v8955
    %9184 = vmatpush.bf16.msra.mxu0 %v8951
    %9185 = vmatpush.bf16.msra.mxu0 %v8947
    %9186 = vmatpush.bf16.msra.mxu0 %v8943
    %9187 = vmatpush.bf16.msra.mxu0 %v8939
    %9188 = vmatpush.bf16.msra.mxu0 %v8935
    %9189 = vmatpush.bf16.msra.mxu0 %v8931
    %9190 = vmatpush.bf16.msra.mxu0 %v8927
    %9191 = vmatmul.bf16.gmra.mxu0 %v7767
    %v9192 = vpop.f32.mrf.mxu0
    %v9193 = vadd.f32 0.0, %v9192
    %v9194 = vpop.f32.mrf.mxu0
    %v9195 = vadd.f32 0.0, %v9194
    %9196 = vdwg.mxu0
    %9197 = vmatpush.bf16.msra.mxu0 %v8987
    %9198 = vmatpush.bf16.msra.mxu0 %v8983
    %9199 = vmatpush.bf16.msra.mxu0 %v8979
    %9200 = vmatpush.bf16.msra.mxu0 %v8975
    %9201 = vmatpush.bf16.msra.mxu0 %v8971
    %9202 = vmatpush.bf16.msra.mxu0 %v8967
    %9203 = vmatpush.bf16.msra.mxu0 %v8963
    %9204 = vmatpush.bf16.msra.mxu0 %v8959
    %9205 = vmatmul.bf16.gmra.mxu0 %v7768
    %v9206 = vpop.f32.mrf.mxu0
    %v9207 = vadd.f32 %v9193, %v9206
    %v9208 = vpop.f32.mrf.mxu0
    %v9209 = vadd.f32 %v9195, %v9208
    %9210 = vdwg.mxu0
    %9211 = vmatpush.bf16.msra.mxu0 %v9019
    %9212 = vmatpush.bf16.msra.mxu0 %v9015
    %9213 = vmatpush.bf16.msra.mxu0 %v9011
    %9214 = vmatpush.bf16.msra.mxu0 %v9007
    %9215 = vmatpush.bf16.msra.mxu0 %v9003
    %9216 = vmatpush.bf16.msra.mxu0 %v8999
    %9217 = vmatpush.bf16.msra.mxu0 %v8995
    %9218 = vmatpush.bf16.msra.mxu0 %v8991
    %9219 = vmatmul.bf16.gmra.mxu0 %v7769
    %v9220 = vpop.f32.mrf.mxu0
    %v9221 = vadd.f32 %v9207, %v9220
    %v9222 = vpop.f32.mrf.mxu0
    %v9223 = vadd.f32 %v9209, %v9222
    %9224 = vdwg.mxu0
    %9225 = vmatpush.bf16.msra.mxu0 %v9051
    %9226 = vmatpush.bf16.msra.mxu0 %v9047
    %9227 = vmatpush.bf16.msra.mxu0 %v9043
    %9228 = vmatpush.bf16.msra.mxu0 %v9039
    %9229 = vmatpush.bf16.msra.mxu0 %v9035
    %9230 = vmatpush.bf16.msra.mxu0 %v9031
    %9231 = vmatpush.bf16.msra.mxu0 %v9027
    %9232 = vmatpush.bf16.msra.mxu0 %v9023
    %9233 = vmatmul.bf16.gmra.mxu0 %v7770
    %v9234 = vpop.f32.mrf.mxu0
    %v9235 = vadd.f32 %v9221, %v9234
    %v9236 = vpop.f32.mrf.mxu0
    %v9237 = vadd.f32 %v9223, %v9236
    %9238 = vdwg.mxu0
    %9239 = vmatpush.bf16.msra.mxu0 %v9083
    %9240 = vmatpush.bf16.msra.mxu0 %v9079
    %9241 = vmatpush.bf16.msra.mxu0 %v9075
    %9242 = vmatpush.bf16.msra.mxu0 %v9071
    %9243 = vmatpush.bf16.msra.mxu0 %v9067
    %9244 = vmatpush.bf16.msra.mxu0 %v9063
    %9245 = vmatpush.bf16.msra.mxu0 %v9059
    %9246 = vmatpush.bf16.msra.mxu0 %v9055
    %9247 = vmatmul.bf16.gmra.mxu0 %v7771
    %v9248 = vpop.f32.mrf.mxu0
    %v9249 = vadd.f32 %v9235, %v9248
    %v9250 = vpop.f32.mrf.mxu0
    %v9251 = vadd.f32 %v9237, %v9250
    %9252 = vdwg.mxu0
    %9253 = vmatpush.bf16.msra.mxu0 %v9115
    %9254 = vmatpush.bf16.msra.mxu0 %v9111
    %9255 = vmatpush.bf16.msra.mxu0 %v9107
    %9256 = vmatpush.bf16.msra.mxu0 %v9103
    %9257 = vmatpush.bf16.msra.mxu0 %v9099
    %9258 = vmatpush.bf16.msra.mxu0 %v9095
    %9259 = vmatpush.bf16.msra.mxu0 %v9091
    %9260 = vmatpush.bf16.msra.mxu0 %v9087
    %9261 = vmatmul.bf16.gmra.mxu0 %v7772
    %v9262 = vpop.f32.mrf.mxu0
    %v9263 = vadd.f32 %v9249, %v9262
    %v9264 = vpop.f32.mrf.mxu0
    %v9265 = vadd.f32 %v9251, %v9264
    %9266 = vdwg.mxu0
    %9267 = vmatpush.bf16.msra.mxu0 %v9147
    %9268 = vmatpush.bf16.msra.mxu0 %v9143
    %9269 = vmatpush.bf16.msra.mxu0 %v9139
    %9270 = vmatpush.bf16.msra.mxu0 %v9135
    %9271 = vmatpush.bf16.msra.mxu0 %v9131
    %9272 = vmatpush.bf16.msra.mxu0 %v9127
    %9273 = vmatpush.bf16.msra.mxu0 %v9123
    %9274 = vmatpush.bf16.msra.mxu0 %v9119
    %9275 = vmatmul.bf16.gmra.mxu0 %v7773
    %v9276 = vpop.f32.mrf.mxu0
    %v9277 = vadd.f32 %v9263, %v9276
    %v9278 = vpop.f32.mrf.mxu0
    %v9279 = vadd.f32 %v9265, %v9278
    %9280 = vdwg.mxu0
    %9281 = vmatpush.bf16.msra.mxu0 %v9179
    %9282 = vmatpush.bf16.msra.mxu0 %v9175
    %9283 = vmatpush.bf16.msra.mxu0 %v9171
    %9284 = vmatpush.bf16.msra.mxu0 %v9167
    %9285 = vmatpush.bf16.msra.mxu0 %v9163
    %9286 = vmatpush.bf16.msra.mxu0 %v9159
    %9287 = vmatpush.bf16.msra.mxu0 %v9155
    %9288 = vmatpush.bf16.msra.mxu0 %v9151
    %9289 = vmatmul.bf16.gmra.mxu0 %v7774
    %v9290 = vpop.f32.mrf.mxu0
    %v9291 = vadd.f32 %v9277, %v9290
    %v9292 = vpop.f32.mrf.mxu0
    %v9293 = vadd.f32 %v9279, %v9292
    %9294 = vdwg.mxu0
    %9295 = vmatpush.bf16.msra.mxu0 %v8956
    %9296 = vmatpush.bf16.msra.mxu0 %v8952
    %9297 = vmatpush.bf16.msra.mxu0 %v8948
    %9298 = vmatpush.bf16.msra.mxu0 %v8944
    %9299 = vmatpush.bf16.msra.mxu0 %v8940
    %9300 = vmatpush.bf16.msra.mxu0 %v8936
    %9301 = vmatpush.bf16.msra.mxu0 %v8932
    %9302 = vmatpush.bf16.msra.mxu0 %v8928
    %9303 = vmatmul.bf16.gmra.mxu0 %v7767
    %v9304 = vpop.f32.mrf.mxu0
    %v9305 = vadd.f32 0.0, %v9304
    %v9306 = vpop.f32.mrf.mxu0
    %v9307 = vadd.f32 0.0, %v9306
    %9308 = vdwg.mxu0
    %9309 = vmatpush.bf16.msra.mxu0 %v8988
    %9310 = vmatpush.bf16.msra.mxu0 %v8984
    %9311 = vmatpush.bf16.msra.mxu0 %v8980
    %9312 = vmatpush.bf16.msra.mxu0 %v8976
    %9313 = vmatpush.bf16.msra.mxu0 %v8972
    %9314 = vmatpush.bf16.msra.mxu0 %v8968
    %9315 = vmatpush.bf16.msra.mxu0 %v8964
    %9316 = vmatpush.bf16.msra.mxu0 %v8960
    %9317 = vmatmul.bf16.gmra.mxu0 %v7768
    %v9318 = vpop.f32.mrf.mxu0
    %v9319 = vadd.f32 %v9305, %v9318
    %v9320 = vpop.f32.mrf.mxu0
    %v9321 = vadd.f32 %v9307, %v9320
    %9322 = vdwg.mxu0
    %9323 = vmatpush.bf16.msra.mxu0 %v9020
    %9324 = vmatpush.bf16.msra.mxu0 %v9016
    %9325 = vmatpush.bf16.msra.mxu0 %v9012
    %9326 = vmatpush.bf16.msra.mxu0 %v9008
    %9327 = vmatpush.bf16.msra.mxu0 %v9004
    %9328 = vmatpush.bf16.msra.mxu0 %v9000
    %9329 = vmatpush.bf16.msra.mxu0 %v8996
    %9330 = vmatpush.bf16.msra.mxu0 %v8992
    %9331 = vmatmul.bf16.gmra.mxu0 %v7769
    %v9332 = vpop.f32.mrf.mxu0
    %v9333 = vadd.f32 %v9319, %v9332
    %v9334 = vpop.f32.mrf.mxu0
    %v9335 = vadd.f32 %v9321, %v9334
    %9336 = vdwg.mxu0
    %9337 = vmatpush.bf16.msra.mxu0 %v9052
    %9338 = vmatpush.bf16.msra.mxu0 %v9048
    %9339 = vmatpush.bf16.msra.mxu0 %v9044
    %9340 = vmatpush.bf16.msra.mxu0 %v9040
    %9341 = vmatpush.bf16.msra.mxu0 %v9036
    %9342 = vmatpush.bf16.msra.mxu0 %v9032
    %9343 = vmatpush.bf16.msra.mxu0 %v9028
    %9344 = vmatpush.bf16.msra.mxu0 %v9024
    %9345 = vmatmul.bf16.gmra.mxu0 %v7770
    %v9346 = vpop.f32.mrf.mxu0
    %v9347 = vadd.f32 %v9333, %v9346
    %v9348 = vpop.f32.mrf.mxu0
    %v9349 = vadd.f32 %v9335, %v9348
    %9350 = vdwg.mxu0
    %9351 = vmatpush.bf16.msra.mxu0 %v9084
    %9352 = vmatpush.bf16.msra.mxu0 %v9080
    %9353 = vmatpush.bf16.msra.mxu0 %v9076
    %9354 = vmatpush.bf16.msra.mxu0 %v9072
    %9355 = vmatpush.bf16.msra.mxu0 %v9068
    %9356 = vmatpush.bf16.msra.mxu0 %v9064
    %9357 = vmatpush.bf16.msra.mxu0 %v9060
    %9358 = vmatpush.bf16.msra.mxu0 %v9056
    %9359 = vmatmul.bf16.gmra.mxu0 %v7771
    %v9360 = vpop.f32.mrf.mxu0
    %v9361 = vadd.f32 %v9347, %v9360
    %v9362 = vpop.f32.mrf.mxu0
    %v9363 = vadd.f32 %v9349, %v9362
    %9364 = vdwg.mxu0
    %9365 = vmatpush.bf16.msra.mxu0 %v9116
    %9366 = vmatpush.bf16.msra.mxu0 %v9112
    %9367 = vmatpush.bf16.msra.mxu0 %v9108
    %9368 = vmatpush.bf16.msra.mxu0 %v9104
    %9369 = vmatpush.bf16.msra.mxu0 %v9100
    %9370 = vmatpush.bf16.msra.mxu0 %v9096
    %9371 = vmatpush.bf16.msra.mxu0 %v9092
    %9372 = vmatpush.bf16.msra.mxu0 %v9088
    %9373 = vmatmul.bf16.gmra.mxu0 %v7772
    %v9374 = vpop.f32.mrf.mxu0
    %v9375 = vadd.f32 %v9361, %v9374
    %v9376 = vpop.f32.mrf.mxu0
    %v9377 = vadd.f32 %v9363, %v9376
    %9378 = vdwg.mxu0
    %9379 = vmatpush.bf16.msra.mxu0 %v9148
    %9380 = vmatpush.bf16.msra.mxu0 %v9144
    %9381 = vmatpush.bf16.msra.mxu0 %v9140
    %9382 = vmatpush.bf16.msra.mxu0 %v9136
    %9383 = vmatpush.bf16.msra.mxu0 %v9132
    %9384 = vmatpush.bf16.msra.mxu0 %v9128
    %9385 = vmatpush.bf16.msra.mxu0 %v9124
    %9386 = vmatpush.bf16.msra.mxu0 %v9120
    %9387 = vmatmul.bf16.gmra.mxu0 %v7773
    %v9388 = vpop.f32.mrf.mxu0
    %v9389 = vadd.f32 %v9375, %v9388
    %v9390 = vpop.f32.mrf.mxu0
    %v9391 = vadd.f32 %v9377, %v9390
    %9392 = vdwg.mxu0
    %9393 = vmatpush.bf16.msra.mxu0 %v9180
    %9394 = vmatpush.bf16.msra.mxu0 %v9176
    %9395 = vmatpush.bf16.msra.mxu0 %v9172
    %9396 = vmatpush.bf16.msra.mxu0 %v9168
    %9397 = vmatpush.bf16.msra.mxu0 %v9164
    %9398 = vmatpush.bf16.msra.mxu0 %v9160
    %9399 = vmatpush.bf16.msra.mxu0 %v9156
    %9400 = vmatpush.bf16.msra.mxu0 %v9152
    %9401 = vmatmul.bf16.gmra.mxu0 %v7774
    %v9402 = vpop.f32.mrf.mxu0
    %v9403 = vadd.f32 %v9389, %v9402
    %v9404 = vpop.f32.mrf.mxu0
    %v9405 = vadd.f32 %v9391, %v9404
    %9406 = vdwg.mxu0
    %9407 = vmatpush.bf16.msra.mxu0 %v8957
    %9408 = vmatpush.bf16.msra.mxu0 %v8953
    %9409 = vmatpush.bf16.msra.mxu0 %v8949
    %9410 = vmatpush.bf16.msra.mxu0 %v8945
    %9411 = vmatpush.bf16.msra.mxu0 %v8941
    %9412 = vmatpush.bf16.msra.mxu0 %v8937
    %9413 = vmatpush.bf16.msra.mxu0 %v8933
    %9414 = vmatpush.bf16.msra.mxu0 %v8929
    %9415 = vmatmul.bf16.gmra.mxu0 %v7767
    %v9416 = vpop.f32.mrf.mxu0
    %v9417 = vadd.f32 0.0, %v9416
    %v9418 = vpop.f32.mrf.mxu0
    %v9419 = vadd.f32 0.0, %v9418
    %9420 = vdwg.mxu0
    %9421 = vmatpush.bf16.msra.mxu0 %v8989
    %9422 = vmatpush.bf16.msra.mxu0 %v8985
    %9423 = vmatpush.bf16.msra.mxu0 %v8981
    %9424 = vmatpush.bf16.msra.mxu0 %v8977
    %9425 = vmatpush.bf16.msra.mxu0 %v8973
    %9426 = vmatpush.bf16.msra.mxu0 %v8969
    %9427 = vmatpush.bf16.msra.mxu0 %v8965
    %9428 = vmatpush.bf16.msra.mxu0 %v8961
    %9429 = vmatmul.bf16.gmra.mxu0 %v7768
    %v9430 = vpop.f32.mrf.mxu0
    %v9431 = vadd.f32 %v9417, %v9430
    %v9432 = vpop.f32.mrf.mxu0
    %v9433 = vadd.f32 %v9419, %v9432
    %9434 = vdwg.mxu0
    %9435 = vmatpush.bf16.msra.mxu0 %v9021
    %9436 = vmatpush.bf16.msra.mxu0 %v9017
    %9437 = vmatpush.bf16.msra.mxu0 %v9013
    %9438 = vmatpush.bf16.msra.mxu0 %v9009
    %9439 = vmatpush.bf16.msra.mxu0 %v9005
    %9440 = vmatpush.bf16.msra.mxu0 %v9001
    %9441 = vmatpush.bf16.msra.mxu0 %v8997
    %9442 = vmatpush.bf16.msra.mxu0 %v8993
    %9443 = vmatmul.bf16.gmra.mxu0 %v7769
    %v9444 = vpop.f32.mrf.mxu0
    %v9445 = vadd.f32 %v9431, %v9444
    %v9446 = vpop.f32.mrf.mxu0
    %v9447 = vadd.f32 %v9433, %v9446
    %9448 = vdwg.mxu0
    %9449 = vmatpush.bf16.msra.mxu0 %v9053
    %9450 = vmatpush.bf16.msra.mxu0 %v9049
    %9451 = vmatpush.bf16.msra.mxu0 %v9045
    %9452 = vmatpush.bf16.msra.mxu0 %v9041
    %9453 = vmatpush.bf16.msra.mxu0 %v9037
    %9454 = vmatpush.bf16.msra.mxu0 %v9033
    %9455 = vmatpush.bf16.msra.mxu0 %v9029
    %9456 = vmatpush.bf16.msra.mxu0 %v9025
    %9457 = vmatmul.bf16.gmra.mxu0 %v7770
    %v9458 = vpop.f32.mrf.mxu0
    %v9459 = vadd.f32 %v9445, %v9458
    %v9460 = vpop.f32.mrf.mxu0
    %v9461 = vadd.f32 %v9447, %v9460
    %9462 = vdwg.mxu0
    %9463 = vmatpush.bf16.msra.mxu0 %v9085
    %9464 = vmatpush.bf16.msra.mxu0 %v9081
    %9465 = vmatpush.bf16.msra.mxu0 %v9077
    %9466 = vmatpush.bf16.msra.mxu0 %v9073
    %9467 = vmatpush.bf16.msra.mxu0 %v9069
    %9468 = vmatpush.bf16.msra.mxu0 %v9065
    %9469 = vmatpush.bf16.msra.mxu0 %v9061
    %9470 = vmatpush.bf16.msra.mxu0 %v9057
    %9471 = vmatmul.bf16.gmra.mxu0 %v7771
    %v9472 = vpop.f32.mrf.mxu0
    %v9473 = vadd.f32 %v9459, %v9472
    %v9474 = vpop.f32.mrf.mxu0
    %v9475 = vadd.f32 %v9461, %v9474
    %9476 = vdwg.mxu0
    %9477 = vmatpush.bf16.msra.mxu0 %v9117
    %9478 = vmatpush.bf16.msra.mxu0 %v9113
    %9479 = vmatpush.bf16.msra.mxu0 %v9109
    %9480 = vmatpush.bf16.msra.mxu0 %v9105
    %9481 = vmatpush.bf16.msra.mxu0 %v9101
    %9482 = vmatpush.bf16.msra.mxu0 %v9097
    %9483 = vmatpush.bf16.msra.mxu0 %v9093
    %9484 = vmatpush.bf16.msra.mxu0 %v9089
    %9485 = vmatmul.bf16.gmra.mxu0 %v7772
    %v9486 = vpop.f32.mrf.mxu0
    %v9487 = vadd.f32 %v9473, %v9486
    %v9488 = vpop.f32.mrf.mxu0
    %v9489 = vadd.f32 %v9475, %v9488
    %9490 = vdwg.mxu0
    %9491 = vmatpush.bf16.msra.mxu0 %v9149
    %9492 = vmatpush.bf16.msra.mxu0 %v9145
    %9493 = vmatpush.bf16.msra.mxu0 %v9141
    %9494 = vmatpush.bf16.msra.mxu0 %v9137
    %9495 = vmatpush.bf16.msra.mxu0 %v9133
    %9496 = vmatpush.bf16.msra.mxu0 %v9129
    %9497 = vmatpush.bf16.msra.mxu0 %v9125
    %9498 = vmatpush.bf16.msra.mxu0 %v9121
    %9499 = vmatmul.bf16.gmra.mxu0 %v7773
    %v9500 = vpop.f32.mrf.mxu0
    %v9501 = vadd.f32 %v9487, %v9500
    %v9502 = vpop.f32.mrf.mxu0
    %v9503 = vadd.f32 %v9489, %v9502
    %9504 = vdwg.mxu0
    %9505 = vmatpush.bf16.msra.mxu0 %v9181
    %9506 = vmatpush.bf16.msra.mxu0 %v9177
    %9507 = vmatpush.bf16.msra.mxu0 %v9173
    %9508 = vmatpush.bf16.msra.mxu0 %v9169
    %9509 = vmatpush.bf16.msra.mxu0 %v9165
    %9510 = vmatpush.bf16.msra.mxu0 %v9161
    %9511 = vmatpush.bf16.msra.mxu0 %v9157
    %9512 = vmatpush.bf16.msra.mxu0 %v9153
    %9513 = vmatmul.bf16.gmra.mxu0 %v7774
    %v9514 = vpop.f32.mrf.mxu0
    %v9515 = vadd.f32 %v9501, %v9514
    %v9516 = vpop.f32.mrf.mxu0
    %v9517 = vadd.f32 %v9503, %v9516
    %9518 = vdwg.mxu0
    %9519 = vmatpush.bf16.msra.mxu0 %v8958
    %9520 = vmatpush.bf16.msra.mxu0 %v8954
    %9521 = vmatpush.bf16.msra.mxu0 %v8950
    %9522 = vmatpush.bf16.msra.mxu0 %v8946
    %9523 = vmatpush.bf16.msra.mxu0 %v8942
    %9524 = vmatpush.bf16.msra.mxu0 %v8938
    %9525 = vmatpush.bf16.msra.mxu0 %v8934
    %9526 = vmatpush.bf16.msra.mxu0 %v8930
    %9527 = vmatmul.bf16.gmra.mxu0 %v7767
    %v9528 = vpop.f32.mrf.mxu0
    %v9529 = vadd.f32 0.0, %v9528
    %v9530 = vpop.f32.mrf.mxu0
    %v9531 = vadd.f32 0.0, %v9530
    %9532 = vdwg.mxu0
    %9533 = vmatpush.bf16.msra.mxu0 %v8990
    %9534 = vmatpush.bf16.msra.mxu0 %v8986
    %9535 = vmatpush.bf16.msra.mxu0 %v8982
    %9536 = vmatpush.bf16.msra.mxu0 %v8978
    %9537 = vmatpush.bf16.msra.mxu0 %v8974
    %9538 = vmatpush.bf16.msra.mxu0 %v8970
    %9539 = vmatpush.bf16.msra.mxu0 %v8966
    %9540 = vmatpush.bf16.msra.mxu0 %v8962
    %9541 = vmatmul.bf16.gmra.mxu0 %v7768
    %v9542 = vpop.f32.mrf.mxu0
    %v9543 = vadd.f32 %v9529, %v9542
    %v9544 = vpop.f32.mrf.mxu0
    %v9545 = vadd.f32 %v9531, %v9544
    %9546 = vdwg.mxu0
    %9547 = vmatpush.bf16.msra.mxu0 %v9022
    %9548 = vmatpush.bf16.msra.mxu0 %v9018
    %9549 = vmatpush.bf16.msra.mxu0 %v9014
    %9550 = vmatpush.bf16.msra.mxu0 %v9010
    %9551 = vmatpush.bf16.msra.mxu0 %v9006
    %9552 = vmatpush.bf16.msra.mxu0 %v9002
    %9553 = vmatpush.bf16.msra.mxu0 %v8998
    %9554 = vmatpush.bf16.msra.mxu0 %v8994
    %9555 = vmatmul.bf16.gmra.mxu0 %v7769
    %v9556 = vpop.f32.mrf.mxu0
    %v9557 = vadd.f32 %v9543, %v9556
    %v9558 = vpop.f32.mrf.mxu0
    %v9559 = vadd.f32 %v9545, %v9558
    %9560 = vdwg.mxu0
    %9561 = vmatpush.bf16.msra.mxu0 %v9054
    %9562 = vmatpush.bf16.msra.mxu0 %v9050
    %9563 = vmatpush.bf16.msra.mxu0 %v9046
    %9564 = vmatpush.bf16.msra.mxu0 %v9042
    %9565 = vmatpush.bf16.msra.mxu0 %v9038
    %9566 = vmatpush.bf16.msra.mxu0 %v9034
    %9567 = vmatpush.bf16.msra.mxu0 %v9030
    %9568 = vmatpush.bf16.msra.mxu0 %v9026
    %9569 = vmatmul.bf16.gmra.mxu0 %v7770
    %v9570 = vpop.f32.mrf.mxu0
    %v9571 = vadd.f32 %v9557, %v9570
    %v9572 = vpop.f32.mrf.mxu0
    %v9573 = vadd.f32 %v9559, %v9572
    %9574 = vdwg.mxu0
    %9575 = vmatpush.bf16.msra.mxu0 %v9086
    %9576 = vmatpush.bf16.msra.mxu0 %v9082
    %9577 = vmatpush.bf16.msra.mxu0 %v9078
    %9578 = vmatpush.bf16.msra.mxu0 %v9074
    %9579 = vmatpush.bf16.msra.mxu0 %v9070
    %9580 = vmatpush.bf16.msra.mxu0 %v9066
    %9581 = vmatpush.bf16.msra.mxu0 %v9062
    %9582 = vmatpush.bf16.msra.mxu0 %v9058
    %9583 = vmatmul.bf16.gmra.mxu0 %v7771
    %v9584 = vpop.f32.mrf.mxu0
    %v9585 = vadd.f32 %v9571, %v9584
    %v9586 = vpop.f32.mrf.mxu0
    %v9587 = vadd.f32 %v9573, %v9586
    %9588 = vdwg.mxu0
    %9589 = vmatpush.bf16.msra.mxu0 %v9118
    %9590 = vmatpush.bf16.msra.mxu0 %v9114
    %9591 = vmatpush.bf16.msra.mxu0 %v9110
    %9592 = vmatpush.bf16.msra.mxu0 %v9106
    %9593 = vmatpush.bf16.msra.mxu0 %v9102
    %9594 = vmatpush.bf16.msra.mxu0 %v9098
    %9595 = vmatpush.bf16.msra.mxu0 %v9094
    %9596 = vmatpush.bf16.msra.mxu0 %v9090
    %9597 = vmatmul.bf16.gmra.mxu0 %v7772
    %v9598 = vpop.f32.mrf.mxu0
    %v9599 = vadd.f32 %v9585, %v9598
    %v9600 = vpop.f32.mrf.mxu0
    %v9601 = vadd.f32 %v9587, %v9600
    %9602 = vdwg.mxu0
    %9603 = vmatpush.bf16.msra.mxu0 %v9150
    %9604 = vmatpush.bf16.msra.mxu0 %v9146
    %9605 = vmatpush.bf16.msra.mxu0 %v9142
    %9606 = vmatpush.bf16.msra.mxu0 %v9138
    %9607 = vmatpush.bf16.msra.mxu0 %v9134
    %9608 = vmatpush.bf16.msra.mxu0 %v9130
    %9609 = vmatpush.bf16.msra.mxu0 %v9126
    %9610 = vmatpush.bf16.msra.mxu0 %v9122
    %9611 = vmatmul.bf16.gmra.mxu0 %v7773
    %v9612 = vpop.f32.mrf.mxu0
    %v9613 = vadd.f32 %v9599, %v9612
    %v9614 = vpop.f32.mrf.mxu0
    %v9615 = vadd.f32 %v9601, %v9614
    %9616 = vdwg.mxu0
    %9617 = vmatpush.bf16.msra.mxu0 %v9182
    %9618 = vmatpush.bf16.msra.mxu0 %v9178
    %9619 = vmatpush.bf16.msra.mxu0 %v9174
    %9620 = vmatpush.bf16.msra.mxu0 %v9170
    %9621 = vmatpush.bf16.msra.mxu0 %v9166
    %9622 = vmatpush.bf16.msra.mxu0 %v9162
    %9623 = vmatpush.bf16.msra.mxu0 %v9158
    %9624 = vmatpush.bf16.msra.mxu0 %v9154
    %9625 = vmatmul.bf16.gmra.mxu0 %v7774
    %v9626 = vpop.f32.mrf.mxu0
    %v9627 = vadd.f32 %v9613, %v9626
    %v9628 = vpop.f32.mrf.mxu0
    %v9629 = vadd.f32 %v9615, %v9628
    %9630 = vdwg.mxu0
    %v9631 = vld [vmem:[#allocation9] sm:$0xf]
    %v9633 = vperm.slane %v9631, 0
    %v9634 = vperm.slane %v9631, 1
    %v9635 = vperm.slane %v9631, 2
    %v9636 = vperm.slane %v9631, 3
    %v9641 = vmul.f32 %v9291, %v9633
    %v9642 = vmul.f32 %v9403, %v9634
    %v9643 = vmul.f32 %v9515, %v9635
    %v9644 = vmul.f32 %v9627, %v9636
    %v9645 = vmul.f32 %v9293, %v9633
    %v9646 = vmul.f32 %v9405, %v9634
    %v9647 = vmul.f32 %v9517, %v9635
    %v9648 = vmul.f32 %v9629, %v9636
    %v9649 = vld [vmem:[#allocation10] sm:$0xf]
    %v9651 = vperm.slane %v9649, 0
    %v9652 = vperm.slane %v9649, 1
    %v9653 = vperm.slane %v9649, 2
    %v9654 = vperm.slane %v9649, 3
    %v9659 = vadd.f32 %v9641, %v9651
    %v9660 = vadd.f32 %v9642, %v9652
    %v9661 = vadd.f32 %v9643, %v9653
    %v9662 = vadd.f32 %v9644, %v9654
    %v9663 = vadd.f32 %v9645, %v9651
    %v9664 = vadd.f32 %v9646, %v9652
    %v9665 = vadd.f32 %v9647, %v9653
    %v9666 = vadd.f32 %v9648, %v9654
    %v9667 = vmax.f32 %v9659, 0.0
    %v9668 = vmax.f32 %v9660, 0.0
    %v9669 = vmax.f32 %v9661, 0.0
    %v9670 = vmax.f32 %v9662, 0.0
    %v9671 = vmax.f32 %v9663, 0.0
    %v9672 = vmax.f32 %v9664, 0.0
    %v9673 = vmax.f32 %v9665, 0.0
    %v9674 = vmax.f32 %v9666, 0.0
    %v9675 = vpack.c.bf16 %v9671, %v9667
    %v9676 = vpack.c.bf16 %v9672, %v9668
    %v9677 = vpack.c.bf16 %v9673, %v9669
    %v9678 = vpack.c.bf16 %v9674, %v9670
    %v9679 = vld [vmem:[#allocation12] sm:$0xff]
    %v9680 = vld [vmem:[#allocation12 + $0x8] sm:$0xff]
    %v9681 = vld [vmem:[#allocation12 + $0x10] sm:$0xff]
    %v9682 = vld [vmem:[#allocation12 + $0x18] sm:$0xff]
    %v9683 = vld [vmem:[#allocation12 + $0x20] sm:$0xff]
    %v9684 = vld [vmem:[#allocation12 + $0x28] sm:$0xff]
    %v9685 = vld [vmem:[#allocation12 + $0x30] sm:$0xff]
    %v9686 = vld [vmem:[#allocation12 + $0x38] sm:$0xff]
    %v9687 = vld [vmem:[#allocation12 + $0x40] sm:$0xff]
    %v9688 = vld [vmem:[#allocation12 + $0x48] sm:$0xff]
    %v9689 = vld [vmem:[#allocation12 + $0x50] sm:$0xff]
    %v9690 = vld [vmem:[#allocation12 + $0x58] sm:$0xff]
    %v9691 = vld [vmem:[#allocation12 + $0x60] sm:$0xff]
    %v9692 = vld [vmem:[#allocation12 + $0x68] sm:$0xff]
    %v9693 = vld [vmem:[#allocation12 + $0x70] sm:$0xff]
    %v9694 = vld [vmem:[#allocation12 + $0x78] sm:$0xff]
    %v9695 = vunpack.c.0.s8 %v9679
    %v9696 = vunpack.c.1.s8 %v9679
    %v9697 = vunpack.c.2.s8 %v9679
    %v9698 = vunpack.c.3.s8 %v9679
    %v9699 = vunpack.c.0.s8 %v9680
    %v9700 = vunpack.c.1.s8 %v9680
    %v9701 = vunpack.c.2.s8 %v9680
    %v9702 = vunpack.c.3.s8 %v9680
    %v9703 = vunpack.c.0.s8 %v9681
    %v9704 = vunpack.c.1.s8 %v9681
    %v9705 = vunpack.c.2.s8 %v9681
    %v9706 = vunpack.c.3.s8 %v9681
    %v9707 = vunpack.c.0.s8 %v9682
    %v9708 = vunpack.c.1.s8 %v9682
    %v9709 = vunpack.c.2.s8 %v9682
    %v9710 = vunpack.c.3.s8 %v9682
    %v9711 = vunpack.c.0.s8 %v9683
    %v9712 = vunpack.c.1.s8 %v9683
    %v9713 = vunpack.c.2.s8 %v9683
    %v9714 = vunpack.c.3.s8 %v9683
    %v9715 = vunpack.c.0.s8 %v9684
    %v9716 = vunpack.c.1.s8 %v9684
    %v9717 = vunpack.c.2.s8 %v9684
    %v9718 = vunpack.c.3.s8 %v9684
    %v9719 = vunpack.c.0.s8 %v9685
    %v9720 = vunpack.c.1.s8 %v9685
    %v9721 = vunpack.c.2.s8 %v9685
    %v9722 = vunpack.c.3.s8 %v9685
    %v9723 = vunpack.c.0.s8 %v9686
    %v9724 = vunpack.c.1.s8 %v9686
    %v9725 = vunpack.c.2.s8 %v9686
    %v9726 = vunpack.c.3.s8 %v9686
    %v9727 = vunpack.c.0.s8 %v9687
    %v9728 = vunpack.c.1.s8 %v9687
    %v9729 = vunpack.c.2.s8 %v9687
    %v9730 = vunpack.c.3.s8 %v9687
    %v9731 = vunpack.c.0.s8 %v9688
    %v9732 = vunpack.c.1.s8 %v9688
    %v9733 = vunpack.c.2.s8 %v9688
    %v9734 = vunpack.c.3.s8 %v9688
    %v9735 = vunpack.c.0.s8 %v9689
    %v9736 = vunpack.c.1.s8 %v9689
    %v9737 = vunpack.c.2.s8 %v9689
    %v9738 = vunpack.c.3.s8 %v9689
    %v9739 = vunpack.c.0.s8 %v9690
    %v9740 = vunpack.c.1.s8 %v9690
    %v9741 = vunpack.c.2.s8 %v9690
    %v9742 = vunpack.c.3.s8 %v9690
    %v9743 = vunpack.c.0.s8 %v9691
    %v9744 = vunpack.c.1.s8 %v9691
    %v9745 = vunpack.c.2.s8 %v9691
    %v9746 = vunpack.c.3.s8 %v9691
    %v9747 = vunpack.c.0.s8 %v9692
    %v9748 = vunpack.c.1.s8 %v9692
    %v9749 = vunpack.c.2.s8 %v9692
    %v9750 = vunpack.c.3.s8 %v9692
    %v9751 = vunpack.c.0.s8 %v9693
    %v9752 = vunpack.c.1.s8 %v9693
    %v9753 = vunpack.c.2.s8 %v9693
    %v9754 = vunpack.c.3.s8 %v9693
    %v9755 = vunpack.c.0.s8 %v9694
    %v9756 = vunpack.c.1.s8 %v9694
    %v9757 = vunpack.c.2.s8 %v9694
    %v9758 = vunpack.c.3.s8 %v9694
    %v9759 = vcvt.s32.f32 %v9695
    %v9760 = vcvt.s32.f32 %v9696
    %v9761 = vcvt.s32.f32 %v9697
    %v9762 = vcvt.s32.f32 %v9698
    %v9763 = vcvt.s32.f32 %v9699
    %v9764 = vcvt.s32.f32 %v9700
    %v9765 = vcvt.s32.f32 %v9701
    %v9766 = vcvt.s32.f32 %v9702
    %v9767 = vcvt.s32.f32 %v9703
    %v9768 = vcvt.s32.f32 %v9704
    %v9769 = vcvt.s32.f32 %v9705
    %v9770 = vcvt.s32.f32 %v9706
    %v9771 = vcvt.s32.f32 %v9707
    %v9772 = vcvt.s32.f32 %v9708
    %v9773 = vcvt.s32.f32 %v9709
    %v9774 = vcvt.s32.f32 %v9710
    %v9775 = vcvt.s32.f32 %v9711
    %v9776 = vcvt.s32.f32 %v9712
    %v9777 = vcvt.s32.f32 %v9713
    %v9778 = vcvt.s32.f32 %v9714
    %v9779 = vcvt.s32.f32 %v9715
    %v9780 = vcvt.s32.f32 %v9716
    %v9781 = vcvt.s32.f32 %v9717
    %v9782 = vcvt.s32.f32 %v9718
    %v9783 = vcvt.s32.f32 %v9719
    %v9784 = vcvt.s32.f32 %v9720
    %v9785 = vcvt.s32.f32 %v9721
    %v9786 = vcvt.s32.f32 %v9722
    %v9787 = vcvt.s32.f32 %v9723
    %v9788 = vcvt.s32.f32 %v9724
    %v9789 = vcvt.s32.f32 %v9725
    %v9790 = vcvt.s32.f32 %v9726
    %v9791 = vcvt.s32.f32 %v9727
    %v9792 = vcvt.s32.f32 %v9728
    %v9793 = vcvt.s32.f32 %v9729
    %v9794 = vcvt.s32.f32 %v9730
    %v9795 = vcvt.s32.f32 %v9731
    %v9796 = vcvt.s32.f32 %v9732
    %v9797 = vcvt.s32.f32 %v9733
    %v9798 = vcvt.s32.f32 %v9734
    %v9799 = vcvt.s32.f32 %v9735
    %v9800 = vcvt.s32.f32 %v9736
    %v9801 = vcvt.s32.f32 %v9737
    %v9802 = vcvt.s32.f32 %v9738
    %v9803 = vcvt.s32.f32 %v9739
    %v9804 = vcvt.s32.f32 %v9740
    %v9805 = vcvt.s32.f32 %v9741
    %v9806 = vcvt.s32.f32 %v9742
    %v9807 = vcvt.s32.f32 %v9743
    %v9808 = vcvt.s32.f32 %v9744
    %v9809 = vcvt.s32.f32 %v9745
    %v9810 = vcvt.s32.f32 %v9746
    %v9811 = vcvt.s32.f32 %v9747
    %v9812 = vcvt.s32.f32 %v9748
    %v9813 = vcvt.s32.f32 %v9749
    %v9814 = vcvt.s32.f32 %v9750
    %v9815 = vcvt.s32.f32 %v9751
    %v9816 = vcvt.s32.f32 %v9752
    %v9817 = vcvt.s32.f32 %v9753
    %v9818 = vcvt.s32.f32 %v9754
    %v9819 = vcvt.s32.f32 %v9755
    %v9820 = vcvt.s32.f32 %v9756
    %v9821 = vcvt.s32.f32 %v9757
    %v9822 = vcvt.s32.f32 %v9758
    %v9823 = vpack.c.bf16 %v9760, %v9759
    %v9824 = vpack.c.bf16 %v9762, %v9761
    %v9825 = vpack.c.bf16 %v9764, %v9763
    %v9826 = vpack.c.bf16 %v9766, %v9765
    %v9827 = vpack.c.bf16 %v9768, %v9767
    %v9828 = vpack.c.bf16 %v9770, %v9769
    %v9829 = vpack.c.bf16 %v9772, %v9771
    %v9830 = vpack.c.bf16 %v9774, %v9773
    %v9831 = vpack.c.bf16 %v9776, %v9775
    %v9832 = vpack.c.bf16 %v9778, %v9777
    %v9833 = vpack.c.bf16 %v9780, %v9779
    %v9834 = vpack.c.bf16 %v9782, %v9781
    %v9835 = vpack.c.bf16 %v9784, %v9783
    %v9836 = vpack.c.bf16 %v9786, %v9785
    %v9837 = vpack.c.bf16 %v9788, %v9787
    %v9838 = vpack.c.bf16 %v9790, %v9789
    %v9839 = vpack.c.bf16 %v9792, %v9791
    %v9840 = vpack.c.bf16 %v9794, %v9793
    %v9841 = vpack.c.bf16 %v9796, %v9795
    %v9842 = vpack.c.bf16 %v9798, %v9797
    %v9843 = vpack.c.bf16 %v9800, %v9799
    %v9844 = vpack.c.bf16 %v9802, %v9801
    %v9845 = vpack.c.bf16 %v9804, %v9803
    %v9846 = vpack.c.bf16 %v9806, %v9805
    %v9847 = vpack.c.bf16 %v9808, %v9807
    %v9848 = vpack.c.bf16 %v9810, %v9809
    %v9849 = vpack.c.bf16 %v9812, %v9811
    %v9850 = vpack.c.bf16 %v9814, %v9813
    %v9851 = vpack.c.bf16 %v9816, %v9815
    %v9852 = vpack.c.bf16 %v9818, %v9817
    %v9853 = vpack.c.bf16 %v9820, %v9819
    %v9854 = vpack.c.bf16 %v9822, %v9821
    %9855 = vmatpush.bf16.msra.mxu0 %v9830
    %9856 = vmatpush.bf16.msra.mxu0 %v9829
    %9857 = vmatpush.bf16.msra.mxu0 %v9828
    %9858 = vmatpush.bf16.msra.mxu0 %v9827
    %9859 = vmatpush.bf16.msra.mxu0 %v9826
    %9860 = vmatpush.bf16.msra.mxu0 %v9825
    %9861 = vmatpush.bf16.msra.mxu0 %v9824
    %9862 = vmatpush.bf16.msra.mxu0 %v9823
    %9863 = vmatmul.bf16.gmra.mxu0 %v9675
    %v9864 = vpop.f32.mrf.mxu0
    %v9865 = vadd.f32 0.0, %v9864
    %v9866 = vpop.f32.mrf.mxu0
    %v9867 = vadd.f32 0.0, %v9866
    %9868 = vdwg.mxu0
    %9869 = vmatpush.bf16.msra.mxu0 %v9838
    %9870 = vmatpush.bf16.msra.mxu0 %v9837
    %9871 = vmatpush.bf16.msra.mxu0 %v9836
    %9872 = vmatpush.bf16.msra.mxu0 %v9835
    %9873 = vmatpush.bf16.msra.mxu0 %v9834
    %9874 = vmatpush.bf16.msra.mxu0 %v9833
    %9875 = vmatpush.bf16.msra.mxu0 %v9832
    %9876 = vmatpush.bf16.msra.mxu0 %v9831
    %9877 = vmatmul.bf16.gmra.mxu0 %v9676
    %v9878 = vpop.f32.mrf.mxu0
    %v9879 = vadd.f32 %v9865, %v9878
    %v9880 = vpop.f32.mrf.mxu0
    %v9881 = vadd.f32 %v9867, %v9880
    %9882 = vdwg.mxu0
    %9883 = vmatpush.bf16.msra.mxu0 %v9846
    %9884 = vmatpush.bf16.msra.mxu0 %v9845
    %9885 = vmatpush.bf16.msra.mxu0 %v9844
    %9886 = vmatpush.bf16.msra.mxu0 %v9843
    %9887 = vmatpush.bf16.msra.mxu0 %v9842
    %9888 = vmatpush.bf16.msra.mxu0 %v9841
    %9889 = vmatpush.bf16.msra.mxu0 %v9840
    %9890 = vmatpush.bf16.msra.mxu0 %v9839
    %9891 = vmatmul.bf16.gmra.mxu0 %v9677
    %v9892 = vpop.f32.mrf.mxu0
    %v9893 = vadd.f32 %v9879, %v9892
    %v9894 = vpop.f32.mrf.mxu0
    %v9895 = vadd.f32 %v9881, %v9894
    %9896 = vdwg.mxu0
    %9897 = vmatpush.bf16.msra.mxu0 %v9854
    %9898 = vmatpush.bf16.msra.mxu0 %v9853
    %9899 = vmatpush.bf16.msra.mxu0 %v9852
    %9900 = vmatpush.bf16.msra.mxu0 %v9851
    %9901 = vmatpush.bf16.msra.mxu0 %v9850
    %9902 = vmatpush.bf16.msra.mxu0 %v9849
    %9903 = vmatpush.bf16.msra.mxu0 %v9848
    %9904 = vmatpush.bf16.msra.mxu0 %v9847
    %9905 = vmatmul.bf16.gmra.mxu0 %v9678
    %v9906 = vpop.f32.mrf.mxu0
    %v9907 = vadd.f32 %v9893, %v9906
    %v9908 = vpop.f32.mrf.mxu0
    %v9909 = vadd.f32 %v9895, %v9908
    %9910 = vdwg.mxu0
    %v9911 = vld [vmem:[#allocation13] sm:$0x1]
    %v9913 = vperm.slane %v9911, 0
    %v9915 = vmul.f32 %v9907, %v9913
    %v9916 = vmul.f32 %v9909, %v9913
    %v9917 = vld [vmem:[#allocation15] sm:$0x1]
    %v9919 = vperm.slane %v9917, 0
    %v9921 = vadd.f32 %v9915, %v9919
    %v9922 = vadd.f32 %v9916, %v9919
    %v9923 = vmax.f32 %v9921, 0.0
    %v9924 = vmax.f32 %v9922, 0.0
    %9925 = vst [vmem:[%s10] sm:$0xff] %v9923
    %9926 = vst [vmem:[%s10 + $0x8] sm:$0xff] %v9924
    // Predicated region
    $region78: #{fully_connected_layers.1} parent=1 // pred_check
      _
    $region79: #{fully_connected_layers.1} parent=1 // pred_check_branch
      %9928 = sbr.rel (0) target = $region81
    $region80: #{fully_connected_layers.1} parent=1 // pred_region
      _
    $region81: #{fully_connected_layers.1} parent=1 // pred_fallthru
      _
    // Predicated region
    $region82: #{fully_connected_layers.1} parent=1 // pred_check
      _
    $region83: #{fully_connected_layers.1} parent=1 // pred_check_branch
      %9930 = sbr.rel (0) target = $region85
    $region84: #{fully_connected_layers.1} parent=1 // pred_region
      _
    $region85: #{fully_connected_layers.1} parent=1 // pred_fallthru
      _
    %9931 = vsyncpa [#allocation3], 1
    %9932 = vsyncpa [#allocation5], 1
    %9933 = vsyncpa [#allocation8], 1
    %9934 = vsyncpa [#allocation11], 1
    %9935 = vsyncpa [#allocation14], 1

</llo_original>
